<compile_context>
chip_gen: v7x
topology: tpu7x:2x2x1
jax: 0.10.0
libtpu: 0.0.40
codegen_flags: <defaults>
</compile_context>

<pallas_src>
import functools

import jax
import jax.numpy as jnp
from jax.experimental import pallas as pl
from jax.experimental.pallas import tpu as pltpu


# ----------------------------------------------------------------------------
# Pallas kernel: all layers, one time step per grid point; grid = (batch, time).
# The output block (indexed by batch only) is VMEM-resident across the time axis
# and carries the hidden state.
# ----------------------------------------------------------------------------
def _encoder_kernel(x_ref, hinit_ref, sup_ref, *rest, N, U, S, K, L):
    w_refs = rest[:-1]          # per layer: Wx (3,M,d,U), Wh (3,M,U,U), b (3,1,U)
    out_ref = rest[-1]          # (L, 1, N, U) f32 -- carried hidden state

    t = pl.program_id(1)

    @pl.when(t == 0)
    def _():                    # load the initial hidden state for this batch element
        out_ref[...] = hinit_ref[...]

    cdt = sup_ref.dtype         # matmul-operand dtype (f32 or bf16); accumulate in f32
    A = [sup_ref[s] for s in range(S)]                     # S x (N, N)

    def diffuse_accum(state0, w_ref, w_idx, accs):
        """Chebyshev diffusion of `state0`; for every diffusion output x_m accumulate
        accs[j] += x_m @ w_ref[w_idx[j], m]  (f32 accumulation).
        x0 is intentionally NOT reset between supports (reference DCRNN quirk)."""
        def project(m, xm):
            xm = xm.astype(cdt)
            for j, wi in enumerate(w_idx):
                accs[j] = accs[j] + jnp.dot(xm, w_ref[wi, m],
                                            preferred_element_type=jnp.float32)
        m = 0
        x0 = state0
        project(m, x0); m += 1
        for s in range(S):
            x1 = jnp.dot(A[s], x0.astype(cdt), preferred_element_type=jnp.float32)
            project(m, x1); m += 1
            for _ in range(2, K + 1):
                x2 = 2.0 * jnp.dot(A[s], x1.astype(cdt),
                                   preferred_element_type=jnp.float32) - x0
                project(m, x2); m += 1
                x1, x0 = x2, x1
        return accs

    cur = x_ref[0, 0].astype(jnp.float32)                  # (N, d) input at step t
    for l in range(L):
        wx_ref = w_refs[3 * l + 0]                         # (3, M, d_l, U)
        wh_ref = w_refs[3 * l + 1]                         # (3, M, U, U)
        b_ref = w_refs[3 * l + 2]                          # (3, 1, U) f32
        h = out_ref[l, 0]                                  # (N, U) f32

        zero = jnp.zeros((N, U), jnp.float32)
        # x-channels feed r, u and the candidate; one shared diffusion of `cur`.
        pr, pu, pc = diffuse_accum(cur, wx_ref, (0, 1, 2), [zero, zero, zero])
        # h-channels feed r, u.
        pr, pu = diffuse_accum(h, wh_ref, (0, 1), [pr, pu])
        r = jax.nn.sigmoid(pr + b_ref[0])
        u = jax.nn.sigmoid(pu + b_ref[1])
        # candidate h-channels act on the diffusion of r*h.
        (pc,) = diffuse_accum(r * h, wh_ref, (2,), [pc])
        c = jnp.tanh(pc + b_ref[2])

        new_h = u * h + (1.0 - u) * c
        # TODO(synk): with rnn_units=32 this is a 32-lane (masked) store; at realistic
        # widths (>=128) the store becomes lane-dense automatically.
        out_ref[l, 0] = new_h
        cur = new_h


# ----------------------------------------------------------------------------
# Wrapper: the whole encoder (all layers, all T time steps) in ONE pallas_call.
# ----------------------------------------------------------------------------
@functools.partial(jax.jit, static_argnums=(4, 5, 6, 7))
def encoder_forward_seq(inputs_seq, hidden_state, supports, params,
                        num_nodes, units, in_dim, K):
    """inputs_seq: (T, B, N*in_dim); hidden_state: (L, B, N*units) or None.
    supports: (S, N, N); its dtype selects the matmul-operand precision (f32/bf16).
    Returns (output, hidden) after the last step, matching the module per-step API."""
    T, B = inputs_seq.shape[0], inputs_seq.shape[1]
    N, U = num_nodes, units
    L = len(params)
    S = supports.shape[0]
    M = S * K + 1
    cdt = supports.dtype

    if hidden_state is None:
        hidden_state = jnp.zeros((L, B, N * U), jnp.float32)

    x = inputs_seq.reshape(T, B, N, in_dim).astype(jnp.float32)
    h0 = hidden_state.reshape(L, B, N, U).astype(jnp.float32)

    flat_w = []
    for (Wx, Wh, bias) in params:
        flat_w += [Wx.astype(cdt), Wh.astype(cdt), bias.astype(jnp.float32)]

    # Advisory cost estimate (per-batch N^2 counts, not block-diagonal).
    flops = 0
    for l in range(L):
        d = in_dim if l == 0 else U
        flops += 2 * S * K * N * N * (d + 2 * U)        # diffusion matmuls
        flops += 2 * N * U * M * 3 * (d + U)            # projection matmuls
    flops *= B * T
    trans = 3 * L * N * U * B * T                       # 2x sigmoid + tanh per layer
    bytes_acc = (x.size * 4 + h0.size * 4 + L * B * N * U * 4
                 + supports.size * supports.dtype.itemsize
                 + sum(int(w.size) * w.dtype.itemsize for w in flat_w))

    # VMEM budget: resident weights/supports + double-buffered per-grid blocks.
    resident = (supports.size * supports.dtype.itemsize
                + sum(int(w.size) * w.dtype.itemsize for w in flat_w)
                + 2 * (N * in_dim * 4) + 4 * (L * N * U * 4))
    vmem_limit = int(min(64 * 1024 * 1024, max(16 * 1024 * 1024, 8 * resident)))

    kernel = functools.partial(_encoder_kernel, N=N, U=U, S=S, K=K, L=L)
    in_specs = [
        pl.BlockSpec((1, 1, N, in_dim), lambda b, t: (t, b, 0, 0)),   # x[t, b]
        pl.BlockSpec((L, 1, N, U), lambda b, t: (0, b, 0, 0)),        # h_init[:, b]
        pl.BlockSpec((S, N, N), lambda b, t: (0, 0, 0)),              # supports (resident)
    ] + [pl.BlockSpec(tuple(w.shape), (lambda b, t, nd=w.ndim: (0,) * nd))
         for w in flat_w]
    out_specs = pl.BlockSpec((L, 1, N, U), lambda b, t: (0, b, 0, 0))

    new_h = pl.pallas_call(
        kernel,
        grid=(B, T),
        in_specs=in_specs,
        out_specs=out_specs,
        out_shape=jax.ShapeDtypeStruct((L, B, N, U), jnp.float32),
        input_output_aliases={1: 0},                    # reuse the h buffer as output
        compiler_params=pltpu.CompilerParams(
            dimension_semantics=("parallel", "arbitrary"),
            vmem_limit_bytes=vmem_limit),
        cost_estimate=pl.CostEstimate(flops=int(flops), transcendentals=int(trans),
                                      bytes_accessed=int(bytes_acc)),
    )(x, h0, supports, *flat_w)

    hidden = new_h.reshape(L, B, N * U)
    return hidden[-1], hidden


def encoder_forward(inputs, hidden_state, supports, params, num_nodes, units, in_dim, K):
    """Single-step EncoderModel.forward (exact PyTorch module semantics)."""
    return encoder_forward_seq(inputs[None], hidden_state, supports, params,
                               num_nodes, units, in_dim, K)


# ----------------------------------------------------------------------------
# Support / parameter construction (deterministic, synthetic).
# ----------------------------------------------------------------------------
def _random_walk(adj):
    d = adj.sum(axis=1)
    d_inv = jnp.where(d > 0, 1.0 / d, 0.0)
    return d_inv[:, None] * adj


def build_supports(adj, filter_type):
    if filter_type == "dual_random_walk":
        return jnp.stack([_random_walk(adj).T, _random_walk(adj.T).T]).astype(jnp.float32)
    elif filter_type == "random_walk":
        return _random_walk(adj).T[None].astype(jnp.float32)
    else:
        # TODO(synk): filter_type='laplacian' (scaled-Laplacian support) not implemented.
        raise NotImplementedError(filter_type)


def init_params(key, num_layers, num_nodes, in_dim, units, K, num_supports):
    """Returns (kernel-layout params, torch-layout params for the pure-JAX reference)."""
    U = units
    M = num_supports * K + 1
    kernel_params, ref_params = [], []
    for layer in range(num_layers):
        d = in_dim if layer == 0 else units
        C = d + U
        key, kg, kc = jax.random.split(key, 3)

        def xavier(k, shape):
            std = (2.0 / (shape[0] + shape[1])) ** 0.5
            return (std * jax.random.normal(k, shape)).astype(jnp.float32)

        Wg = xavier(kg, (C * M, 2 * U))                 # torch layout, row = c*M + m
        bg = jnp.full((1, 2 * U), 1.0, jnp.float32)     # bias_start = 1.0 for gates
        Wc = xavier(kc, (C * M, U))
        bc = jnp.zeros((1, U), jnp.float32)

        # Kernel layout: per diffusion step m, per destination {r, u, cand}.
        Wg_k = Wg.reshape(C, M, 2 * U)
        Wc_k = Wc.reshape(C, M, U)
        Wx = jnp.stack([Wg_k[:d, :, :U].transpose(1, 0, 2),     # (M, d, U)  r
                        Wg_k[:d, :, U:].transpose(1, 0, 2),     #            u
                        Wc_k[:d].transpose(1, 0, 2)], axis=0)   #            cand (x rows)
        Wh = jnp.stack([Wg_k[d:, :, :U].transpose(1, 0, 2),     # (M, U, U)  r
                        Wg_k[d:, :, U:].transpose(1, 0, 2),     #            u
                        Wc_k[d:].transpose(1, 0, 2)], axis=0)   #            cand (on r*h)
        b = jnp.stack([bg[:, :U], bg[:, U:], bc], axis=0)       # (3, 1, U)

        kernel_params.append((Wx, Wh, b))
        ref_params.append((Wg, bg, Wc, bc))
    return kernel_params, ref_params


# ----------------------------------------------------------------------------
# Pure-JAX reference (literal transcription of the PyTorch DCGRUCell math).
# ----------------------------------------------------------------------------
def _gconv_ref(x_flat, h_flat, supports, W, b, N, K):
    B = x_flat.shape[0]
    xs = jnp.concatenate([x_flat.reshape(B, N, -1), h_flat.reshape(B, N, -1)], axis=2)
    C = xs.shape[2]
    x0 = xs.transpose(1, 2, 0).reshape(N, C * B)
    x = x0[None]
    for s in range(supports.shape[0]):
        A = supports[s]
        x1 = A @ x0
        x = jnp.concatenate([x, x1[None]], 0)
        for _ in range(2, K + 1):
            x2 = 2.0 * (A @ x1) - x0
            x = jnp.concatenate([x, x2[None]], 0)
            x1, x0 = x2, x1
    M = supports.shape[0] * K + 1
    x = x.reshape(M, N, C, B).transpose(3, 1, 2, 0).reshape(B * N, C * M)
    return (x @ W + b).reshape(B, N, -1)


def _dcgru_cell_ref(x_flat, h_flat, supports, Wg, bg, Wc, bc, N, U, K):
    B = x_flat.shape[0]
    value = jax.nn.sigmoid(_gconv_ref(x_flat, h_flat, supports, Wg, bg, N, K))
    r = value[..., :U].reshape(B, N * U)
    u = value[..., U:].reshape(B, N * U)
    c = _gconv_ref(x_flat, r * h_flat, supports, Wc, bc, N, K).reshape(B, N * U)
    return u * h_flat + (1.0 - u) * jnp.tanh(c)


def encoder_forward_ref(inputs, hidden_state, supports, ref_params, N, U, K):
    B = inputs.shape[0]
    L = len(ref_params)
    if hidden_state is None:
        hidden_state = jnp.zeros((L, B, N * U), jnp.float32)
    output = inputs
    hs = []
    for layer in range(L):
        Wg, bg, Wc, bc = ref_params[layer]
        nh = _dcgru_cell_ref(output, hidden_state[layer], supports, Wg, bg, Wc, bc, N, U, K)
        hs.append(nh)
        output = nh
    return output, jnp.stack(hs)


# ----------------------------------------------------------------------------
if __name__ == "__main__":
    net_params = dict(
        max_diffusion_step=2,
        cl_decay_steps=1000,        # unused by forward
        filter_type="dual_random_walk",
        num_nodes=16,
        num_layers=2,
        dim=32,                     # rnn_units
        in_dim=2,
        seq_in_len=8,
    )
    B = 2
    N, U = net_params["num_nodes"], net_params["dim"]
    D_in, L, K = net_params["in_dim"], net_params["num_layers"], net_params["max_diffusion_step"]
    T = net_params["seq_in_len"]

    key = jax.random.PRNGKey(0)
    k_adj, k_par, k_in = jax.random.split(key, 3)

    adj = jax.random.uniform(k_adj, (N, N), jnp.float32)
    adj = adj * (adj > 0.5).astype(jnp.float32) + jnp.eye(N, dtype=jnp.float32)
    supports = build_supports(adj, net_params["filter_type"])        # (S, N, N) f32
    S = supports.shape[0]

    params, ref_params = init_params(k_par, L, N, D_in, U, K, S)
    inputs_seq = jax.random.normal(k_in, (T, B, N * D_in), jnp.float32)

    # 1) Single step (module semantics), f32 matmul operands.
    out, hidden = encoder_forward(inputs_seq[0], None, supports, params, N, U, D_in, K)
    out = jax.block_until_ready(out)
    hidden = jax.block_until_ready(hidden)
    assert out.shape == (B, N * U) and hidden.shape == (L, B, N * U)

    with jax.default_matmul_precision("highest"):
        ref_out, ref_hidden = encoder_forward_ref(inputs_seq[0], None, supports,
                                                  ref_params, N, U, K)
    # Tolerance tightened 10x vs before; kept above ~1e-5 only to allow for MXU f32
    # multi-pass rounding / accumulation-order differences.
    assert jnp.allclose(out, ref_out, atol=1e-3, rtol=1e-3), float(jnp.abs(out - ref_out).max())
    assert jnp.allclose(hidden, ref_hidden, atol=1e-3, rtol=1e-3)

    # 2) Whole sequence (T=8 encoder steps) fused into ONE pallas_call.
    out_s, hidden_s = encoder_forward_seq(inputs_seq, None, supports, params, N, U, D_in, K)
    out_s = jax.block_until_ready(out_s)
    assert out_s.shape == (B, N * U)

    with jax.default_matmul_precision("highest"):
        hid_r = None
        out_r = None
        for t in range(T):
            out_r, hid_r = encoder_forward_ref(inputs_seq[t], hid_r, supports,
                                               ref_params, N, U, K)
    assert jnp.allclose(out_s, out_r, atol=2e-3, rtol=2e-3), float(jnp.abs(out_s - out_r).max())
    assert jnp.allclose(hidden_s, hid_r, atol=2e-3, rtol=2e-3)

    # 3) bf16 MXU operands (v6e/v7x fast path): supports/weights/diffusion states bf16,
    #    accumulation and all element-wise math stay f32 (v5e-safe).
    out_b, hidden_b = encoder_forward(inputs_seq[0], None, supports.astype(jnp.bfloat16),
                                      params, N, U, D_in, K)
    out_b = jax.block_until_ready(out_b)
    assert jnp.allclose(out_b, ref_out, atol=3e-2, rtol=3e-2)
    assert jnp.allclose(hidden_b, ref_hidden, atol=3e-2, rtol=3e-2)

    print("KERNEL_OK")
</pallas_src>

<mosaic_0001>
module attributes {stable_mosaic.version = 11 : i64} {
  func.func @_encoder_kernel(%arg0: i32, %arg1: i32, %arg2: memref<1x1x16x2xf32, #tpu.memory_space<vmem>>, %arg3: memref<2x1x16x32xf32, #tpu.memory_space<vmem>>, %arg4: memref<2x16x16xf32, #tpu.memory_space<vmem>>, %arg5: memref<3x5x2x32xf32, #tpu.memory_space<vmem>>, %arg6: memref<3x5x32x32xf32, #tpu.memory_space<vmem>>, %arg7: memref<3x1x32xf32, #tpu.memory_space<vmem>>, %arg8: memref<3x5x32x32xf32, #tpu.memory_space<vmem>>, %arg9: memref<3x5x32x32xf32, #tpu.memory_space<vmem>>, %arg10: memref<3x1x32xf32, #tpu.memory_space<vmem>>, %arg11: memref<2x1x16x32xf32, #tpu.memory_space<vmem>>) attributes {dimension_semantics = [#tpu.dimension_semantics<parallel>, #tpu.dimension_semantics<arbitrary>], iteration_bounds = array<i64: 2, 1>, scalar_prefetch = 0 : i64, scratch_operands = 0 : i64, tpu.core_type = #tpu.core_type<tc>, window_params = [{transform_indices = @transform_0, window_bounds = array<i64: 1, 1, 16, 2>}, {transform_indices = @transform_1, window_bounds = array<i64: 2, 1, 16, 32>}, {pipeline_mode = #tpu.pipeline_mode<synchronous>, transform_indices = @transform_2, window_bounds = array<i64: 2, 16, 16>}, {pipeline_mode = #tpu.pipeline_mode<synchronous>, transform_indices = @transform_3, window_bounds = array<i64: 3, 5, 2, 32>}, {pipeline_mode = #tpu.pipeline_mode<synchronous>, transform_indices = @transform_4, window_bounds = array<i64: 3, 5, 32, 32>}, {pipeline_mode = #tpu.pipeline_mode<synchronous>, transform_indices = @transform_5, window_bounds = array<i64: 3, 1, 32>}, {pipeline_mode = #tpu.pipeline_mode<synchronous>, transform_indices = @transform_6, window_bounds = array<i64: 3, 5, 32, 32>}, {pipeline_mode = #tpu.pipeline_mode<synchronous>, transform_indices = @transform_7, window_bounds = array<i64: 3, 5, 32, 32>}, {pipeline_mode = #tpu.pipeline_mode<synchronous>, transform_indices = @transform_8, window_bounds = array<i64: 3, 1, 32>}, {transform_indices = @transform_9, window_bounds = array<i64: 2, 1, 16, 32>}]} {
    %c0_i32 = arith.constant 0 : i32
    %0 = arith.cmpi eq, %arg1, %c0_i32 : i32
    %1 = arith.extui %0 : i1 to i32
    %c0_i32_0 = arith.constant 0 : i32
    %2 = arith.cmpi ne, %1, %c0_i32_0 : i32
    scf.if %2 {
      %c0_383 = arith.constant 0 : index
      %c0_384 = arith.constant 0 : index
      %c0_385 = arith.constant 0 : index
      %c0_386 = arith.constant 0 : index
      %379 = vector.load %arg3[%c0_383, %c0_384, %c0_385, %c0_386] : memref<2x1x16x32xf32, #tpu.memory_space<vmem>>, vector<2x1x16x32xf32>
      %c0_387 = arith.constant 0 : index
      %c0_388 = arith.constant 0 : index
      %c0_389 = arith.constant 0 : index
      %c0_390 = arith.constant 0 : index
      %380 = vector.load %arg11[%c0_387, %c0_388, %c0_389, %c0_390] : memref<2x1x16x32xf32, #tpu.memory_space<vmem>>, vector<2x1x16x32xf32>
      tpu.vector_store %arg11[%c0_387, %c0_388, %c0_389, %c0_390], %379 {strides = array<i32>} : memref<2x1x16x32xf32, #tpu.memory_space<vmem>>, vector<2x1x16x32xf32>,
    } else {
    }
    %c0 = arith.constant 0 : index
    %c0_1 = arith.constant 0 : index
    %c0_2 = arith.constant 0 : index
    %3 = vector.load %arg4[%c0, %c0_1, %c0_2] : memref<2x16x16xf32, #tpu.memory_space<vmem>>, vector<1x16x16xf32>
    %4 = vector.shape_cast %3 : vector<1x16x16xf32> to vector<16x16xf32>
    %c1 = arith.constant 1 : index
    %c0_3 = arith.constant 0 : index
    %c0_4 = arith.constant 0 : index
    %5 = vector.load %arg4[%c1, %c0_3, %c0_4] : memref<2x16x16xf32, #tpu.memory_space<vmem>>, vector<1x16x16xf32>
    %6 = vector.shape_cast %5 : vector<1x16x16xf32> to vector<16x16xf32>
    %c0_5 = arith.constant 0 : index
    %c0_6 = arith.constant 0 : index
    %c0_7 = arith.constant 0 : index
    %c0_8 = arith.constant 0 : index
    %7 = vector.load %arg2[%c0_5, %c0_6, %c0_7, %c0_8] : memref<1x1x16x2xf32, #tpu.memory_space<vmem>>, vector<1x1x16x2xf32>
    %8 = vector.shape_cast %7 : vector<1x1x16x2xf32> to vector<16x2xf32>
    %c0_9 = arith.constant 0 : index
    %c0_10 = arith.constant 0 : index
    %c0_11 = arith.constant 0 : index
    %c0_12 = arith.constant 0 : index
    %9 = vector.load %arg11[%c0_9, %c0_10, %c0_11, %c0_12] : memref<2x1x16x32xf32, #tpu.memory_space<vmem>>, vector<1x1x16x32xf32>
    %10 = vector.shape_cast %9 : vector<1x1x16x32xf32> to vector<16x32xf32>
    %cst = arith.constant 0.000000e+00 : f32
    %11 = vector.broadcast %cst : f32 to vector<16x32xf32>
    %c0_13 = arith.constant 0 : index
    %c0_14 = arith.constant 0 : index
    %c0_15 = arith.constant 0 : index
    %c0_16 = arith.constant 0 : index
    %12 = vector.load %arg5[%c0_13, %c0_14, %c0_15, %c0_16] : memref<3x5x2x32xf32, #tpu.memory_space<vmem>>, vector<1x1x2x32xf32>
    %13 = vector.shape_cast %12 : vector<1x1x2x32xf32> to vector<2x32xf32>
    %cst_17 = arith.constant dense<0.000000e+00> : vector<16x32xf32>
    %14 = tpu.matmul %8, %13, %cst_17 {dimension_numbers = #tpu.dot_dimension_numbers<[1], [0], [0], [1], [0, 0, 1, 1], [], []>} : vector<16x2xf32>, vector<2x32xf32>, vector<16x32xf32> -> vector<16x32xf32>
    %15 = arith.addf %11, %14 : vector<16x32xf32>
    %c1_18 = arith.constant 1 : index
    %c0_19 = arith.constant 0 : index
    %c0_20 = arith.constant 0 : index
    %c0_21 = arith.constant 0 : index
    %16 = vector.load %arg5[%c1_18, %c0_19, %c0_20, %c0_21] : memref<3x5x2x32xf32, #tpu.memory_space<vmem>>, vector<1x1x2x32xf32>
    %17 = vector.shape_cast %16 : vector<1x1x2x32xf32> to vector<2x32xf32>
    %cst_22 = arith.constant dense<0.000000e+00> : vector<16x32xf32>
    %18 = tpu.matmul %8, %17, %cst_22 {dimension_numbers = #tpu.dot_dimension_numbers<[1], [0], [0], [1], [0, 0, 1, 1], [], []>} : vector<16x2xf32>, vector<2x32xf32>, vector<16x32xf32> -> vector<16x32xf32>
    %19 = arith.addf %11, %18 : vector<16x32xf32>
    %c2 = arith.constant 2 : index
    %c0_23 = arith.constant 0 : index
    %c0_24 = arith.constant 0 : index
    %c0_25 = arith.constant 0 : index
    %20 = vector.load %arg5[%c2, %c0_23, %c0_24, %c0_25] : memref<3x5x2x32xf32, #tpu.memory_space<vmem>>, vector<1x1x2x32xf32>
    %21 = vector.shape_cast %20 : vector<1x1x2x32xf32> to vector<2x32xf32>
    %cst_26 = arith.constant dense<0.000000e+00> : vector<16x32xf32>
    %22 = tpu.matmul %8, %21, %cst_26 {dimension_numbers = #tpu.dot_dimension_numbers<[1], [0], [0], [1], [0, 0, 1, 1], [], []>} : vector<16x2xf32>, vector<2x32xf32>, vector<16x32xf32> -> vector<16x32xf32>
    %23 = arith.addf %11, %22 : vector<16x32xf32>
    %cst_27 = arith.constant dense<0.000000e+00> : vector<16x2xf32>
    %24 = tpu.matmul %4, %8, %cst_27 {dimension_numbers = #tpu.dot_dimension_numbers<[1], [0], [0], [1], [0, 0, 1, 1], [], []>} : vector<16x16xf32>, vector<16x2xf32>, vector<16x2xf32> -> vector<16x2xf32>
    %c0_28 = arith.constant 0 : index
    %c1_29 = arith.constant 1 : index
    %c0_30 = arith.constant 0 : index
    %c0_31 = arith.constant 0 : index
    %25 = vector.load %arg5[%c0_28, %c1_29, %c0_30, %c0_31] : memref<3x5x2x32xf32, #tpu.memory_space<vmem>>, vector<1x1x2x32xf32>
    %26 = vector.shape_cast %25 : vector<1x1x2x32xf32> to vector<2x32xf32>
    %cst_32 = arith.constant dense<0.000000e+00> : vector<16x32xf32>
    %27 = tpu.matmul %24, %26, %cst_32 {dimension_numbers = #tpu.dot_dimension_numbers<[1], [0], [0], [1], [0, 0, 1, 1], [], []>} : vector<16x2xf32>, vector<2x32xf32>, vector<16x32xf32> -> vector<16x32xf32>
    %28 = arith.addf %15, %27 : vector<16x32xf32>
    %c1_33 = arith.constant 1 : index
    %c1_34 = arith.constant 1 : index
    %c0_35 = arith.constant 0 : index
    %c0_36 = arith.constant 0 : index
    %29 = vector.load %arg5[%c1_33, %c1_34, %c0_35, %c0_36] : memref<3x5x2x32xf32, #tpu.memory_space<vmem>>, vector<1x1x2x32xf32>
    %30 = vector.shape_cast %29 : vector<1x1x2x32xf32> to vector<2x32xf32>
    %cst_37 = arith.constant dense<0.000000e+00> : vector<16x32xf32>
    %31 = tpu.matmul %24, %30, %cst_37 {dimension_numbers = #tpu.dot_dimension_numbers<[1], [0], [0], [1], [0, 0, 1, 1], [], []>} : vector<16x2xf32>, vector<2x32xf32>, vector<16x32xf32> -> vector<16x32xf32>
    %32 = arith.addf %19, %31 : vector<16x32xf32>
    %c2_38 = arith.constant 2 : index
    %c1_39 = arith.constant 1 : index
    %c0_40 = arith.constant 0 : index
    %c0_41 = arith.constant 0 : index
    %33 = vector.load %arg5[%c2_38, %c1_39, %c0_40, %c0_41] : memref<3x5x2x32xf32, #tpu.memory_space<vmem>>, vector<1x1x2x32xf32>
    %34 = vector.shape_cast %33 : vector<1x1x2x32xf32> to vector<2x32xf32>
    %cst_42 = arith.constant dense<0.000000e+00> : vector<16x32xf32>
    %35 = tpu.matmul %24, %34, %cst_42 {dimension_numbers = #tpu.dot_dimension_numbers<[1], [0], [0], [1], [0, 0, 1, 1], [], []>} : vector<16x2xf32>, vector<2x32xf32>, vector<16x32xf32> -> vector<16x32xf32>
    %36 = arith.addf %23, %35 : vector<16x32xf32>
    %cst_43 = arith.constant dense<0.000000e+00> : vector<16x2xf32>
    %37 = tpu.matmul %4, %24, %cst_43 {dimension_numbers = #tpu.dot_dimension_numbers<[1], [0], [0], [1], [0, 0, 1, 1], [], []>} : vector<16x16xf32>, vector<16x2xf32>, vector<16x2xf32> -> vector<16x2xf32>
    %cst_44 = arith.constant 2.000000e+00 : f32
    %38 = vector.broadcast %cst_44 : f32 to vector<16x2xf32>
    %39 = arith.mulf %38, %37 : vector<16x2xf32>
    %40 = arith.subf %39, %8 : vector<16x2xf32>
    %c0_45 = arith.constant 0 : index
    %c2_46 = arith.constant 2 : index
    %c0_47 = arith.constant 0 : index
    %c0_48 = arith.constant 0 : index
    %41 = vector.load %arg5[%c0_45, %c2_46, %c0_47, %c0_48] : memref<3x5x2x32xf32, #tpu.memory_space<vmem>>, vector<1x1x2x32xf32>
    %42 = vector.shape_cast %41 : vector<1x1x2x32xf32> to vector<2x32xf32>
    %cst_49 = arith.constant dense<0.000000e+00> : vector<16x32xf32>
    %43 = tpu.matmul %40, %42, %cst_49 {dimension_numbers = #tpu.dot_dimension_numbers<[1], [0], [0], [1], [0, 0, 1, 1], [], []>} : vector<16x2xf32>, vector<2x32xf32>, vector<16x32xf32> -> vector<16x32xf32>
    %44 = arith.addf %28, %43 : vector<16x32xf32>
    %c1_50 = arith.constant 1 : index
    %c2_51 = arith.constant 2 : index
    %c0_52 = arith.constant 0 : index
    %c0_53 = arith.constant 0 : index
    %45 = vector.load %arg5[%c1_50, %c2_51, %c0_52, %c0_53] : memref<3x5x2x32xf32, #tpu.memory_space<vmem>>, vector<1x1x2x32xf32>
    %46 = vector.shape_cast %45 : vector<1x1x2x32xf32> to vector<2x32xf32>
    %cst_54 = arith.constant dense<0.000000e+00> : vector<16x32xf32>
    %47 = tpu.matmul %40, %46, %cst_54 {dimension_numbers = #tpu.dot_dimension_numbers<[1], [0], [0], [1], [0, 0, 1, 1], [], []>} : vector<16x2xf32>, vector<2x32xf32>, vector<16x32xf32> -> vector<16x32xf32>
    %48 = arith.addf %32, %47 : vector<16x32xf32>
    %c2_55 = arith.constant 2 : index
    %c2_56 = arith.constant 2 : index
    %c0_57 = arith.constant 0 : index
    %c0_58 = arith.constant 0 : index
    %49 = vector.load %arg5[%c2_55, %c2_56, %c0_57, %c0_58] : memref<3x5x2x32xf32, #tpu.memory_space<vmem>>, vector<1x1x2x32xf32>
    %50 = vector.shape_cast %49 : vector<1x1x2x32xf32> to vector<2x32xf32>
    %cst_59 = arith.constant dense<0.000000e+00> : vector<16x32xf32>
    %51 = tpu.matmul %40, %50, %cst_59 {dimension_numbers = #tpu.dot_dimension_numbers<[1], [0], [0], [1], [0, 0, 1, 1], [], []>} : vector<16x2xf32>, vector<2x32xf32>, vector<16x32xf32> -> vector<16x32xf32>
    %52 = arith.addf %36, %51 : vector<16x32xf32>
    %cst_60 = arith.constant dense<0.000000e+00> : vector<16x2xf32>
    %53 = tpu.matmul %6, %24, %cst_60 {dimension_numbers = #tpu.dot_dimension_numbers<[1], [0], [0], [1], [0, 0, 1, 1], [], []>} : vector<16x16xf32>, vector<16x2xf32>, vector<16x2xf32> -> vector<16x2xf32>
    %c0_61 = arith.constant 0 : index
    %c3 = arith.constant 3 : index
    %c0_62 = arith.constant 0 : index
    %c0_63 = arith.constant 0 : index
    %54 = vector.load %arg5[%c0_61, %c3, %c0_62, %c0_63] : memref<3x5x2x32xf32, #tpu.memory_space<vmem>>, vector<1x1x2x32xf32>
    %55 = vector.shape_cast %54 : vector<1x1x2x32xf32> to vector<2x32xf32>
    %cst_64 = arith.constant dense<0.000000e+00> : vector<16x32xf32>
    %56 = tpu.matmul %53, %55, %cst_64 {dimension_numbers = #tpu.dot_dimension_numbers<[1], [0], [0], [1], [0, 0, 1, 1], [], []>} : vector<16x2xf32>, vector<2x32xf32>, vector<16x32xf32> -> vector<16x32xf32>
    %57 = arith.addf %44, %56 : vector<16x32xf32>
    %c1_65 = arith.constant 1 : index
    %c3_66 = arith.constant 3 : index
    %c0_67 = arith.constant 0 : index
    %c0_68 = arith.constant 0 : index
    %58 = vector.load %arg5[%c1_65, %c3_66, %c0_67, %c0_68] : memref<3x5x2x32xf32, #tpu.memory_space<vmem>>, vector<1x1x2x32xf32>
    %59 = vector.shape_cast %58 : vector<1x1x2x32xf32> to vector<2x32xf32>
    %cst_69 = arith.constant dense<0.000000e+00> : vector<16x32xf32>
    %60 = tpu.matmul %53, %59, %cst_69 {dimension_numbers = #tpu.dot_dimension_numbers<[1], [0], [0], [1], [0, 0, 1, 1], [], []>} : vector<16x2xf32>, vector<2x32xf32>, vector<16x32xf32> -> vector<16x32xf32>
    %61 = arith.addf %48, %60 : vector<16x32xf32>
    %c2_70 = arith.constant 2 : index
    %c3_71 = arith.constant 3 : index
    %c0_72 = arith.constant 0 : index
    %c0_73 = arith.constant 0 : index
    %62 = vector.load %arg5[%c2_70, %c3_71, %c0_72, %c0_73] : memref<3x5x2x32xf32, #tpu.memory_space<vmem>>, vector<1x1x2x32xf32>
    %63 = vector.shape_cast %62 : vector<1x1x2x32xf32> to vector<2x32xf32>
    %cst_74 = arith.constant dense<0.000000e+00> : vector<16x32xf32>
    %64 = tpu.matmul %53, %63, %cst_74 {dimension_numbers = #tpu.dot_dimension_numbers<[1], [0], [0], [1], [0, 0, 1, 1], [], []>} : vector<16x2xf32>, vector<2x32xf32>, vector<16x32xf32> -> vector<16x32xf32>
    %65 = arith.addf %52, %64 : vector<16x32xf32>
    %cst_75 = arith.constant dense<0.000000e+00> : vector<16x2xf32>
    %66 = tpu.matmul %6, %53, %cst_75 {dimension_numbers = #tpu.dot_dimension_numbers<[1], [0], [0], [1], [0, 0, 1, 1], [], []>} : vector<16x16xf32>, vector<16x2xf32>, vector<16x2xf32> -> vector<16x2xf32>
    %cst_76 = arith.constant 2.000000e+00 : f32
    %67 = vector.broadcast %cst_76 : f32 to vector<16x2xf32>
    %68 = arith.mulf %67, %66 : vector<16x2xf32>
    %69 = arith.subf %68, %24 : vector<16x2xf32>
    %c0_77 = arith.constant 0 : index
    %c4 = arith.constant 4 : index
    %c0_78 = arith.constant 0 : index
    %c0_79 = arith.constant 0 : index
    %70 = vector.load %arg5[%c0_77, %c4, %c0_78, %c0_79] : memref<3x5x2x32xf32, #tpu.memory_space<vmem>>, vector<1x1x2x32xf32>
    %71 = vector.shape_cast %70 : vector<1x1x2x32xf32> to vector<2x32xf32>
    %cst_80 = arith.constant dense<0.000000e+00> : vector<16x32xf32>
    %72 = tpu.matmul %69, %71, %cst_80 {dimension_numbers = #tpu.dot_dimension_numbers<[1], [0], [0], [1], [0, 0, 1, 1], [], []>} : vector<16x2xf32>, vector<2x32xf32>, vector<16x32xf32> -> vector<16x32xf32>
    %73 = arith.addf %57, %72 : vector<16x32xf32>
    %c1_81 = arith.constant 1 : index
    %c4_82 = arith.constant 4 : index
    %c0_83 = arith.constant 0 : index
    %c0_84 = arith.constant 0 : index
    %74 = vector.load %arg5[%c1_81, %c4_82, %c0_83, %c0_84] : memref<3x5x2x32xf32, #tpu.memory_space<vmem>>, vector<1x1x2x32xf32>
    %75 = vector.shape_cast %74 : vector<1x1x2x32xf32> to vector<2x32xf32>
    %cst_85 = arith.constant dense<0.000000e+00> : vector<16x32xf32>
    %76 = tpu.matmul %69, %75, %cst_85 {dimension_numbers = #tpu.dot_dimension_numbers<[1], [0], [0], [1], [0, 0, 1, 1], [], []>} : vector<16x2xf32>, vector<2x32xf32>, vector<16x32xf32> -> vector<16x32xf32>
    %77 = arith.addf %61, %76 : vector<16x32xf32>
    %c2_86 = arith.constant 2 : index
    %c4_87 = arith.constant 4 : index
    %c0_88 = arith.constant 0 : index
    %c0_89 = arith.constant 0 : index
    %78 = vector.load %arg5[%c2_86, %c4_87, %c0_88, %c0_89] : memref<3x5x2x32xf32, #tpu.memory_space<vmem>>, vector<1x1x2x32xf32>
    %79 = vector.shape_cast %78 : vector<1x1x2x32xf32> to vector<2x32xf32>
    %cst_90 = arith.constant dense<0.000000e+00> : vector<16x32xf32>
    %80 = tpu.matmul %69, %79, %cst_90 {dimension_numbers = #tpu.dot_dimension_numbers<[1], [0], [0], [1], [0, 0, 1, 1], [], []>} : vector<16x2xf32>, vector<2x32xf32>, vector<16x32xf32> -> vector<16x32xf32>
    %81 = arith.addf %65, %80 : vector<16x32xf32>
    %c0_91 = arith.constant 0 : index
    %c0_92 = arith.constant 0 : index
    %c0_93 = arith.constant 0 : index
    %c0_94 = arith.constant 0 : index
    %82 = vector.load %arg6[%c0_91, %c0_92, %c0_93, %c0_94] : memref<3x5x32x32xf32, #tpu.memory_space<vmem>>, vector<1x1x32x32xf32>
    %83 = vector.shape_cast %82 : vector<1x1x32x32xf32> to vector<32x32xf32>
    %cst_95 = arith.constant dense<0.000000e+00> : vector<16x32xf32>
    %84 = tpu.matmul %10, %83, %cst_95 {dimension_numbers = #tpu.dot_dimension_numbers<[1], [0], [0], [1], [0, 0, 1, 1], [], []>} : vector<16x32xf32>, vector<32x32xf32>, vector<16x32xf32> -> vector<16x32xf32>
    %85 = arith.addf %73, %84 : vector<16x32xf32>
    %c1_96 = arith.constant 1 : index
    %c0_97 = arith.constant 0 : index
    %c0_98 = arith.constant 0 : index
    %c0_99 = arith.constant 0 : index
    %86 = vector.load %arg6[%c1_96, %c0_97, %c0_98, %c0_99] : memref<3x5x32x32xf32, #tpu.memory_space<vmem>>, vector<1x1x32x32xf32>
    %87 = vector.shape_cast %86 : vector<1x1x32x32xf32> to vector<32x32xf32>
    %cst_100 = arith.constant dense<0.000000e+00> : vector<16x32xf32>
    %88 = tpu.matmul %10, %87, %cst_100 {dimension_numbers = #tpu.dot_dimension_numbers<[1], [0], [0], [1], [0, 0, 1, 1], [], []>} : vector<16x32xf32>, vector<32x32xf32>, vector<16x32xf32> -> vector<16x32xf32>
    %89 = arith.addf %77, %88 : vector<16x32xf32>
    %cst_101 = arith.constant dense<0.000000e+00> : vector<16x32xf32>
    %90 = tpu.matmul %4, %10, %cst_101 {dimension_numbers = #tpu.dot_dimension_numbers<[1], [0], [0], [1], [0, 0, 1, 1], [], []>} : vector<16x16xf32>, vector<16x32xf32>, vector<16x32xf32> -> vector<16x32xf32>
    %c0_102 = arith.constant 0 : index
    %c1_103 = arith.constant 1 : index
    %c0_104 = arith.constant 0 : index
    %c0_105 = arith.constant 0 : index
    %91 = vector.load %arg6[%c0_102, %c1_103, %c0_104, %c0_105] : memref<3x5x32x32xf32, #tpu.memory_space<vmem>>, vector<1x1x32x32xf32>
    %92 = vector.shape_cast %91 : vector<1x1x32x32xf32> to vector<32x32xf32>
    %cst_106 = arith.constant dense<0.000000e+00> : vector<16x32xf32>
    %93 = tpu.matmul %90, %92, %cst_106 {dimension_numbers = #tpu.dot_dimension_numbers<[1], [0], [0], [1], [0, 0, 1, 1], [], []>} : vector<16x32xf32>, vector<32x32xf32>, vector<16x32xf32> -> vector<16x32xf32>
    %94 = arith.addf %85, %93 : vector<16x32xf32>
    %c1_107 = arith.constant 1 : index
    %c1_108 = arith.constant 1 : index
    %c0_109 = arith.constant 0 : index
    %c0_110 = arith.constant 0 : index
    %95 = vector.load %arg6[%c1_107, %c1_108, %c0_109, %c0_110] : memref<3x5x32x32xf32, #tpu.memory_space<vmem>>, vector<1x1x32x32xf32>
    %96 = vector.shape_cast %95 : vector<1x1x32x32xf32> to vector<32x32xf32>
    %cst_111 = arith.constant dense<0.000000e+00> : vector<16x32xf32>
    %97 = tpu.matmul %90, %96, %cst_111 {dimension_numbers = #tpu.dot_dimension_numbers<[1], [0], [0], [1], [0, 0, 1, 1], [], []>} : vector<16x32xf32>, vector<32x32xf32>, vector<16x32xf32> -> vector<16x32xf32>
    %98 = arith.addf %89, %97 : vector<16x32xf32>
    %cst_112 = arith.constant dense<0.000000e+00> : vector<16x32xf32>
    %99 = tpu.matmul %4, %90, %cst_112 {dimension_numbers = #tpu.dot_dimension_numbers<[1], [0], [0], [1], [0, 0, 1, 1], [], []>} : vector<16x16xf32>, vector<16x32xf32>, vector<16x32xf32> -> vector<16x32xf32>
    %cst_113 = arith.constant 2.000000e+00 : f32
    %100 = vector.broadcast %cst_113 : f32 to vector<16x32xf32>
    %101 = arith.mulf %100, %99 : vector<16x32xf32>
    %102 = arith.subf %101, %10 : vector<16x32xf32>
    %c0_114 = arith.constant 0 : index
    %c2_115 = arith.constant 2 : index
    %c0_116 = arith.constant 0 : index
    %c0_117 = arith.constant 0 : index
    %103 = vector.load %arg6[%c0_114, %c2_115, %c0_116, %c0_117] : memref<3x5x32x32xf32, #tpu.memory_space<vmem>>, vector<1x1x32x32xf32>
    %104 = vector.shape_cast %103 : vector<1x1x32x32xf32> to vector<32x32xf32>
    %cst_118 = arith.constant dense<0.000000e+00> : vector<16x32xf32>
    %105 = tpu.matmul %102, %104, %cst_118 {dimension_numbers = #tpu.dot_dimension_numbers<[1], [0], [0], [1], [0, 0, 1, 1], [], []>} : vector<16x32xf32>, vector<32x32xf32>, vector<16x32xf32> -> vector<16x32xf32>
    %106 = arith.addf %94, %105 : vector<16x32xf32>
    %c1_119 = arith.constant 1 : index
    %c2_120 = arith.constant 2 : index
    %c0_121 = arith.constant 0 : index
    %c0_122 = arith.constant 0 : index
    %107 = vector.load %arg6[%c1_119, %c2_120, %c0_121, %c0_122] : memref<3x5x32x32xf32, #tpu.memory_space<vmem>>, vector<1x1x32x32xf32>
    %108 = vector.shape_cast %107 : vector<1x1x32x32xf32> to vector<32x32xf32>
    %cst_123 = arith.constant dense<0.000000e+00> : vector<16x32xf32>
    %109 = tpu.matmul %102, %108, %cst_123 {dimension_numbers = #tpu.dot_dimension_numbers<[1], [0], [0], [1], [0, 0, 1, 1], [], []>} : vector<16x32xf32>, vector<32x32xf32>, vector<16x32xf32> -> vector<16x32xf32>
    %110 = arith.addf %98, %109 : vector<16x32xf32>
    %cst_124 = arith.constant dense<0.000000e+00> : vector<16x32xf32>
    %111 = tpu.matmul %6, %90, %cst_124 {dimension_numbers = #tpu.dot_dimension_numbers<[1], [0], [0], [1], [0, 0, 1, 1], [], []>} : vector<16x16xf32>, vector<16x32xf32>, vector<16x32xf32> -> vector<16x32xf32>
    %c0_125 = arith.constant 0 : index
    %c3_126 = arith.constant 3 : index
    %c0_127 = arith.constant 0 : index
    %c0_128 = arith.constant 0 : index
    %112 = vector.load %arg6[%c0_125, %c3_126, %c0_127, %c0_128] : memref<3x5x32x32xf32, #tpu.memory_space<vmem>>, vector<1x1x32x32xf32>
    %113 = vector.shape_cast %112 : vector<1x1x32x32xf32> to vector<32x32xf32>
    %cst_129 = arith.constant dense<0.000000e+00> : vector<16x32xf32>
    %114 = tpu.matmul %111, %113, %cst_129 {dimension_numbers = #tpu.dot_dimension_numbers<[1], [0], [0], [1], [0, 0, 1, 1], [], []>} : vector<16x32xf32>, vector<32x32xf32>, vector<16x32xf32> -> vector<16x32xf32>
    %115 = arith.addf %106, %114 : vector<16x32xf32>
    %c1_130 = arith.constant 1 : index
    %c3_131 = arith.constant 3 : index
    %c0_132 = arith.constant 0 : index
    %c0_133 = arith.constant 0 : index
    %116 = vector.load %arg6[%c1_130, %c3_131, %c0_132, %c0_133] : memref<3x5x32x32xf32, #tpu.memory_space<vmem>>, vector<1x1x32x32xf32>
    %117 = vector.shape_cast %116 : vector<1x1x32x32xf32> to vector<32x32xf32>
    %cst_134 = arith.constant dense<0.000000e+00> : vector<16x32xf32>
    %118 = tpu.matmul %111, %117, %cst_134 {dimension_numbers = #tpu.dot_dimension_numbers<[1], [0], [0], [1], [0, 0, 1, 1], [], []>} : vector<16x32xf32>, vector<32x32xf32>, vector<16x32xf32> -> vector<16x32xf32>
    %119 = arith.addf %110, %118 : vector<16x32xf32>
    %cst_135 = arith.constant dense<0.000000e+00> : vector<16x32xf32>
    %120 = tpu.matmul %6, %111, %cst_135 {dimension_numbers = #tpu.dot_dimension_numbers<[1], [0], [0], [1], [0, 0, 1, 1], [], []>} : vector<16x16xf32>, vector<16x32xf32>, vector<16x32xf32> -> vector<16x32xf32>
    %cst_136 = arith.constant 2.000000e+00 : f32
    %121 = vector.broadcast %cst_136 : f32 to vector<16x32xf32>
    %122 = arith.mulf %121, %120 : vector<16x32xf32>
    %123 = arith.subf %122, %90 : vector<16x32xf32>
    %c0_137 = arith.constant 0 : index
    %c4_138 = arith.constant 4 : index
    %c0_139 = arith.constant 0 : index
    %c0_140 = arith.constant 0 : index
    %124 = vector.load %arg6[%c0_137, %c4_138, %c0_139, %c0_140] : memref<3x5x32x32xf32, #tpu.memory_space<vmem>>, vector<1x1x32x32xf32>
    %125 = vector.shape_cast %124 : vector<1x1x32x32xf32> to vector<32x32xf32>
    %cst_141 = arith.constant dense<0.000000e+00> : vector<16x32xf32>
    %126 = tpu.matmul %123, %125, %cst_141 {dimension_numbers = #tpu.dot_dimension_numbers<[1], [0], [0], [1], [0, 0, 1, 1], [], []>} : vector<16x32xf32>, vector<32x32xf32>, vector<16x32xf32> -> vector<16x32xf32>
    %127 = arith.addf %115, %126 : vector<16x32xf32>
    %c1_142 = arith.constant 1 : index
    %c4_143 = arith.constant 4 : index
    %c0_144 = arith.constant 0 : index
    %c0_145 = arith.constant 0 : index
    %128 = vector.load %arg6[%c1_142, %c4_143, %c0_144, %c0_145] : memref<3x5x32x32xf32, #tpu.memory_space<vmem>>, vector<1x1x32x32xf32>
    %129 = vector.shape_cast %128 : vector<1x1x32x32xf32> to vector<32x32xf32>
    %cst_146 = arith.constant dense<0.000000e+00> : vector<16x32xf32>
    %130 = tpu.matmul %123, %129, %cst_146 {dimension_numbers = #tpu.dot_dimension_numbers<[1], [0], [0], [1], [0, 0, 1, 1], [], []>} : vector<16x32xf32>, vector<32x32xf32>, vector<16x32xf32> -> vector<16x32xf32>
    %131 = arith.addf %119, %130 : vector<16x32xf32>
    %c0_147 = arith.constant 0 : index
    %c0_148 = arith.constant 0 : index
    %c0_149 = arith.constant 0 : index
    %132 = vector.load %arg7[%c0_147, %c0_148, %c0_149] : memref<3x1x32xf32, #tpu.memory_space<vmem>>, vector<1x1x32xf32>
    %133 = vector.shape_cast %132 : vector<1x1x32xf32> to vector<1x32xf32>
    %134 = vector.broadcast %133 : vector<1x32xf32> to vector<16x32xf32>
    %135 = arith.addf %127, %134 : vector<16x32xf32>
    %136 = arith.negf %135 : vector<16x32xf32>
    %137 = math.exp %136 : vector<16x32xf32>
    %cst_150 = arith.constant 1.000000e+00 : f32
    %138 = vector.broadcast %cst_150 : f32 to vector<16x32xf32>
    %139 = arith.addf %138, %137 : vector<16x32xf32>
    %140 = arith.divf %138, %139 : vector<16x32xf32>
    %c1_151 = arith.constant 1 : index
    %c0_152 = arith.constant 0 : index
    %c0_153 = arith.constant 0 : index
    %141 = vector.load %arg7[%c1_151, %c0_152, %c0_153] : memref<3x1x32xf32, #tpu.memory_space<vmem>>, vector<1x1x32xf32>
    %142 = vector.shape_cast %141 : vector<1x1x32xf32> to vector<1x32xf32>
    %143 = vector.broadcast %142 : vector<1x32xf32> to vector<16x32xf32>
    %144 = arith.addf %131, %143 : vector<16x32xf32>
    %145 = arith.negf %144 : vector<16x32xf32>
    %146 = math.exp %145 : vector<16x32xf32>
    %cst_154 = arith.constant 1.000000e+00 : f32
    %147 = vector.broadcast %cst_154 : f32 to vector<16x32xf32>
    %148 = arith.addf %147, %146 : vector<16x32xf32>
    %149 = arith.divf %147, %148 : vector<16x32xf32>
    %150 = arith.mulf %140, %10 : vector<16x32xf32>
    %c2_155 = arith.constant 2 : index
    %c0_156 = arith.constant 0 : index
    %c0_157 = arith.constant 0 : index
    %c0_158 = arith.constant 0 : index
    %151 = vector.load %arg6[%c2_155, %c0_156, %c0_157, %c0_158] : memref<3x5x32x32xf32, #tpu.memory_space<vmem>>, vector<1x1x32x32xf32>
    %152 = vector.shape_cast %151 : vector<1x1x32x32xf32> to vector<32x32xf32>
    %cst_159 = arith.constant dense<0.000000e+00> : vector<16x32xf32>
    %153 = tpu.matmul %150, %152, %cst_159 {dimension_numbers = #tpu.dot_dimension_numbers<[1], [0], [0], [1], [0, 0, 1, 1], [], []>} : vector<16x32xf32>, vector<32x32xf32>, vector<16x32xf32> -> vector<16x32xf32>
    %154 = arith.addf %81, %153 : vector<16x32xf32>
    %cst_160 = arith.constant dense<0.000000e+00> : vector<16x32xf32>
    %155 = tpu.matmul %4, %150, %cst_160 {dimension_numbers = #tpu.dot_dimension_numbers<[1], [0], [0], [1], [0, 0, 1, 1], [], []>} : vector<16x16xf32>, vector<16x32xf32>, vector<16x32xf32> -> vector<16x32xf32>
    %c2_161 = arith.constant 2 : index
    %c1_162 = arith.constant 1 : index
    %c0_163 = arith.constant 0 : index
    %c0_164 = arith.constant 0 : index
    %156 = vector.load %arg6[%c2_161, %c1_162, %c0_163, %c0_164] : memref<3x5x32x32xf32, #tpu.memory_space<vmem>>, vector<1x1x32x32xf32>
    %157 = vector.shape_cast %156 : vector<1x1x32x32xf32> to vector<32x32xf32>
    %cst_165 = arith.constant dense<0.000000e+00> : vector<16x32xf32>
    %158 = tpu.matmul %155, %157, %cst_165 {dimension_numbers = #tpu.dot_dimension_numbers<[1], [0], [0], [1], [0, 0, 1, 1], [], []>} : vector<16x32xf32>, vector<32x32xf32>, vector<16x32xf32> -> vector<16x32xf32>
    %159 = arith.addf %154, %158 : vector<16x32xf32>
    %cst_166 = arith.constant dense<0.000000e+00> : vector<16x32xf32>
    %160 = tpu.matmul %4, %155, %cst_166 {dimension_numbers = #tpu.dot_dimension_numbers<[1], [0], [0], [1], [0, 0, 1, 1], [], []>} : vector<16x16xf32>, vector<16x32xf32>, vector<16x32xf32> -> vector<16x32xf32>
    %cst_167 = arith.constant 2.000000e+00 : f32
    %161 = vector.broadcast %cst_167 : f32 to vector<16x32xf32>
    %162 = arith.mulf %161, %160 : vector<16x32xf32>
    %163 = arith.subf %162, %150 : vector<16x32xf32>
    %c2_168 = arith.constant 2 : index
    %c2_169 = arith.constant 2 : index
    %c0_170 = arith.constant 0 : index
    %c0_171 = arith.constant 0 : index
    %164 = vector.load %arg6[%c2_168, %c2_169, %c0_170, %c0_171] : memref<3x5x32x32xf32, #tpu.memory_space<vmem>>, vector<1x1x32x32xf32>
    %165 = vector.shape_cast %164 : vector<1x1x32x32xf32> to vector<32x32xf32>
    %cst_172 = arith.constant dense<0.000000e+00> : vector<16x32xf32>
    %166 = tpu.matmul %163, %165, %cst_172 {dimension_numbers = #tpu.dot_dimension_numbers<[1], [0], [0], [1], [0, 0, 1, 1], [], []>} : vector<16x32xf32>, vector<32x32xf32>, vector<16x32xf32> -> vector<16x32xf32>
    %167 = arith.addf %159, %166 : vector<16x32xf32>
    %cst_173 = arith.constant dense<0.000000e+00> : vector<16x32xf32>
    %168 = tpu.matmul %6, %155, %cst_173 {dimension_numbers = #tpu.dot_dimension_numbers<[1], [0], [0], [1], [0, 0, 1, 1], [], []>} : vector<16x16xf32>, vector<16x32xf32>, vector<16x32xf32> -> vector<16x32xf32>
    %c2_174 = arith.constant 2 : index
    %c3_175 = arith.constant 3 : index
    %c0_176 = arith.constant 0 : index
    %c0_177 = arith.constant 0 : index
    %169 = vector.load %arg6[%c2_174, %c3_175, %c0_176, %c0_177] : memref<3x5x32x32xf32, #tpu.memory_space<vmem>>, vector<1x1x32x32xf32>
    %170 = vector.shape_cast %169 : vector<1x1x32x32xf32> to vector<32x32xf32>
    %cst_178 = arith.constant dense<0.000000e+00> : vector<16x32xf32>
    %171 = tpu.matmul %168, %170, %cst_178 {dimension_numbers = #tpu.dot_dimension_numbers<[1], [0], [0], [1], [0, 0, 1, 1], [], []>} : vector<16x32xf32>, vector<32x32xf32>, vector<16x32xf32> -> vector<16x32xf32>
    %172 = arith.addf %167, %171 : vector<16x32xf32>
    %cst_179 = arith.constant dense<0.000000e+00> : vector<16x32xf32>
    %173 = tpu.matmul %6, %168, %cst_179 {dimension_numbers = #tpu.dot_dimension_numbers<[1], [0], [0], [1], [0, 0, 1, 1], [], []>} : vector<16x16xf32>, vector<16x32xf32>, vector<16x32xf32> -> vector<16x32xf32>
    %cst_180 = arith.constant 2.000000e+00 : f32
    %174 = vector.broadcast %cst_180 : f32 to vector<16x32xf32>
    %175 = arith.mulf %174, %173 : vector<16x32xf32>
    %176 = arith.subf %175, %155 : vector<16x32xf32>
    %c2_181 = arith.constant 2 : index
    %c4_182 = arith.constant 4 : index
    %c0_183 = arith.constant 0 : index
    %c0_184 = arith.constant 0 : index
    %177 = vector.load %arg6[%c2_181, %c4_182, %c0_183, %c0_184] : memref<3x5x32x32xf32, #tpu.memory_space<vmem>>, vector<1x1x32x32xf32>
    %178 = vector.shape_cast %177 : vector<1x1x32x32xf32> to vector<32x32xf32>
    %cst_185 = arith.constant dense<0.000000e+00> : vector<16x32xf32>
    %179 = tpu.matmul %176, %178, %cst_185 {dimension_numbers = #tpu.dot_dimension_numbers<[1], [0], [0], [1], [0, 0, 1, 1], [], []>} : vector<16x32xf32>, vector<32x32xf32>, vector<16x32xf32> -> vector<16x32xf32>
    %180 = arith.addf %172, %179 : vector<16x32xf32>
    %c2_186 = arith.constant 2 : index
    %c0_187 = arith.constant 0 : index
    %c0_188 = arith.constant 0 : index
    %181 = vector.load %arg7[%c2_186, %c0_187, %c0_188] : memref<3x1x32xf32, #tpu.memory_space<vmem>>, vector<1x1x32xf32>
    %182 = vector.shape_cast %181 : vector<1x1x32xf32> to vector<1x32xf32>
    %183 = vector.broadcast %182 : vector<1x32xf32> to vector<16x32xf32>
    %184 = arith.addf %180, %183 : vector<16x32xf32>
    %185 = math.tanh %184 : vector<16x32xf32>
    %186 = arith.mulf %149, %10 : vector<16x32xf32>
    %cst_189 = arith.constant 1.000000e+00 : f32
    %187 = vector.broadcast %cst_189 : f32 to vector<16x32xf32>
    %188 = arith.subf %187, %149 : vector<16x32xf32>
    %189 = arith.mulf %188, %185 : vector<16x32xf32>
    %190 = arith.addf %186, %189 : vector<16x32xf32>
    %c0_190 = arith.constant 0 : index
    %c0_191 = arith.constant 0 : index
    %c0_192 = arith.constant 0 : index
    %c0_193 = arith.constant 0 : index
    %191 = vector.load %arg11[%c0_190, %c0_191, %c0_192, %c0_193] : memref<2x1x16x32xf32, #tpu.memory_space<vmem>>, vector<1x1x16x32xf32>
    %192 = vector.shape_cast %191 : vector<1x1x16x32xf32> to vector<16x32xf32>
    %193 = vector.shape_cast %190 : vector<16x32xf32> to vector<1x1x16x32xf32>
    tpu.vector_store %arg11[%c0_190, %c0_191, %c0_192, %c0_193], %193 {strides = array<i32>} : memref<2x1x16x32xf32, #tpu.memory_space<vmem>>, vector<1x1x16x32xf32>,
    %c1_194 = arith.constant 1 : index
    %c0_195 = arith.constant 0 : index
    %c0_196 = arith.constant 0 : index
    %c0_197 = arith.constant 0 : index
    %194 = vector.load %arg11[%c1_194, %c0_195, %c0_196, %c0_197] : memref<2x1x16x32xf32, #tpu.memory_space<vmem>>, vector<1x1x16x32xf32>
    %195 = vector.shape_cast %194 : vector<1x1x16x32xf32> to vector<16x32xf32>
    %cst_198 = arith.constant 0.000000e+00 : f32
    %196 = vector.broadcast %cst_198 : f32 to vector<16x32xf32>
    %c0_199 = arith.constant 0 : index
    %c0_200 = arith.constant 0 : index
    %c0_201 = arith.constant 0 : index
    %c0_202 = arith.constant 0 : index
    %197 = vector.load %arg8[%c0_199, %c0_200, %c0_201, %c0_202] : memref<3x5x32x32xf32, #tpu.memory_space<vmem>>, vector<1x1x32x32xf32>
    %198 = vector.shape_cast %197 : vector<1x1x32x32xf32> to vector<32x32xf32>
    %cst_203 = arith.constant dense<0.000000e+00> : vector<16x32xf32>
    %199 = tpu.matmul %190, %198, %cst_203 {dimension_numbers = #tpu.dot_dimension_numbers<[1], [0], [0], [1], [0, 0, 1, 1], [], []>} : vector<16x32xf32>, vector<32x32xf32>, vector<16x32xf32> -> vector<16x32xf32>
    %200 = arith.addf %196, %199 : vector<16x32xf32>
    %c1_204 = arith.constant 1 : index
    %c0_205 = arith.constant 0 : index
    %c0_206 = arith.constant 0 : index
    %c0_207 = arith.constant 0 : index
    %201 = vector.load %arg8[%c1_204, %c0_205, %c0_206, %c0_207] : memref<3x5x32x32xf32, #tpu.memory_space<vmem>>, vector<1x1x32x32xf32>
    %202 = vector.shape_cast %201 : vector<1x1x32x32xf32> to vector<32x32xf32>
    %cst_208 = arith.constant dense<0.000000e+00> : vector<16x32xf32>
    %203 = tpu.matmul %190, %202, %cst_208 {dimension_numbers = #tpu.dot_dimension_numbers<[1], [0], [0], [1], [0, 0, 1, 1], [], []>} : vector<16x32xf32>, vector<32x32xf32>, vector<16x32xf32> -> vector<16x32xf32>
    %204 = arith.addf %196, %203 : vector<16x32xf32>
    %c2_209 = arith.constant 2 : index
    %c0_210 = arith.constant 0 : index
    %c0_211 = arith.constant 0 : index
    %c0_212 = arith.constant 0 : index
    %205 = vector.load %arg8[%c2_209, %c0_210, %c0_211, %c0_212] : memref<3x5x32x32xf32, #tpu.memory_space<vmem>>, vector<1x1x32x32xf32>
    %206 = vector.shape_cast %205 : vector<1x1x32x32xf32> to vector<32x32xf32>
    %cst_213 = arith.constant dense<0.000000e+00> : vector<16x32xf32>
    %207 = tpu.matmul %190, %206, %cst_213 {dimension_numbers = #tpu.dot_dimension_numbers<[1], [0], [0], [1], [0, 0, 1, 1], [], []>} : vector<16x32xf32>, vector<32x32xf32>, vector<16x32xf32> -> vector<16x32xf32>
    %208 = arith.addf %196, %207 : vector<16x32xf32>
    %cst_214 = arith.constant dense<0.000000e+00> : vector<16x32xf32>
    %209 = tpu.matmul %4, %190, %cst_214 {dimension_numbers = #tpu.dot_dimension_numbers<[1], [0], [0], [1], [0, 0, 1, 1], [], []>} : vector<16x16xf32>, vector<16x32xf32>, vector<16x32xf32> -> vector<16x32xf32>
    %c0_215 = arith.constant 0 : index
    %c1_216 = arith.constant 1 : index
    %c0_217 = arith.constant 0 : index
    %c0_218 = arith.constant 0 : index
    %210 = vector.load %arg8[%c0_215, %c1_216, %c0_217, %c0_218] : memref<3x5x32x32xf32, #tpu.memory_space<vmem>>, vector<1x1x32x32xf32>
    %211 = vector.shape_cast %210 : vector<1x1x32x32xf32> to vector<32x32xf32>
    %cst_219 = arith.constant dense<0.000000e+00> : vector<16x32xf32>
    %212 = tpu.matmul %209, %211, %cst_219 {dimension_numbers = #tpu.dot_dimension_numbers<[1], [0], [0], [1], [0, 0, 1, 1], [], []>} : vector<16x32xf32>, vector<32x32xf32>, vector<16x32xf32> -> vector<16x32xf32>
    %213 = arith.addf %200, %212 : vector<16x32xf32>
    %c1_220 = arith.constant 1 : index
    %c1_221 = arith.constant 1 : index
    %c0_222 = arith.constant 0 : index
    %c0_223 = arith.constant 0 : index
    %214 = vector.load %arg8[%c1_220, %c1_221, %c0_222, %c0_223] : memref<3x5x32x32xf32, #tpu.memory_space<vmem>>, vector<1x1x32x32xf32>
    %215 = vector.shape_cast %214 : vector<1x1x32x32xf32> to vector<32x32xf32>
    %cst_224 = arith.constant dense<0.000000e+00> : vector<16x32xf32>
    %216 = tpu.matmul %209, %215, %cst_224 {dimension_numbers = #tpu.dot_dimension_numbers<[1], [0], [0], [1], [0, 0, 1, 1], [], []>} : vector<16x32xf32>, vector<32x32xf32>, vector<16x32xf32> -> vector<16x32xf32>
    %217 = arith.addf %204, %216 : vector<16x32xf32>
    %c2_225 = arith.constant 2 : index
    %c1_226 = arith.constant 1 : index
    %c0_227 = arith.constant 0 : index
    %c0_228 = arith.constant 0 : index
    %218 = vector.load %arg8[%c2_225, %c1_226, %c0_227, %c0_228] : memref<3x5x32x32xf32, #tpu.memory_space<vmem>>, vector<1x1x32x32xf32>
    %219 = vector.shape_cast %218 : vector<1x1x32x32xf32> to vector<32x32xf32>
    %cst_229 = arith.constant dense<0.000000e+00> : vector<16x32xf32>
    %220 = tpu.matmul %209, %219, %cst_229 {dimension_numbers = #tpu.dot_dimension_numbers<[1], [0], [0], [1], [0, 0, 1, 1], [], []>} : vector<16x32xf32>, vector<32x32xf32>, vector<16x32xf32> -> vector<16x32xf32>
    %221 = arith.addf %208, %220 : vector<16x32xf32>
    %cst_230 = arith.constant dense<0.000000e+00> : vector<16x32xf32>
    %222 = tpu.matmul %4, %209, %cst_230 {dimension_numbers = #tpu.dot_dimension_numbers<[1], [0], [0], [1], [0, 0, 1, 1], [], []>} : vector<16x16xf32>, vector<16x32xf32>, vector<16x32xf32> -> vector<16x32xf32>
    %cst_231 = arith.constant 2.000000e+00 : f32
    %223 = vector.broadcast %cst_231 : f32 to vector<16x32xf32>
    %224 = arith.mulf %223, %222 : vector<16x32xf32>
    %225 = arith.subf %224, %190 : vector<16x32xf32>
    %c0_232 = arith.constant 0 : index
    %c2_233 = arith.constant 2 : index
    %c0_234 = arith.constant 0 : index
    %c0_235 = arith.constant 0 : index
    %226 = vector.load %arg8[%c0_232, %c2_233, %c0_234, %c0_235] : memref<3x5x32x32xf32, #tpu.memory_space<vmem>>, vector<1x1x32x32xf32>
    %227 = vector.shape_cast %226 : vector<1x1x32x32xf32> to vector<32x32xf32>
    %cst_236 = arith.constant dense<0.000000e+00> : vector<16x32xf32>
    %228 = tpu.matmul %225, %227, %cst_236 {dimension_numbers = #tpu.dot_dimension_numbers<[1], [0], [0], [1], [0, 0, 1, 1], [], []>} : vector<16x32xf32>, vector<32x32xf32>, vector<16x32xf32> -> vector<16x32xf32>
    %229 = arith.addf %213, %228 : vector<16x32xf32>
    %c1_237 = arith.constant 1 : index
    %c2_238 = arith.constant 2 : index
    %c0_239 = arith.constant 0 : index
    %c0_240 = arith.constant 0 : index
    %230 = vector.load %arg8[%c1_237, %c2_238, %c0_239, %c0_240] : memref<3x5x32x32xf32, #tpu.memory_space<vmem>>, vector<1x1x32x32xf32>
    %231 = vector.shape_cast %230 : vector<1x1x32x32xf32> to vector<32x32xf32>
    %cst_241 = arith.constant dense<0.000000e+00> : vector<16x32xf32>
    %232 = tpu.matmul %225, %231, %cst_241 {dimension_numbers = #tpu.dot_dimension_numbers<[1], [0], [0], [1], [0, 0, 1, 1], [], []>} : vector<16x32xf32>, vector<32x32xf32>, vector<16x32xf32> -> vector<16x32xf32>
    %233 = arith.addf %217, %232 : vector<16x32xf32>
    %c2_242 = arith.constant 2 : index
    %c2_243 = arith.constant 2 : index
    %c0_244 = arith.constant 0 : index
    %c0_245 = arith.constant 0 : index
    %234 = vector.load %arg8[%c2_242, %c2_243, %c0_244, %c0_245] : memref<3x5x32x32xf32, #tpu.memory_space<vmem>>, vector<1x1x32x32xf32>
    %235 = vector.shape_cast %234 : vector<1x1x32x32xf32> to vector<32x32xf32>
    %cst_246 = arith.constant dense<0.000000e+00> : vector<16x32xf32>
    %236 = tpu.matmul %225, %235, %cst_246 {dimension_numbers = #tpu.dot_dimension_numbers<[1], [0], [0], [1], [0, 0, 1, 1], [], []>} : vector<16x32xf32>, vector<32x32xf32>, vector<16x32xf32> -> vector<16x32xf32>
    %237 = arith.addf %221, %236 : vector<16x32xf32>
    %cst_247 = arith.constant dense<0.000000e+00> : vector<16x32xf32>
    %238 = tpu.matmul %6, %209, %cst_247 {dimension_numbers = #tpu.dot_dimension_numbers<[1], [0], [0], [1], [0, 0, 1, 1], [], []>} : vector<16x16xf32>, vector<16x32xf32>, vector<16x32xf32> -> vector<16x32xf32>
    %c0_248 = arith.constant 0 : index
    %c3_249 = arith.constant 3 : index
    %c0_250 = arith.constant 0 : index
    %c0_251 = arith.constant 0 : index
    %239 = vector.load %arg8[%c0_248, %c3_249, %c0_250, %c0_251] : memref<3x5x32x32xf32, #tpu.memory_space<vmem>>, vector<1x1x32x32xf32>
    %240 = vector.shape_cast %239 : vector<1x1x32x32xf32> to vector<32x32xf32>
    %cst_252 = arith.constant dense<0.000000e+00> : vector<16x32xf32>
    %241 = tpu.matmul %238, %240, %cst_252 {dimension_numbers = #tpu.dot_dimension_numbers<[1], [0], [0], [1], [0, 0, 1, 1], [], []>} : vector<16x32xf32>, vector<32x32xf32>, vector<16x32xf32> -> vector<16x32xf32>
    %242 = arith.addf %229, %241 : vector<16x32xf32>
    %c1_253 = arith.constant 1 : index
    %c3_254 = arith.constant 3 : index
    %c0_255 = arith.constant 0 : index
    %c0_256 = arith.constant 0 : index
    %243 = vector.load %arg8[%c1_253, %c3_254, %c0_255, %c0_256] : memref<3x5x32x32xf32, #tpu.memory_space<vmem>>, vector<1x1x32x32xf32>
    %244 = vector.shape_cast %243 : vector<1x1x32x32xf32> to vector<32x32xf32>
    %cst_257 = arith.constant dense<0.000000e+00> : vector<16x32xf32>
    %245 = tpu.matmul %238, %244, %cst_257 {dimension_numbers = #tpu.dot_dimension_numbers<[1], [0], [0], [1], [0, 0, 1, 1], [], []>} : vector<16x32xf32>, vector<32x32xf32>, vector<16x32xf32> -> vector<16x32xf32>
    %246 = arith.addf %233, %245 : vector<16x32xf32>
    %c2_258 = arith.constant 2 : index
    %c3_259 = arith.constant 3 : index
    %c0_260 = arith.constant 0 : index
    %c0_261 = arith.constant 0 : index
    %247 = vector.load %arg8[%c2_258, %c3_259, %c0_260, %c0_261] : memref<3x5x32x32xf32, #tpu.memory_space<vmem>>, vector<1x1x32x32xf32>
    %248 = vector.shape_cast %247 : vector<1x1x32x32xf32> to vector<32x32xf32>
    %cst_262 = arith.constant dense<0.000000e+00> : vector<16x32xf32>
    %249 = tpu.matmul %238, %248, %cst_262 {dimension_numbers = #tpu.dot_dimension_numbers<[1], [0], [0], [1], [0, 0, 1, 1], [], []>} : vector<16x32xf32>, vector<32x32xf32>, vector<16x32xf32> -> vector<16x32xf32>
    %250 = arith.addf %237, %249 : vector<16x32xf32>
    %cst_263 = arith.constant dense<0.000000e+00> : vector<16x32xf32>
    %251 = tpu.matmul %6, %238, %cst_263 {dimension_numbers = #tpu.dot_dimension_numbers<[1], [0], [0], [1], [0, 0, 1, 1], [], []>} : vector<16x16xf32>, vector<16x32xf32>, vector<16x32xf32> -> vector<16x32xf32>
    %cst_264 = arith.constant 2.000000e+00 : f32
    %252 = vector.broadcast %cst_264 : f32 to vector<16x32xf32>
    %253 = arith.mulf %252, %251 : vector<16x32xf32>
    %254 = arith.subf %253, %209 : vector<16x32xf32>
    %c0_265 = arith.constant 0 : index
    %c4_266 = arith.constant 4 : index
    %c0_267 = arith.constant 0 : index
    %c0_268 = arith.constant 0 : index
    %255 = vector.load %arg8[%c0_265, %c4_266, %c0_267, %c0_268] : memref<3x5x32x32xf32, #tpu.memory_space<vmem>>, vector<1x1x32x32xf32>
    %256 = vector.shape_cast %255 : vector<1x1x32x32xf32> to vector<32x32xf32>
    %cst_269 = arith.constant dense<0.000000e+00> : vector<16x32xf32>
    %257 = tpu.matmul %254, %256, %cst_269 {dimension_numbers = #tpu.dot_dimension_numbers<[1], [0], [0], [1], [0, 0, 1, 1], [], []>} : vector<16x32xf32>, vector<32x32xf32>, vector<16x32xf32> -> vector<16x32xf32>
    %258 = arith.addf %242, %257 : vector<16x32xf32>
    %c1_270 = arith.constant 1 : index
    %c4_271 = arith.constant 4 : index
    %c0_272 = arith.constant 0 : index
    %c0_273 = arith.constant 0 : index
    %259 = vector.load %arg8[%c1_270, %c4_271, %c0_272, %c0_273] : memref<3x5x32x32xf32, #tpu.memory_space<vmem>>, vector<1x1x32x32xf32>
    %260 = vector.shape_cast %259 : vector<1x1x32x32xf32> to vector<32x32xf32>
    %cst_274 = arith.constant dense<0.000000e+00> : vector<16x32xf32>
    %261 = tpu.matmul %254, %260, %cst_274 {dimension_numbers = #tpu.dot_dimension_numbers<[1], [0], [0], [1], [0, 0, 1, 1], [], []>} : vector<16x32xf32>, vector<32x32xf32>, vector<16x32xf32> -> vector<16x32xf32>
    %262 = arith.addf %246, %261 : vector<16x32xf32>
    %c2_275 = arith.constant 2 : index
    %c4_276 = arith.constant 4 : index
    %c0_277 = arith.constant 0 : index
    %c0_278 = arith.constant 0 : index
    %263 = vector.load %arg8[%c2_275, %c4_276, %c0_277, %c0_278] : memref<3x5x32x32xf32, #tpu.memory_space<vmem>>, vector<1x1x32x32xf32>
    %264 = vector.shape_cast %263 : vector<1x1x32x32xf32> to vector<32x32xf32>
    %cst_279 = arith.constant dense<0.000000e+00> : vector<16x32xf32>
    %265 = tpu.matmul %254, %264, %cst_279 {dimension_numbers = #tpu.dot_dimension_numbers<[1], [0], [0], [1], [0, 0, 1, 1], [], []>} : vector<16x32xf32>, vector<32x32xf32>, vector<16x32xf32> -> vector<16x32xf32>
    %266 = arith.addf %250, %265 : vector<16x32xf32>
    %c0_280 = arith.constant 0 : index
    %c0_281 = arith.constant 0 : index
    %c0_282 = arith.constant 0 : index
    %c0_283 = arith.constant 0 : index
    %267 = vector.load %arg9[%c0_280, %c0_281, %c0_282, %c0_283] : memref<3x5x32x32xf32, #tpu.memory_space<vmem>>, vector<1x1x32x32xf32>
    %268 = vector.shape_cast %267 : vector<1x1x32x32xf32> to vector<32x32xf32>
    %cst_284 = arith.constant dense<0.000000e+00> : vector<16x32xf32>
    %269 = tpu.matmul %195, %268, %cst_284 {dimension_numbers = #tpu.dot_dimension_numbers<[1], [0], [0], [1], [0, 0, 1, 1], [], []>} : vector<16x32xf32>, vector<32x32xf32>, vector<16x32xf32> -> vector<16x32xf32>
    %270 = arith.addf %258, %269 : vector<16x32xf32>
    %c1_285 = arith.constant 1 : index
    %c0_286 = arith.constant 0 : index
    %c0_287 = arith.constant 0 : index
    %c0_288 = arith.constant 0 : index
    %271 = vector.load %arg9[%c1_285, %c0_286, %c0_287, %c0_288] : memref<3x5x32x32xf32, #tpu.memory_space<vmem>>, vector<1x1x32x32xf32>
    %272 = vector.shape_cast %271 : vector<1x1x32x32xf32> to vector<32x32xf32>
    %cst_289 = arith.constant dense<0.000000e+00> : vector<16x32xf32>
    %273 = tpu.matmul %195, %272, %cst_289 {dimension_numbers = #tpu.dot_dimension_numbers<[1], [0], [0], [1], [0, 0, 1, 1], [], []>} : vector<16x32xf32>, vector<32x32xf32>, vector<16x32xf32> -> vector<16x32xf32>
    %274 = arith.addf %262, %273 : vector<16x32xf32>
    %cst_290 = arith.constant dense<0.000000e+00> : vector<16x32xf32>
    %275 = tpu.matmul %4, %195, %cst_290 {dimension_numbers = #tpu.dot_dimension_numbers<[1], [0], [0], [1], [0, 0, 1, 1], [], []>} : vector<16x16xf32>, vector<16x32xf32>, vector<16x32xf32> -> vector<16x32xf32>
    %c0_291 = arith.constant 0 : index
    %c1_292 = arith.constant 1 : index
    %c0_293 = arith.constant 0 : index
    %c0_294 = arith.constant 0 : index
    %276 = vector.load %arg9[%c0_291, %c1_292, %c0_293, %c0_294] : memref<3x5x32x32xf32, #tpu.memory_space<vmem>>, vector<1x1x32x32xf32>
    %277 = vector.shape_cast %276 : vector<1x1x32x32xf32> to vector<32x32xf32>
    %cst_295 = arith.constant dense<0.000000e+00> : vector<16x32xf32>
    %278 = tpu.matmul %275, %277, %cst_295 {dimension_numbers = #tpu.dot_dimension_numbers<[1], [0], [0], [1], [0, 0, 1, 1], [], []>} : vector<16x32xf32>, vector<32x32xf32>, vector<16x32xf32> -> vector<16x32xf32>
    %279 = arith.addf %270, %278 : vector<16x32xf32>
    %c1_296 = arith.constant 1 : index
    %c1_297 = arith.constant 1 : index
    %c0_298 = arith.constant 0 : index
    %c0_299 = arith.constant 0 : index
    %280 = vector.load %arg9[%c1_296, %c1_297, %c0_298, %c0_299] : memref<3x5x32x32xf32, #tpu.memory_space<vmem>>, vector<1x1x32x32xf32>
    %281 = vector.shape_cast %280 : vector<1x1x32x32xf32> to vector<32x32xf32>
    %cst_300 = arith.constant dense<0.000000e+00> : vector<16x32xf32>
    %282 = tpu.matmul %275, %281, %cst_300 {dimension_numbers = #tpu.dot_dimension_numbers<[1], [0], [0], [1], [0, 0, 1, 1], [], []>} : vector<16x32xf32>, vector<32x32xf32>, vector<16x32xf32> -> vector<16x32xf32>
    %283 = arith.addf %274, %282 : vector<16x32xf32>
    %cst_301 = arith.constant dense<0.000000e+00> : vector<16x32xf32>
    %284 = tpu.matmul %4, %275, %cst_301 {dimension_numbers = #tpu.dot_dimension_numbers<[1], [0], [0], [1], [0, 0, 1, 1], [], []>} : vector<16x16xf32>, vector<16x32xf32>, vector<16x32xf32> -> vector<16x32xf32>
    %cst_302 = arith.constant 2.000000e+00 : f32
    %285 = vector.broadcast %cst_302 : f32 to vector<16x32xf32>
    %286 = arith.mulf %285, %284 : vector<16x32xf32>
    %287 = arith.subf %286, %195 : vector<16x32xf32>
    %c0_303 = arith.constant 0 : index
    %c2_304 = arith.constant 2 : index
    %c0_305 = arith.constant 0 : index
    %c0_306 = arith.constant 0 : index
    %288 = vector.load %arg9[%c0_303, %c2_304, %c0_305, %c0_306] : memref<3x5x32x32xf32, #tpu.memory_space<vmem>>, vector<1x1x32x32xf32>
    %289 = vector.shape_cast %288 : vector<1x1x32x32xf32> to vector<32x32xf32>
    %cst_307 = arith.constant dense<0.000000e+00> : vector<16x32xf32>
    %290 = tpu.matmul %287, %289, %cst_307 {dimension_numbers = #tpu.dot_dimension_numbers<[1], [0], [0], [1], [0, 0, 1, 1], [], []>} : vector<16x32xf32>, vector<32x32xf32>, vector<16x32xf32> -> vector<16x32xf32>
    %291 = arith.addf %279, %290 : vector<16x32xf32>
    %c1_308 = arith.constant 1 : index
    %c2_309 = arith.constant 2 : index
    %c0_310 = arith.constant 0 : index
    %c0_311 = arith.constant 0 : index
    %292 = vector.load %arg9[%c1_308, %c2_309, %c0_310, %c0_311] : memref<3x5x32x32xf32, #tpu.memory_space<vmem>>, vector<1x1x32x32xf32>
    %293 = vector.shape_cast %292 : vector<1x1x32x32xf32> to vector<32x32xf32>
    %cst_312 = arith.constant dense<0.000000e+00> : vector<16x32xf32>
    %294 = tpu.matmul %287, %293, %cst_312 {dimension_numbers = #tpu.dot_dimension_numbers<[1], [0], [0], [1], [0, 0, 1, 1], [], []>} : vector<16x32xf32>, vector<32x32xf32>, vector<16x32xf32> -> vector<16x32xf32>
    %295 = arith.addf %283, %294 : vector<16x32xf32>
    %cst_313 = arith.constant dense<0.000000e+00> : vector<16x32xf32>
    %296 = tpu.matmul %6, %275, %cst_313 {dimension_numbers = #tpu.dot_dimension_numbers<[1], [0], [0], [1], [0, 0, 1, 1], [], []>} : vector<16x16xf32>, vector<16x32xf32>, vector<16x32xf32> -> vector<16x32xf32>
    %c0_314 = arith.constant 0 : index
    %c3_315 = arith.constant 3 : index
    %c0_316 = arith.constant 0 : index
    %c0_317 = arith.constant 0 : index
    %297 = vector.load %arg9[%c0_314, %c3_315, %c0_316, %c0_317] : memref<3x5x32x32xf32, #tpu.memory_space<vmem>>, vector<1x1x32x32xf32>
    %298 = vector.shape_cast %297 : vector<1x1x32x32xf32> to vector<32x32xf32>
    %cst_318 = arith.constant dense<0.000000e+00> : vector<16x32xf32>
    %299 = tpu.matmul %296, %298, %cst_318 {dimension_numbers = #tpu.dot_dimension_numbers<[1], [0], [0], [1], [0, 0, 1, 1], [], []>} : vector<16x32xf32>, vector<32x32xf32>, vector<16x32xf32> -> vector<16x32xf32>
    %300 = arith.addf %291, %299 : vector<16x32xf32>
    %c1_319 = arith.constant 1 : index
    %c3_320 = arith.constant 3 : index
    %c0_321 = arith.constant 0 : index
    %c0_322 = arith.constant 0 : index
    %301 = vector.load %arg9[%c1_319, %c3_320, %c0_321, %c0_322] : memref<3x5x32x32xf32, #tpu.memory_space<vmem>>, vector<1x1x32x32xf32>
    %302 = vector.shape_cast %301 : vector<1x1x32x32xf32> to vector<32x32xf32>
    %cst_323 = arith.constant dense<0.000000e+00> : vector<16x32xf32>
    %303 = tpu.matmul %296, %302, %cst_323 {dimension_numbers = #tpu.dot_dimension_numbers<[1], [0], [0], [1], [0, 0, 1, 1], [], []>} : vector<16x32xf32>, vector<32x32xf32>, vector<16x32xf32> -> vector<16x32xf32>
    %304 = arith.addf %295, %303 : vector<16x32xf32>
    %cst_324 = arith.constant dense<0.000000e+00> : vector<16x32xf32>
    %305 = tpu.matmul %6, %296, %cst_324 {dimension_numbers = #tpu.dot_dimension_numbers<[1], [0], [0], [1], [0, 0, 1, 1], [], []>} : vector<16x16xf32>, vector<16x32xf32>, vector<16x32xf32> -> vector<16x32xf32>
    %cst_325 = arith.constant 2.000000e+00 : f32
    %306 = vector.broadcast %cst_325 : f32 to vector<16x32xf32>
    %307 = arith.mulf %306, %305 : vector<16x32xf32>
    %308 = arith.subf %307, %275 : vector<16x32xf32>
    %c0_326 = arith.constant 0 : index
    %c4_327 = arith.constant 4 : index
    %c0_328 = arith.constant 0 : index
    %c0_329 = arith.constant 0 : index
    %309 = vector.load %arg9[%c0_326, %c4_327, %c0_328, %c0_329] : memref<3x5x32x32xf32, #tpu.memory_space<vmem>>, vector<1x1x32x32xf32>
    %310 = vector.shape_cast %309 : vector<1x1x32x32xf32> to vector<32x32xf32>
    %cst_330 = arith.constant dense<0.000000e+00> : vector<16x32xf32>
    %311 = tpu.matmul %308, %310, %cst_330 {dimension_numbers = #tpu.dot_dimension_numbers<[1], [0], [0], [1], [0, 0, 1, 1], [], []>} : vector<16x32xf32>, vector<32x32xf32>, vector<16x32xf32> -> vector<16x32xf32>
    %312 = arith.addf %300, %311 : vector<16x32xf32>
    %c1_331 = arith.constant 1 : index
    %c4_332 = arith.constant 4 : index
    %c0_333 = arith.constant 0 : index
    %c0_334 = arith.constant 0 : index
    %313 = vector.load %arg9[%c1_331, %c4_332, %c0_333, %c0_334] : memref<3x5x32x32xf32, #tpu.memory_space<vmem>>, vector<1x1x32x32xf32>
    %314 = vector.shape_cast %313 : vector<1x1x32x32xf32> to vector<32x32xf32>
    %cst_335 = arith.constant dense<0.000000e+00> : vector<16x32xf32>
    %315 = tpu.matmul %308, %314, %cst_335 {dimension_numbers = #tpu.dot_dimension_numbers<[1], [0], [0], [1], [0, 0, 1, 1], [], []>} : vector<16x32xf32>, vector<32x32xf32>, vector<16x32xf32> -> vector<16x32xf32>
    %316 = arith.addf %304, %315 : vector<16x32xf32>
    %c0_336 = arith.constant 0 : index
    %c0_337 = arith.constant 0 : index
    %c0_338 = arith.constant 0 : index
    %317 = vector.load %arg10[%c0_336, %c0_337, %c0_338] : memref<3x1x32xf32, #tpu.memory_space<vmem>>, vector<1x1x32xf32>
    %318 = vector.shape_cast %317 : vector<1x1x32xf32> to vector<1x32xf32>
    %319 = vector.broadcast %318 : vector<1x32xf32> to vector<16x32xf32>
    %320 = arith.addf %312, %319 : vector<16x32xf32>
    %321 = arith.negf %320 : vector<16x32xf32>
    %322 = math.exp %321 : vector<16x32xf32>
    %cst_339 = arith.constant 1.000000e+00 : f32
    %323 = vector.broadcast %cst_339 : f32 to vector<16x32xf32>
    %324 = arith.addf %323, %322 : vector<16x32xf32>
    %325 = arith.divf %323, %324 : vector<16x32xf32>
    %c1_340 = arith.constant 1 : index
    %c0_341 = arith.constant 0 : index
    %c0_342 = arith.constant 0 : index
    %326 = vector.load %arg10[%c1_340, %c0_341, %c0_342] : memref<3x1x32xf32, #tpu.memory_space<vmem>>, vector<1x1x32xf32>
    %327 = vector.shape_cast %326 : vector<1x1x32xf32> to vector<1x32xf32>
    %328 = vector.broadcast %327 : vector<1x32xf32> to vector<16x32xf32>
    %329 = arith.addf %316, %328 : vector<16x32xf32>
    %330 = arith.negf %329 : vector<16x32xf32>
    %331 = math.exp %330 : vector<16x32xf32>
    %cst_343 = arith.constant 1.000000e+00 : f32
    %332 = vector.broadcast %cst_343 : f32 to vector<16x32xf32>
    %333 = arith.addf %332, %331 : vector<16x32xf32>
    %334 = arith.divf %332, %333 : vector<16x32xf32>
    %335 = arith.mulf %325, %195 : vector<16x32xf32>
    %c2_344 = arith.constant 2 : index
    %c0_345 = arith.constant 0 : index
    %c0_346 = arith.constant 0 : index
    %c0_347 = arith.constant 0 : index
    %336 = vector.load %arg9[%c2_344, %c0_345, %c0_346, %c0_347] : memref<3x5x32x32xf32, #tpu.memory_space<vmem>>, vector<1x1x32x32xf32>
    %337 = vector.shape_cast %336 : vector<1x1x32x32xf32> to vector<32x32xf32>
    %cst_348 = arith.constant dense<0.000000e+00> : vector<16x32xf32>
    %338 = tpu.matmul %335, %337, %cst_348 {dimension_numbers = #tpu.dot_dimension_numbers<[1], [0], [0], [1], [0, 0, 1, 1], [], []>} : vector<16x32xf32>, vector<32x32xf32>, vector<16x32xf32> -> vector<16x32xf32>
    %339 = arith.addf %266, %338 : vector<16x32xf32>
    %cst_349 = arith.constant dense<0.000000e+00> : vector<16x32xf32>
    %340 = tpu.matmul %4, %335, %cst_349 {dimension_numbers = #tpu.dot_dimension_numbers<[1], [0], [0], [1], [0, 0, 1, 1], [], []>} : vector<16x16xf32>, vector<16x32xf32>, vector<16x32xf32> -> vector<16x32xf32>
    %c2_350 = arith.constant 2 : index
    %c1_351 = arith.constant 1 : index
    %c0_352 = arith.constant 0 : index
    %c0_353 = arith.constant 0 : index
    %341 = vector.load %arg9[%c2_350, %c1_351, %c0_352, %c0_353] : memref<3x5x32x32xf32, #tpu.memory_space<vmem>>, vector<1x1x32x32xf32>
    %342 = vector.shape_cast %341 : vector<1x1x32x32xf32> to vector<32x32xf32>
    %cst_354 = arith.constant dense<0.000000e+00> : vector<16x32xf32>
    %343 = tpu.matmul %340, %342, %cst_354 {dimension_numbers = #tpu.dot_dimension_numbers<[1], [0], [0], [1], [0, 0, 1, 1], [], []>} : vector<16x32xf32>, vector<32x32xf32>, vector<16x32xf32> -> vector<16x32xf32>
    %344 = arith.addf %339, %343 : vector<16x32xf32>
    %cst_355 = arith.constant dense<0.000000e+00> : vector<16x32xf32>
    %345 = tpu.matmul %4, %340, %cst_355 {dimension_numbers = #tpu.dot_dimension_numbers<[1], [0], [0], [1], [0, 0, 1, 1], [], []>} : vector<16x16xf32>, vector<16x32xf32>, vector<16x32xf32> -> vector<16x32xf32>
    %cst_356 = arith.constant 2.000000e+00 : f32
    %346 = vector.broadcast %cst_356 : f32 to vector<16x32xf32>
    %347 = arith.mulf %346, %345 : vector<16x32xf32>
    %348 = arith.subf %347, %335 : vector<16x32xf32>
    %c2_357 = arith.constant 2 : index
    %c2_358 = arith.constant 2 : index
    %c0_359 = arith.constant 0 : index
    %c0_360 = arith.constant 0 : index
    %349 = vector.load %arg9[%c2_357, %c2_358, %c0_359, %c0_360] : memref<3x5x32x32xf32, #tpu.memory_space<vmem>>, vector<1x1x32x32xf32>
    %350 = vector.shape_cast %349 : vector<1x1x32x32xf32> to vector<32x32xf32>
    %cst_361 = arith.constant dense<0.000000e+00> : vector<16x32xf32>
    %351 = tpu.matmul %348, %350, %cst_361 {dimension_numbers = #tpu.dot_dimension_numbers<[1], [0], [0], [1], [0, 0, 1, 1], [], []>} : vector<16x32xf32>, vector<32x32xf32>, vector<16x32xf32> -> vector<16x32xf32>
    %352 = arith.addf %344, %351 : vector<16x32xf32>
    %cst_362 = arith.constant dense<0.000000e+00> : vector<16x32xf32>
    %353 = tpu.matmul %6, %340, %cst_362 {dimension_numbers = #tpu.dot_dimension_numbers<[1], [0], [0], [1], [0, 0, 1, 1], [], []>} : vector<16x16xf32>, vector<16x32xf32>, vector<16x32xf32> -> vector<16x32xf32>
    %c2_363 = arith.constant 2 : index
    %c3_364 = arith.constant 3 : index
    %c0_365 = arith.constant 0 : index
    %c0_366 = arith.constant 0 : index
    %354 = vector.load %arg9[%c2_363, %c3_364, %c0_365, %c0_366] : memref<3x5x32x32xf32, #tpu.memory_space<vmem>>, vector<1x1x32x32xf32>
    %355 = vector.shape_cast %354 : vector<1x1x32x32xf32> to vector<32x32xf32>
    %cst_367 = arith.constant dense<0.000000e+00> : vector<16x32xf32>
    %356 = tpu.matmul %353, %355, %cst_367 {dimension_numbers = #tpu.dot_dimension_numbers<[1], [0], [0], [1], [0, 0, 1, 1], [], []>} : vector<16x32xf32>, vector<32x32xf32>, vector<16x32xf32> -> vector<16x32xf32>
    %357 = arith.addf %352, %356 : vector<16x32xf32>
    %cst_368 = arith.constant dense<0.000000e+00> : vector<16x32xf32>
    %358 = tpu.matmul %6, %353, %cst_368 {dimension_numbers = #tpu.dot_dimension_numbers<[1], [0], [0], [1], [0, 0, 1, 1], [], []>} : vector<16x16xf32>, vector<16x32xf32>, vector<16x32xf32> -> vector<16x32xf32>
    %cst_369 = arith.constant 2.000000e+00 : f32
    %359 = vector.broadcast %cst_369 : f32 to vector<16x32xf32>
    %360 = arith.mulf %359, %358 : vector<16x32xf32>
    %361 = arith.subf %360, %340 : vector<16x32xf32>
    %c2_370 = arith.constant 2 : index
    %c4_371 = arith.constant 4 : index
    %c0_372 = arith.constant 0 : index
    %c0_373 = arith.constant 0 : index
    %362 = vector.load %arg9[%c2_370, %c4_371, %c0_372, %c0_373] : memref<3x5x32x32xf32, #tpu.memory_space<vmem>>, vector<1x1x32x32xf32>
    %363 = vector.shape_cast %362 : vector<1x1x32x32xf32> to vector<32x32xf32>
    %cst_374 = arith.constant dense<0.000000e+00> : vector<16x32xf32>
    %364 = tpu.matmul %361, %363, %cst_374 {dimension_numbers = #tpu.dot_dimension_numbers<[1], [0], [0], [1], [0, 0, 1, 1], [], []>} : vector<16x32xf32>, vector<32x32xf32>, vector<16x32xf32> -> vector<16x32xf32>
    %365 = arith.addf %357, %364 : vector<16x32xf32>
    %c2_375 = arith.constant 2 : index
    %c0_376 = arith.constant 0 : index
    %c0_377 = arith.constant 0 : index
    %366 = vector.load %arg10[%c2_375, %c0_376, %c0_377] : memref<3x1x32xf32, #tpu.memory_space<vmem>>, vector<1x1x32xf32>
    %367 = vector.shape_cast %366 : vector<1x1x32xf32> to vector<1x32xf32>
    %368 = vector.broadcast %367 : vector<1x32xf32> to vector<16x32xf32>
    %369 = arith.addf %365, %368 : vector<16x32xf32>
    %370 = math.tanh %369 : vector<16x32xf32>
    %371 = arith.mulf %334, %195 : vector<16x32xf32>
    %cst_378 = arith.constant 1.000000e+00 : f32
    %372 = vector.broadcast %cst_378 : f32 to vector<16x32xf32>
    %373 = arith.subf %372, %334 : vector<16x32xf32>
    %374 = arith.mulf %373, %370 : vector<16x32xf32>
    %375 = arith.addf %371, %374 : vector<16x32xf32>
    %c1_379 = arith.constant 1 : index
    %c0_380 = arith.constant 0 : index
    %c0_381 = arith.constant 0 : index
    %c0_382 = arith.constant 0 : index
    %376 = vector.load %arg11[%c1_379, %c0_380, %c0_381, %c0_382] : memref<2x1x16x32xf32, #tpu.memory_space<vmem>>, vector<1x1x16x32xf32>
    %377 = vector.shape_cast %376 : vector<1x1x16x32xf32> to vector<16x32xf32>
    %378 = vector.shape_cast %375 : vector<16x32xf32> to vector<1x1x16x32xf32>
    tpu.vector_store %arg11[%c1_379, %c0_380, %c0_381, %c0_382], %378 {strides = array<i32>} : memref<2x1x16x32xf32, #tpu.memory_space<vmem>>, vector<1x1x16x32xf32>,
    return
  }
  func.func @transform_0(%arg0: i32, %arg1: i32) -> (i32, i32, i32, i32) {
    %c0_i32 = arith.constant 0 : i32
    %c0_i32_0 = arith.constant 0 : i32
    %c0_i32_1 = arith.constant 0 : i32
    return %arg1, %arg0, %c0_i32, %c0_i32_0 : i32, i32, i32, i32
  }
  func.func @transform_1(%arg0: i32, %arg1: i32) -> (i32, i32, i32, i32) {
    %c0_i32 = arith.constant 0 : i32
    %c0_i32_0 = arith.constant 0 : i32
    %c0_i32_1 = arith.constant 0 : i32
    %c0_i32_2 = arith.constant 0 : i32
    return %c0_i32, %arg0, %c0_i32_0, %c0_i32_1 : i32, i32, i32, i32
  }
  func.func @transform_2(%arg0: i32, %arg1: i32) -> (i32, i32, i32) {
    %c0_i32 = arith.constant 0 : i32
    %c0_i32_0 = arith.constant 0 : i32
    %c0_i32_1 = arith.constant 0 : i32
    %c0_i32_2 = arith.constant 0 : i32
    return %c0_i32, %c0_i32_0, %c0_i32_1 : i32, i32, i32
  }
  func.func @transform_3(%arg0: i32, %arg1: i32) -> (i32, i32, i32, i32) {
    %c0_i32 = arith.constant 0 : i32
    %c0_i32_0 = arith.constant 0 : i32
    %c0_i32_1 = arith.constant 0 : i32
    %c0_i32_2 = arith.constant 0 : i32
    %c0_i32_3 = arith.constant 0 : i32
    return %c0_i32, %c0_i32_0, %c0_i32_1, %c0_i32_2 : i32, i32, i32, i32
  }
  func.func @transform_4(%arg0: i32, %arg1: i32) -> (i32, i32, i32, i32) {
    %c0_i32 = arith.constant 0 : i32
    %c0_i32_0 = arith.constant 0 : i32
    %c0_i32_1 = arith.constant 0 : i32
    %c0_i32_2 = arith.constant 0 : i32
    %c0_i32_3 = arith.constant 0 : i32
    return %c0_i32, %c0_i32_0, %c0_i32_1, %c0_i32_2 : i32, i32, i32, i32
  }
  func.func @transform_5(%arg0: i32, %arg1: i32) -> (i32, i32, i32) {
    %c0_i32 = arith.constant 0 : i32
    %c0_i32_0 = arith.constant 0 : i32
    %c0_i32_1 = arith.constant 0 : i32
    %c0_i32_2 = arith.constant 0 : i32
    return %c0_i32, %c0_i32_0, %c0_i32_1 : i32, i32, i32
  }
  func.func @transform_6(%arg0: i32, %arg1: i32) -> (i32, i32, i32, i32) {
    %c0_i32 = arith.constant 0 : i32
    %c0_i32_0 = arith.constant 0 : i32
    %c0_i32_1 = arith.constant 0 : i32
    %c0_i32_2 = arith.constant 0 : i32
    %c0_i32_3 = arith.constant 0 : i32
    return %c0_i32, %c0_i32_0, %c0_i32_1, %c0_i32_2 : i32, i32, i32, i32
  }
  func.func @transform_7(%arg0: i32, %arg1: i32) -> (i32, i32, i32, i32) {
    %c0_i32 = arith.constant 0 : i32
    %c0_i32_0 = arith.constant 0 : i32
    %c0_i32_1 = arith.constant 0 : i32
    %c0_i32_2 = arith.constant 0 : i32
    %c0_i32_3 = arith.constant 0 : i32
    return %c0_i32, %c0_i32_0, %c0_i32_1, %c0_i32_2 : i32, i32, i32, i32
  }
  func.func @transform_8(%arg0: i32, %arg1: i32) -> (i32, i32, i32) {
    %c0_i32 = arith.constant 0 : i32
    %c0_i32_0 = arith.constant 0 : i32
    %c0_i32_1 = arith.constant 0 : i32
    %c0_i32_2 = arith.constant 0 : i32
    return %c0_i32, %c0_i32_0, %c0_i32_1 : i32, i32, i32
  }
  func.func @transform_9(%arg0: i32, %arg1: i32) -> (i32, i32, i32, i32) {
    %c0_i32 = arith.constant 0 : i32
    %c0_i32_0 = arith.constant 0 : i32
    %c0_i32_1 = arith.constant 0 : i32
    %c0_i32_2 = arith.constant 0 : i32
    return %c0_i32, %arg0, %c0_i32_0, %c0_i32_1 : i32, i32, i32, i32
  }
}

</mosaic_0001>

<llo_original>
// kernel: encoder_forward_seq.1
$region0: #{encoder_forward_seq.1}
  #allocation0 [shape = 'u32[]', space=smem, size = 0x4, offset = 0x4, fixed_abs, tag = 'smem constant byte address 0x4 - core index']
  #allocation1 [shape = 'u32[144,128]{1,0:T(1,128)}', space=vmem, size = 0x12000, scoped, tag = 'internal scratch']
  %s0 = inlined_call_operand.vmem [shape: f32[1,2,16,2], index: 0, kind: input, shape index: {}]
  %s1 = inlined_call_operand.vmem [shape: f32[2,2,16,32], index: 1, kind: input, shape index: {}, may-alias: {1,9}]
  %s2 = inlined_call_operand.vmem [shape: f32[2,16,16], index: 2, kind: input, shape index: {}]
  %s3 = inlined_call_operand.vmem [shape: f32[3,5,2,32], index: 3, kind: input, shape index: {}]
  %s4 = inlined_call_operand.hbm [shape: f32[3,5,32,32], index: 4, kind: input, shape index: {}]
  %s5 = inlined_call_operand.vmem [shape: f32[3,1,32], index: 5, kind: input, shape index: {}]
  %s6 = inlined_call_operand.hbm [shape: f32[3,5,32,32], index: 6, kind: input, shape index: {}]
  %s7 = inlined_call_operand.hbm [shape: f32[3,5,32,32], index: 7, kind: input, shape index: {}]
  %s8 = inlined_call_operand.vmem [shape: f32[3,1,32], index: 8, kind: input, shape index: {}]
  %s9 = inlined_call_operand.vmem [shape: f32[2,2,16,32], index: 9, kind: output, shape index: {}, may-alias: {1,9}]
  %s10 = sld [smem:[#allocation0]]
  $region157: #{encoder_forward_seq.1} parent=0
    _
  %s12 = ssub.s32 1, %s10
  %s13 = scalar_select 0, %s12, %s10
  $region1: #{encoder_forward_seq.1} parent=0
    #allocation2 [shape = 'u8[32768]{0}', space=vmem, size = 0x8000, scoped, tag = 'input window, operand 1']
    #allocation3 [shape = 'u8[245760]{0}', space=vmem, size = 0x3c000, scoped, tag = 'input window, operand 4, single buffered']
    #allocation4 [shape = 's32[2]{0}', space=sflag, size = 0x8, scoped, tag = 'scoped memory for encoder_forward_seq.1']
    #allocation5 [shape = 'u8[245760]{0}', space=vmem, size = 0x3c000, scoped, tag = 'input window, operand 6, single buffered']
    #allocation6 [shape = 's32[1]{0}', space=sflag, size = 0x4, scoped, tag = 'scoped memory for encoder_forward_seq.1']
    #allocation7 [shape = 'u8[245760]{0}', space=vmem, size = 0x3c000, scoped, tag = 'input window, operand 7, single buffered']
    #allocation8 [shape = 'u8[32768]{0}', space=vmem, size = 0x8000, scoped, tag = 'output window, operand 0']
    %14 = vsyncpa [#allocation4], 0
    %15 = vsyncpa [#allocation6], 0
    loop: start=0, step=1, limit=4
    $region2: #{encoder_forward_seq.1} parent=1 // loop_pre_header
      _
    $region3: #{encoder_forward_seq.1} parent=1 // loop_header
      %s17 = sphi 0, %s21
      %p18 = scmp.ge.s32.totalorder %s17, 4
      %s24 = sphi 0, %s36
      %s25 = sphi 0, %s32
      %s26 = sphi 0, %s24
      %s27 = sphi 0, %s25
      %s28 = sphi 0, %s26
      %s29 = sphi 0, %s27
      %s41 = sphi 0, %s43
      %s44 = sphi 0, %s41
      %s45 = sphi 0, %s44
      %s61 = sphi 0, %s45
      %s67 = sphi 0, %s69
      %s70 = sphi 0, %s67
      %s71 = sphi 0, %s70
      %s87 = sphi 0, %s71
      %s91 = sphi 0, %s91
      %s93 = sphi 0, %s91
      %s94 = sphi 0, %s93
      %s108 = sphi 0, %s94
      %s112 = sphi 0, %s112
      %s114 = sphi 0, %s112
      %s115 = sphi 0, %s114
      %s129 = sphi 0, %s115
      %s133 = sphi 0, %s133
      %s135 = sphi 0, %s133
      %s136 = sphi 0, %s135
      %s150 = sphi 0, %s136
      %s154 = sphi 0, %s154
      %s156 = sphi 0, %s154
      %s157 = sphi 0, %s156
      %s171 = sphi 0, %s157
      %s175 = sphi 0, %s175
      %s177 = sphi 0, %s175
      %s178 = sphi 0, %s177
      %s192 = sphi 0, %s178
      %s196 = sphi 0, %s196
      %s198 = sphi 0, %s196
      %s199 = sphi 0, %s198
      %s213 = sphi 0, %s199
      %s217 = sphi 0, %s217
      %s219 = sphi 0, %s217
      %s220 = sphi 0, %s219
      %s234 = sphi 0, %s220
      %s240 = sphi 0, %s242
      %s243 = sphi 0, %s240
      %s244 = sphi 0, %s243
      %s260 = sphi 0, %s244
    $region4: #{encoder_forward_seq.1} parent=1 // loop_header_branch
      %20 = sbr.rel (%p18) target = $region8
    $region5: #{encoder_forward_seq.1} parent=1 // loop_body
      %s22 = ssub.s32 %s17, 1
      %s23 = ssub.s32 %s17, 2
      %s30 = sadd.s32 1, %s25
      %p31 = scmp.ge.s32.totalorder %s30, 1
      %s32 = scalar_select %p31, 0, %s30
      %s33 = sadd.s32 1, %s24
      %s34 = scalar_select %p31, %s33, %s24
      %p35 = scmp.ge.s32.totalorder %s34, 2
      %s36 = scalar_select %p35, 0, %s34
      %s37 = ssub.s32 %s25, %s32
      %s38 = ssub.s32 %s24, %s36
      %s39 = sor.u32 %s37, %s38
      %p40 = scmp.eq.s32.totalorder %s39, 0
      %s42 = sadd.s32 %s41, 1
      %s43 = scalar_select %p40, %s41, %s42
      %p46 = pneg %p40
      %p47 = scmp.eq.s32.totalorder %s17, 1
      %p48 = por %p46, %p47
      %p49 = scmp.ne.s32.totalorder %s41, %s44
      %p50 = scmp.eq.s32.totalorder %s17, 0
      %p51 = por %p49, %p50
      %p52 = scmp.ne.s32.totalorder %s41, %s44
      %p53 = scmp.eq.s32.totalorder %s22, 1
      %p54 = por %p52, %p53
      %p55 = scmp.ne.s32.totalorder %s44, %s45
      %p56 = scmp.eq.s32.totalorder %s22, 0
      %p57 = por %p55, %p56
      %p58 = scmp.ne.s32.totalorder %s44, %s45
      %p59 = scmp.eq.s32.totalorder %s23, 1
      %p60 = por %p58, %p59
      %p62 = scmp.ne.s32.totalorder %s45, %s61
      %p63 = scmp.eq.s32.totalorder %s23, 0
      %p64 = por %p62, %p63
      %s65 = ssub.s32 %s24, %s36
      %p66 = scmp.eq.s32.totalorder %s65, 0
      %s68 = sadd.s32 %s67, 1
      %s69 = scalar_select %p66, %s67, %s68
      %p72 = pneg %p66
      %p73 = scmp.eq.s32.totalorder %s17, 1
      %p74 = por %p72, %p73
      %p75 = scmp.ne.s32.totalorder %s67, %s70
      %p76 = scmp.eq.s32.totalorder %s17, 0
      %p77 = por %p75, %p76
      %p78 = scmp.ne.s32.totalorder %s67, %s70
      %p79 = scmp.eq.s32.totalorder %s22, 1
      %p80 = por %p78, %p79
      %p81 = scmp.ne.s32.totalorder %s70, %s71
      %p82 = scmp.eq.s32.totalorder %s22, 0
      %p83 = por %p81, %p82
      %p84 = scmp.ne.s32.totalorder %s70, %s71
      %p85 = scmp.eq.s32.totalorder %s23, 1
      %p86 = por %p84, %p85
      %p88 = scmp.ne.s32.totalorder %s71, %s87
      %p89 = scmp.eq.s32.totalorder %s23, 0
      %p90 = por %p88, %p89
      %s92 = sadd.s32 %s91, 1
      %p95 = scmp.eq.s32.totalorder %s17, 1
      %p96 = scmp.ne.s32.totalorder %s91, %s93
      %p97 = scmp.eq.s32.totalorder %s17, 0
      %p98 = por %p96, %p97
      %p99 = scmp.ne.s32.totalorder %s91, %s93
      %p100 = scmp.eq.s32.totalorder %s22, 1
      %p101 = por %p99, %p100
      %p102 = scmp.ne.s32.totalorder %s93, %s94
      %p103 = scmp.eq.s32.totalorder %s22, 0
      %p104 = por %p102, %p103
      %p105 = scmp.ne.s32.totalorder %s93, %s94
      %p106 = scmp.eq.s32.totalorder %s23, 1
      %p107 = por %p105, %p106
      %p109 = scmp.ne.s32.totalorder %s94, %s108
      %p110 = scmp.eq.s32.totalorder %s23, 0
      %p111 = por %p109, %p110
      %s113 = sadd.s32 %s112, 1
      %p116 = scmp.eq.s32.totalorder %s17, 1
      %p117 = scmp.ne.s32.totalorder %s112, %s114
      %p118 = scmp.eq.s32.totalorder %s17, 0
      %p119 = por %p117, %p118
      %p120 = scmp.ne.s32.totalorder %s112, %s114
      %p121 = scmp.eq.s32.totalorder %s22, 1
      %p122 = por %p120, %p121
      %p123 = scmp.ne.s32.totalorder %s114, %s115
      %p124 = scmp.eq.s32.totalorder %s22, 0
      %p125 = por %p123, %p124
      %p126 = scmp.ne.s32.totalorder %s114, %s115
      %p127 = scmp.eq.s32.totalorder %s23, 1
      %p128 = por %p126, %p127
      %p130 = scmp.ne.s32.totalorder %s115, %s129
      %p131 = scmp.eq.s32.totalorder %s23, 0
      %p132 = por %p130, %p131
      %s134 = sadd.s32 %s133, 1
      %p137 = scmp.eq.s32.totalorder %s17, 1
      %p138 = scmp.ne.s32.totalorder %s133, %s135
      %p139 = scmp.eq.s32.totalorder %s17, 0
      %p140 = por %p138, %p139
      %p141 = scmp.ne.s32.totalorder %s133, %s135
      %p142 = scmp.eq.s32.totalorder %s22, 1
      %p143 = por %p141, %p142
      %p144 = scmp.ne.s32.totalorder %s135, %s136
      %p145 = scmp.eq.s32.totalorder %s22, 0
      %p146 = por %p144, %p145
      %p147 = scmp.ne.s32.totalorder %s135, %s136
      %p148 = scmp.eq.s32.totalorder %s23, 1
      %p149 = por %p147, %p148
      %p151 = scmp.ne.s32.totalorder %s136, %s150
      %p152 = scmp.eq.s32.totalorder %s23, 0
      %p153 = por %p151, %p152
      %s155 = sadd.s32 %s154, 1
      %p158 = scmp.eq.s32.totalorder %s17, 1
      %p159 = scmp.ne.s32.totalorder %s154, %s156
      %p160 = scmp.eq.s32.totalorder %s17, 0
      %p161 = por %p159, %p160
      %p162 = scmp.ne.s32.totalorder %s154, %s156
      %p163 = scmp.eq.s32.totalorder %s22, 1
      %p164 = por %p162, %p163
      %p165 = scmp.ne.s32.totalorder %s156, %s157
      %p166 = scmp.eq.s32.totalorder %s22, 0
      %p167 = por %p165, %p166
      %p168 = scmp.ne.s32.totalorder %s156, %s157
      %p169 = scmp.eq.s32.totalorder %s23, 1
      %p170 = por %p168, %p169
      %p172 = scmp.ne.s32.totalorder %s157, %s171
      %p173 = scmp.eq.s32.totalorder %s23, 0
      %p174 = por %p172, %p173
      %s176 = sadd.s32 %s175, 1
      %p179 = scmp.eq.s32.totalorder %s17, 1
      %p180 = scmp.ne.s32.totalorder %s175, %s177
      %p181 = scmp.eq.s32.totalorder %s17, 0
      %p182 = por %p180, %p181
      %p183 = scmp.ne.s32.totalorder %s175, %s177
      %p184 = scmp.eq.s32.totalorder %s22, 1
      %p185 = por %p183, %p184
      %p186 = scmp.ne.s32.totalorder %s177, %s178
      %p187 = scmp.eq.s32.totalorder %s22, 0
      %p188 = por %p186, %p187
      %p189 = scmp.ne.s32.totalorder %s177, %s178
      %p190 = scmp.eq.s32.totalorder %s23, 1
      %p191 = por %p189, %p190
      %p193 = scmp.ne.s32.totalorder %s178, %s192
      %p194 = scmp.eq.s32.totalorder %s23, 0
      %p195 = por %p193, %p194
      %s197 = sadd.s32 %s196, 1
      %p200 = scmp.eq.s32.totalorder %s17, 1
      %p201 = scmp.ne.s32.totalorder %s196, %s198
      %p202 = scmp.eq.s32.totalorder %s17, 0
      %p203 = por %p201, %p202
      %p204 = scmp.ne.s32.totalorder %s196, %s198
      %p205 = scmp.eq.s32.totalorder %s22, 1
      %p206 = por %p204, %p205
      %p207 = scmp.ne.s32.totalorder %s198, %s199
      %p208 = scmp.eq.s32.totalorder %s22, 0
      %p209 = por %p207, %p208
      %p210 = scmp.ne.s32.totalorder %s198, %s199
      %p211 = scmp.eq.s32.totalorder %s23, 1
      %p212 = por %p210, %p211
      %p214 = scmp.ne.s32.totalorder %s199, %s213
      %p215 = scmp.eq.s32.totalorder %s23, 0
      %p216 = por %p214, %p215
      %s218 = sadd.s32 %s217, 1
      %p221 = scmp.eq.s32.totalorder %s17, 1
      %p222 = scmp.ne.s32.totalorder %s217, %s219
      %p223 = scmp.eq.s32.totalorder %s17, 0
      %p224 = por %p222, %p223
      %p225 = scmp.ne.s32.totalorder %s217, %s219
      %p226 = scmp.eq.s32.totalorder %s22, 1
      %p227 = por %p225, %p226
      %p228 = scmp.ne.s32.totalorder %s219, %s220
      %p229 = scmp.eq.s32.totalorder %s22, 0
      %p230 = por %p228, %p229
      %p231 = scmp.ne.s32.totalorder %s219, %s220
      %p232 = scmp.eq.s32.totalorder %s23, 1
      %p233 = por %p231, %p232
      %p235 = scmp.ne.s32.totalorder %s220, %s234
      %p236 = scmp.eq.s32.totalorder %s23, 0
      %p237 = por %p235, %p236
      %s238 = ssub.s32 %s24, %s36
      %p239 = scmp.eq.s32.totalorder %s238, 0
      %s241 = sadd.s32 %s240, 1
      %s242 = scalar_select %p239, %s240, %s241
      %p245 = pneg %p239
      %p246 = scmp.eq.s32.totalorder %s17, 1
      %p247 = por %p245, %p246
      %p248 = scmp.ne.s32.totalorder %s240, %s243
      %p249 = scmp.eq.s32.totalorder %s17, 0
      %p250 = por %p248, %p249
      %p251 = scmp.ne.s32.totalorder %s240, %s243
      %p252 = scmp.eq.s32.totalorder %s22, 1
      %p253 = por %p251, %p252
      %p254 = scmp.ne.s32.totalorder %s243, %s244
      %p255 = scmp.eq.s32.totalorder %s22, 0
      %p256 = por %p254, %p255
      %p257 = scmp.ne.s32.totalorder %s243, %s244
      %p258 = scmp.eq.s32.totalorder %s23, 1
      %p259 = por %p257, %p258
      %p261 = scmp.ne.s32.totalorder %s244, %s260
      %p262 = scmp.eq.s32.totalorder %s23, 0
      %p263 = por %p261, %p262
      %p264 = scmp.le.s32.totalorder 1, %s17
      %p265 = scmp.lt.s32.totalorder %s17, 3
      %p266 = pnand %p264, %p265
      %p267 = pneg %p266
      // Predicated region
      $region9: #{encoder_forward_seq.1} parent=5 // pred_check
        _
      $region10: #{encoder_forward_seq.1} parent=5 // pred_check_branch
        %269 = sbr.rel (%p266) target = $region12
      $region11: #{encoder_forward_seq.1} parent=5 // pred_region
        %s270 = ssub.s32 %s17, 1
        // Predicated region
        $region13: #{encoder_forward_seq.1} parent=11 // pred_check
          %p271 = pneg %p104
        $region14: #{encoder_forward_seq.1} parent=11 // pred_check_branch
          %273 = sbr.rel (%p271) target = $region16
        $region15: #{encoder_forward_seq.1} parent=11 // pred_region
          _
        $region16: #{encoder_forward_seq.1} parent=11 // pred_fallthru
          _
        // Predicated region
        $region17: #{encoder_forward_seq.1} parent=11 // pred_check
          %p274 = pneg %p125
        $region18: #{encoder_forward_seq.1} parent=11 // pred_check_branch
          %276 = sbr.rel (%p274) target = $region20
        $region19: #{encoder_forward_seq.1} parent=11 // pred_region
          _
        $region20: #{encoder_forward_seq.1} parent=11 // pred_fallthru
          _
        // Predicated region
        $region21: #{encoder_forward_seq.1} parent=11 // pred_check
          %p277 = pneg %p146
        $region22: #{encoder_forward_seq.1} parent=11 // pred_check_branch
          %279 = sbr.rel (%p277) target = $region24
        $region23: #{encoder_forward_seq.1} parent=11 // pred_region
          %s281 = ssub.s32 7680, 7680
          %282 = vsyncadd [#allocation4], %s281
          %s283 = sshll.u32 [#allocation3], 4
          %s284 = int_to_ptr.vmem [resolvable:$true] %s283
          %289 = dma.hbm_to_vmem [thread:$0]  %s4, 7680, %s284, [#allocation4], 128, 128, 8
        $region24: #{encoder_forward_seq.1} parent=11 // pred_fallthru
          _
        // Predicated region
        $region25: #{encoder_forward_seq.1} parent=11 // pred_check
          %p290 = pneg %p167
        $region26: #{encoder_forward_seq.1} parent=11 // pred_check_branch
          %292 = sbr.rel (%p290) target = $region28
        $region27: #{encoder_forward_seq.1} parent=11 // pred_region
          _
        $region28: #{encoder_forward_seq.1} parent=11 // pred_fallthru
          _
        // Predicated region
        $region29: #{encoder_forward_seq.1} parent=11 // pred_check
          %p293 = pneg %p188
        $region30: #{encoder_forward_seq.1} parent=11 // pred_check_branch
          %295 = sbr.rel (%p293) target = $region32
        $region31: #{encoder_forward_seq.1} parent=11 // pred_region
          %s297 = ssub.s32 7680, 7680
          %298 = vsyncadd [#allocation6], %s297
          %s299 = sshll.u32 [#allocation5], 4
          %s300 = int_to_ptr.vmem [resolvable:$true] %s299
          %305 = dma.hbm_to_vmem [thread:$0]  %s6, 7680, %s300, [#allocation6], 128, 128, 8
        $region32: #{encoder_forward_seq.1} parent=11 // pred_fallthru
          _
        // Predicated region
        $region33: #{encoder_forward_seq.1} parent=11 // pred_check
          %p306 = pneg %p209
        $region34: #{encoder_forward_seq.1} parent=11 // pred_check_branch
          %308 = sbr.rel (%p306) target = $region36
        $region35: #{encoder_forward_seq.1} parent=11 // pred_region
          %s310 = ssub.s32 7680, 7680
          %311 = vsyncadd [#allocation6], %s310
          %s312 = sshll.u32 [#allocation7], 4
          %s313 = int_to_ptr.vmem [resolvable:$true] %s312
          %318 = dma.hbm_to_vmem [thread:$0]  %s7, 7680, %s313, [#allocation6], 128, 128, 8
        $region36: #{encoder_forward_seq.1} parent=11 // pred_fallthru
          _
        // Predicated region
        $region37: #{encoder_forward_seq.1} parent=11 // pred_check
          %p319 = pneg %p230
        $region38: #{encoder_forward_seq.1} parent=11 // pred_check_branch
          %321 = sbr.rel (%p319) target = $region40
        $region39: #{encoder_forward_seq.1} parent=11 // pred_region
          _
        $region40: #{encoder_forward_seq.1} parent=11 // pred_fallthru
          _
      $region12: #{encoder_forward_seq.1} parent=5 // pred_fallthru
        _
      %p322 = scmp.lt.s32.totalorder %s17, 2
      // Predicated region
      $region41: #{encoder_forward_seq.1} parent=5 // pred_check
        %p323 = pneg %p322
      $region42: #{encoder_forward_seq.1} parent=5 // pred_check_branch
        %325 = sbr.rel (%p323) target = $region44
      $region43: #{encoder_forward_seq.1} parent=5 // pred_region
        // Predicated region
        $region45: #{encoder_forward_seq.1} parent=43 // pred_check
          %p326 = pneg %p51
        $region46: #{encoder_forward_seq.1} parent=43 // pred_check_branch
          %328 = sbr.rel (%p326) target = $region48
        $region47: #{encoder_forward_seq.1} parent=43 // pred_region
          %p329 = scmp.lt.s32.totalorder %s25, 0
          %s330 = scalar_select %p329, %s25, 0
          %p331 = scmp.lt.s32.totalorder %s24, 1
          %s332 = scalar_select %p331, %s24, 1
          %s333 = smul.addr %s332, 2
          %s334 = smul.addr %s330, 4
          %s335 = sadd.s32 %s333, %s334
          %s336 = smul.addr %s335, 8
          %s337 = scalar_lea.vmem %s0, %s336
        $region48: #{encoder_forward_seq.1} parent=43 // pred_fallthru
          _
        // Predicated region
        $region49: #{encoder_forward_seq.1} parent=43 // pred_check
          %p338 = pneg %p77
        $region50: #{encoder_forward_seq.1} parent=43 // pred_check_branch
          %340 = sbr.rel (%p338) target = $region52
        $region51: #{encoder_forward_seq.1} parent=43 // pred_region
          %s341 = sand.u32 %s67, 1
          %s342 = sand.u32 %s67, 1
          %s343 = smul.addr %s342, 32
          %s344 = scalar_lea.vmem [#allocation2], %s343
          %s345 = smul.addr %s24, 2
          %s346 = smul.addr %s345, 8
          %s347 = scalar_lea.vmem %s1, %s346
          // Predicated region
          $region53: #{encoder_forward_seq.1} parent=51 // pred_check
            _
          $region54: #{encoder_forward_seq.1} parent=51 // pred_check_branch
            %349 = sbr.rel (0) target = $region56
          $region55: #{encoder_forward_seq.1} parent=51 // pred_region
            // Predicated region
            $region57: #{encoder_forward_seq.1} parent=55 // pred_check
              _
            $region58: #{encoder_forward_seq.1} parent=55 // pred_check_branch
              %351 = sbr.rel (0) target = $region60
            $region59: #{encoder_forward_seq.1} parent=55 // pred_region
              // Predicated region
              $region72: #{encoder_forward_seq.1} parent=59 // pred_check
                _
              $region73: #{encoder_forward_seq.1} parent=59 // pred_check_branch
                %372 = sbr.rel (0) target = $region75
              $region74: #{encoder_forward_seq.1} parent=59 // pred_region
                loop: start=0, step=1, limit=1
                $region76: #{encoder_forward_seq.1} parent=74 // loop_pre_header
                  _
                $region77: #{encoder_forward_seq.1} parent=74 // loop_header
                  %s374 = sphi 0, %s378
                  %p375 = scmp.ge.s32.totalorder %s374, 1
                  %s379 = sphi %s347, %s347
                  %s380 = sphi %s344, %s344
                $region78: #{encoder_forward_seq.1} parent=74 // loop_header_branch
                  %377 = sbr.rel (%p375) target = $region82
                $region79: #{encoder_forward_seq.1} parent=74 // loop_body
                  %v381 = vld [vmem:[%s379] sm:$0xff]
                  %382 = vst [vmem:[%s380] sm:$0xff] %v381
                  %v383 = vld [vmem:[%s379 + $0x8] sm:$0xff]
                  %384 = vst [vmem:[%s380 + $0x8] sm:$0xff] %v383
                  %v385 = vld [vmem:[%s379 + $0x20] sm:$0xff]
                  %386 = vst [vmem:[%s380 + $0x10] sm:$0xff] %v385
                  %v387 = vld [vmem:[%s379 + $0x28] sm:$0xff]
                  %388 = vst [vmem:[%s380 + $0x18] sm:$0xff] %v387
                $region80: #{encoder_forward_seq.1} parent=74 // loop_footer
                  %s378 = sadd.s32 1, %s374
                $region81: #{encoder_forward_seq.1} parent=74 // loop_footer_branch
                  %373 = sbr.rel target = $region77
                $region82: #{encoder_forward_seq.1} parent=74 // loop_exit
                  _
              $region75: #{encoder_forward_seq.1} parent=59 // pred_fallthru
                _
              // Predicated region
              $region83: #{encoder_forward_seq.1} parent=59 // pred_check
                _
              $region84: #{encoder_forward_seq.1} parent=59 // pred_check_branch
                %390 = sbr.rel target = $region86
              $region85: #{encoder_forward_seq.1} parent=59 // pred_region
                _
              $region86: #{encoder_forward_seq.1} parent=59 // pred_fallthru
                _
            $region60: #{encoder_forward_seq.1} parent=55 // pred_fallthru
              _
            // Predicated region
            $region61: #{encoder_forward_seq.1} parent=55 // pred_check
              _
            $region62: #{encoder_forward_seq.1} parent=55 // pred_check_branch
              %353 = sbr.rel target = $region64
            $region63: #{encoder_forward_seq.1} parent=55 // pred_region
              loop: start=0, step=1, limit=1
              $region65: #{encoder_forward_seq.1} parent=63 // loop_pre_header
                _
              $region66: #{encoder_forward_seq.1} parent=63 // loop_header
                %s356 = sphi 0, %s360
                %p357 = scmp.ge.s32.totalorder %s356, 1
                %s361 = sphi %s347, %s347
                %s362 = sphi %s344, %s344
              $region67: #{encoder_forward_seq.1} parent=63 // loop_header_branch
                %359 = sbr.rel (%p357) target = $region71
              $region68: #{encoder_forward_seq.1} parent=63 // loop_body
                %v363 = vld [vmem:[%s361] sm:$0xff]
                %364 = vst [vmem:[%s362] sm:$0xff] %v363
                %v365 = vld [vmem:[%s361 + $0x8] sm:$0xff]
                %366 = vst [vmem:[%s362 + $0x8] sm:$0xff] %v365
                %v367 = vld [vmem:[%s361 + $0x20] sm:$0xff]
                %368 = vst [vmem:[%s362 + $0x10] sm:$0xff] %v367
                %v369 = vld [vmem:[%s361 + $0x28] sm:$0xff]
                %370 = vst [vmem:[%s362 + $0x18] sm:$0xff] %v369
              $region69: #{encoder_forward_seq.1} parent=63 // loop_footer
                %s360 = sadd.s32 1, %s356
              $region70: #{encoder_forward_seq.1} parent=63 // loop_footer_branch
                %355 = sbr.rel target = $region66
              $region71: #{encoder_forward_seq.1} parent=63 // loop_exit
                _
            $region64: #{encoder_forward_seq.1} parent=55 // pred_fallthru
              _
          $region56: #{encoder_forward_seq.1} parent=51 // pred_fallthru
            _
          %391 = vnop
        $region52: #{encoder_forward_seq.1} parent=43 // pred_fallthru
          _
      $region44: #{encoder_forward_seq.1} parent=5 // pred_fallthru
        _
      %p392 = scmp.le.s32.totalorder 1, %s17
      %p393 = scmp.lt.s32.totalorder %s17, 3
      %p394 = pnand %p392, %p393
      %p395 = pneg %p394
      // Predicated region
      $region87: #{encoder_forward_seq.1} parent=5 // pred_check
        _
      $region88: #{encoder_forward_seq.1} parent=5 // pred_check_branch
        %397 = sbr.rel (%p394) target = $region90
      $region89: #{encoder_forward_seq.1} parent=5 // pred_region
        %s398 = ssub.s32 %s17, 1
        %s399 = sand.u32 %s70, 1
        %s400 = sand.u32 %s70, 1
        %s401 = smul.addr %s400, 32
        %s402 = scalar_lea.vmem [#allocation2], %s401
        // Predicated region
        $region91: #{encoder_forward_seq.1} parent=89 // pred_check
          %p403 = pneg %p83
        $region92: #{encoder_forward_seq.1} parent=89 // pred_check_branch
          %405 = sbr.rel (%p403) target = $region94
        $region93: #{encoder_forward_seq.1} parent=89 // pred_region
          _
        $region94: #{encoder_forward_seq.1} parent=89 // pred_fallthru
          _
        // Predicated region
        $region95: #{encoder_forward_seq.1} parent=89 // pred_check
          %p406 = pneg %p146
        $region96: #{encoder_forward_seq.1} parent=89 // pred_check_branch
          %408 = sbr.rel (%p406) target = $region98
        $region97: #{encoder_forward_seq.1} parent=89 // pred_region
          %409 = dma.done [#allocation4], 7680
        $region98: #{encoder_forward_seq.1} parent=89 // pred_fallthru
          _
        // Predicated region
        $region99: #{encoder_forward_seq.1} parent=89 // pred_check
          %p410 = pneg %p188
        $region100: #{encoder_forward_seq.1} parent=89 // pred_check_branch
          %412 = sbr.rel (%p410) target = $region102
        $region101: #{encoder_forward_seq.1} parent=89 // pred_region
          %413 = dma.done [#allocation6], 7680
        $region102: #{encoder_forward_seq.1} parent=89 // pred_fallthru
          _
        // Predicated region
        $region103: #{encoder_forward_seq.1} parent=89 // pred_check
          %p414 = pneg %p209
        $region104: #{encoder_forward_seq.1} parent=89 // pred_check_branch
          %416 = sbr.rel (%p414) target = $region106
        $region105: #{encoder_forward_seq.1} parent=89 // pred_region
          %417 = dma.done [#allocation6], 7680
        $region106: #{encoder_forward_seq.1} parent=89 // pred_fallthru
          _
        %p418 = scmp.lt.s32.totalorder %s27, 0
        %s419 = scalar_select %p418, %s27, 0
        %p420 = scmp.lt.s32.totalorder %s26, 1
        %s421 = scalar_select %p420, %s26, 1
        %s422 = smul.addr %s421, 2
        %s423 = smul.addr %s419, 4
        %s424 = sadd.s32 %s422, %s423
        %s425 = smul.addr %s424, 8
        %s426 = scalar_lea.vmem %s0, %s425
        %p427 = pneg %p57
        %p428 = pneg %p54
        %s429 = sand.u32 %s70, 1
        %s430 = sand.u32 %s70, 1
        %s431 = smul.addr %s430, 32
        %s432 = scalar_lea.vmem [#allocation2], %s431
        %p433 = pneg %p83
        %p434 = pneg %p80
        %p435 = pneg %p104
        %p436 = pneg %p101
        %p437 = pneg %p125
        %p438 = pneg %p122
        %p439 = pneg %p146
        %p440 = pneg %p143
        %p441 = pneg %p167
        %p442 = pneg %p164
        %p443 = pneg %p188
        %p444 = pneg %p185
        %p445 = pneg %p209
        %p446 = pneg %p206
        %p447 = pneg %p230
        %p448 = pneg %p227
        %p449 = pneg %p256
        %p450 = pneg %p253
        %s451 = sand.u32 %s243, 1
        %s452 = sand.u32 %s243, 1
        %s453 = smul.addr %s452, 32
        %s454 = scalar_lea.vmem [#allocation8], %s453
        %p455 = scmp.lt.s32.totalorder %s27, 0
        %s456 = scalar_select %p455, %s27, 0
        %p457 = scmp.lt.s32.totalorder %s26, 1
        %s458 = scalar_select %p457, %s26, 1
        %s459 = smul.addr %s458, 2
        %s460 = smul.addr %s456, 4
        %s461 = sadd.s32 %s459, %s460
        %s462 = smul.addr %s461, 8
        %s463 = scalar_lea.vmem %s0, %s462
        %p464 = scmp.eq.s32.totalorder %s27, 0
        // Predicated region
        $region107: #{encoder_forward_seq.1} parent=89 // pred_check
          %p465 = pneg %p464
        $region108: #{encoder_forward_seq.1} parent=89 // pred_check_branch
          %467 = sbr.rel (%p465) target = $region110
        $region109: #{encoder_forward_seq.1} parent=89 // pred_region
          %v468 = vld [vmem:[%s402] sm:$0xff]
          %v469 = vld [vmem:[%s402 + $0x8] sm:$0xff]
          %v470 = vld [vmem:[%s402 + $0x10] sm:$0xff]
          %v471 = vld [vmem:[%s402 + $0x18] sm:$0xff]
          %vm472 = vcmask 261120
          %473 = vst.msk [vmem:[%s454] sm:$0xff] %vm472, %v468
          %474 = vst.msk [vmem:[%s454 + $0x8] sm:$0xff] %vm472, %v469
          %475 = vst.msk [vmem:[%s454 + $0x10] sm:$0xff] %vm472, %v470
          %476 = vst.msk [vmem:[%s454 + $0x18] sm:$0xff] %vm472, %v471
        $region110: #{encoder_forward_seq.1} parent=89 // pred_fallthru
          _
        %v477 = vld [vmem:[%s2] sm:$0xff]
        %v478 = vld [vmem:[%s2 + $0x8] sm:$0xff]
        %s479 = scalar_lea.vmem %s2, 16
        %v480 = vld [vmem:[%s479] sm:$0xff]
        %v481 = vld [vmem:[%s479 + $0x8] sm:$0xff]
        %v482 = vld [vmem:[%s463] sm:$0xff]
        %v483 = vld [vmem:[%s463 + $0x8] sm:$0xff]
        %v484 = vld [vmem:[%s454] sm:$0xff]
        %v485 = vld [vmem:[%s454 + $0x8] sm:$0xff]
        %v486 = vld [vmem:[%s3] sm:$0x3]
        %s487 = scalar_lea.vmem %s3, 10
        %v488 = vld [vmem:[%s487] sm:$0x3]
        %s489 = scalar_lea.vmem %s3, 20
        %v490 = vld [vmem:[%s489] sm:$0x3]
        %vm491 = vcmask 130048
        %v493 = vsel %vm491, %v477, 0
        %v496 = vsel %vm491, %v478, 0
        %498 = vmatprep.subr.mxu0 0.0
        %499 = vmatpush1.msra.mxu0 %v482
        %500 = vmatprep.subr.mxu0 0.0
        %501 = vmatpush1.msra.mxu0 %v483
        %502 = vmatprep.subr.mxu0 0.0
        %503 = vmatpush1.msra.mxu0 0.0
        %504 = vmatprep.subr.mxu0 0.0
        %505 = vmatpush1.msra.mxu0 0.0
        %506 = vmatprep.subr.mxu0 0.0
        %507 = vmatpush1.msra.mxu0 0.0
        %508 = vmatprep.subr.mxu0 0.0
        %509 = vmatpush1.msra.mxu0 0.0
        %510 = vmatprep.subr.mxu0 0.0
        %511 = vmatpush1.msra.mxu0 0.0
        %512 = vmatprep.subr.mxu0 0.0
        %513 = vmatpush1.msra.mxu0 0.0
        %514 = vmatprep.subr.mxu0 0.0
        %515 = vmatpush1.msra.mxu0 0.0
        %516 = vmatprep.subr.mxu0 0.0
        %517 = vmatpush1.msra.mxu0 0.0
        %518 = vmatprep.subr.mxu0 0.0
        %519 = vmatpush1.msra.mxu0 0.0
        %520 = vmatprep.subr.mxu0 0.0
        %521 = vmatpush1.msra.mxu0 0.0
        %522 = vmatprep.subr.mxu0 0.0
        %523 = vmatpush1.msra.mxu0 0.0
        %524 = vmatprep.subr.mxu0 0.0
        %525 = vmatpush1.msra.mxu0 0.0
        %526 = vmatprep.subr.mxu0 0.0
        %527 = vmatpush1.msra.mxu0 0.0
        %528 = vmatprep.subr.mxu0 0.0
        %529 = vmatpush1.msra.mxu0 0.0
        %530 = vmatprep.subr.mxu0 0.0
        %531 = vmatpush1.msra.mxu0 0.0
        %532 = vmatprep.subr.mxu0 0.0
        %533 = vmatpush1.msra.mxu0 0.0
        %534 = vmatprep.subr.mxu0 0.0
        %535 = vmatpush1.msra.mxu0 0.0
        %536 = vmatprep.subr.mxu0 0.0
        %537 = vmatpush1.msra.mxu0 0.0
        %538 = vmatprep.subr.mxu0 0.0
        %539 = vmatpush1.msra.mxu0 0.0
        %540 = vmatprep.subr.mxu0 0.0
        %541 = vmatpush1.msra.mxu0 0.0
        %542 = vmatprep.subr.mxu0 0.0
        %543 = vmatpush1.msra.mxu0 0.0
        %544 = vmatprep.subr.mxu0 0.0
        %545 = vmatpush1.msra.mxu0 0.0
        %546 = vmatprep.subr.mxu0 0.0
        %547 = vmatpush1.msra.mxu0 0.0
        %548 = vmatprep.subr.mxu0 0.0
        %549 = vmatpush1.msra.mxu0 0.0
        %550 = vmatprep.subr.mxu0 0.0
        %551 = vmatpush1.msra.mxu0 0.0
        %552 = vmatprep.subr.mxu0 0.0
        %553 = vmatpush1.msra.mxu0 0.0
        %554 = vmatprep.subr.mxu0 0.0
        %555 = vmatpush1.msra.mxu0 0.0
        %556 = vmatprep.subr.mxu0 0.0
        %557 = vmatpush1.msra.mxu0 0.0
        %558 = vmatprep.subr.mxu0 0.0
        %559 = vmatpush1.msra.mxu0 0.0
        %560 = vmatprep.subr.mxu0 0.0
        %561 = vmatpush1.msra.mxu0 0.0
        %562 = vmatprep.mubr.f32.mxu0 0.0
        %563 = vmatmul.mubr.f32.gmra.mrb[0].mxu0 %v493
        %v564 = vpop.f32.mrb[0].mxu0
        %v565 = vadd.f32 0.0, %v564
        %v566 = vpop.f32.mrb[0].mxu0
        %567 = vmatprep.mubr.f32.mxu0 0.0
        %568 = vmatmul.mubr.f32.gmra.mrb[0].mxu0 %v496
        %v569 = vpop.f32.mrb[0].mxu0
        %v570 = vadd.f32 0.0, %v569
        %v571 = vpop.f32.mrb[0].mxu0
        %572 = vdwg.mxu0
        %s573 = scalar_lea.vmem %s3, 2
        %v574 = vld [vmem:[%s573] sm:$0x3]
        %vm575 = vcmask 15360
        %v577 = vsel %vm575, %v565, 0
        %v580 = vsel %vm575, %v570, 0
        %vm582 = vcmask 1041408
        %v584 = vsel %vm582, %v574, 0
        %586 = vmatprep.subr.mxu0 0.0
        %587 = vmatpush1.msra.mxu0 %v584
        %588 = vmatprep.subr.mxu0 0.0
        %589 = vmatpush1.msra.mxu0 0.0
        %590 = vmatprep.subr.mxu0 0.0
        %591 = vmatpush1.msra.mxu0 0.0
        %592 = vmatprep.subr.mxu0 0.0
        %593 = vmatpush1.msra.mxu0 0.0
        %594 = vmatprep.subr.mxu0 0.0
        %595 = vmatpush1.msra.mxu0 0.0
        %596 = vmatprep.subr.mxu0 0.0
        %597 = vmatpush1.msra.mxu0 0.0
        %598 = vmatprep.subr.mxu0 0.0
        %599 = vmatpush1.msra.mxu0 0.0
        %600 = vmatprep.subr.mxu0 0.0
        %601 = vmatpush1.msra.mxu0 0.0
        %602 = vmatprep.subr.mxu0 0.0
        %603 = vmatpush1.msra.mxu0 0.0
        %604 = vmatprep.subr.mxu0 0.0
        %605 = vmatpush1.msra.mxu0 0.0
        %606 = vmatprep.subr.mxu0 0.0
        %607 = vmatpush1.msra.mxu0 0.0
        %608 = vmatprep.subr.mxu0 0.0
        %609 = vmatpush1.msra.mxu0 0.0
        %610 = vmatprep.subr.mxu0 0.0
        %611 = vmatpush1.msra.mxu0 0.0
        %612 = vmatprep.subr.mxu0 0.0
        %613 = vmatpush1.msra.mxu0 0.0
        %614 = vmatprep.subr.mxu0 0.0
        %615 = vmatpush1.msra.mxu0 0.0
        %616 = vmatprep.subr.mxu0 0.0
        %617 = vmatpush1.msra.mxu0 0.0
        %618 = vmatprep.subr.mxu0 0.0
        %619 = vmatpush1.msra.mxu0 0.0
        %620 = vmatprep.subr.mxu0 0.0
        %621 = vmatpush1.msra.mxu0 0.0
        %622 = vmatprep.subr.mxu0 0.0
        %623 = vmatpush1.msra.mxu0 0.0
        %624 = vmatprep.subr.mxu0 0.0
        %625 = vmatpush1.msra.mxu0 0.0
        %626 = vmatprep.subr.mxu0 0.0
        %627 = vmatpush1.msra.mxu0 0.0
        %628 = vmatprep.subr.mxu0 0.0
        %629 = vmatpush1.msra.mxu0 0.0
        %630 = vmatprep.subr.mxu0 0.0
        %631 = vmatpush1.msra.mxu0 0.0
        %632 = vmatprep.subr.mxu0 0.0
        %633 = vmatpush1.msra.mxu0 0.0
        %634 = vmatprep.subr.mxu0 0.0
        %635 = vmatpush1.msra.mxu0 0.0
        %636 = vmatprep.subr.mxu0 0.0
        %637 = vmatpush1.msra.mxu0 0.0
        %638 = vmatprep.subr.mxu0 0.0
        %639 = vmatpush1.msra.mxu0 0.0
        %640 = vmatprep.subr.mxu0 0.0
        %641 = vmatpush1.msra.mxu0 0.0
        %642 = vmatprep.subr.mxu0 0.0
        %643 = vmatpush1.msra.mxu0 0.0
        %644 = vmatprep.subr.mxu0 0.0
        %645 = vmatpush1.msra.mxu0 0.0
        %646 = vmatprep.subr.mxu0 0.0
        %647 = vmatpush1.msra.mxu0 0.0
        %648 = vmatprep.subr.mxu0 0.0
        %649 = vmatpush1.msra.mxu0 0.0
        %650 = vmatprep.mubr.f32.mxu0 0.0
        %651 = vmatmul.mubr.f32.gmra.mrb[0].mxu0 %v577
        %v652 = vpop.f32.mrb[0].mxu0
        %v653 = vadd.f32 0.0, %v652
        %v654 = vpop.f32.mrb[0].mxu0
        %655 = vmatprep.mubr.f32.mxu0 0.0
        %656 = vmatmul.mubr.f32.gmra.mrb[0].mxu0 %v580
        %v657 = vpop.f32.mrb[0].mxu0
        %v658 = vadd.f32 0.0, %v657
        %v659 = vpop.f32.mrb[0].mxu0
        %660 = vdwg.mxu0
        %v662 = vsel %vm575, %v482, 0
        %v665 = vsel %vm575, %v483, 0
        %v668 = vsel %vm582, %v486, 0
        %670 = vmatprep.subr.mxu0 0.0
        %671 = vmatpush1.msra.mxu0 %v668
        %672 = vmatprep.subr.mxu0 0.0
        %673 = vmatpush1.msra.mxu0 0.0
        %674 = vmatprep.subr.mxu0 0.0
        %675 = vmatpush1.msra.mxu0 0.0
        %676 = vmatprep.subr.mxu0 0.0
        %677 = vmatpush1.msra.mxu0 0.0
        %678 = vmatprep.subr.mxu0 0.0
        %679 = vmatpush1.msra.mxu0 0.0
        %680 = vmatprep.subr.mxu0 0.0
        %681 = vmatpush1.msra.mxu0 0.0
        %682 = vmatprep.subr.mxu0 0.0
        %683 = vmatpush1.msra.mxu0 0.0
        %684 = vmatprep.subr.mxu0 0.0
        %685 = vmatpush1.msra.mxu0 0.0
        %686 = vmatprep.subr.mxu0 0.0
        %687 = vmatpush1.msra.mxu0 0.0
        %688 = vmatprep.subr.mxu0 0.0
        %689 = vmatpush1.msra.mxu0 0.0
        %690 = vmatprep.subr.mxu0 0.0
        %691 = vmatpush1.msra.mxu0 0.0
        %692 = vmatprep.subr.mxu0 0.0
        %693 = vmatpush1.msra.mxu0 0.0
        %694 = vmatprep.subr.mxu0 0.0
        %695 = vmatpush1.msra.mxu0 0.0
        %696 = vmatprep.subr.mxu0 0.0
        %697 = vmatpush1.msra.mxu0 0.0
        %698 = vmatprep.subr.mxu0 0.0
        %699 = vmatpush1.msra.mxu0 0.0
        %700 = vmatprep.subr.mxu0 0.0
        %701 = vmatpush1.msra.mxu0 0.0
        %702 = vmatprep.subr.mxu0 0.0
        %703 = vmatpush1.msra.mxu0 0.0
        %704 = vmatprep.subr.mxu0 0.0
        %705 = vmatpush1.msra.mxu0 0.0
        %706 = vmatprep.subr.mxu0 0.0
        %707 = vmatpush1.msra.mxu0 0.0
        %708 = vmatprep.subr.mxu0 0.0
        %709 = vmatpush1.msra.mxu0 0.0
        %710 = vmatprep.subr.mxu0 0.0
        %711 = vmatpush1.msra.mxu0 0.0
        %712 = vmatprep.subr.mxu0 0.0
        %713 = vmatpush1.msra.mxu0 0.0
        %714 = vmatprep.subr.mxu0 0.0
        %715 = vmatpush1.msra.mxu0 0.0
        %716 = vmatprep.subr.mxu0 0.0
        %717 = vmatpush1.msra.mxu0 0.0
        %718 = vmatprep.subr.mxu0 0.0
        %719 = vmatpush1.msra.mxu0 0.0
        %720 = vmatprep.subr.mxu0 0.0
        %721 = vmatpush1.msra.mxu0 0.0
        %722 = vmatprep.subr.mxu0 0.0
        %723 = vmatpush1.msra.mxu0 0.0
        %724 = vmatprep.subr.mxu0 0.0
        %725 = vmatpush1.msra.mxu0 0.0
        %726 = vmatprep.subr.mxu0 0.0
        %727 = vmatpush1.msra.mxu0 0.0
        %728 = vmatprep.subr.mxu0 0.0
        %729 = vmatpush1.msra.mxu0 0.0
        %730 = vmatprep.subr.mxu0 0.0
        %731 = vmatpush1.msra.mxu0 0.0
        %732 = vmatprep.subr.mxu0 0.0
        %733 = vmatpush1.msra.mxu0 0.0
        %734 = vmatprep.mubr.f32.mxu0 0.0
        %735 = vmatmul.mubr.f32.gmra.mrb[0].mxu0 %v662
        %v736 = vpop.f32.mrb[0].mxu0
        %v737 = vadd.f32 %v653, %v736
        %v738 = vpop.f32.mrb[0].mxu0
        %739 = vmatprep.mubr.f32.mxu0 0.0
        %740 = vmatmul.mubr.f32.gmra.mrb[0].mxu0 %v665
        %v741 = vpop.f32.mrb[0].mxu0
        %v742 = vadd.f32 %v658, %v741
        %v743 = vpop.f32.mrb[0].mxu0
        %744 = vdwg.mxu0
        %s745 = scalar_lea.vmem %s3, 12
        %v746 = vld [vmem:[%s745] sm:$0x3]
        %v748 = vsel %vm582, %v746, 0
        %750 = vmatprep.subr.mxu0 0.0
        %751 = vmatpush1.msra.mxu0 %v748
        %752 = vmatprep.subr.mxu0 0.0
        %753 = vmatpush1.msra.mxu0 0.0
        %754 = vmatprep.subr.mxu0 0.0
        %755 = vmatpush1.msra.mxu0 0.0
        %756 = vmatprep.subr.mxu0 0.0
        %757 = vmatpush1.msra.mxu0 0.0
        %758 = vmatprep.subr.mxu0 0.0
        %759 = vmatpush1.msra.mxu0 0.0
        %760 = vmatprep.subr.mxu0 0.0
        %761 = vmatpush1.msra.mxu0 0.0
        %762 = vmatprep.subr.mxu0 0.0
        %763 = vmatpush1.msra.mxu0 0.0
        %764 = vmatprep.subr.mxu0 0.0
        %765 = vmatpush1.msra.mxu0 0.0
        %766 = vmatprep.subr.mxu0 0.0
        %767 = vmatpush1.msra.mxu0 0.0
        %768 = vmatprep.subr.mxu0 0.0
        %769 = vmatpush1.msra.mxu0 0.0
        %770 = vmatprep.subr.mxu0 0.0
        %771 = vmatpush1.msra.mxu0 0.0
        %772 = vmatprep.subr.mxu0 0.0
        %773 = vmatpush1.msra.mxu0 0.0
        %774 = vmatprep.subr.mxu0 0.0
        %775 = vmatpush1.msra.mxu0 0.0
        %776 = vmatprep.subr.mxu0 0.0
        %777 = vmatpush1.msra.mxu0 0.0
        %778 = vmatprep.subr.mxu0 0.0
        %779 = vmatpush1.msra.mxu0 0.0
        %780 = vmatprep.subr.mxu0 0.0
        %781 = vmatpush1.msra.mxu0 0.0
        %782 = vmatprep.subr.mxu0 0.0
        %783 = vmatpush1.msra.mxu0 0.0
        %784 = vmatprep.subr.mxu0 0.0
        %785 = vmatpush1.msra.mxu0 0.0
        %786 = vmatprep.subr.mxu0 0.0
        %787 = vmatpush1.msra.mxu0 0.0
        %788 = vmatprep.subr.mxu0 0.0
        %789 = vmatpush1.msra.mxu0 0.0
        %790 = vmatprep.subr.mxu0 0.0
        %791 = vmatpush1.msra.mxu0 0.0
        %792 = vmatprep.subr.mxu0 0.0
        %793 = vmatpush1.msra.mxu0 0.0
        %794 = vmatprep.subr.mxu0 0.0
        %795 = vmatpush1.msra.mxu0 0.0
        %796 = vmatprep.subr.mxu0 0.0
        %797 = vmatpush1.msra.mxu0 0.0
        %798 = vmatprep.subr.mxu0 0.0
        %799 = vmatpush1.msra.mxu0 0.0
        %800 = vmatprep.subr.mxu0 0.0
        %801 = vmatpush1.msra.mxu0 0.0
        %802 = vmatprep.subr.mxu0 0.0
        %803 = vmatpush1.msra.mxu0 0.0
        %804 = vmatprep.subr.mxu0 0.0
        %805 = vmatpush1.msra.mxu0 0.0
        %806 = vmatprep.subr.mxu0 0.0
        %807 = vmatpush1.msra.mxu0 0.0
        %808 = vmatprep.subr.mxu0 0.0
        %809 = vmatpush1.msra.mxu0 0.0
        %810 = vmatprep.subr.mxu0 0.0
        %811 = vmatpush1.msra.mxu0 0.0
        %812 = vmatprep.subr.mxu0 0.0
        %813 = vmatpush1.msra.mxu0 0.0
        %814 = vmatprep.mubr.f32.mxu0 0.0
        %815 = vmatmul.mubr.f32.gmra.mrb[0].mxu0 %v577
        %v816 = vpop.f32.mrb[0].mxu0
        %v817 = vadd.f32 0.0, %v816
        %v818 = vpop.f32.mrb[0].mxu0
        %819 = vmatprep.mubr.f32.mxu0 0.0
        %820 = vmatmul.mubr.f32.gmra.mrb[0].mxu0 %v580
        %v821 = vpop.f32.mrb[0].mxu0
        %v822 = vadd.f32 0.0, %v821
        %v823 = vpop.f32.mrb[0].mxu0
        %824 = vdwg.mxu0
        %v826 = vsel %vm582, %v488, 0
        %828 = vmatprep.subr.mxu0 0.0
        %829 = vmatpush1.msra.mxu0 %v826
        %830 = vmatprep.subr.mxu0 0.0
        %831 = vmatpush1.msra.mxu0 0.0
        %832 = vmatprep.subr.mxu0 0.0
        %833 = vmatpush1.msra.mxu0 0.0
        %834 = vmatprep.subr.mxu0 0.0
        %835 = vmatpush1.msra.mxu0 0.0
        %836 = vmatprep.subr.mxu0 0.0
        %837 = vmatpush1.msra.mxu0 0.0
        %838 = vmatprep.subr.mxu0 0.0
        %839 = vmatpush1.msra.mxu0 0.0
        %840 = vmatprep.subr.mxu0 0.0
        %841 = vmatpush1.msra.mxu0 0.0
        %842 = vmatprep.subr.mxu0 0.0
        %843 = vmatpush1.msra.mxu0 0.0
        %844 = vmatprep.subr.mxu0 0.0
        %845 = vmatpush1.msra.mxu0 0.0
        %846 = vmatprep.subr.mxu0 0.0
        %847 = vmatpush1.msra.mxu0 0.0
        %848 = vmatprep.subr.mxu0 0.0
        %849 = vmatpush1.msra.mxu0 0.0
        %850 = vmatprep.subr.mxu0 0.0
        %851 = vmatpush1.msra.mxu0 0.0
        %852 = vmatprep.subr.mxu0 0.0
        %853 = vmatpush1.msra.mxu0 0.0
        %854 = vmatprep.subr.mxu0 0.0
        %855 = vmatpush1.msra.mxu0 0.0
        %856 = vmatprep.subr.mxu0 0.0
        %857 = vmatpush1.msra.mxu0 0.0
        %858 = vmatprep.subr.mxu0 0.0
        %859 = vmatpush1.msra.mxu0 0.0
        %860 = vmatprep.subr.mxu0 0.0
        %861 = vmatpush1.msra.mxu0 0.0
        %862 = vmatprep.subr.mxu0 0.0
        %863 = vmatpush1.msra.mxu0 0.0
        %864 = vmatprep.subr.mxu0 0.0
        %865 = vmatpush1.msra.mxu0 0.0
        %866 = vmatprep.subr.mxu0 0.0
        %867 = vmatpush1.msra.mxu0 0.0
        %868 = vmatprep.subr.mxu0 0.0
        %869 = vmatpush1.msra.mxu0 0.0
        %870 = vmatprep.subr.mxu0 0.0
        %871 = vmatpush1.msra.mxu0 0.0
        %872 = vmatprep.subr.mxu0 0.0
        %873 = vmatpush1.msra.mxu0 0.0
        %874 = vmatprep.subr.mxu0 0.0
        %875 = vmatpush1.msra.mxu0 0.0
        %876 = vmatprep.subr.mxu0 0.0
        %877 = vmatpush1.msra.mxu0 0.0
        %878 = vmatprep.subr.mxu0 0.0
        %879 = vmatpush1.msra.mxu0 0.0
        %880 = vmatprep.subr.mxu0 0.0
        %881 = vmatpush1.msra.mxu0 0.0
        %882 = vmatprep.subr.mxu0 0.0
        %883 = vmatpush1.msra.mxu0 0.0
        %884 = vmatprep.subr.mxu0 0.0
        %885 = vmatpush1.msra.mxu0 0.0
        %886 = vmatprep.subr.mxu0 0.0
        %887 = vmatpush1.msra.mxu0 0.0
        %888 = vmatprep.subr.mxu0 0.0
        %889 = vmatpush1.msra.mxu0 0.0
        %890 = vmatprep.subr.mxu0 0.0
        %891 = vmatpush1.msra.mxu0 0.0
        %892 = vmatprep.mubr.f32.mxu0 0.0
        %893 = vmatmul.mubr.f32.gmra.mrb[0].mxu0 %v662
        %v894 = vpop.f32.mrb[0].mxu0
        %v895 = vadd.f32 %v817, %v894
        %v896 = vpop.f32.mrb[0].mxu0
        %897 = vmatprep.mubr.f32.mxu0 0.0
        %898 = vmatmul.mubr.f32.gmra.mrb[0].mxu0 %v665
        %v899 = vpop.f32.mrb[0].mxu0
        %v900 = vadd.f32 %v822, %v899
        %v901 = vpop.f32.mrb[0].mxu0
        %902 = vdwg.mxu0
        %s903 = scalar_lea.vmem %s3, 22
        %v904 = vld [vmem:[%s903] sm:$0x3]
        %v906 = vsel %vm582, %v904, 0
        %908 = vmatprep.subr.mxu0 0.0
        %909 = vmatpush1.msra.mxu0 %v906
        %910 = vmatprep.subr.mxu0 0.0
        %911 = vmatpush1.msra.mxu0 0.0
        %912 = vmatprep.subr.mxu0 0.0
        %913 = vmatpush1.msra.mxu0 0.0
        %914 = vmatprep.subr.mxu0 0.0
        %915 = vmatpush1.msra.mxu0 0.0
        %916 = vmatprep.subr.mxu0 0.0
        %917 = vmatpush1.msra.mxu0 0.0
        %918 = vmatprep.subr.mxu0 0.0
        %919 = vmatpush1.msra.mxu0 0.0
        %920 = vmatprep.subr.mxu0 0.0
        %921 = vmatpush1.msra.mxu0 0.0
        %922 = vmatprep.subr.mxu0 0.0
        %923 = vmatpush1.msra.mxu0 0.0
        %924 = vmatprep.subr.mxu0 0.0
        %925 = vmatpush1.msra.mxu0 0.0
        %926 = vmatprep.subr.mxu0 0.0
        %927 = vmatpush1.msra.mxu0 0.0
        %928 = vmatprep.subr.mxu0 0.0
        %929 = vmatpush1.msra.mxu0 0.0
        %930 = vmatprep.subr.mxu0 0.0
        %931 = vmatpush1.msra.mxu0 0.0
        %932 = vmatprep.subr.mxu0 0.0
        %933 = vmatpush1.msra.mxu0 0.0
        %934 = vmatprep.subr.mxu0 0.0
        %935 = vmatpush1.msra.mxu0 0.0
        %936 = vmatprep.subr.mxu0 0.0
        %937 = vmatpush1.msra.mxu0 0.0
        %938 = vmatprep.subr.mxu0 0.0
        %939 = vmatpush1.msra.mxu0 0.0
        %940 = vmatprep.subr.mxu0 0.0
        %941 = vmatpush1.msra.mxu0 0.0
        %942 = vmatprep.subr.mxu0 0.0
        %943 = vmatpush1.msra.mxu0 0.0
        %944 = vmatprep.subr.mxu0 0.0
        %945 = vmatpush1.msra.mxu0 0.0
        %946 = vmatprep.subr.mxu0 0.0
        %947 = vmatpush1.msra.mxu0 0.0
        %948 = vmatprep.subr.mxu0 0.0
        %949 = vmatpush1.msra.mxu0 0.0
        %950 = vmatprep.subr.mxu0 0.0
        %951 = vmatpush1.msra.mxu0 0.0
        %952 = vmatprep.subr.mxu0 0.0
        %953 = vmatpush1.msra.mxu0 0.0
        %954 = vmatprep.subr.mxu0 0.0
        %955 = vmatpush1.msra.mxu0 0.0
        %956 = vmatprep.subr.mxu0 0.0
        %957 = vmatpush1.msra.mxu0 0.0
        %958 = vmatprep.subr.mxu0 0.0
        %959 = vmatpush1.msra.mxu0 0.0
        %960 = vmatprep.subr.mxu0 0.0
        %961 = vmatpush1.msra.mxu0 0.0
        %962 = vmatprep.subr.mxu0 0.0
        %963 = vmatpush1.msra.mxu0 0.0
        %964 = vmatprep.subr.mxu0 0.0
        %965 = vmatpush1.msra.mxu0 0.0
        %966 = vmatprep.subr.mxu0 0.0
        %967 = vmatpush1.msra.mxu0 0.0
        %968 = vmatprep.subr.mxu0 0.0
        %969 = vmatpush1.msra.mxu0 0.0
        %970 = vmatprep.subr.mxu0 0.0
        %971 = vmatpush1.msra.mxu0 0.0
        %972 = vmatprep.mubr.f32.mxu0 0.0
        %973 = vmatmul.mubr.f32.gmra.mrb[0].mxu0 %v577
        %v974 = vpop.f32.mrb[0].mxu0
        %v975 = vadd.f32 0.0, %v974
        %v976 = vpop.f32.mrb[0].mxu0
        %977 = vmatprep.mubr.f32.mxu0 0.0
        %978 = vmatmul.mubr.f32.gmra.mrb[0].mxu0 %v580
        %v979 = vpop.f32.mrb[0].mxu0
        %v980 = vadd.f32 0.0, %v979
        %v981 = vpop.f32.mrb[0].mxu0
        %982 = vdwg.mxu0
        %v984 = vsel %vm582, %v490, 0
        %986 = vmatprep.subr.mxu0 0.0
        %987 = vmatpush1.msra.mxu0 %v984
        %988 = vmatprep.subr.mxu0 0.0
        %989 = vmatpush1.msra.mxu0 0.0
        %990 = vmatprep.subr.mxu0 0.0
        %991 = vmatpush1.msra.mxu0 0.0
        %992 = vmatprep.subr.mxu0 0.0
        %993 = vmatpush1.msra.mxu0 0.0
        %994 = vmatprep.subr.mxu0 0.0
        %995 = vmatpush1.msra.mxu0 0.0
        %996 = vmatprep.subr.mxu0 0.0
        %997 = vmatpush1.msra.mxu0 0.0
        %998 = vmatprep.subr.mxu0 0.0
        %999 = vmatpush1.msra.mxu0 0.0
        %1000 = vmatprep.subr.mxu0 0.0
        %1001 = vmatpush1.msra.mxu0 0.0
        %1002 = vmatprep.subr.mxu0 0.0
        %1003 = vmatpush1.msra.mxu0 0.0
        %1004 = vmatprep.subr.mxu0 0.0
        %1005 = vmatpush1.msra.mxu0 0.0
        %1006 = vmatprep.subr.mxu0 0.0
        %1007 = vmatpush1.msra.mxu0 0.0
        %1008 = vmatprep.subr.mxu0 0.0
        %1009 = vmatpush1.msra.mxu0 0.0
        %1010 = vmatprep.subr.mxu0 0.0
        %1011 = vmatpush1.msra.mxu0 0.0
        %1012 = vmatprep.subr.mxu0 0.0
        %1013 = vmatpush1.msra.mxu0 0.0
        %1014 = vmatprep.subr.mxu0 0.0
        %1015 = vmatpush1.msra.mxu0 0.0
        %1016 = vmatprep.subr.mxu0 0.0
        %1017 = vmatpush1.msra.mxu0 0.0
        %1018 = vmatprep.subr.mxu0 0.0
        %1019 = vmatpush1.msra.mxu0 0.0
        %1020 = vmatprep.subr.mxu0 0.0
        %1021 = vmatpush1.msra.mxu0 0.0
        %1022 = vmatprep.subr.mxu0 0.0
        %1023 = vmatpush1.msra.mxu0 0.0
        %1024 = vmatprep.subr.mxu0 0.0
        %1025 = vmatpush1.msra.mxu0 0.0
        %1026 = vmatprep.subr.mxu0 0.0
        %1027 = vmatpush1.msra.mxu0 0.0
        %1028 = vmatprep.subr.mxu0 0.0
        %1029 = vmatpush1.msra.mxu0 0.0
        %1030 = vmatprep.subr.mxu0 0.0
        %1031 = vmatpush1.msra.mxu0 0.0
        %1032 = vmatprep.subr.mxu0 0.0
        %1033 = vmatpush1.msra.mxu0 0.0
        %1034 = vmatprep.subr.mxu0 0.0
        %1035 = vmatpush1.msra.mxu0 0.0
        %1036 = vmatprep.subr.mxu0 0.0
        %1037 = vmatpush1.msra.mxu0 0.0
        %1038 = vmatprep.subr.mxu0 0.0
        %1039 = vmatpush1.msra.mxu0 0.0
        %1040 = vmatprep.subr.mxu0 0.0
        %1041 = vmatpush1.msra.mxu0 0.0
        %1042 = vmatprep.subr.mxu0 0.0
        %1043 = vmatpush1.msra.mxu0 0.0
        %1044 = vmatprep.subr.mxu0 0.0
        %1045 = vmatpush1.msra.mxu0 0.0
        %1046 = vmatprep.subr.mxu0 0.0
        %1047 = vmatpush1.msra.mxu0 0.0
        %1048 = vmatprep.subr.mxu0 0.0
        %1049 = vmatpush1.msra.mxu0 0.0
        %1050 = vmatprep.mubr.f32.mxu0 0.0
        %1051 = vmatmul.mubr.f32.gmra.mrb[0].mxu0 %v662
        %v1052 = vpop.f32.mrb[0].mxu0
        %v1053 = vadd.f32 %v975, %v1052
        %v1054 = vpop.f32.mrb[0].mxu0
        %1055 = vmatprep.mubr.f32.mxu0 0.0
        %1056 = vmatmul.mubr.f32.gmra.mrb[0].mxu0 %v665
        %v1057 = vpop.f32.mrb[0].mxu0
        %v1058 = vadd.f32 %v980, %v1057
        %v1059 = vpop.f32.mrb[0].mxu0
        %1060 = vdwg.mxu0
        %1061 = vmatprep.subr.mxu0 0.0
        %1062 = vmatpush1.msra.mxu0 %v565
        %1063 = vmatprep.subr.mxu0 0.0
        %1064 = vmatpush1.msra.mxu0 %v570
        %1065 = vmatprep.subr.mxu0 0.0
        %1066 = vmatpush1.msra.mxu0 0.0
        %1067 = vmatprep.subr.mxu0 0.0
        %1068 = vmatpush1.msra.mxu0 0.0
        %1069 = vmatprep.subr.mxu0 0.0
        %1070 = vmatpush1.msra.mxu0 0.0
        %1071 = vmatprep.subr.mxu0 0.0
        %1072 = vmatpush1.msra.mxu0 0.0
        %1073 = vmatprep.subr.mxu0 0.0
        %1074 = vmatpush1.msra.mxu0 0.0
        %1075 = vmatprep.subr.mxu0 0.0
        %1076 = vmatpush1.msra.mxu0 0.0
        %1077 = vmatprep.subr.mxu0 0.0
        %1078 = vmatpush1.msra.mxu0 0.0
        %1079 = vmatprep.subr.mxu0 0.0
        %1080 = vmatpush1.msra.mxu0 0.0
        %1081 = vmatprep.subr.mxu0 0.0
        %1082 = vmatpush1.msra.mxu0 0.0
        %1083 = vmatprep.subr.mxu0 0.0
        %1084 = vmatpush1.msra.mxu0 0.0
        %1085 = vmatprep.subr.mxu0 0.0
        %1086 = vmatpush1.msra.mxu0 0.0
        %1087 = vmatprep.subr.mxu0 0.0
        %1088 = vmatpush1.msra.mxu0 0.0
        %1089 = vmatprep.subr.mxu0 0.0
        %1090 = vmatpush1.msra.mxu0 0.0
        %1091 = vmatprep.subr.mxu0 0.0
        %1092 = vmatpush1.msra.mxu0 0.0
        %1093 = vmatprep.subr.mxu0 0.0
        %1094 = vmatpush1.msra.mxu0 0.0
        %1095 = vmatprep.subr.mxu0 0.0
        %1096 = vmatpush1.msra.mxu0 0.0
        %1097 = vmatprep.subr.mxu0 0.0
        %1098 = vmatpush1.msra.mxu0 0.0
        %1099 = vmatprep.subr.mxu0 0.0
        %1100 = vmatpush1.msra.mxu0 0.0
        %1101 = vmatprep.subr.mxu0 0.0
        %1102 = vmatpush1.msra.mxu0 0.0
        %1103 = vmatprep.subr.mxu0 0.0
        %1104 = vmatpush1.msra.mxu0 0.0
        %1105 = vmatprep.subr.mxu0 0.0
        %1106 = vmatpush1.msra.mxu0 0.0
        %1107 = vmatprep.subr.mxu0 0.0
        %1108 = vmatpush1.msra.mxu0 0.0
        %1109 = vmatprep.subr.mxu0 0.0
        %1110 = vmatpush1.msra.mxu0 0.0
        %1111 = vmatprep.subr.mxu0 0.0
        %1112 = vmatpush1.msra.mxu0 0.0
        %1113 = vmatprep.subr.mxu0 0.0
        %1114 = vmatpush1.msra.mxu0 0.0
        %1115 = vmatprep.subr.mxu0 0.0
        %1116 = vmatpush1.msra.mxu0 0.0
        %1117 = vmatprep.subr.mxu0 0.0
        %1118 = vmatpush1.msra.mxu0 0.0
        %1119 = vmatprep.subr.mxu0 0.0
        %1120 = vmatpush1.msra.mxu0 0.0
        %1121 = vmatprep.subr.mxu0 0.0
        %1122 = vmatpush1.msra.mxu0 0.0
        %1123 = vmatprep.subr.mxu0 0.0
        %1124 = vmatpush1.msra.mxu0 0.0
        %1125 = vmatprep.mubr.f32.mxu0 0.0
        %1126 = vmatmul.mubr.f32.gmra.mrb[0].mxu0 %v493
        %v1127 = vpop.f32.mrb[0].mxu0
        %v1128 = vadd.f32 0.0, %v1127
        %v1129 = vpop.f32.mrb[0].mxu0
        %1130 = vmatprep.mubr.f32.mxu0 0.0
        %1131 = vmatmul.mubr.f32.gmra.mrb[0].mxu0 %v496
        %v1132 = vpop.f32.mrb[0].mxu0
        %v1133 = vadd.f32 0.0, %v1132
        %v1134 = vpop.f32.mrb[0].mxu0
        %1135 = vdwg.mxu0
        %v1136 = vmul.f32 %v1128, 2.0
        %v1137 = vmul.f32 %v1133, 2.0
        %v1138 = vsub.f32 %v1136, %v482
        %v1139 = vsub.f32 %v1137, %v483
        %s1140 = scalar_lea.vmem %s3, 4
        %v1141 = vld [vmem:[%s1140] sm:$0x3]
        %v1143 = vsel %vm575, %v1138, 0
        %v1146 = vsel %vm575, %v1139, 0
        %v1149 = vsel %vm582, %v1141, 0
        %1151 = vmatprep.subr.mxu0 0.0
        %1152 = vmatpush1.msra.mxu0 %v1149
        %1153 = vmatprep.subr.mxu0 0.0
        %1154 = vmatpush1.msra.mxu0 0.0
        %1155 = vmatprep.subr.mxu0 0.0
        %1156 = vmatpush1.msra.mxu0 0.0
        %1157 = vmatprep.subr.mxu0 0.0
        %1158 = vmatpush1.msra.mxu0 0.0
        %1159 = vmatprep.subr.mxu0 0.0
        %1160 = vmatpush1.msra.mxu0 0.0
        %1161 = vmatprep.subr.mxu0 0.0
        %1162 = vmatpush1.msra.mxu0 0.0
        %1163 = vmatprep.subr.mxu0 0.0
        %1164 = vmatpush1.msra.mxu0 0.0
        %1165 = vmatprep.subr.mxu0 0.0
        %1166 = vmatpush1.msra.mxu0 0.0
        %1167 = vmatprep.subr.mxu0 0.0
        %1168 = vmatpush1.msra.mxu0 0.0
        %1169 = vmatprep.subr.mxu0 0.0
        %1170 = vmatpush1.msra.mxu0 0.0
        %1171 = vmatprep.subr.mxu0 0.0
        %1172 = vmatpush1.msra.mxu0 0.0
        %1173 = vmatprep.subr.mxu0 0.0
        %1174 = vmatpush1.msra.mxu0 0.0
        %1175 = vmatprep.subr.mxu0 0.0
        %1176 = vmatpush1.msra.mxu0 0.0
        %1177 = vmatprep.subr.mxu0 0.0
        %1178 = vmatpush1.msra.mxu0 0.0
        %1179 = vmatprep.subr.mxu0 0.0
        %1180 = vmatpush1.msra.mxu0 0.0
        %1181 = vmatprep.subr.mxu0 0.0
        %1182 = vmatpush1.msra.mxu0 0.0
        %1183 = vmatprep.subr.mxu0 0.0
        %1184 = vmatpush1.msra.mxu0 0.0
        %1185 = vmatprep.subr.mxu0 0.0
        %1186 = vmatpush1.msra.mxu0 0.0
        %1187 = vmatprep.subr.mxu0 0.0
        %1188 = vmatpush1.msra.mxu0 0.0
        %1189 = vmatprep.subr.mxu0 0.0
        %1190 = vmatpush1.msra.mxu0 0.0
        %1191 = vmatprep.subr.mxu0 0.0
        %1192 = vmatpush1.msra.mxu0 0.0
        %1193 = vmatprep.subr.mxu0 0.0
        %1194 = vmatpush1.msra.mxu0 0.0
        %1195 = vmatprep.subr.mxu0 0.0
        %1196 = vmatpush1.msra.mxu0 0.0
        %1197 = vmatprep.subr.mxu0 0.0
        %1198 = vmatpush1.msra.mxu0 0.0
        %1199 = vmatprep.subr.mxu0 0.0
        %1200 = vmatpush1.msra.mxu0 0.0
        %1201 = vmatprep.subr.mxu0 0.0
        %1202 = vmatpush1.msra.mxu0 0.0
        %1203 = vmatprep.subr.mxu0 0.0
        %1204 = vmatpush1.msra.mxu0 0.0
        %1205 = vmatprep.subr.mxu0 0.0
        %1206 = vmatpush1.msra.mxu0 0.0
        %1207 = vmatprep.subr.mxu0 0.0
        %1208 = vmatpush1.msra.mxu0 0.0
        %1209 = vmatprep.subr.mxu0 0.0
        %1210 = vmatpush1.msra.mxu0 0.0
        %1211 = vmatprep.subr.mxu0 0.0
        %1212 = vmatpush1.msra.mxu0 0.0
        %1213 = vmatprep.subr.mxu0 0.0
        %1214 = vmatpush1.msra.mxu0 0.0
        %1215 = vmatprep.mubr.f32.mxu0 0.0
        %1216 = vmatmul.mubr.f32.gmra.mrb[0].mxu0 %v1143
        %v1217 = vpop.f32.mrb[0].mxu0
        %v1218 = vadd.f32 0.0, %v1217
        %v1219 = vpop.f32.mrb[0].mxu0
        %1220 = vmatprep.mubr.f32.mxu0 0.0
        %1221 = vmatmul.mubr.f32.gmra.mrb[0].mxu0 %v1146
        %v1222 = vpop.f32.mrb[0].mxu0
        %v1223 = vadd.f32 0.0, %v1222
        %v1224 = vpop.f32.mrb[0].mxu0
        %1225 = vdwg.mxu0
        %v1226 = vadd.f32 %v737, %v1218
        %v1227 = vadd.f32 %v742, %v1223
        %s1228 = scalar_lea.vmem %s3, 14
        %v1229 = vld [vmem:[%s1228] sm:$0x3]
        %v1231 = vsel %vm582, %v1229, 0
        %1233 = vmatprep.subr.mxu0 0.0
        %1234 = vmatpush1.msra.mxu0 %v1231
        %1235 = vmatprep.subr.mxu0 0.0
        %1236 = vmatpush1.msra.mxu0 0.0
        %1237 = vmatprep.subr.mxu0 0.0
        %1238 = vmatpush1.msra.mxu0 0.0
        %1239 = vmatprep.subr.mxu0 0.0
        %1240 = vmatpush1.msra.mxu0 0.0
        %1241 = vmatprep.subr.mxu0 0.0
        %1242 = vmatpush1.msra.mxu0 0.0
        %1243 = vmatprep.subr.mxu0 0.0
        %1244 = vmatpush1.msra.mxu0 0.0
        %1245 = vmatprep.subr.mxu0 0.0
        %1246 = vmatpush1.msra.mxu0 0.0
        %1247 = vmatprep.subr.mxu0 0.0
        %1248 = vmatpush1.msra.mxu0 0.0
        %1249 = vmatprep.subr.mxu0 0.0
        %1250 = vmatpush1.msra.mxu0 0.0
        %1251 = vmatprep.subr.mxu0 0.0
        %1252 = vmatpush1.msra.mxu0 0.0
        %1253 = vmatprep.subr.mxu0 0.0
        %1254 = vmatpush1.msra.mxu0 0.0
        %1255 = vmatprep.subr.mxu0 0.0
        %1256 = vmatpush1.msra.mxu0 0.0
        %1257 = vmatprep.subr.mxu0 0.0
        %1258 = vmatpush1.msra.mxu0 0.0
        %1259 = vmatprep.subr.mxu0 0.0
        %1260 = vmatpush1.msra.mxu0 0.0
        %1261 = vmatprep.subr.mxu0 0.0
        %1262 = vmatpush1.msra.mxu0 0.0
        %1263 = vmatprep.subr.mxu0 0.0
        %1264 = vmatpush1.msra.mxu0 0.0
        %1265 = vmatprep.subr.mxu0 0.0
        %1266 = vmatpush1.msra.mxu0 0.0
        %1267 = vmatprep.subr.mxu0 0.0
        %1268 = vmatpush1.msra.mxu0 0.0
        %1269 = vmatprep.subr.mxu0 0.0
        %1270 = vmatpush1.msra.mxu0 0.0
        %1271 = vmatprep.subr.mxu0 0.0
        %1272 = vmatpush1.msra.mxu0 0.0
        %1273 = vmatprep.subr.mxu0 0.0
        %1274 = vmatpush1.msra.mxu0 0.0
        %1275 = vmatprep.subr.mxu0 0.0
        %1276 = vmatpush1.msra.mxu0 0.0
        %1277 = vmatprep.subr.mxu0 0.0
        %1278 = vmatpush1.msra.mxu0 0.0
        %1279 = vmatprep.subr.mxu0 0.0
        %1280 = vmatpush1.msra.mxu0 0.0
        %1281 = vmatprep.subr.mxu0 0.0
        %1282 = vmatpush1.msra.mxu0 0.0
        %1283 = vmatprep.subr.mxu0 0.0
        %1284 = vmatpush1.msra.mxu0 0.0
        %1285 = vmatprep.subr.mxu0 0.0
        %1286 = vmatpush1.msra.mxu0 0.0
        %1287 = vmatprep.subr.mxu0 0.0
        %1288 = vmatpush1.msra.mxu0 0.0
        %1289 = vmatprep.subr.mxu0 0.0
        %1290 = vmatpush1.msra.mxu0 0.0
        %1291 = vmatprep.subr.mxu0 0.0
        %1292 = vmatpush1.msra.mxu0 0.0
        %1293 = vmatprep.subr.mxu0 0.0
        %1294 = vmatpush1.msra.mxu0 0.0
        %1295 = vmatprep.subr.mxu0 0.0
        %1296 = vmatpush1.msra.mxu0 0.0
        %1297 = vmatprep.mubr.f32.mxu0 0.0
        %1298 = vmatmul.mubr.f32.gmra.mrb[0].mxu0 %v1143
        %v1299 = vpop.f32.mrb[0].mxu0
        %v1300 = vadd.f32 0.0, %v1299
        %v1301 = vpop.f32.mrb[0].mxu0
        %1302 = vmatprep.mubr.f32.mxu0 0.0
        %1303 = vmatmul.mubr.f32.gmra.mrb[0].mxu0 %v1146
        %v1304 = vpop.f32.mrb[0].mxu0
        %v1305 = vadd.f32 0.0, %v1304
        %v1306 = vpop.f32.mrb[0].mxu0
        %1307 = vdwg.mxu0
        %v1308 = vadd.f32 %v895, %v1300
        %v1309 = vadd.f32 %v900, %v1305
        %s1310 = scalar_lea.vmem %s3, 24
        %v1311 = vld [vmem:[%s1310] sm:$0x3]
        %v1313 = vsel %vm582, %v1311, 0
        %1315 = vmatprep.subr.mxu0 0.0
        %1316 = vmatpush1.msra.mxu0 %v1313
        %1317 = vmatprep.subr.mxu0 0.0
        %1318 = vmatpush1.msra.mxu0 0.0
        %1319 = vmatprep.subr.mxu0 0.0
        %1320 = vmatpush1.msra.mxu0 0.0
        %1321 = vmatprep.subr.mxu0 0.0
        %1322 = vmatpush1.msra.mxu0 0.0
        %1323 = vmatprep.subr.mxu0 0.0
        %1324 = vmatpush1.msra.mxu0 0.0
        %1325 = vmatprep.subr.mxu0 0.0
        %1326 = vmatpush1.msra.mxu0 0.0
        %1327 = vmatprep.subr.mxu0 0.0
        %1328 = vmatpush1.msra.mxu0 0.0
        %1329 = vmatprep.subr.mxu0 0.0
        %1330 = vmatpush1.msra.mxu0 0.0
        %1331 = vmatprep.subr.mxu0 0.0
        %1332 = vmatpush1.msra.mxu0 0.0
        %1333 = vmatprep.subr.mxu0 0.0
        %1334 = vmatpush1.msra.mxu0 0.0
        %1335 = vmatprep.subr.mxu0 0.0
        %1336 = vmatpush1.msra.mxu0 0.0
        %1337 = vmatprep.subr.mxu0 0.0
        %1338 = vmatpush1.msra.mxu0 0.0
        %1339 = vmatprep.subr.mxu0 0.0
        %1340 = vmatpush1.msra.mxu0 0.0
        %1341 = vmatprep.subr.mxu0 0.0
        %1342 = vmatpush1.msra.mxu0 0.0
        %1343 = vmatprep.subr.mxu0 0.0
        %1344 = vmatpush1.msra.mxu0 0.0
        %1345 = vmatprep.subr.mxu0 0.0
        %1346 = vmatpush1.msra.mxu0 0.0
        %1347 = vmatprep.subr.mxu0 0.0
        %1348 = vmatpush1.msra.mxu0 0.0
        %1349 = vmatprep.subr.mxu0 0.0
        %1350 = vmatpush1.msra.mxu0 0.0
        %1351 = vmatprep.subr.mxu0 0.0
        %1352 = vmatpush1.msra.mxu0 0.0
        %1353 = vmatprep.subr.mxu0 0.0
        %1354 = vmatpush1.msra.mxu0 0.0
        %1355 = vmatprep.subr.mxu0 0.0
        %1356 = vmatpush1.msra.mxu0 0.0
        %1357 = vmatprep.subr.mxu0 0.0
        %1358 = vmatpush1.msra.mxu0 0.0
        %1359 = vmatprep.subr.mxu0 0.0
        %1360 = vmatpush1.msra.mxu0 0.0
        %1361 = vmatprep.subr.mxu0 0.0
        %1362 = vmatpush1.msra.mxu0 0.0
        %1363 = vmatprep.subr.mxu0 0.0
        %1364 = vmatpush1.msra.mxu0 0.0
        %1365 = vmatprep.subr.mxu0 0.0
        %1366 = vmatpush1.msra.mxu0 0.0
        %1367 = vmatprep.subr.mxu0 0.0
        %1368 = vmatpush1.msra.mxu0 0.0
        %1369 = vmatprep.subr.mxu0 0.0
        %1370 = vmatpush1.msra.mxu0 0.0
        %1371 = vmatprep.subr.mxu0 0.0
        %1372 = vmatpush1.msra.mxu0 0.0
        %1373 = vmatprep.subr.mxu0 0.0
        %1374 = vmatpush1.msra.mxu0 0.0
        %1375 = vmatprep.subr.mxu0 0.0
        %1376 = vmatpush1.msra.mxu0 0.0
        %1377 = vmatprep.subr.mxu0 0.0
        %1378 = vmatpush1.msra.mxu0 0.0
        %1379 = vmatprep.mubr.f32.mxu0 0.0
        %1380 = vmatmul.mubr.f32.gmra.mrb[0].mxu0 %v1143
        %v1381 = vpop.f32.mrb[0].mxu0
        %v1382 = vadd.f32 0.0, %v1381
        %v1383 = vpop.f32.mrb[0].mxu0
        %1384 = vmatprep.mubr.f32.mxu0 0.0
        %1385 = vmatmul.mubr.f32.gmra.mrb[0].mxu0 %v1146
        %v1386 = vpop.f32.mrb[0].mxu0
        %v1387 = vadd.f32 0.0, %v1386
        %v1388 = vpop.f32.mrb[0].mxu0
        %1389 = vdwg.mxu0
        %v1390 = vadd.f32 %v1053, %v1382
        %v1391 = vadd.f32 %v1058, %v1387
        %v1393 = vsel %vm491, %v480, 0
        %v1396 = vsel %vm491, %v481, 0
        %1398 = vmatprep.subr.mxu0 0.0
        %1399 = vmatpush1.msra.mxu0 %v565
        %1400 = vmatprep.subr.mxu0 0.0
        %1401 = vmatpush1.msra.mxu0 %v570
        %1402 = vmatprep.subr.mxu0 0.0
        %1403 = vmatpush1.msra.mxu0 0.0
        %1404 = vmatprep.subr.mxu0 0.0
        %1405 = vmatpush1.msra.mxu0 0.0
        %1406 = vmatprep.subr.mxu0 0.0
        %1407 = vmatpush1.msra.mxu0 0.0
        %1408 = vmatprep.subr.mxu0 0.0
        %1409 = vmatpush1.msra.mxu0 0.0
        %1410 = vmatprep.subr.mxu0 0.0
        %1411 = vmatpush1.msra.mxu0 0.0
        %1412 = vmatprep.subr.mxu0 0.0
        %1413 = vmatpush1.msra.mxu0 0.0
        %1414 = vmatprep.subr.mxu0 0.0
        %1415 = vmatpush1.msra.mxu0 0.0
        %1416 = vmatprep.subr.mxu0 0.0
        %1417 = vmatpush1.msra.mxu0 0.0
        %1418 = vmatprep.subr.mxu0 0.0
        %1419 = vmatpush1.msra.mxu0 0.0
        %1420 = vmatprep.subr.mxu0 0.0
        %1421 = vmatpush1.msra.mxu0 0.0
        %1422 = vmatprep.subr.mxu0 0.0
        %1423 = vmatpush1.msra.mxu0 0.0
        %1424 = vmatprep.subr.mxu0 0.0
        %1425 = vmatpush1.msra.mxu0 0.0
        %1426 = vmatprep.subr.mxu0 0.0
        %1427 = vmatpush1.msra.mxu0 0.0
        %1428 = vmatprep.subr.mxu0 0.0
        %1429 = vmatpush1.msra.mxu0 0.0
        %1430 = vmatprep.subr.mxu0 0.0
        %1431 = vmatpush1.msra.mxu0 0.0
        %1432 = vmatprep.subr.mxu0 0.0
        %1433 = vmatpush1.msra.mxu0 0.0
        %1434 = vmatprep.subr.mxu0 0.0
        %1435 = vmatpush1.msra.mxu0 0.0
        %1436 = vmatprep.subr.mxu0 0.0
        %1437 = vmatpush1.msra.mxu0 0.0
        %1438 = vmatprep.subr.mxu0 0.0
        %1439 = vmatpush1.msra.mxu0 0.0
        %1440 = vmatprep.subr.mxu0 0.0
        %1441 = vmatpush1.msra.mxu0 0.0
        %1442 = vmatprep.subr.mxu0 0.0
        %1443 = vmatpush1.msra.mxu0 0.0
        %1444 = vmatprep.subr.mxu0 0.0
        %1445 = vmatpush1.msra.mxu0 0.0
        %1446 = vmatprep.subr.mxu0 0.0
        %1447 = vmatpush1.msra.mxu0 0.0
        %1448 = vmatprep.subr.mxu0 0.0
        %1449 = vmatpush1.msra.mxu0 0.0
        %1450 = vmatprep.subr.mxu0 0.0
        %1451 = vmatpush1.msra.mxu0 0.0
        %1452 = vmatprep.subr.mxu0 0.0
        %1453 = vmatpush1.msra.mxu0 0.0
        %1454 = vmatprep.subr.mxu0 0.0
        %1455 = vmatpush1.msra.mxu0 0.0
        %1456 = vmatprep.subr.mxu0 0.0
        %1457 = vmatpush1.msra.mxu0 0.0
        %1458 = vmatprep.subr.mxu0 0.0
        %1459 = vmatpush1.msra.mxu0 0.0
        %1460 = vmatprep.subr.mxu0 0.0
        %1461 = vmatpush1.msra.mxu0 0.0
        %1462 = vmatprep.mubr.f32.mxu0 0.0
        %1463 = vmatmul.mubr.f32.gmra.mrb[0].mxu0 %v1393
        %v1464 = vpop.f32.mrb[0].mxu0
        %v1465 = vadd.f32 0.0, %v1464
        %v1466 = vpop.f32.mrb[0].mxu0
        %1467 = vmatprep.mubr.f32.mxu0 0.0
        %1468 = vmatmul.mubr.f32.gmra.mrb[0].mxu0 %v1396
        %v1469 = vpop.f32.mrb[0].mxu0
        %v1470 = vadd.f32 0.0, %v1469
        %v1471 = vpop.f32.mrb[0].mxu0
        %1472 = vdwg.mxu0
        %s1473 = scalar_lea.vmem %s3, 6
        %v1474 = vld [vmem:[%s1473] sm:$0x3]
        %v1476 = vsel %vm575, %v1465, 0
        %v1479 = vsel %vm575, %v1470, 0
        %v1482 = vsel %vm582, %v1474, 0
        %1484 = vmatprep.subr.mxu0 0.0
        %1485 = vmatpush1.msra.mxu0 %v1482
        %1486 = vmatprep.subr.mxu0 0.0
        %1487 = vmatpush1.msra.mxu0 0.0
        %1488 = vmatprep.subr.mxu0 0.0
        %1489 = vmatpush1.msra.mxu0 0.0
        %1490 = vmatprep.subr.mxu0 0.0
        %1491 = vmatpush1.msra.mxu0 0.0
        %1492 = vmatprep.subr.mxu0 0.0
        %1493 = vmatpush1.msra.mxu0 0.0
        %1494 = vmatprep.subr.mxu0 0.0
        %1495 = vmatpush1.msra.mxu0 0.0
        %1496 = vmatprep.subr.mxu0 0.0
        %1497 = vmatpush1.msra.mxu0 0.0
        %1498 = vmatprep.subr.mxu0 0.0
        %1499 = vmatpush1.msra.mxu0 0.0
        %1500 = vmatprep.subr.mxu0 0.0
        %1501 = vmatpush1.msra.mxu0 0.0
        %1502 = vmatprep.subr.mxu0 0.0
        %1503 = vmatpush1.msra.mxu0 0.0
        %1504 = vmatprep.subr.mxu0 0.0
        %1505 = vmatpush1.msra.mxu0 0.0
        %1506 = vmatprep.subr.mxu0 0.0
        %1507 = vmatpush1.msra.mxu0 0.0
        %1508 = vmatprep.subr.mxu0 0.0
        %1509 = vmatpush1.msra.mxu0 0.0
        %1510 = vmatprep.subr.mxu0 0.0
        %1511 = vmatpush1.msra.mxu0 0.0
        %1512 = vmatprep.subr.mxu0 0.0
        %1513 = vmatpush1.msra.mxu0 0.0
        %1514 = vmatprep.subr.mxu0 0.0
        %1515 = vmatpush1.msra.mxu0 0.0
        %1516 = vmatprep.subr.mxu0 0.0
        %1517 = vmatpush1.msra.mxu0 0.0
        %1518 = vmatprep.subr.mxu0 0.0
        %1519 = vmatpush1.msra.mxu0 0.0
        %1520 = vmatprep.subr.mxu0 0.0
        %1521 = vmatpush1.msra.mxu0 0.0
        %1522 = vmatprep.subr.mxu0 0.0
        %1523 = vmatpush1.msra.mxu0 0.0
        %1524 = vmatprep.subr.mxu0 0.0
        %1525 = vmatpush1.msra.mxu0 0.0
        %1526 = vmatprep.subr.mxu0 0.0
        %1527 = vmatpush1.msra.mxu0 0.0
        %1528 = vmatprep.subr.mxu0 0.0
        %1529 = vmatpush1.msra.mxu0 0.0
        %1530 = vmatprep.subr.mxu0 0.0
        %1531 = vmatpush1.msra.mxu0 0.0
        %1532 = vmatprep.subr.mxu0 0.0
        %1533 = vmatpush1.msra.mxu0 0.0
        %1534 = vmatprep.subr.mxu0 0.0
        %1535 = vmatpush1.msra.mxu0 0.0
        %1536 = vmatprep.subr.mxu0 0.0
        %1537 = vmatpush1.msra.mxu0 0.0
        %1538 = vmatprep.subr.mxu0 0.0
        %1539 = vmatpush1.msra.mxu0 0.0
        %1540 = vmatprep.subr.mxu0 0.0
        %1541 = vmatpush1.msra.mxu0 0.0
        %1542 = vmatprep.subr.mxu0 0.0
        %1543 = vmatpush1.msra.mxu0 0.0
        %1544 = vmatprep.subr.mxu0 0.0
        %1545 = vmatpush1.msra.mxu0 0.0
        %1546 = vmatprep.subr.mxu0 0.0
        %1547 = vmatpush1.msra.mxu0 0.0
        %1548 = vmatprep.mubr.f32.mxu0 0.0
        %1549 = vmatmul.mubr.f32.gmra.mrb[0].mxu0 %v1476
        %v1550 = vpop.f32.mrb[0].mxu0
        %v1551 = vadd.f32 0.0, %v1550
        %v1552 = vpop.f32.mrb[0].mxu0
        %1553 = vmatprep.mubr.f32.mxu0 0.0
        %1554 = vmatmul.mubr.f32.gmra.mrb[0].mxu0 %v1479
        %v1555 = vpop.f32.mrb[0].mxu0
        %v1556 = vadd.f32 0.0, %v1555
        %v1557 = vpop.f32.mrb[0].mxu0
        %1558 = vdwg.mxu0
        %v1559 = vadd.f32 %v1226, %v1551
        %v1560 = vadd.f32 %v1227, %v1556
        %s1561 = scalar_lea.vmem %s3, 16
        %v1562 = vld [vmem:[%s1561] sm:$0x3]
        %v1564 = vsel %vm582, %v1562, 0
        %1566 = vmatprep.subr.mxu0 0.0
        %1567 = vmatpush1.msra.mxu0 %v1564
        %1568 = vmatprep.subr.mxu0 0.0
        %1569 = vmatpush1.msra.mxu0 0.0
        %1570 = vmatprep.subr.mxu0 0.0
        %1571 = vmatpush1.msra.mxu0 0.0
        %1572 = vmatprep.subr.mxu0 0.0
        %1573 = vmatpush1.msra.mxu0 0.0
        %1574 = vmatprep.subr.mxu0 0.0
        %1575 = vmatpush1.msra.mxu0 0.0
        %1576 = vmatprep.subr.mxu0 0.0
        %1577 = vmatpush1.msra.mxu0 0.0
        %1578 = vmatprep.subr.mxu0 0.0
        %1579 = vmatpush1.msra.mxu0 0.0
        %1580 = vmatprep.subr.mxu0 0.0
        %1581 = vmatpush1.msra.mxu0 0.0
        %1582 = vmatprep.subr.mxu0 0.0
        %1583 = vmatpush1.msra.mxu0 0.0
        %1584 = vmatprep.subr.mxu0 0.0
        %1585 = vmatpush1.msra.mxu0 0.0
        %1586 = vmatprep.subr.mxu0 0.0
        %1587 = vmatpush1.msra.mxu0 0.0
        %1588 = vmatprep.subr.mxu0 0.0
        %1589 = vmatpush1.msra.mxu0 0.0
        %1590 = vmatprep.subr.mxu0 0.0
        %1591 = vmatpush1.msra.mxu0 0.0
        %1592 = vmatprep.subr.mxu0 0.0
        %1593 = vmatpush1.msra.mxu0 0.0
        %1594 = vmatprep.subr.mxu0 0.0
        %1595 = vmatpush1.msra.mxu0 0.0
        %1596 = vmatprep.subr.mxu0 0.0
        %1597 = vmatpush1.msra.mxu0 0.0
        %1598 = vmatprep.subr.mxu0 0.0
        %1599 = vmatpush1.msra.mxu0 0.0
        %1600 = vmatprep.subr.mxu0 0.0
        %1601 = vmatpush1.msra.mxu0 0.0
        %1602 = vmatprep.subr.mxu0 0.0
        %1603 = vmatpush1.msra.mxu0 0.0
        %1604 = vmatprep.subr.mxu0 0.0
        %1605 = vmatpush1.msra.mxu0 0.0
        %1606 = vmatprep.subr.mxu0 0.0
        %1607 = vmatpush1.msra.mxu0 0.0
        %1608 = vmatprep.subr.mxu0 0.0
        %1609 = vmatpush1.msra.mxu0 0.0
        %1610 = vmatprep.subr.mxu0 0.0
        %1611 = vmatpush1.msra.mxu0 0.0
        %1612 = vmatprep.subr.mxu0 0.0
        %1613 = vmatpush1.msra.mxu0 0.0
        %1614 = vmatprep.subr.mxu0 0.0
        %1615 = vmatpush1.msra.mxu0 0.0
        %1616 = vmatprep.subr.mxu0 0.0
        %1617 = vmatpush1.msra.mxu0 0.0
        %1618 = vmatprep.subr.mxu0 0.0
        %1619 = vmatpush1.msra.mxu0 0.0
        %1620 = vmatprep.subr.mxu0 0.0
        %1621 = vmatpush1.msra.mxu0 0.0
        %1622 = vmatprep.subr.mxu0 0.0
        %1623 = vmatpush1.msra.mxu0 0.0
        %1624 = vmatprep.subr.mxu0 0.0
        %1625 = vmatpush1.msra.mxu0 0.0
        %1626 = vmatprep.subr.mxu0 0.0
        %1627 = vmatpush1.msra.mxu0 0.0
        %1628 = vmatprep.subr.mxu0 0.0
        %1629 = vmatpush1.msra.mxu0 0.0
        %1630 = vmatprep.mubr.f32.mxu0 0.0
        %1631 = vmatmul.mubr.f32.gmra.mrb[0].mxu0 %v1476
        %v1632 = vpop.f32.mrb[0].mxu0
        %v1633 = vadd.f32 0.0, %v1632
        %v1634 = vpop.f32.mrb[0].mxu0
        %1635 = vmatprep.mubr.f32.mxu0 0.0
        %1636 = vmatmul.mubr.f32.gmra.mrb[0].mxu0 %v1479
        %v1637 = vpop.f32.mrb[0].mxu0
        %v1638 = vadd.f32 0.0, %v1637
        %v1639 = vpop.f32.mrb[0].mxu0
        %1640 = vdwg.mxu0
        %v1641 = vadd.f32 %v1308, %v1633
        %v1642 = vadd.f32 %v1309, %v1638
        %s1643 = scalar_lea.vmem %s3, 26
        %v1644 = vld [vmem:[%s1643] sm:$0x3]
        %v1646 = vsel %vm582, %v1644, 0
        %1648 = vmatprep.subr.mxu0 0.0
        %1649 = vmatpush1.msra.mxu0 %v1646
        %1650 = vmatprep.subr.mxu0 0.0
        %1651 = vmatpush1.msra.mxu0 0.0
        %1652 = vmatprep.subr.mxu0 0.0
        %1653 = vmatpush1.msra.mxu0 0.0
        %1654 = vmatprep.subr.mxu0 0.0
        %1655 = vmatpush1.msra.mxu0 0.0
        %1656 = vmatprep.subr.mxu0 0.0
        %1657 = vmatpush1.msra.mxu0 0.0
        %1658 = vmatprep.subr.mxu0 0.0
        %1659 = vmatpush1.msra.mxu0 0.0
        %1660 = vmatprep.subr.mxu0 0.0
        %1661 = vmatpush1.msra.mxu0 0.0
        %1662 = vmatprep.subr.mxu0 0.0
        %1663 = vmatpush1.msra.mxu0 0.0
        %1664 = vmatprep.subr.mxu0 0.0
        %1665 = vmatpush1.msra.mxu0 0.0
        %1666 = vmatprep.subr.mxu0 0.0
        %1667 = vmatpush1.msra.mxu0 0.0
        %1668 = vmatprep.subr.mxu0 0.0
        %1669 = vmatpush1.msra.mxu0 0.0
        %1670 = vmatprep.subr.mxu0 0.0
        %1671 = vmatpush1.msra.mxu0 0.0
        %1672 = vmatprep.subr.mxu0 0.0
        %1673 = vmatpush1.msra.mxu0 0.0
        %1674 = vmatprep.subr.mxu0 0.0
        %1675 = vmatpush1.msra.mxu0 0.0
        %1676 = vmatprep.subr.mxu0 0.0
        %1677 = vmatpush1.msra.mxu0 0.0
        %1678 = vmatprep.subr.mxu0 0.0
        %1679 = vmatpush1.msra.mxu0 0.0
        %1680 = vmatprep.subr.mxu0 0.0
        %1681 = vmatpush1.msra.mxu0 0.0
        %1682 = vmatprep.subr.mxu0 0.0
        %1683 = vmatpush1.msra.mxu0 0.0
        %1684 = vmatprep.subr.mxu0 0.0
        %1685 = vmatpush1.msra.mxu0 0.0
        %1686 = vmatprep.subr.mxu0 0.0
        %1687 = vmatpush1.msra.mxu0 0.0
        %1688 = vmatprep.subr.mxu0 0.0
        %1689 = vmatpush1.msra.mxu0 0.0
        %1690 = vmatprep.subr.mxu0 0.0
        %1691 = vmatpush1.msra.mxu0 0.0
        %1692 = vmatprep.subr.mxu0 0.0
        %1693 = vmatpush1.msra.mxu0 0.0
        %1694 = vmatprep.subr.mxu0 0.0
        %1695 = vmatpush1.msra.mxu0 0.0
        %1696 = vmatprep.subr.mxu0 0.0
        %1697 = vmatpush1.msra.mxu0 0.0
        %1698 = vmatprep.subr.mxu0 0.0
        %1699 = vmatpush1.msra.mxu0 0.0
        %1700 = vmatprep.subr.mxu0 0.0
        %1701 = vmatpush1.msra.mxu0 0.0
        %1702 = vmatprep.subr.mxu0 0.0
        %1703 = vmatpush1.msra.mxu0 0.0
        %1704 = vmatprep.subr.mxu0 0.0
        %1705 = vmatpush1.msra.mxu0 0.0
        %1706 = vmatprep.subr.mxu0 0.0
        %1707 = vmatpush1.msra.mxu0 0.0
        %1708 = vmatprep.subr.mxu0 0.0
        %1709 = vmatpush1.msra.mxu0 0.0
        %1710 = vmatprep.subr.mxu0 0.0
        %1711 = vmatpush1.msra.mxu0 0.0
        %1712 = vmatprep.mubr.f32.mxu0 0.0
        %1713 = vmatmul.mubr.f32.gmra.mrb[0].mxu0 %v1476
        %v1714 = vpop.f32.mrb[0].mxu0
        %v1715 = vadd.f32 0.0, %v1714
        %v1716 = vpop.f32.mrb[0].mxu0
        %1717 = vmatprep.mubr.f32.mxu0 0.0
        %1718 = vmatmul.mubr.f32.gmra.mrb[0].mxu0 %v1479
        %v1719 = vpop.f32.mrb[0].mxu0
        %v1720 = vadd.f32 0.0, %v1719
        %v1721 = vpop.f32.mrb[0].mxu0
        %1722 = vdwg.mxu0
        %v1723 = vadd.f32 %v1390, %v1715
        %v1724 = vadd.f32 %v1391, %v1720
        %1725 = vmatprep.subr.mxu0 0.0
        %1726 = vmatpush1.msra.mxu0 %v1465
        %1727 = vmatprep.subr.mxu0 0.0
        %1728 = vmatpush1.msra.mxu0 %v1470
        %1729 = vmatprep.subr.mxu0 0.0
        %1730 = vmatpush1.msra.mxu0 0.0
        %1731 = vmatprep.subr.mxu0 0.0
        %1732 = vmatpush1.msra.mxu0 0.0
        %1733 = vmatprep.subr.mxu0 0.0
        %1734 = vmatpush1.msra.mxu0 0.0
        %1735 = vmatprep.subr.mxu0 0.0
        %1736 = vmatpush1.msra.mxu0 0.0
        %1737 = vmatprep.subr.mxu0 0.0
        %1738 = vmatpush1.msra.mxu0 0.0
        %1739 = vmatprep.subr.mxu0 0.0
        %1740 = vmatpush1.msra.mxu0 0.0
        %1741 = vmatprep.subr.mxu0 0.0
        %1742 = vmatpush1.msra.mxu0 0.0
        %1743 = vmatprep.subr.mxu0 0.0
        %1744 = vmatpush1.msra.mxu0 0.0
        %1745 = vmatprep.subr.mxu0 0.0
        %1746 = vmatpush1.msra.mxu0 0.0
        %1747 = vmatprep.subr.mxu0 0.0
        %1748 = vmatpush1.msra.mxu0 0.0
        %1749 = vmatprep.subr.mxu0 0.0
        %1750 = vmatpush1.msra.mxu0 0.0
        %1751 = vmatprep.subr.mxu0 0.0
        %1752 = vmatpush1.msra.mxu0 0.0
        %1753 = vmatprep.subr.mxu0 0.0
        %1754 = vmatpush1.msra.mxu0 0.0
        %1755 = vmatprep.subr.mxu0 0.0
        %1756 = vmatpush1.msra.mxu0 0.0
        %1757 = vmatprep.subr.mxu0 0.0
        %1758 = vmatpush1.msra.mxu0 0.0
        %1759 = vmatprep.subr.mxu0 0.0
        %1760 = vmatpush1.msra.mxu0 0.0
        %1761 = vmatprep.subr.mxu0 0.0
        %1762 = vmatpush1.msra.mxu0 0.0
        %1763 = vmatprep.subr.mxu0 0.0
        %1764 = vmatpush1.msra.mxu0 0.0
        %1765 = vmatprep.subr.mxu0 0.0
        %1766 = vmatpush1.msra.mxu0 0.0
        %1767 = vmatprep.subr.mxu0 0.0
        %1768 = vmatpush1.msra.mxu0 0.0
        %1769 = vmatprep.subr.mxu0 0.0
        %1770 = vmatpush1.msra.mxu0 0.0
        %1771 = vmatprep.subr.mxu0 0.0
        %1772 = vmatpush1.msra.mxu0 0.0
        %1773 = vmatprep.subr.mxu0 0.0
        %1774 = vmatpush1.msra.mxu0 0.0
        %1775 = vmatprep.subr.mxu0 0.0
        %1776 = vmatpush1.msra.mxu0 0.0
        %1777 = vmatprep.subr.mxu0 0.0
        %1778 = vmatpush1.msra.mxu0 0.0
        %1779 = vmatprep.subr.mxu0 0.0
        %1780 = vmatpush1.msra.mxu0 0.0
        %1781 = vmatprep.subr.mxu0 0.0
        %1782 = vmatpush1.msra.mxu0 0.0
        %1783 = vmatprep.subr.mxu0 0.0
        %1784 = vmatpush1.msra.mxu0 0.0
        %1785 = vmatprep.subr.mxu0 0.0
        %1786 = vmatpush1.msra.mxu0 0.0
        %1787 = vmatprep.subr.mxu0 0.0
        %1788 = vmatpush1.msra.mxu0 0.0
        %1789 = vmatprep.mubr.f32.mxu0 0.0
        %1790 = vmatmul.mubr.f32.gmra.mrb[0].mxu0 %v1393
        %v1791 = vpop.f32.mrb[0].mxu0
        %v1792 = vadd.f32 0.0, %v1791
        %v1793 = vpop.f32.mrb[0].mxu0
        %1794 = vmatprep.mubr.f32.mxu0 0.0
        %1795 = vmatmul.mubr.f32.gmra.mrb[0].mxu0 %v1396
        %v1796 = vpop.f32.mrb[0].mxu0
        %v1797 = vadd.f32 0.0, %v1796
        %v1798 = vpop.f32.mrb[0].mxu0
        %1799 = vdwg.mxu0
        %v1800 = vmul.f32 %v1792, 2.0
        %v1801 = vmul.f32 %v1797, 2.0
        %v1802 = vsub.f32 %v1800, %v565
        %v1803 = vsub.f32 %v1801, %v570
        %s1804 = scalar_lea.vmem %s3, 8
        %v1805 = vld [vmem:[%s1804] sm:$0x3]
        %v1807 = vsel %vm575, %v1802, 0
        %v1810 = vsel %vm575, %v1803, 0
        %v1813 = vsel %vm582, %v1805, 0
        %1815 = vmatprep.subr.mxu0 0.0
        %1816 = vmatpush1.msra.mxu0 %v1813
        %1817 = vmatprep.subr.mxu0 0.0
        %1818 = vmatpush1.msra.mxu0 0.0
        %1819 = vmatprep.subr.mxu0 0.0
        %1820 = vmatpush1.msra.mxu0 0.0
        %1821 = vmatprep.subr.mxu0 0.0
        %1822 = vmatpush1.msra.mxu0 0.0
        %1823 = vmatprep.subr.mxu0 0.0
        %1824 = vmatpush1.msra.mxu0 0.0
        %1825 = vmatprep.subr.mxu0 0.0
        %1826 = vmatpush1.msra.mxu0 0.0
        %1827 = vmatprep.subr.mxu0 0.0
        %1828 = vmatpush1.msra.mxu0 0.0
        %1829 = vmatprep.subr.mxu0 0.0
        %1830 = vmatpush1.msra.mxu0 0.0
        %1831 = vmatprep.subr.mxu0 0.0
        %1832 = vmatpush1.msra.mxu0 0.0
        %1833 = vmatprep.subr.mxu0 0.0
        %1834 = vmatpush1.msra.mxu0 0.0
        %1835 = vmatprep.subr.mxu0 0.0
        %1836 = vmatpush1.msra.mxu0 0.0
        %1837 = vmatprep.subr.mxu0 0.0
        %1838 = vmatpush1.msra.mxu0 0.0
        %1839 = vmatprep.subr.mxu0 0.0
        %1840 = vmatpush1.msra.mxu0 0.0
        %1841 = vmatprep.subr.mxu0 0.0
        %1842 = vmatpush1.msra.mxu0 0.0
        %1843 = vmatprep.subr.mxu0 0.0
        %1844 = vmatpush1.msra.mxu0 0.0
        %1845 = vmatprep.subr.mxu0 0.0
        %1846 = vmatpush1.msra.mxu0 0.0
        %1847 = vmatprep.subr.mxu0 0.0
        %1848 = vmatpush1.msra.mxu0 0.0
        %1849 = vmatprep.subr.mxu0 0.0
        %1850 = vmatpush1.msra.mxu0 0.0
        %1851 = vmatprep.subr.mxu0 0.0
        %1852 = vmatpush1.msra.mxu0 0.0
        %1853 = vmatprep.subr.mxu0 0.0
        %1854 = vmatpush1.msra.mxu0 0.0
        %1855 = vmatprep.subr.mxu0 0.0
        %1856 = vmatpush1.msra.mxu0 0.0
        %1857 = vmatprep.subr.mxu0 0.0
        %1858 = vmatpush1.msra.mxu0 0.0
        %1859 = vmatprep.subr.mxu0 0.0
        %1860 = vmatpush1.msra.mxu0 0.0
        %1861 = vmatprep.subr.mxu0 0.0
        %1862 = vmatpush1.msra.mxu0 0.0
        %1863 = vmatprep.subr.mxu0 0.0
        %1864 = vmatpush1.msra.mxu0 0.0
        %1865 = vmatprep.subr.mxu0 0.0
        %1866 = vmatpush1.msra.mxu0 0.0
        %1867 = vmatprep.subr.mxu0 0.0
        %1868 = vmatpush1.msra.mxu0 0.0
        %1869 = vmatprep.subr.mxu0 0.0
        %1870 = vmatpush1.msra.mxu0 0.0
        %1871 = vmatprep.subr.mxu0 0.0
        %1872 = vmatpush1.msra.mxu0 0.0
        %1873 = vmatprep.subr.mxu0 0.0
        %1874 = vmatpush1.msra.mxu0 0.0
        %1875 = vmatprep.subr.mxu0 0.0
        %1876 = vmatpush1.msra.mxu0 0.0
        %1877 = vmatprep.subr.mxu0 0.0
        %1878 = vmatpush1.msra.mxu0 0.0
        %1879 = vmatprep.mubr.f32.mxu0 0.0
        %1880 = vmatmul.mubr.f32.gmra.mrb[0].mxu0 %v1807
        %v1881 = vpop.f32.mrb[0].mxu0
        %v1882 = vadd.f32 0.0, %v1881
        %v1883 = vpop.f32.mrb[0].mxu0
        %1884 = vmatprep.mubr.f32.mxu0 0.0
        %1885 = vmatmul.mubr.f32.gmra.mrb[0].mxu0 %v1810
        %v1886 = vpop.f32.mrb[0].mxu0
        %v1887 = vadd.f32 0.0, %v1886
        %v1888 = vpop.f32.mrb[0].mxu0
        %1889 = vdwg.mxu0
        %v1890 = vadd.f32 %v1559, %v1882
        %v1891 = vadd.f32 %v1560, %v1887
        %s1892 = scalar_lea.vmem %s3, 18
        %v1893 = vld [vmem:[%s1892] sm:$0x3]
        %v1895 = vsel %vm582, %v1893, 0
        %1897 = vmatprep.subr.mxu0 0.0
        %1898 = vmatpush1.msra.mxu0 %v1895
        %1899 = vmatprep.subr.mxu0 0.0
        %1900 = vmatpush1.msra.mxu0 0.0
        %1901 = vmatprep.subr.mxu0 0.0
        %1902 = vmatpush1.msra.mxu0 0.0
        %1903 = vmatprep.subr.mxu0 0.0
        %1904 = vmatpush1.msra.mxu0 0.0
        %1905 = vmatprep.subr.mxu0 0.0
        %1906 = vmatpush1.msra.mxu0 0.0
        %1907 = vmatprep.subr.mxu0 0.0
        %1908 = vmatpush1.msra.mxu0 0.0
        %1909 = vmatprep.subr.mxu0 0.0
        %1910 = vmatpush1.msra.mxu0 0.0
        %1911 = vmatprep.subr.mxu0 0.0
        %1912 = vmatpush1.msra.mxu0 0.0
        %1913 = vmatprep.subr.mxu0 0.0
        %1914 = vmatpush1.msra.mxu0 0.0
        %1915 = vmatprep.subr.mxu0 0.0
        %1916 = vmatpush1.msra.mxu0 0.0
        %1917 = vmatprep.subr.mxu0 0.0
        %1918 = vmatpush1.msra.mxu0 0.0
        %1919 = vmatprep.subr.mxu0 0.0
        %1920 = vmatpush1.msra.mxu0 0.0
        %1921 = vmatprep.subr.mxu0 0.0
        %1922 = vmatpush1.msra.mxu0 0.0
        %1923 = vmatprep.subr.mxu0 0.0
        %1924 = vmatpush1.msra.mxu0 0.0
        %1925 = vmatprep.subr.mxu0 0.0
        %1926 = vmatpush1.msra.mxu0 0.0
        %1927 = vmatprep.subr.mxu0 0.0
        %1928 = vmatpush1.msra.mxu0 0.0
        %1929 = vmatprep.subr.mxu0 0.0
        %1930 = vmatpush1.msra.mxu0 0.0
        %1931 = vmatprep.subr.mxu0 0.0
        %1932 = vmatpush1.msra.mxu0 0.0
        %1933 = vmatprep.subr.mxu0 0.0
        %1934 = vmatpush1.msra.mxu0 0.0
        %1935 = vmatprep.subr.mxu0 0.0
        %1936 = vmatpush1.msra.mxu0 0.0
        %1937 = vmatprep.subr.mxu0 0.0
        %1938 = vmatpush1.msra.mxu0 0.0
        %1939 = vmatprep.subr.mxu0 0.0
        %1940 = vmatpush1.msra.mxu0 0.0
        %1941 = vmatprep.subr.mxu0 0.0
        %1942 = vmatpush1.msra.mxu0 0.0
        %1943 = vmatprep.subr.mxu0 0.0
        %1944 = vmatpush1.msra.mxu0 0.0
        %1945 = vmatprep.subr.mxu0 0.0
        %1946 = vmatpush1.msra.mxu0 0.0
        %1947 = vmatprep.subr.mxu0 0.0
        %1948 = vmatpush1.msra.mxu0 0.0
        %1949 = vmatprep.subr.mxu0 0.0
        %1950 = vmatpush1.msra.mxu0 0.0
        %1951 = vmatprep.subr.mxu0 0.0
        %1952 = vmatpush1.msra.mxu0 0.0
        %1953 = vmatprep.subr.mxu0 0.0
        %1954 = vmatpush1.msra.mxu0 0.0
        %1955 = vmatprep.subr.mxu0 0.0
        %1956 = vmatpush1.msra.mxu0 0.0
        %1957 = vmatprep.subr.mxu0 0.0
        %1958 = vmatpush1.msra.mxu0 0.0
        %1959 = vmatprep.subr.mxu0 0.0
        %1960 = vmatpush1.msra.mxu0 0.0
        %1961 = vmatprep.mubr.f32.mxu0 0.0
        %1962 = vmatmul.mubr.f32.gmra.mrb[0].mxu0 %v1807
        %v1963 = vpop.f32.mrb[0].mxu0
        %v1964 = vadd.f32 0.0, %v1963
        %v1965 = vpop.f32.mrb[0].mxu0
        %1966 = vmatprep.mubr.f32.mxu0 0.0
        %1967 = vmatmul.mubr.f32.gmra.mrb[0].mxu0 %v1810
        %v1968 = vpop.f32.mrb[0].mxu0
        %v1969 = vadd.f32 0.0, %v1968
        %v1970 = vpop.f32.mrb[0].mxu0
        %1971 = vdwg.mxu0
        %v1972 = vadd.f32 %v1641, %v1964
        %v1973 = vadd.f32 %v1642, %v1969
        %s1974 = scalar_lea.vmem %s3, 28
        %v1975 = vld [vmem:[%s1974] sm:$0x3]
        %v1977 = vsel %vm582, %v1975, 0
        %1979 = vmatprep.subr.mxu0 0.0
        %1980 = vmatpush1.msra.mxu0 %v1977
        %1981 = vmatprep.subr.mxu0 0.0
        %1982 = vmatpush1.msra.mxu0 0.0
        %1983 = vmatprep.subr.mxu0 0.0
        %1984 = vmatpush1.msra.mxu0 0.0
        %1985 = vmatprep.subr.mxu0 0.0
        %1986 = vmatpush1.msra.mxu0 0.0
        %1987 = vmatprep.subr.mxu0 0.0
        %1988 = vmatpush1.msra.mxu0 0.0
        %1989 = vmatprep.subr.mxu0 0.0
        %1990 = vmatpush1.msra.mxu0 0.0
        %1991 = vmatprep.subr.mxu0 0.0
        %1992 = vmatpush1.msra.mxu0 0.0
        %1993 = vmatprep.subr.mxu0 0.0
        %1994 = vmatpush1.msra.mxu0 0.0
        %1995 = vmatprep.subr.mxu0 0.0
        %1996 = vmatpush1.msra.mxu0 0.0
        %1997 = vmatprep.subr.mxu0 0.0
        %1998 = vmatpush1.msra.mxu0 0.0
        %1999 = vmatprep.subr.mxu0 0.0
        %2000 = vmatpush1.msra.mxu0 0.0
        %2001 = vmatprep.subr.mxu0 0.0
        %2002 = vmatpush1.msra.mxu0 0.0
        %2003 = vmatprep.subr.mxu0 0.0
        %2004 = vmatpush1.msra.mxu0 0.0
        %2005 = vmatprep.subr.mxu0 0.0
        %2006 = vmatpush1.msra.mxu0 0.0
        %2007 = vmatprep.subr.mxu0 0.0
        %2008 = vmatpush1.msra.mxu0 0.0
        %2009 = vmatprep.subr.mxu0 0.0
        %2010 = vmatpush1.msra.mxu0 0.0
        %2011 = vmatprep.subr.mxu0 0.0
        %2012 = vmatpush1.msra.mxu0 0.0
        %2013 = vmatprep.subr.mxu0 0.0
        %2014 = vmatpush1.msra.mxu0 0.0
        %2015 = vmatprep.subr.mxu0 0.0
        %2016 = vmatpush1.msra.mxu0 0.0
        %2017 = vmatprep.subr.mxu0 0.0
        %2018 = vmatpush1.msra.mxu0 0.0
        %2019 = vmatprep.subr.mxu0 0.0
        %2020 = vmatpush1.msra.mxu0 0.0
        %2021 = vmatprep.subr.mxu0 0.0
        %2022 = vmatpush1.msra.mxu0 0.0
        %2023 = vmatprep.subr.mxu0 0.0
        %2024 = vmatpush1.msra.mxu0 0.0
        %2025 = vmatprep.subr.mxu0 0.0
        %2026 = vmatpush1.msra.mxu0 0.0
        %2027 = vmatprep.subr.mxu0 0.0
        %2028 = vmatpush1.msra.mxu0 0.0
        %2029 = vmatprep.subr.mxu0 0.0
        %2030 = vmatpush1.msra.mxu0 0.0
        %2031 = vmatprep.subr.mxu0 0.0
        %2032 = vmatpush1.msra.mxu0 0.0
        %2033 = vmatprep.subr.mxu0 0.0
        %2034 = vmatpush1.msra.mxu0 0.0
        %2035 = vmatprep.subr.mxu0 0.0
        %2036 = vmatpush1.msra.mxu0 0.0
        %2037 = vmatprep.subr.mxu0 0.0
        %2038 = vmatpush1.msra.mxu0 0.0
        %2039 = vmatprep.subr.mxu0 0.0
        %2040 = vmatpush1.msra.mxu0 0.0
        %2041 = vmatprep.subr.mxu0 0.0
        %2042 = vmatpush1.msra.mxu0 0.0
        %2043 = vmatprep.mubr.f32.mxu0 0.0
        %2044 = vmatmul.mubr.f32.gmra.mrb[0].mxu0 %v1807
        %v2045 = vpop.f32.mrb[0].mxu0
        %v2046 = vadd.f32 0.0, %v2045
        %v2047 = vpop.f32.mrb[0].mxu0
        %2048 = vmatprep.mubr.f32.mxu0 0.0
        %2049 = vmatmul.mubr.f32.gmra.mrb[0].mxu0 %v1810
        %v2050 = vpop.f32.mrb[0].mxu0
        %v2051 = vadd.f32 0.0, %v2050
        %v2052 = vpop.f32.mrb[0].mxu0
        %2053 = vdwg.mxu0
        %v2054 = vadd.f32 %v1723, %v2046
        %v2055 = vadd.f32 %v1724, %v2051
        %v2056 = vld [vmem:[#allocation3] sm:$0xff]
        %v2057 = vld [vmem:[#allocation3 + $0x8] sm:$0xff]
        %v2058 = vld [vmem:[#allocation3 + $0x10] sm:$0xff]
        %v2059 = vld [vmem:[#allocation3 + $0x18] sm:$0xff]
        %vm2060 = vcmask 261120
        %v2062 = vsel %vm2060, %v484, 0
        %v2065 = vsel %vm2060, %v485, 0
        %2067 = vmatprep.subr.mxu0 0.0
        %2068 = vmatpush1.msra.mxu0 %v2056
        %2069 = vmatprep.subr.mxu0 0.0
        %2070 = vmatpush1.msra.mxu0 %v2057
        %2071 = vmatprep.subr.mxu0 0.0
        %2072 = vmatpush1.msra.mxu0 %v2058
        %2073 = vmatprep.subr.mxu0 0.0
        %2074 = vmatpush1.msra.mxu0 %v2059
        %2075 = vmatprep.subr.mxu0 0.0
        %2076 = vmatpush1.msra.mxu0 0.0
        %2077 = vmatprep.subr.mxu0 0.0
        %2078 = vmatpush1.msra.mxu0 0.0
        %2079 = vmatprep.subr.mxu0 0.0
        %2080 = vmatpush1.msra.mxu0 0.0
        %2081 = vmatprep.subr.mxu0 0.0
        %2082 = vmatpush1.msra.mxu0 0.0
        %2083 = vmatprep.subr.mxu0 0.0
        %2084 = vmatpush1.msra.mxu0 0.0
        %2085 = vmatprep.subr.mxu0 0.0
        %2086 = vmatpush1.msra.mxu0 0.0
        %2087 = vmatprep.subr.mxu0 0.0
        %2088 = vmatpush1.msra.mxu0 0.0
        %2089 = vmatprep.subr.mxu0 0.0
        %2090 = vmatpush1.msra.mxu0 0.0
        %2091 = vmatprep.subr.mxu0 0.0
        %2092 = vmatpush1.msra.mxu0 0.0
        %2093 = vmatprep.subr.mxu0 0.0
        %2094 = vmatpush1.msra.mxu0 0.0
        %2095 = vmatprep.subr.mxu0 0.0
        %2096 = vmatpush1.msra.mxu0 0.0
        %2097 = vmatprep.subr.mxu0 0.0
        %2098 = vmatpush1.msra.mxu0 0.0
        %2099 = vmatprep.subr.mxu0 0.0
        %2100 = vmatpush1.msra.mxu0 0.0
        %2101 = vmatprep.subr.mxu0 0.0
        %2102 = vmatpush1.msra.mxu0 0.0
        %2103 = vmatprep.subr.mxu0 0.0
        %2104 = vmatpush1.msra.mxu0 0.0
        %2105 = vmatprep.subr.mxu0 0.0
        %2106 = vmatpush1.msra.mxu0 0.0
        %2107 = vmatprep.subr.mxu0 0.0
        %2108 = vmatpush1.msra.mxu0 0.0
        %2109 = vmatprep.subr.mxu0 0.0
        %2110 = vmatpush1.msra.mxu0 0.0
        %2111 = vmatprep.subr.mxu0 0.0
        %2112 = vmatpush1.msra.mxu0 0.0
        %2113 = vmatprep.subr.mxu0 0.0
        %2114 = vmatpush1.msra.mxu0 0.0
        %2115 = vmatprep.subr.mxu0 0.0
        %2116 = vmatpush1.msra.mxu0 0.0
        %2117 = vmatprep.subr.mxu0 0.0
        %2118 = vmatpush1.msra.mxu0 0.0
        %2119 = vmatprep.subr.mxu0 0.0
        %2120 = vmatpush1.msra.mxu0 0.0
        %2121 = vmatprep.subr.mxu0 0.0
        %2122 = vmatpush1.msra.mxu0 0.0
        %2123 = vmatprep.subr.mxu0 0.0
        %2124 = vmatpush1.msra.mxu0 0.0
        %2125 = vmatprep.subr.mxu0 0.0
        %2126 = vmatpush1.msra.mxu0 0.0
        %2127 = vmatprep.subr.mxu0 0.0
        %2128 = vmatpush1.msra.mxu0 0.0
        %2129 = vmatprep.subr.mxu0 0.0
        %2130 = vmatpush1.msra.mxu0 0.0
        %2131 = vmatprep.mubr.f32.mxu0 0.0
        %2132 = vmatmul.mubr.f32.gmra.mrb[0].mxu0 %v2062
        %v2133 = vpop.f32.mrb[0].mxu0
        %v2134 = vadd.f32 0.0, %v2133
        %v2135 = vpop.f32.mrb[0].mxu0
        %2136 = vmatprep.mubr.f32.mxu0 0.0
        %2137 = vmatmul.mubr.f32.gmra.mrb[0].mxu0 %v2065
        %v2138 = vpop.f32.mrb[0].mxu0
        %v2139 = vadd.f32 0.0, %v2138
        %v2140 = vpop.f32.mrb[0].mxu0
        %2141 = vdwg.mxu0
        %v2142 = vadd.f32 %v1890, %v2134
        %v2143 = vadd.f32 %v1891, %v2139
        %s2144 = scalar_lea.vmem [#allocation3], 160
        %v2145 = vld [vmem:[%s2144] sm:$0xff]
        %v2146 = vld [vmem:[%s2144 + $0x8] sm:$0xff]
        %v2147 = vld [vmem:[%s2144 + $0x10] sm:$0xff]
        %v2148 = vld [vmem:[%s2144 + $0x18] sm:$0xff]
        %2149 = vmatprep.subr.mxu0 0.0
        %2150 = vmatpush1.msra.mxu0 %v2145
        %2151 = vmatprep.subr.mxu0 0.0
        %2152 = vmatpush1.msra.mxu0 %v2146
        %2153 = vmatprep.subr.mxu0 0.0
        %2154 = vmatpush1.msra.mxu0 %v2147
        %2155 = vmatprep.subr.mxu0 0.0
        %2156 = vmatpush1.msra.mxu0 %v2148
        %2157 = vmatprep.subr.mxu0 0.0
        %2158 = vmatpush1.msra.mxu0 0.0
        %2159 = vmatprep.subr.mxu0 0.0
        %2160 = vmatpush1.msra.mxu0 0.0
        %2161 = vmatprep.subr.mxu0 0.0
        %2162 = vmatpush1.msra.mxu0 0.0
        %2163 = vmatprep.subr.mxu0 0.0
        %2164 = vmatpush1.msra.mxu0 0.0
        %2165 = vmatprep.subr.mxu0 0.0
        %2166 = vmatpush1.msra.mxu0 0.0
        %2167 = vmatprep.subr.mxu0 0.0
        %2168 = vmatpush1.msra.mxu0 0.0
        %2169 = vmatprep.subr.mxu0 0.0
        %2170 = vmatpush1.msra.mxu0 0.0
        %2171 = vmatprep.subr.mxu0 0.0
        %2172 = vmatpush1.msra.mxu0 0.0
        %2173 = vmatprep.subr.mxu0 0.0
        %2174 = vmatpush1.msra.mxu0 0.0
        %2175 = vmatprep.subr.mxu0 0.0
        %2176 = vmatpush1.msra.mxu0 0.0
        %2177 = vmatprep.subr.mxu0 0.0
        %2178 = vmatpush1.msra.mxu0 0.0
        %2179 = vmatprep.subr.mxu0 0.0
        %2180 = vmatpush1.msra.mxu0 0.0
        %2181 = vmatprep.subr.mxu0 0.0
        %2182 = vmatpush1.msra.mxu0 0.0
        %2183 = vmatprep.subr.mxu0 0.0
        %2184 = vmatpush1.msra.mxu0 0.0
        %2185 = vmatprep.subr.mxu0 0.0
        %2186 = vmatpush1.msra.mxu0 0.0
        %2187 = vmatprep.subr.mxu0 0.0
        %2188 = vmatpush1.msra.mxu0 0.0
        %2189 = vmatprep.subr.mxu0 0.0
        %2190 = vmatpush1.msra.mxu0 0.0
        %2191 = vmatprep.subr.mxu0 0.0
        %2192 = vmatpush1.msra.mxu0 0.0
        %2193 = vmatprep.subr.mxu0 0.0
        %2194 = vmatpush1.msra.mxu0 0.0
        %2195 = vmatprep.subr.mxu0 0.0
        %2196 = vmatpush1.msra.mxu0 0.0
        %2197 = vmatprep.subr.mxu0 0.0
        %2198 = vmatpush1.msra.mxu0 0.0
        %2199 = vmatprep.subr.mxu0 0.0
        %2200 = vmatpush1.msra.mxu0 0.0
        %2201 = vmatprep.subr.mxu0 0.0
        %2202 = vmatpush1.msra.mxu0 0.0
        %2203 = vmatprep.subr.mxu0 0.0
        %2204 = vmatpush1.msra.mxu0 0.0
        %2205 = vmatprep.subr.mxu0 0.0
        %2206 = vmatpush1.msra.mxu0 0.0
        %2207 = vmatprep.subr.mxu0 0.0
        %2208 = vmatpush1.msra.mxu0 0.0
        %2209 = vmatprep.subr.mxu0 0.0
        %2210 = vmatpush1.msra.mxu0 0.0
        %2211 = vmatprep.subr.mxu0 0.0
        %2212 = vmatpush1.msra.mxu0 0.0
        %2213 = vmatprep.mubr.f32.mxu0 0.0
        %2214 = vmatmul.mubr.f32.gmra.mrb[0].mxu0 %v2062
        %v2215 = vpop.f32.mrb[0].mxu0
        %v2216 = vadd.f32 0.0, %v2215
        %v2217 = vpop.f32.mrb[0].mxu0
        %2218 = vmatprep.mubr.f32.mxu0 0.0
        %2219 = vmatmul.mubr.f32.gmra.mrb[0].mxu0 %v2065
        %v2220 = vpop.f32.mrb[0].mxu0
        %v2221 = vadd.f32 0.0, %v2220
        %v2222 = vpop.f32.mrb[0].mxu0
        %2223 = vdwg.mxu0
        %v2224 = vadd.f32 %v1972, %v2216
        %v2225 = vadd.f32 %v1973, %v2221
        %2226 = vmatprep.subr.mxu0 0.0
        %2227 = vmatpush1.msra.mxu0 %v484
        %2228 = vmatprep.subr.mxu0 0.0
        %2229 = vmatpush1.msra.mxu0 %v485
        %2230 = vmatprep.subr.mxu0 0.0
        %2231 = vmatpush1.msra.mxu0 0.0
        %2232 = vmatprep.subr.mxu0 0.0
        %2233 = vmatpush1.msra.mxu0 0.0
        %2234 = vmatprep.subr.mxu0 0.0
        %2235 = vmatpush1.msra.mxu0 0.0
        %2236 = vmatprep.subr.mxu0 0.0
        %2237 = vmatpush1.msra.mxu0 0.0
        %2238 = vmatprep.subr.mxu0 0.0
        %2239 = vmatpush1.msra.mxu0 0.0
        %2240 = vmatprep.subr.mxu0 0.0
        %2241 = vmatpush1.msra.mxu0 0.0
        %2242 = vmatprep.subr.mxu0 0.0
        %2243 = vmatpush1.msra.mxu0 0.0
        %2244 = vmatprep.subr.mxu0 0.0
        %2245 = vmatpush1.msra.mxu0 0.0
        %2246 = vmatprep.subr.mxu0 0.0
        %2247 = vmatpush1.msra.mxu0 0.0
        %2248 = vmatprep.subr.mxu0 0.0
        %2249 = vmatpush1.msra.mxu0 0.0
        %2250 = vmatprep.subr.mxu0 0.0
        %2251 = vmatpush1.msra.mxu0 0.0
        %2252 = vmatprep.subr.mxu0 0.0
        %2253 = vmatpush1.msra.mxu0 0.0
        %2254 = vmatprep.subr.mxu0 0.0
        %2255 = vmatpush1.msra.mxu0 0.0
        %2256 = vmatprep.subr.mxu0 0.0
        %2257 = vmatpush1.msra.mxu0 0.0
        %2258 = vmatprep.subr.mxu0 0.0
        %2259 = vmatpush1.msra.mxu0 0.0
        %2260 = vmatprep.subr.mxu0 0.0
        %2261 = vmatpush1.msra.mxu0 0.0
        %2262 = vmatprep.subr.mxu0 0.0
        %2263 = vmatpush1.msra.mxu0 0.0
        %2264 = vmatprep.subr.mxu0 0.0
        %2265 = vmatpush1.msra.mxu0 0.0
        %2266 = vmatprep.subr.mxu0 0.0
        %2267 = vmatpush1.msra.mxu0 0.0
        %2268 = vmatprep.subr.mxu0 0.0
        %2269 = vmatpush1.msra.mxu0 0.0
        %2270 = vmatprep.subr.mxu0 0.0
        %2271 = vmatpush1.msra.mxu0 0.0
        %2272 = vmatprep.subr.mxu0 0.0
        %2273 = vmatpush1.msra.mxu0 0.0
        %2274 = vmatprep.subr.mxu0 0.0
        %2275 = vmatpush1.msra.mxu0 0.0
        %2276 = vmatprep.subr.mxu0 0.0
        %2277 = vmatpush1.msra.mxu0 0.0
        %2278 = vmatprep.subr.mxu0 0.0
        %2279 = vmatpush1.msra.mxu0 0.0
        %2280 = vmatprep.subr.mxu0 0.0
        %2281 = vmatpush1.msra.mxu0 0.0
        %2282 = vmatprep.subr.mxu0 0.0
        %2283 = vmatpush1.msra.mxu0 0.0
        %2284 = vmatprep.subr.mxu0 0.0
        %2285 = vmatpush1.msra.mxu0 0.0
        %2286 = vmatprep.subr.mxu0 0.0
        %2287 = vmatpush1.msra.mxu0 0.0
        %2288 = vmatprep.subr.mxu0 0.0
        %2289 = vmatpush1.msra.mxu0 0.0
        %2290 = vmatprep.mubr.f32.mxu0 0.0
        %2291 = vmatmul.mubr.f32.gmra.mrb[0].mxu0 %v493
        %v2292 = vpop.f32.mrb[0].mxu0
        %v2293 = vadd.f32 0.0, %v2292
        %v2294 = vpop.f32.mrb[0].mxu0
        %2295 = vmatprep.mubr.f32.mxu0 0.0
        %2296 = vmatmul.mubr.f32.gmra.mrb[0].mxu0 %v496
        %v2297 = vpop.f32.mrb[0].mxu0
        %v2298 = vadd.f32 0.0, %v2297
        %v2299 = vpop.f32.mrb[0].mxu0
        %2300 = vdwg.mxu0
        %s2301 = scalar_lea.vmem [#allocation3], 32
        %v2302 = vld [vmem:[%s2301] sm:$0xff]
        %v2303 = vld [vmem:[%s2301 + $0x8] sm:$0xff]
        %v2304 = vld [vmem:[%s2301 + $0x10] sm:$0xff]
        %v2305 = vld [vmem:[%s2301 + $0x18] sm:$0xff]
        %v2307 = vsel %vm2060, %v2293, 0
        %v2310 = vsel %vm2060, %v2298, 0
        %2312 = vmatprep.subr.mxu0 0.0
        %2313 = vmatpush1.msra.mxu0 %v2302
        %2314 = vmatprep.subr.mxu0 0.0
        %2315 = vmatpush1.msra.mxu0 %v2303
        %2316 = vmatprep.subr.mxu0 0.0
        %2317 = vmatpush1.msra.mxu0 %v2304
        %2318 = vmatprep.subr.mxu0 0.0
        %2319 = vmatpush1.msra.mxu0 %v2305
        %2320 = vmatprep.subr.mxu0 0.0
        %2321 = vmatpush1.msra.mxu0 0.0
        %2322 = vmatprep.subr.mxu0 0.0
        %2323 = vmatpush1.msra.mxu0 0.0
        %2324 = vmatprep.subr.mxu0 0.0
        %2325 = vmatpush1.msra.mxu0 0.0
        %2326 = vmatprep.subr.mxu0 0.0
        %2327 = vmatpush1.msra.mxu0 0.0
        %2328 = vmatprep.subr.mxu0 0.0
        %2329 = vmatpush1.msra.mxu0 0.0
        %2330 = vmatprep.subr.mxu0 0.0
        %2331 = vmatpush1.msra.mxu0 0.0
        %2332 = vmatprep.subr.mxu0 0.0
        %2333 = vmatpush1.msra.mxu0 0.0
        %2334 = vmatprep.subr.mxu0 0.0
        %2335 = vmatpush1.msra.mxu0 0.0
        %2336 = vmatprep.subr.mxu0 0.0
        %2337 = vmatpush1.msra.mxu0 0.0
        %2338 = vmatprep.subr.mxu0 0.0
        %2339 = vmatpush1.msra.mxu0 0.0
        %2340 = vmatprep.subr.mxu0 0.0
        %2341 = vmatpush1.msra.mxu0 0.0
        %2342 = vmatprep.subr.mxu0 0.0
        %2343 = vmatpush1.msra.mxu0 0.0
        %2344 = vmatprep.subr.mxu0 0.0
        %2345 = vmatpush1.msra.mxu0 0.0
        %2346 = vmatprep.subr.mxu0 0.0
        %2347 = vmatpush1.msra.mxu0 0.0
        %2348 = vmatprep.subr.mxu0 0.0
        %2349 = vmatpush1.msra.mxu0 0.0
        %2350 = vmatprep.subr.mxu0 0.0
        %2351 = vmatpush1.msra.mxu0 0.0
        %2352 = vmatprep.subr.mxu0 0.0
        %2353 = vmatpush1.msra.mxu0 0.0
        %2354 = vmatprep.subr.mxu0 0.0
        %2355 = vmatpush1.msra.mxu0 0.0
        %2356 = vmatprep.subr.mxu0 0.0
        %2357 = vmatpush1.msra.mxu0 0.0
        %2358 = vmatprep.subr.mxu0 0.0
        %2359 = vmatpush1.msra.mxu0 0.0
        %2360 = vmatprep.subr.mxu0 0.0
        %2361 = vmatpush1.msra.mxu0 0.0
        %2362 = vmatprep.subr.mxu0 0.0
        %2363 = vmatpush1.msra.mxu0 0.0
        %2364 = vmatprep.subr.mxu0 0.0
        %2365 = vmatpush1.msra.mxu0 0.0
        %2366 = vmatprep.subr.mxu0 0.0
        %2367 = vmatpush1.msra.mxu0 0.0
        %2368 = vmatprep.subr.mxu0 0.0
        %2369 = vmatpush1.msra.mxu0 0.0
        %2370 = vmatprep.subr.mxu0 0.0
        %2371 = vmatpush1.msra.mxu0 0.0
        %2372 = vmatprep.subr.mxu0 0.0
        %2373 = vmatpush1.msra.mxu0 0.0
        %2374 = vmatprep.subr.mxu0 0.0
        %2375 = vmatpush1.msra.mxu0 0.0
        %2376 = vmatprep.mubr.f32.mxu0 0.0
        %2377 = vmatmul.mubr.f32.gmra.mrb[0].mxu0 %v2307
        %v2378 = vpop.f32.mrb[0].mxu0
        %v2379 = vadd.f32 0.0, %v2378
        %v2380 = vpop.f32.mrb[0].mxu0
        %2381 = vmatprep.mubr.f32.mxu0 0.0
        %2382 = vmatmul.mubr.f32.gmra.mrb[0].mxu0 %v2310
        %v2383 = vpop.f32.mrb[0].mxu0
        %v2384 = vadd.f32 0.0, %v2383
        %v2385 = vpop.f32.mrb[0].mxu0
        %2386 = vdwg.mxu0
        %v2387 = vadd.f32 %v2142, %v2379
        %v2388 = vadd.f32 %v2143, %v2384
        %s2389 = scalar_lea.vmem [#allocation3], 192
        %v2390 = vld [vmem:[%s2389] sm:$0xff]
        %v2391 = vld [vmem:[%s2389 + $0x8] sm:$0xff]
        %v2392 = vld [vmem:[%s2389 + $0x10] sm:$0xff]
        %v2393 = vld [vmem:[%s2389 + $0x18] sm:$0xff]
        %2394 = vmatprep.subr.mxu0 0.0
        %2395 = vmatpush1.msra.mxu0 %v2390
        %2396 = vmatprep.subr.mxu0 0.0
        %2397 = vmatpush1.msra.mxu0 %v2391
        %2398 = vmatprep.subr.mxu0 0.0
        %2399 = vmatpush1.msra.mxu0 %v2392
        %2400 = vmatprep.subr.mxu0 0.0
        %2401 = vmatpush1.msra.mxu0 %v2393
        %2402 = vmatprep.subr.mxu0 0.0
        %2403 = vmatpush1.msra.mxu0 0.0
        %2404 = vmatprep.subr.mxu0 0.0
        %2405 = vmatpush1.msra.mxu0 0.0
        %2406 = vmatprep.subr.mxu0 0.0
        %2407 = vmatpush1.msra.mxu0 0.0
        %2408 = vmatprep.subr.mxu0 0.0
        %2409 = vmatpush1.msra.mxu0 0.0
        %2410 = vmatprep.subr.mxu0 0.0
        %2411 = vmatpush1.msra.mxu0 0.0
        %2412 = vmatprep.subr.mxu0 0.0
        %2413 = vmatpush1.msra.mxu0 0.0
        %2414 = vmatprep.subr.mxu0 0.0
        %2415 = vmatpush1.msra.mxu0 0.0
        %2416 = vmatprep.subr.mxu0 0.0
        %2417 = vmatpush1.msra.mxu0 0.0
        %2418 = vmatprep.subr.mxu0 0.0
        %2419 = vmatpush1.msra.mxu0 0.0
        %2420 = vmatprep.subr.mxu0 0.0
        %2421 = vmatpush1.msra.mxu0 0.0
        %2422 = vmatprep.subr.mxu0 0.0
        %2423 = vmatpush1.msra.mxu0 0.0
        %2424 = vmatprep.subr.mxu0 0.0
        %2425 = vmatpush1.msra.mxu0 0.0
        %2426 = vmatprep.subr.mxu0 0.0
        %2427 = vmatpush1.msra.mxu0 0.0
        %2428 = vmatprep.subr.mxu0 0.0
        %2429 = vmatpush1.msra.mxu0 0.0
        %2430 = vmatprep.subr.mxu0 0.0
        %2431 = vmatpush1.msra.mxu0 0.0
        %2432 = vmatprep.subr.mxu0 0.0
        %2433 = vmatpush1.msra.mxu0 0.0
        %2434 = vmatprep.subr.mxu0 0.0
        %2435 = vmatpush1.msra.mxu0 0.0
        %2436 = vmatprep.subr.mxu0 0.0
        %2437 = vmatpush1.msra.mxu0 0.0
        %2438 = vmatprep.subr.mxu0 0.0
        %2439 = vmatpush1.msra.mxu0 0.0
        %2440 = vmatprep.subr.mxu0 0.0
        %2441 = vmatpush1.msra.mxu0 0.0
        %2442 = vmatprep.subr.mxu0 0.0
        %2443 = vmatpush1.msra.mxu0 0.0
        %2444 = vmatprep.subr.mxu0 0.0
        %2445 = vmatpush1.msra.mxu0 0.0
        %2446 = vmatprep.subr.mxu0 0.0
        %2447 = vmatpush1.msra.mxu0 0.0
        %2448 = vmatprep.subr.mxu0 0.0
        %2449 = vmatpush1.msra.mxu0 0.0
        %2450 = vmatprep.subr.mxu0 0.0
        %2451 = vmatpush1.msra.mxu0 0.0
        %2452 = vmatprep.subr.mxu0 0.0
        %2453 = vmatpush1.msra.mxu0 0.0
        %2454 = vmatprep.subr.mxu0 0.0
        %2455 = vmatpush1.msra.mxu0 0.0
        %2456 = vmatprep.subr.mxu0 0.0
        %2457 = vmatpush1.msra.mxu0 0.0
        %2458 = vmatprep.mubr.f32.mxu0 0.0
        %2459 = vmatmul.mubr.f32.gmra.mrb[0].mxu0 %v2307
        %v2460 = vpop.f32.mrb[0].mxu0
        %v2461 = vadd.f32 0.0, %v2460
        %v2462 = vpop.f32.mrb[0].mxu0
        %2463 = vmatprep.mubr.f32.mxu0 0.0
        %2464 = vmatmul.mubr.f32.gmra.mrb[0].mxu0 %v2310
        %v2465 = vpop.f32.mrb[0].mxu0
        %v2466 = vadd.f32 0.0, %v2465
        %v2467 = vpop.f32.mrb[0].mxu0
        %2468 = vdwg.mxu0
        %v2469 = vadd.f32 %v2224, %v2461
        %v2470 = vadd.f32 %v2225, %v2466
        %2471 = vmatprep.subr.mxu0 0.0
        %2472 = vmatpush1.msra.mxu0 %v2293
        %2473 = vmatprep.subr.mxu0 0.0
        %2474 = vmatpush1.msra.mxu0 %v2298
        %2475 = vmatprep.subr.mxu0 0.0
        %2476 = vmatpush1.msra.mxu0 0.0
        %2477 = vmatprep.subr.mxu0 0.0
        %2478 = vmatpush1.msra.mxu0 0.0
        %2479 = vmatprep.subr.mxu0 0.0
        %2480 = vmatpush1.msra.mxu0 0.0
        %2481 = vmatprep.subr.mxu0 0.0
        %2482 = vmatpush1.msra.mxu0 0.0
        %2483 = vmatprep.subr.mxu0 0.0
        %2484 = vmatpush1.msra.mxu0 0.0
        %2485 = vmatprep.subr.mxu0 0.0
        %2486 = vmatpush1.msra.mxu0 0.0
        %2487 = vmatprep.subr.mxu0 0.0
        %2488 = vmatpush1.msra.mxu0 0.0
        %2489 = vmatprep.subr.mxu0 0.0
        %2490 = vmatpush1.msra.mxu0 0.0
        %2491 = vmatprep.subr.mxu0 0.0
        %2492 = vmatpush1.msra.mxu0 0.0
        %2493 = vmatprep.subr.mxu0 0.0
        %2494 = vmatpush1.msra.mxu0 0.0
        %2495 = vmatprep.subr.mxu0 0.0
        %2496 = vmatpush1.msra.mxu0 0.0
        %2497 = vmatprep.subr.mxu0 0.0
        %2498 = vmatpush1.msra.mxu0 0.0
        %2499 = vmatprep.subr.mxu0 0.0
        %2500 = vmatpush1.msra.mxu0 0.0
        %2501 = vmatprep.subr.mxu0 0.0
        %2502 = vmatpush1.msra.mxu0 0.0
        %2503 = vmatprep.subr.mxu0 0.0
        %2504 = vmatpush1.msra.mxu0 0.0
        %2505 = vmatprep.subr.mxu0 0.0
        %2506 = vmatpush1.msra.mxu0 0.0
        %2507 = vmatprep.subr.mxu0 0.0
        %2508 = vmatpush1.msra.mxu0 0.0
        %2509 = vmatprep.subr.mxu0 0.0
        %2510 = vmatpush1.msra.mxu0 0.0
        %2511 = vmatprep.subr.mxu0 0.0
        %2512 = vmatpush1.msra.mxu0 0.0
        %2513 = vmatprep.subr.mxu0 0.0
        %2514 = vmatpush1.msra.mxu0 0.0
        %2515 = vmatprep.subr.mxu0 0.0
        %2516 = vmatpush1.msra.mxu0 0.0
        %2517 = vmatprep.subr.mxu0 0.0
        %2518 = vmatpush1.msra.mxu0 0.0
        %2519 = vmatprep.subr.mxu0 0.0
        %2520 = vmatpush1.msra.mxu0 0.0
        %2521 = vmatprep.subr.mxu0 0.0
        %2522 = vmatpush1.msra.mxu0 0.0
        %2523 = vmatprep.subr.mxu0 0.0
        %2524 = vmatpush1.msra.mxu0 0.0
        %2525 = vmatprep.subr.mxu0 0.0
        %2526 = vmatpush1.msra.mxu0 0.0
        %2527 = vmatprep.subr.mxu0 0.0
        %2528 = vmatpush1.msra.mxu0 0.0
        %2529 = vmatprep.subr.mxu0 0.0
        %2530 = vmatpush1.msra.mxu0 0.0
        %2531 = vmatprep.subr.mxu0 0.0
        %2532 = vmatpush1.msra.mxu0 0.0
        %2533 = vmatprep.subr.mxu0 0.0
        %2534 = vmatpush1.msra.mxu0 0.0
        %2535 = vmatprep.mubr.f32.mxu0 0.0
        %2536 = vmatmul.mubr.f32.gmra.mrb[0].mxu0 %v493
        %v2537 = vpop.f32.mrb[0].mxu0
        %v2538 = vadd.f32 0.0, %v2537
        %v2539 = vpop.f32.mrb[0].mxu0
        %2540 = vmatprep.mubr.f32.mxu0 0.0
        %2541 = vmatmul.mubr.f32.gmra.mrb[0].mxu0 %v496
        %v2542 = vpop.f32.mrb[0].mxu0
        %v2543 = vadd.f32 0.0, %v2542
        %v2544 = vpop.f32.mrb[0].mxu0
        %2545 = vdwg.mxu0
        %v2546 = vmul.f32 %v2538, 2.0
        %v2547 = vmul.f32 %v2543, 2.0
        %v2548 = vsub.f32 %v2546, %v484
        %v2549 = vsub.f32 %v2547, %v485
        %s2550 = scalar_lea.vmem [#allocation3], 64
        %v2551 = vld [vmem:[%s2550] sm:$0xff]
        %v2552 = vld [vmem:[%s2550 + $0x8] sm:$0xff]
        %v2553 = vld [vmem:[%s2550 + $0x10] sm:$0xff]
        %v2554 = vld [vmem:[%s2550 + $0x18] sm:$0xff]
        %v2556 = vsel %vm2060, %v2548, 0
        %v2559 = vsel %vm2060, %v2549, 0
        %2561 = vmatprep.subr.mxu0 0.0
        %2562 = vmatpush1.msra.mxu0 %v2551
        %2563 = vmatprep.subr.mxu0 0.0
        %2564 = vmatpush1.msra.mxu0 %v2552
        %2565 = vmatprep.subr.mxu0 0.0
        %2566 = vmatpush1.msra.mxu0 %v2553
        %2567 = vmatprep.subr.mxu0 0.0
        %2568 = vmatpush1.msra.mxu0 %v2554
        %2569 = vmatprep.subr.mxu0 0.0
        %2570 = vmatpush1.msra.mxu0 0.0
        %2571 = vmatprep.subr.mxu0 0.0
        %2572 = vmatpush1.msra.mxu0 0.0
        %2573 = vmatprep.subr.mxu0 0.0
        %2574 = vmatpush1.msra.mxu0 0.0
        %2575 = vmatprep.subr.mxu0 0.0
        %2576 = vmatpush1.msra.mxu0 0.0
        %2577 = vmatprep.subr.mxu0 0.0
        %2578 = vmatpush1.msra.mxu0 0.0
        %2579 = vmatprep.subr.mxu0 0.0
        %2580 = vmatpush1.msra.mxu0 0.0
        %2581 = vmatprep.subr.mxu0 0.0
        %2582 = vmatpush1.msra.mxu0 0.0
        %2583 = vmatprep.subr.mxu0 0.0
        %2584 = vmatpush1.msra.mxu0 0.0
        %2585 = vmatprep.subr.mxu0 0.0
        %2586 = vmatpush1.msra.mxu0 0.0
        %2587 = vmatprep.subr.mxu0 0.0
        %2588 = vmatpush1.msra.mxu0 0.0
        %2589 = vmatprep.subr.mxu0 0.0
        %2590 = vmatpush1.msra.mxu0 0.0
        %2591 = vmatprep.subr.mxu0 0.0
        %2592 = vmatpush1.msra.mxu0 0.0
        %2593 = vmatprep.subr.mxu0 0.0
        %2594 = vmatpush1.msra.mxu0 0.0
        %2595 = vmatprep.subr.mxu0 0.0
        %2596 = vmatpush1.msra.mxu0 0.0
        %2597 = vmatprep.subr.mxu0 0.0
        %2598 = vmatpush1.msra.mxu0 0.0
        %2599 = vmatprep.subr.mxu0 0.0
        %2600 = vmatpush1.msra.mxu0 0.0
        %2601 = vmatprep.subr.mxu0 0.0
        %2602 = vmatpush1.msra.mxu0 0.0
        %2603 = vmatprep.subr.mxu0 0.0
        %2604 = vmatpush1.msra.mxu0 0.0
        %2605 = vmatprep.subr.mxu0 0.0
        %2606 = vmatpush1.msra.mxu0 0.0
        %2607 = vmatprep.subr.mxu0 0.0
        %2608 = vmatpush1.msra.mxu0 0.0
        %2609 = vmatprep.subr.mxu0 0.0
        %2610 = vmatpush1.msra.mxu0 0.0
        %2611 = vmatprep.subr.mxu0 0.0
        %2612 = vmatpush1.msra.mxu0 0.0
        %2613 = vmatprep.subr.mxu0 0.0
        %2614 = vmatpush1.msra.mxu0 0.0
        %2615 = vmatprep.subr.mxu0 0.0
        %2616 = vmatpush1.msra.mxu0 0.0
        %2617 = vmatprep.subr.mxu0 0.0
        %2618 = vmatpush1.msra.mxu0 0.0
        %2619 = vmatprep.subr.mxu0 0.0
        %2620 = vmatpush1.msra.mxu0 0.0
        %2621 = vmatprep.subr.mxu0 0.0
        %2622 = vmatpush1.msra.mxu0 0.0
        %2623 = vmatprep.subr.mxu0 0.0
        %2624 = vmatpush1.msra.mxu0 0.0
        %2625 = vmatprep.mubr.f32.mxu0 0.0
        %2626 = vmatmul.mubr.f32.gmra.mrb[0].mxu0 %v2556
        %v2627 = vpop.f32.mrb[0].mxu0
        %v2628 = vadd.f32 0.0, %v2627
        %v2629 = vpop.f32.mrb[0].mxu0
        %2630 = vmatprep.mubr.f32.mxu0 0.0
        %2631 = vmatmul.mubr.f32.gmra.mrb[0].mxu0 %v2559
        %v2632 = vpop.f32.mrb[0].mxu0
        %v2633 = vadd.f32 0.0, %v2632
        %v2634 = vpop.f32.mrb[0].mxu0
        %2635 = vdwg.mxu0
        %v2636 = vadd.f32 %v2387, %v2628
        %v2637 = vadd.f32 %v2388, %v2633
        %s2638 = scalar_lea.vmem [#allocation3], 224
        %v2639 = vld [vmem:[%s2638] sm:$0xff]
        %v2640 = vld [vmem:[%s2638 + $0x8] sm:$0xff]
        %v2641 = vld [vmem:[%s2638 + $0x10] sm:$0xff]
        %v2642 = vld [vmem:[%s2638 + $0x18] sm:$0xff]
        %2643 = vmatprep.subr.mxu0 0.0
        %2644 = vmatpush1.msra.mxu0 %v2639
        %2645 = vmatprep.subr.mxu0 0.0
        %2646 = vmatpush1.msra.mxu0 %v2640
        %2647 = vmatprep.subr.mxu0 0.0
        %2648 = vmatpush1.msra.mxu0 %v2641
        %2649 = vmatprep.subr.mxu0 0.0
        %2650 = vmatpush1.msra.mxu0 %v2642
        %2651 = vmatprep.subr.mxu0 0.0
        %2652 = vmatpush1.msra.mxu0 0.0
        %2653 = vmatprep.subr.mxu0 0.0
        %2654 = vmatpush1.msra.mxu0 0.0
        %2655 = vmatprep.subr.mxu0 0.0
        %2656 = vmatpush1.msra.mxu0 0.0
        %2657 = vmatprep.subr.mxu0 0.0
        %2658 = vmatpush1.msra.mxu0 0.0
        %2659 = vmatprep.subr.mxu0 0.0
        %2660 = vmatpush1.msra.mxu0 0.0
        %2661 = vmatprep.subr.mxu0 0.0
        %2662 = vmatpush1.msra.mxu0 0.0
        %2663 = vmatprep.subr.mxu0 0.0
        %2664 = vmatpush1.msra.mxu0 0.0
        %2665 = vmatprep.subr.mxu0 0.0
        %2666 = vmatpush1.msra.mxu0 0.0
        %2667 = vmatprep.subr.mxu0 0.0
        %2668 = vmatpush1.msra.mxu0 0.0
        %2669 = vmatprep.subr.mxu0 0.0
        %2670 = vmatpush1.msra.mxu0 0.0
        %2671 = vmatprep.subr.mxu0 0.0
        %2672 = vmatpush1.msra.mxu0 0.0
        %2673 = vmatprep.subr.mxu0 0.0
        %2674 = vmatpush1.msra.mxu0 0.0
        %2675 = vmatprep.subr.mxu0 0.0
        %2676 = vmatpush1.msra.mxu0 0.0
        %2677 = vmatprep.subr.mxu0 0.0
        %2678 = vmatpush1.msra.mxu0 0.0
        %2679 = vmatprep.subr.mxu0 0.0
        %2680 = vmatpush1.msra.mxu0 0.0
        %2681 = vmatprep.subr.mxu0 0.0
        %2682 = vmatpush1.msra.mxu0 0.0
        %2683 = vmatprep.subr.mxu0 0.0
        %2684 = vmatpush1.msra.mxu0 0.0
        %2685 = vmatprep.subr.mxu0 0.0
        %2686 = vmatpush1.msra.mxu0 0.0
        %2687 = vmatprep.subr.mxu0 0.0
        %2688 = vmatpush1.msra.mxu0 0.0
        %2689 = vmatprep.subr.mxu0 0.0
        %2690 = vmatpush1.msra.mxu0 0.0
        %2691 = vmatprep.subr.mxu0 0.0
        %2692 = vmatpush1.msra.mxu0 0.0
        %2693 = vmatprep.subr.mxu0 0.0
        %2694 = vmatpush1.msra.mxu0 0.0
        %2695 = vmatprep.subr.mxu0 0.0
        %2696 = vmatpush1.msra.mxu0 0.0
        %2697 = vmatprep.subr.mxu0 0.0
        %2698 = vmatpush1.msra.mxu0 0.0
        %2699 = vmatprep.subr.mxu0 0.0
        %2700 = vmatpush1.msra.mxu0 0.0
        %2701 = vmatprep.subr.mxu0 0.0
        %2702 = vmatpush1.msra.mxu0 0.0
        %2703 = vmatprep.subr.mxu0 0.0
        %2704 = vmatpush1.msra.mxu0 0.0
        %2705 = vmatprep.subr.mxu0 0.0
        %2706 = vmatpush1.msra.mxu0 0.0
        %2707 = vmatprep.mubr.f32.mxu0 0.0
        %2708 = vmatmul.mubr.f32.gmra.mrb[0].mxu0 %v2556
        %v2709 = vpop.f32.mrb[0].mxu0
        %v2710 = vadd.f32 0.0, %v2709
        %v2711 = vpop.f32.mrb[0].mxu0
        %2712 = vmatprep.mubr.f32.mxu0 0.0
        %2713 = vmatmul.mubr.f32.gmra.mrb[0].mxu0 %v2559
        %v2714 = vpop.f32.mrb[0].mxu0
        %v2715 = vadd.f32 0.0, %v2714
        %v2716 = vpop.f32.mrb[0].mxu0
        %2717 = vdwg.mxu0
        %v2718 = vadd.f32 %v2469, %v2710
        %v2719 = vadd.f32 %v2470, %v2715
        %2720 = vmatprep.subr.mxu0 0.0
        %2721 = vmatpush1.msra.mxu0 %v2293
        %2722 = vmatprep.subr.mxu0 0.0
        %2723 = vmatpush1.msra.mxu0 %v2298
        %2724 = vmatprep.subr.mxu0 0.0
        %2725 = vmatpush1.msra.mxu0 0.0
        %2726 = vmatprep.subr.mxu0 0.0
        %2727 = vmatpush1.msra.mxu0 0.0
        %2728 = vmatprep.subr.mxu0 0.0
        %2729 = vmatpush1.msra.mxu0 0.0
        %2730 = vmatprep.subr.mxu0 0.0
        %2731 = vmatpush1.msra.mxu0 0.0
        %2732 = vmatprep.subr.mxu0 0.0
        %2733 = vmatpush1.msra.mxu0 0.0
        %2734 = vmatprep.subr.mxu0 0.0
        %2735 = vmatpush1.msra.mxu0 0.0
        %2736 = vmatprep.subr.mxu0 0.0
        %2737 = vmatpush1.msra.mxu0 0.0
        %2738 = vmatprep.subr.mxu0 0.0
        %2739 = vmatpush1.msra.mxu0 0.0
        %2740 = vmatprep.subr.mxu0 0.0
        %2741 = vmatpush1.msra.mxu0 0.0
        %2742 = vmatprep.subr.mxu0 0.0
        %2743 = vmatpush1.msra.mxu0 0.0
        %2744 = vmatprep.subr.mxu0 0.0
        %2745 = vmatpush1.msra.mxu0 0.0
        %2746 = vmatprep.subr.mxu0 0.0
        %2747 = vmatpush1.msra.mxu0 0.0
        %2748 = vmatprep.subr.mxu0 0.0
        %2749 = vmatpush1.msra.mxu0 0.0
        %2750 = vmatprep.subr.mxu0 0.0
        %2751 = vmatpush1.msra.mxu0 0.0
        %2752 = vmatprep.subr.mxu0 0.0
        %2753 = vmatpush1.msra.mxu0 0.0
        %2754 = vmatprep.subr.mxu0 0.0
        %2755 = vmatpush1.msra.mxu0 0.0
        %2756 = vmatprep.subr.mxu0 0.0
        %2757 = vmatpush1.msra.mxu0 0.0
        %2758 = vmatprep.subr.mxu0 0.0
        %2759 = vmatpush1.msra.mxu0 0.0
        %2760 = vmatprep.subr.mxu0 0.0
        %2761 = vmatpush1.msra.mxu0 0.0
        %2762 = vmatprep.subr.mxu0 0.0
        %2763 = vmatpush1.msra.mxu0 0.0
        %2764 = vmatprep.subr.mxu0 0.0
        %2765 = vmatpush1.msra.mxu0 0.0
        %2766 = vmatprep.subr.mxu0 0.0
        %2767 = vmatpush1.msra.mxu0 0.0
        %2768 = vmatprep.subr.mxu0 0.0
        %2769 = vmatpush1.msra.mxu0 0.0
        %2770 = vmatprep.subr.mxu0 0.0
        %2771 = vmatpush1.msra.mxu0 0.0
        %2772 = vmatprep.subr.mxu0 0.0
        %2773 = vmatpush1.msra.mxu0 0.0
        %2774 = vmatprep.subr.mxu0 0.0
        %2775 = vmatpush1.msra.mxu0 0.0
        %2776 = vmatprep.subr.mxu0 0.0
        %2777 = vmatpush1.msra.mxu0 0.0
        %2778 = vmatprep.subr.mxu0 0.0
        %2779 = vmatpush1.msra.mxu0 0.0
        %2780 = vmatprep.subr.mxu0 0.0
        %2781 = vmatpush1.msra.mxu0 0.0
        %2782 = vmatprep.subr.mxu0 0.0
        %2783 = vmatpush1.msra.mxu0 0.0
        %2784 = vmatprep.mubr.f32.mxu0 0.0
        %2785 = vmatmul.mubr.f32.gmra.mrb[0].mxu0 %v1393
        %v2786 = vpop.f32.mrb[0].mxu0
        %v2787 = vadd.f32 0.0, %v2786
        %v2788 = vpop.f32.mrb[0].mxu0
        %2789 = vmatprep.mubr.f32.mxu0 0.0
        %2790 = vmatmul.mubr.f32.gmra.mrb[0].mxu0 %v1396
        %v2791 = vpop.f32.mrb[0].mxu0
        %v2792 = vadd.f32 0.0, %v2791
        %v2793 = vpop.f32.mrb[0].mxu0
        %2794 = vdwg.mxu0
        %s2795 = scalar_lea.vmem [#allocation3], 96
        %v2796 = vld [vmem:[%s2795] sm:$0xff]
        %v2797 = vld [vmem:[%s2795 + $0x8] sm:$0xff]
        %v2798 = vld [vmem:[%s2795 + $0x10] sm:$0xff]
        %v2799 = vld [vmem:[%s2795 + $0x18] sm:$0xff]
        %v2801 = vsel %vm2060, %v2787, 0
        %v2804 = vsel %vm2060, %v2792, 0
        %2806 = vmatprep.subr.mxu0 0.0
        %2807 = vmatpush1.msra.mxu0 %v2796
        %2808 = vmatprep.subr.mxu0 0.0
        %2809 = vmatpush1.msra.mxu0 %v2797
        %2810 = vmatprep.subr.mxu0 0.0
        %2811 = vmatpush1.msra.mxu0 %v2798
        %2812 = vmatprep.subr.mxu0 0.0
        %2813 = vmatpush1.msra.mxu0 %v2799
        %2814 = vmatprep.subr.mxu0 0.0
        %2815 = vmatpush1.msra.mxu0 0.0
        %2816 = vmatprep.subr.mxu0 0.0
        %2817 = vmatpush1.msra.mxu0 0.0
        %2818 = vmatprep.subr.mxu0 0.0
        %2819 = vmatpush1.msra.mxu0 0.0
        %2820 = vmatprep.subr.mxu0 0.0
        %2821 = vmatpush1.msra.mxu0 0.0
        %2822 = vmatprep.subr.mxu0 0.0
        %2823 = vmatpush1.msra.mxu0 0.0
        %2824 = vmatprep.subr.mxu0 0.0
        %2825 = vmatpush1.msra.mxu0 0.0
        %2826 = vmatprep.subr.mxu0 0.0
        %2827 = vmatpush1.msra.mxu0 0.0
        %2828 = vmatprep.subr.mxu0 0.0
        %2829 = vmatpush1.msra.mxu0 0.0
        %2830 = vmatprep.subr.mxu0 0.0
        %2831 = vmatpush1.msra.mxu0 0.0
        %2832 = vmatprep.subr.mxu0 0.0
        %2833 = vmatpush1.msra.mxu0 0.0
        %2834 = vmatprep.subr.mxu0 0.0
        %2835 = vmatpush1.msra.mxu0 0.0
        %2836 = vmatprep.subr.mxu0 0.0
        %2837 = vmatpush1.msra.mxu0 0.0
        %2838 = vmatprep.subr.mxu0 0.0
        %2839 = vmatpush1.msra.mxu0 0.0
        %2840 = vmatprep.subr.mxu0 0.0
        %2841 = vmatpush1.msra.mxu0 0.0
        %2842 = vmatprep.subr.mxu0 0.0
        %2843 = vmatpush1.msra.mxu0 0.0
        %2844 = vmatprep.subr.mxu0 0.0
        %2845 = vmatpush1.msra.mxu0 0.0
        %2846 = vmatprep.subr.mxu0 0.0
        %2847 = vmatpush1.msra.mxu0 0.0
        %2848 = vmatprep.subr.mxu0 0.0
        %2849 = vmatpush1.msra.mxu0 0.0
        %2850 = vmatprep.subr.mxu0 0.0
        %2851 = vmatpush1.msra.mxu0 0.0
        %2852 = vmatprep.subr.mxu0 0.0
        %2853 = vmatpush1.msra.mxu0 0.0
        %2854 = vmatprep.subr.mxu0 0.0
        %2855 = vmatpush1.msra.mxu0 0.0
        %2856 = vmatprep.subr.mxu0 0.0
        %2857 = vmatpush1.msra.mxu0 0.0
        %2858 = vmatprep.subr.mxu0 0.0
        %2859 = vmatpush1.msra.mxu0 0.0
        %2860 = vmatprep.subr.mxu0 0.0
        %2861 = vmatpush1.msra.mxu0 0.0
        %2862 = vmatprep.subr.mxu0 0.0
        %2863 = vmatpush1.msra.mxu0 0.0
        %2864 = vmatprep.subr.mxu0 0.0
        %2865 = vmatpush1.msra.mxu0 0.0
        %2866 = vmatprep.subr.mxu0 0.0
        %2867 = vmatpush1.msra.mxu0 0.0
        %2868 = vmatprep.subr.mxu0 0.0
        %2869 = vmatpush1.msra.mxu0 0.0
        %2870 = vmatprep.mubr.f32.mxu0 0.0
        %2871 = vmatmul.mubr.f32.gmra.mrb[0].mxu0 %v2801
        %v2872 = vpop.f32.mrb[0].mxu0
        %v2873 = vadd.f32 0.0, %v2872
        %v2874 = vpop.f32.mrb[0].mxu0
        %2875 = vmatprep.mubr.f32.mxu0 0.0
        %2876 = vmatmul.mubr.f32.gmra.mrb[0].mxu0 %v2804
        %v2877 = vpop.f32.mrb[0].mxu0
        %v2878 = vadd.f32 0.0, %v2877
        %v2879 = vpop.f32.mrb[0].mxu0
        %2880 = vdwg.mxu0
        %v2881 = vadd.f32 %v2636, %v2873
        %v2882 = vadd.f32 %v2637, %v2878
        %s2883 = scalar_lea.vmem [#allocation3], 256
        %v2884 = vld [vmem:[%s2883] sm:$0xff]
        %v2885 = vld [vmem:[%s2883 + $0x8] sm:$0xff]
        %v2886 = vld [vmem:[%s2883 + $0x10] sm:$0xff]
        %v2887 = vld [vmem:[%s2883 + $0x18] sm:$0xff]
        %2888 = vmatprep.subr.mxu0 0.0
        %2889 = vmatpush1.msra.mxu0 %v2884
        %2890 = vmatprep.subr.mxu0 0.0
        %2891 = vmatpush1.msra.mxu0 %v2885
        %2892 = vmatprep.subr.mxu0 0.0
        %2893 = vmatpush1.msra.mxu0 %v2886
        %2894 = vmatprep.subr.mxu0 0.0
        %2895 = vmatpush1.msra.mxu0 %v2887
        %2896 = vmatprep.subr.mxu0 0.0
        %2897 = vmatpush1.msra.mxu0 0.0
        %2898 = vmatprep.subr.mxu0 0.0
        %2899 = vmatpush1.msra.mxu0 0.0
        %2900 = vmatprep.subr.mxu0 0.0
        %2901 = vmatpush1.msra.mxu0 0.0
        %2902 = vmatprep.subr.mxu0 0.0
        %2903 = vmatpush1.msra.mxu0 0.0
        %2904 = vmatprep.subr.mxu0 0.0
        %2905 = vmatpush1.msra.mxu0 0.0
        %2906 = vmatprep.subr.mxu0 0.0
        %2907 = vmatpush1.msra.mxu0 0.0
        %2908 = vmatprep.subr.mxu0 0.0
        %2909 = vmatpush1.msra.mxu0 0.0
        %2910 = vmatprep.subr.mxu0 0.0
        %2911 = vmatpush1.msra.mxu0 0.0
        %2912 = vmatprep.subr.mxu0 0.0
        %2913 = vmatpush1.msra.mxu0 0.0
        %2914 = vmatprep.subr.mxu0 0.0
        %2915 = vmatpush1.msra.mxu0 0.0
        %2916 = vmatprep.subr.mxu0 0.0
        %2917 = vmatpush1.msra.mxu0 0.0
        %2918 = vmatprep.subr.mxu0 0.0
        %2919 = vmatpush1.msra.mxu0 0.0
        %2920 = vmatprep.subr.mxu0 0.0
        %2921 = vmatpush1.msra.mxu0 0.0
        %2922 = vmatprep.subr.mxu0 0.0
        %2923 = vmatpush1.msra.mxu0 0.0
        %2924 = vmatprep.subr.mxu0 0.0
        %2925 = vmatpush1.msra.mxu0 0.0
        %2926 = vmatprep.subr.mxu0 0.0
        %2927 = vmatpush1.msra.mxu0 0.0
        %2928 = vmatprep.subr.mxu0 0.0
        %2929 = vmatpush1.msra.mxu0 0.0
        %2930 = vmatprep.subr.mxu0 0.0
        %2931 = vmatpush1.msra.mxu0 0.0
        %2932 = vmatprep.subr.mxu0 0.0
        %2933 = vmatpush1.msra.mxu0 0.0
        %2934 = vmatprep.subr.mxu0 0.0
        %2935 = vmatpush1.msra.mxu0 0.0
        %2936 = vmatprep.subr.mxu0 0.0
        %2937 = vmatpush1.msra.mxu0 0.0
        %2938 = vmatprep.subr.mxu0 0.0
        %2939 = vmatpush1.msra.mxu0 0.0
        %2940 = vmatprep.subr.mxu0 0.0
        %2941 = vmatpush1.msra.mxu0 0.0
        %2942 = vmatprep.subr.mxu0 0.0
        %2943 = vmatpush1.msra.mxu0 0.0
        %2944 = vmatprep.subr.mxu0 0.0
        %2945 = vmatpush1.msra.mxu0 0.0
        %2946 = vmatprep.subr.mxu0 0.0
        %2947 = vmatpush1.msra.mxu0 0.0
        %2948 = vmatprep.subr.mxu0 0.0
        %2949 = vmatpush1.msra.mxu0 0.0
        %2950 = vmatprep.subr.mxu0 0.0
        %2951 = vmatpush1.msra.mxu0 0.0
        %2952 = vmatprep.mubr.f32.mxu0 0.0
        %2953 = vmatmul.mubr.f32.gmra.mrb[0].mxu0 %v2801
        %v2954 = vpop.f32.mrb[0].mxu0
        %v2955 = vadd.f32 0.0, %v2954
        %v2956 = vpop.f32.mrb[0].mxu0
        %2957 = vmatprep.mubr.f32.mxu0 0.0
        %2958 = vmatmul.mubr.f32.gmra.mrb[0].mxu0 %v2804
        %v2959 = vpop.f32.mrb[0].mxu0
        %v2960 = vadd.f32 0.0, %v2959
        %v2961 = vpop.f32.mrb[0].mxu0
        %2962 = vdwg.mxu0
        %v2963 = vadd.f32 %v2718, %v2955
        %v2964 = vadd.f32 %v2719, %v2960
        %2965 = vmatprep.subr.mxu0 0.0
        %2966 = vmatpush1.msra.mxu0 %v2787
        %2967 = vmatprep.subr.mxu0 0.0
        %2968 = vmatpush1.msra.mxu0 %v2792
        %2969 = vmatprep.subr.mxu0 0.0
        %2970 = vmatpush1.msra.mxu0 0.0
        %2971 = vmatprep.subr.mxu0 0.0
        %2972 = vmatpush1.msra.mxu0 0.0
        %2973 = vmatprep.subr.mxu0 0.0
        %2974 = vmatpush1.msra.mxu0 0.0
        %2975 = vmatprep.subr.mxu0 0.0
        %2976 = vmatpush1.msra.mxu0 0.0
        %2977 = vmatprep.subr.mxu0 0.0
        %2978 = vmatpush1.msra.mxu0 0.0
        %2979 = vmatprep.subr.mxu0 0.0
        %2980 = vmatpush1.msra.mxu0 0.0
        %2981 = vmatprep.subr.mxu0 0.0
        %2982 = vmatpush1.msra.mxu0 0.0
        %2983 = vmatprep.subr.mxu0 0.0
        %2984 = vmatpush1.msra.mxu0 0.0
        %2985 = vmatprep.subr.mxu0 0.0
        %2986 = vmatpush1.msra.mxu0 0.0
        %2987 = vmatprep.subr.mxu0 0.0
        %2988 = vmatpush1.msra.mxu0 0.0
        %2989 = vmatprep.subr.mxu0 0.0
        %2990 = vmatpush1.msra.mxu0 0.0
        %2991 = vmatprep.subr.mxu0 0.0
        %2992 = vmatpush1.msra.mxu0 0.0
        %2993 = vmatprep.subr.mxu0 0.0
        %2994 = vmatpush1.msra.mxu0 0.0
        %2995 = vmatprep.subr.mxu0 0.0
        %2996 = vmatpush1.msra.mxu0 0.0
        %2997 = vmatprep.subr.mxu0 0.0
        %2998 = vmatpush1.msra.mxu0 0.0
        %2999 = vmatprep.subr.mxu0 0.0
        %3000 = vmatpush1.msra.mxu0 0.0
        %3001 = vmatprep.subr.mxu0 0.0
        %3002 = vmatpush1.msra.mxu0 0.0
        %3003 = vmatprep.subr.mxu0 0.0
        %3004 = vmatpush1.msra.mxu0 0.0
        %3005 = vmatprep.subr.mxu0 0.0
        %3006 = vmatpush1.msra.mxu0 0.0
        %3007 = vmatprep.subr.mxu0 0.0
        %3008 = vmatpush1.msra.mxu0 0.0
        %3009 = vmatprep.subr.mxu0 0.0
        %3010 = vmatpush1.msra.mxu0 0.0
        %3011 = vmatprep.subr.mxu0 0.0
        %3012 = vmatpush1.msra.mxu0 0.0
        %3013 = vmatprep.subr.mxu0 0.0
        %3014 = vmatpush1.msra.mxu0 0.0
        %3015 = vmatprep.subr.mxu0 0.0
        %3016 = vmatpush1.msra.mxu0 0.0
        %3017 = vmatprep.subr.mxu0 0.0
        %3018 = vmatpush1.msra.mxu0 0.0
        %3019 = vmatprep.subr.mxu0 0.0
        %3020 = vmatpush1.msra.mxu0 0.0
        %3021 = vmatprep.subr.mxu0 0.0
        %3022 = vmatpush1.msra.mxu0 0.0
        %3023 = vmatprep.subr.mxu0 0.0
        %3024 = vmatpush1.msra.mxu0 0.0
        %3025 = vmatprep.subr.mxu0 0.0
        %3026 = vmatpush1.msra.mxu0 0.0
        %3027 = vmatprep.subr.mxu0 0.0
        %3028 = vmatpush1.msra.mxu0 0.0
        %3029 = vmatprep.mubr.f32.mxu0 0.0
        %3030 = vmatmul.mubr.f32.gmra.mrb[0].mxu0 %v1393
        %v3031 = vpop.f32.mrb[0].mxu0
        %v3032 = vadd.f32 0.0, %v3031
        %v3033 = vpop.f32.mrb[0].mxu0
        %3034 = vmatprep.mubr.f32.mxu0 0.0
        %3035 = vmatmul.mubr.f32.gmra.mrb[0].mxu0 %v1396
        %v3036 = vpop.f32.mrb[0].mxu0
        %v3037 = vadd.f32 0.0, %v3036
        %v3038 = vpop.f32.mrb[0].mxu0
        %3039 = vdwg.mxu0
        %v3040 = vmul.f32 %v3032, 2.0
        %v3041 = vmul.f32 %v3037, 2.0
        %v3042 = vsub.f32 %v3040, %v2293
        %v3043 = vsub.f32 %v3041, %v2298
        %s3044 = scalar_lea.vmem [#allocation3], 128
        %v3045 = vld [vmem:[%s3044] sm:$0xff]
        %v3046 = vld [vmem:[%s3044 + $0x8] sm:$0xff]
        %v3047 = vld [vmem:[%s3044 + $0x10] sm:$0xff]
        %v3048 = vld [vmem:[%s3044 + $0x18] sm:$0xff]
        %v3050 = vsel %vm2060, %v3042, 0
        %v3053 = vsel %vm2060, %v3043, 0
        %3055 = vmatprep.subr.mxu0 0.0
        %3056 = vmatpush1.msra.mxu0 %v3045
        %3057 = vmatprep.subr.mxu0 0.0
        %3058 = vmatpush1.msra.mxu0 %v3046
        %3059 = vmatprep.subr.mxu0 0.0
        %3060 = vmatpush1.msra.mxu0 %v3047
        %3061 = vmatprep.subr.mxu0 0.0
        %3062 = vmatpush1.msra.mxu0 %v3048
        %3063 = vmatprep.subr.mxu0 0.0
        %3064 = vmatpush1.msra.mxu0 0.0
        %3065 = vmatprep.subr.mxu0 0.0
        %3066 = vmatpush1.msra.mxu0 0.0
        %3067 = vmatprep.subr.mxu0 0.0
        %3068 = vmatpush1.msra.mxu0 0.0
        %3069 = vmatprep.subr.mxu0 0.0
        %3070 = vmatpush1.msra.mxu0 0.0
        %3071 = vmatprep.subr.mxu0 0.0
        %3072 = vmatpush1.msra.mxu0 0.0
        %3073 = vmatprep.subr.mxu0 0.0
        %3074 = vmatpush1.msra.mxu0 0.0
        %3075 = vmatprep.subr.mxu0 0.0
        %3076 = vmatpush1.msra.mxu0 0.0
        %3077 = vmatprep.subr.mxu0 0.0
        %3078 = vmatpush1.msra.mxu0 0.0
        %3079 = vmatprep.subr.mxu0 0.0
        %3080 = vmatpush1.msra.mxu0 0.0
        %3081 = vmatprep.subr.mxu0 0.0
        %3082 = vmatpush1.msra.mxu0 0.0
        %3083 = vmatprep.subr.mxu0 0.0
        %3084 = vmatpush1.msra.mxu0 0.0
        %3085 = vmatprep.subr.mxu0 0.0
        %3086 = vmatpush1.msra.mxu0 0.0
        %3087 = vmatprep.subr.mxu0 0.0
        %3088 = vmatpush1.msra.mxu0 0.0
        %3089 = vmatprep.subr.mxu0 0.0
        %3090 = vmatpush1.msra.mxu0 0.0
        %3091 = vmatprep.subr.mxu0 0.0
        %3092 = vmatpush1.msra.mxu0 0.0
        %3093 = vmatprep.subr.mxu0 0.0
        %3094 = vmatpush1.msra.mxu0 0.0
        %3095 = vmatprep.subr.mxu0 0.0
        %3096 = vmatpush1.msra.mxu0 0.0
        %3097 = vmatprep.subr.mxu0 0.0
        %3098 = vmatpush1.msra.mxu0 0.0
        %3099 = vmatprep.subr.mxu0 0.0
        %3100 = vmatpush1.msra.mxu0 0.0
        %3101 = vmatprep.subr.mxu0 0.0
        %3102 = vmatpush1.msra.mxu0 0.0
        %3103 = vmatprep.subr.mxu0 0.0
        %3104 = vmatpush1.msra.mxu0 0.0
        %3105 = vmatprep.subr.mxu0 0.0
        %3106 = vmatpush1.msra.mxu0 0.0
        %3107 = vmatprep.subr.mxu0 0.0
        %3108 = vmatpush1.msra.mxu0 0.0
        %3109 = vmatprep.subr.mxu0 0.0
        %3110 = vmatpush1.msra.mxu0 0.0
        %3111 = vmatprep.subr.mxu0 0.0
        %3112 = vmatpush1.msra.mxu0 0.0
        %3113 = vmatprep.subr.mxu0 0.0
        %3114 = vmatpush1.msra.mxu0 0.0
        %3115 = vmatprep.subr.mxu0 0.0
        %3116 = vmatpush1.msra.mxu0 0.0
        %3117 = vmatprep.subr.mxu0 0.0
        %3118 = vmatpush1.msra.mxu0 0.0
        %3119 = vmatprep.mubr.f32.mxu0 0.0
        %3120 = vmatmul.mubr.f32.gmra.mrb[0].mxu0 %v3050
        %v3121 = vpop.f32.mrb[0].mxu0
        %v3122 = vadd.f32 0.0, %v3121
        %v3123 = vpop.f32.mrb[0].mxu0
        %3124 = vmatprep.mubr.f32.mxu0 0.0
        %3125 = vmatmul.mubr.f32.gmra.mrb[0].mxu0 %v3053
        %v3126 = vpop.f32.mrb[0].mxu0
        %v3127 = vadd.f32 0.0, %v3126
        %v3128 = vpop.f32.mrb[0].mxu0
        %3129 = vdwg.mxu0
        %v3130 = vadd.f32 %v2881, %v3122
        %v3131 = vadd.f32 %v2882, %v3127
        %s3132 = scalar_lea.vmem [#allocation3], 288
        %v3133 = vld [vmem:[%s3132] sm:$0xff]
        %v3134 = vld [vmem:[%s3132 + $0x8] sm:$0xff]
        %v3135 = vld [vmem:[%s3132 + $0x10] sm:$0xff]
        %v3136 = vld [vmem:[%s3132 + $0x18] sm:$0xff]
        %3137 = vmatprep.subr.mxu0 0.0
        %3138 = vmatpush1.msra.mxu0 %v3133
        %3139 = vmatprep.subr.mxu0 0.0
        %3140 = vmatpush1.msra.mxu0 %v3134
        %3141 = vmatprep.subr.mxu0 0.0
        %3142 = vmatpush1.msra.mxu0 %v3135
        %3143 = vmatprep.subr.mxu0 0.0
        %3144 = vmatpush1.msra.mxu0 %v3136
        %3145 = vmatprep.subr.mxu0 0.0
        %3146 = vmatpush1.msra.mxu0 0.0
        %3147 = vmatprep.subr.mxu0 0.0
        %3148 = vmatpush1.msra.mxu0 0.0
        %3149 = vmatprep.subr.mxu0 0.0
        %3150 = vmatpush1.msra.mxu0 0.0
        %3151 = vmatprep.subr.mxu0 0.0
        %3152 = vmatpush1.msra.mxu0 0.0
        %3153 = vmatprep.subr.mxu0 0.0
        %3154 = vmatpush1.msra.mxu0 0.0
        %3155 = vmatprep.subr.mxu0 0.0
        %3156 = vmatpush1.msra.mxu0 0.0
        %3157 = vmatprep.subr.mxu0 0.0
        %3158 = vmatpush1.msra.mxu0 0.0
        %3159 = vmatprep.subr.mxu0 0.0
        %3160 = vmatpush1.msra.mxu0 0.0
        %3161 = vmatprep.subr.mxu0 0.0
        %3162 = vmatpush1.msra.mxu0 0.0
        %3163 = vmatprep.subr.mxu0 0.0
        %3164 = vmatpush1.msra.mxu0 0.0
        %3165 = vmatprep.subr.mxu0 0.0
        %3166 = vmatpush1.msra.mxu0 0.0
        %3167 = vmatprep.subr.mxu0 0.0
        %3168 = vmatpush1.msra.mxu0 0.0
        %3169 = vmatprep.subr.mxu0 0.0
        %3170 = vmatpush1.msra.mxu0 0.0
        %3171 = vmatprep.subr.mxu0 0.0
        %3172 = vmatpush1.msra.mxu0 0.0
        %3173 = vmatprep.subr.mxu0 0.0
        %3174 = vmatpush1.msra.mxu0 0.0
        %3175 = vmatprep.subr.mxu0 0.0
        %3176 = vmatpush1.msra.mxu0 0.0
        %3177 = vmatprep.subr.mxu0 0.0
        %3178 = vmatpush1.msra.mxu0 0.0
        %3179 = vmatprep.subr.mxu0 0.0
        %3180 = vmatpush1.msra.mxu0 0.0
        %3181 = vmatprep.subr.mxu0 0.0
        %3182 = vmatpush1.msra.mxu0 0.0
        %3183 = vmatprep.subr.mxu0 0.0
        %3184 = vmatpush1.msra.mxu0 0.0
        %3185 = vmatprep.subr.mxu0 0.0
        %3186 = vmatpush1.msra.mxu0 0.0
        %3187 = vmatprep.subr.mxu0 0.0
        %3188 = vmatpush1.msra.mxu0 0.0
        %3189 = vmatprep.subr.mxu0 0.0
        %3190 = vmatpush1.msra.mxu0 0.0
        %3191 = vmatprep.subr.mxu0 0.0
        %3192 = vmatpush1.msra.mxu0 0.0
        %3193 = vmatprep.subr.mxu0 0.0
        %3194 = vmatpush1.msra.mxu0 0.0
        %3195 = vmatprep.subr.mxu0 0.0
        %3196 = vmatpush1.msra.mxu0 0.0
        %3197 = vmatprep.subr.mxu0 0.0
        %3198 = vmatpush1.msra.mxu0 0.0
        %3199 = vmatprep.subr.mxu0 0.0
        %3200 = vmatpush1.msra.mxu0 0.0
        %3201 = vmatprep.mubr.f32.mxu0 0.0
        %3202 = vmatmul.mubr.f32.gmra.mrb[0].mxu0 %v3050
        %v3203 = vpop.f32.mrb[0].mxu0
        %v3204 = vadd.f32 0.0, %v3203
        %v3205 = vpop.f32.mrb[0].mxu0
        %3206 = vmatprep.mubr.f32.mxu0 0.0
        %3207 = vmatmul.mubr.f32.gmra.mrb[0].mxu0 %v3053
        %v3208 = vpop.f32.mrb[0].mxu0
        %v3209 = vadd.f32 0.0, %v3208
        %v3210 = vpop.f32.mrb[0].mxu0
        %3211 = vdwg.mxu0
        %v3212 = vadd.f32 %v2963, %v3204
        %v3213 = vadd.f32 %v2964, %v3209
        %v3214 = vld [vmem:[%s5] sm:$0x1]
        %v3216 = vlaneseq
        %v3217 = vshrl.u32 %v3216, 7
        %v3218 = vsub.s32 0, %v3217
        %v3219 = vrot.slane %v3214, %v3218
        %v3221 = vadd.f32 %v3130, %v3219
        %v3222 = vadd.f32 %v3131, %v3219
        %v3223 = vxor.u32 %v3221, 2147483648
        %v3224 = vxor.u32 %v3222, 2147483648
        %v3225 = vmul.f32 %v3223, 1.442695
        %v3226 = vpow.pop %v3225
        %v3227 = vmul.f32 %v3224, 1.442695
        %v3228 = vpow.pop %v3227
        %v3229 = vadd.f32 %v3226, 1.0
        %v3230 = vadd.f32 %v3228, 1.0
        %v3231 = vrcp.pop %v3229
        %v3232 = vmul.f32 1.0, %v3231
        %v3233 = vrcp.pop %v3230
        %v3234 = vmul.f32 1.0, %v3233
        %s3235 = scalar_lea.vmem %s5, 1
        %v3236 = vld [vmem:[%s3235] sm:$0x1]
        %v3238 = vlaneseq
        %v3239 = vshrl.u32 %v3238, 7
        %v3240 = vsub.s32 0, %v3239
        %v3241 = vrot.slane %v3236, %v3240
        %v3243 = vadd.f32 %v3212, %v3241
        %v3244 = vadd.f32 %v3213, %v3241
        %v3245 = vxor.u32 %v3243, 2147483648
        %v3246 = vxor.u32 %v3244, 2147483648
        %v3247 = vmul.f32 %v3245, 1.442695
        %v3248 = vpow.pop %v3247
        %v3249 = vmul.f32 %v3246, 1.442695
        %v3250 = vpow.pop %v3249
        %v3251 = vadd.f32 %v3248, 1.0
        %v3252 = vadd.f32 %v3250, 1.0
        %v3253 = vrcp.pop %v3251
        %v3254 = vmul.f32 1.0, %v3253
        %v3255 = vrcp.pop %v3252
        %v3256 = vmul.f32 1.0, %v3255
        %v3257 = vmul.f32 %v3232, %v484
        %v3258 = vmul.f32 %v3234, %v485
        %s3259 = scalar_lea.vmem [#allocation3], 320
        %v3260 = vld [vmem:[%s3259] sm:$0xff]
        %v3261 = vld [vmem:[%s3259 + $0x8] sm:$0xff]
        %v3262 = vld [vmem:[%s3259 + $0x10] sm:$0xff]
        %v3263 = vld [vmem:[%s3259 + $0x18] sm:$0xff]
        %v3265 = vsel %vm2060, %v3257, 0
        %v3268 = vsel %vm2060, %v3258, 0
        %3270 = vmatprep.subr.mxu0 0.0
        %3271 = vmatpush1.msra.mxu0 %v3260
        %3272 = vmatprep.subr.mxu0 0.0
        %3273 = vmatpush1.msra.mxu0 %v3261
        %3274 = vmatprep.subr.mxu0 0.0
        %3275 = vmatpush1.msra.mxu0 %v3262
        %3276 = vmatprep.subr.mxu0 0.0
        %3277 = vmatpush1.msra.mxu0 %v3263
        %3278 = vmatprep.subr.mxu0 0.0
        %3279 = vmatpush1.msra.mxu0 0.0
        %3280 = vmatprep.subr.mxu0 0.0
        %3281 = vmatpush1.msra.mxu0 0.0
        %3282 = vmatprep.subr.mxu0 0.0
        %3283 = vmatpush1.msra.mxu0 0.0
        %3284 = vmatprep.subr.mxu0 0.0
        %3285 = vmatpush1.msra.mxu0 0.0
        %3286 = vmatprep.subr.mxu0 0.0
        %3287 = vmatpush1.msra.mxu0 0.0
        %3288 = vmatprep.subr.mxu0 0.0
        %3289 = vmatpush1.msra.mxu0 0.0
        %3290 = vmatprep.subr.mxu0 0.0
        %3291 = vmatpush1.msra.mxu0 0.0
        %3292 = vmatprep.subr.mxu0 0.0
        %3293 = vmatpush1.msra.mxu0 0.0
        %3294 = vmatprep.subr.mxu0 0.0
        %3295 = vmatpush1.msra.mxu0 0.0
        %3296 = vmatprep.subr.mxu0 0.0
        %3297 = vmatpush1.msra.mxu0 0.0
        %3298 = vmatprep.subr.mxu0 0.0
        %3299 = vmatpush1.msra.mxu0 0.0
        %3300 = vmatprep.subr.mxu0 0.0
        %3301 = vmatpush1.msra.mxu0 0.0
        %3302 = vmatprep.subr.mxu0 0.0
        %3303 = vmatpush1.msra.mxu0 0.0
        %3304 = vmatprep.subr.mxu0 0.0
        %3305 = vmatpush1.msra.mxu0 0.0
        %3306 = vmatprep.subr.mxu0 0.0
        %3307 = vmatpush1.msra.mxu0 0.0
        %3308 = vmatprep.subr.mxu0 0.0
        %3309 = vmatpush1.msra.mxu0 0.0
        %3310 = vmatprep.subr.mxu0 0.0
        %3311 = vmatpush1.msra.mxu0 0.0
        %3312 = vmatprep.subr.mxu0 0.0
        %3313 = vmatpush1.msra.mxu0 0.0
        %3314 = vmatprep.subr.mxu0 0.0
        %3315 = vmatpush1.msra.mxu0 0.0
        %3316 = vmatprep.subr.mxu0 0.0
        %3317 = vmatpush1.msra.mxu0 0.0
        %3318 = vmatprep.subr.mxu0 0.0
        %3319 = vmatpush1.msra.mxu0 0.0
        %3320 = vmatprep.subr.mxu0 0.0
        %3321 = vmatpush1.msra.mxu0 0.0
        %3322 = vmatprep.subr.mxu0 0.0
        %3323 = vmatpush1.msra.mxu0 0.0
        %3324 = vmatprep.subr.mxu0 0.0
        %3325 = vmatpush1.msra.mxu0 0.0
        %3326 = vmatprep.subr.mxu0 0.0
        %3327 = vmatpush1.msra.mxu0 0.0
        %3328 = vmatprep.subr.mxu0 0.0
        %3329 = vmatpush1.msra.mxu0 0.0
        %3330 = vmatprep.subr.mxu0 0.0
        %3331 = vmatpush1.msra.mxu0 0.0
        %3332 = vmatprep.subr.mxu0 0.0
        %3333 = vmatpush1.msra.mxu0 0.0
        %3334 = vmatprep.mubr.f32.mxu0 0.0
        %3335 = vmatmul.mubr.f32.gmra.mrb[0].mxu0 %v3265
        %v3336 = vpop.f32.mrb[0].mxu0
        %v3337 = vadd.f32 0.0, %v3336
        %v3338 = vpop.f32.mrb[0].mxu0
        %3339 = vmatprep.mubr.f32.mxu0 0.0
        %3340 = vmatmul.mubr.f32.gmra.mrb[0].mxu0 %v3268
        %v3341 = vpop.f32.mrb[0].mxu0
        %v3342 = vadd.f32 0.0, %v3341
        %v3343 = vpop.f32.mrb[0].mxu0
        %3344 = vdwg.mxu0
        %v3345 = vadd.f32 %v2054, %v3337
        %v3346 = vadd.f32 %v2055, %v3342
        %3347 = vmatprep.subr.mxu0 0.0
        %3348 = vmatpush1.msra.mxu0 %v3257
        %3349 = vmatprep.subr.mxu0 0.0
        %3350 = vmatpush1.msra.mxu0 %v3258
        %3351 = vmatprep.subr.mxu0 0.0
        %3352 = vmatpush1.msra.mxu0 0.0
        %3353 = vmatprep.subr.mxu0 0.0
        %3354 = vmatpush1.msra.mxu0 0.0
        %3355 = vmatprep.subr.mxu0 0.0
        %3356 = vmatpush1.msra.mxu0 0.0
        %3357 = vmatprep.subr.mxu0 0.0
        %3358 = vmatpush1.msra.mxu0 0.0
        %3359 = vmatprep.subr.mxu0 0.0
        %3360 = vmatpush1.msra.mxu0 0.0
        %3361 = vmatprep.subr.mxu0 0.0
        %3362 = vmatpush1.msra.mxu0 0.0
        %3363 = vmatprep.subr.mxu0 0.0
        %3364 = vmatpush1.msra.mxu0 0.0
        %3365 = vmatprep.subr.mxu0 0.0
        %3366 = vmatpush1.msra.mxu0 0.0
        %3367 = vmatprep.subr.mxu0 0.0
        %3368 = vmatpush1.msra.mxu0 0.0
        %3369 = vmatprep.subr.mxu0 0.0
        %3370 = vmatpush1.msra.mxu0 0.0
        %3371 = vmatprep.subr.mxu0 0.0
        %3372 = vmatpush1.msra.mxu0 0.0
        %3373 = vmatprep.subr.mxu0 0.0
        %3374 = vmatpush1.msra.mxu0 0.0
        %3375 = vmatprep.subr.mxu0 0.0
        %3376 = vmatpush1.msra.mxu0 0.0
        %3377 = vmatprep.subr.mxu0 0.0
        %3378 = vmatpush1.msra.mxu0 0.0
        %3379 = vmatprep.subr.mxu0 0.0
        %3380 = vmatpush1.msra.mxu0 0.0
        %3381 = vmatprep.subr.mxu0 0.0
        %3382 = vmatpush1.msra.mxu0 0.0
        %3383 = vmatprep.subr.mxu0 0.0
        %3384 = vmatpush1.msra.mxu0 0.0
        %3385 = vmatprep.subr.mxu0 0.0
        %3386 = vmatpush1.msra.mxu0 0.0
        %3387 = vmatprep.subr.mxu0 0.0
        %3388 = vmatpush1.msra.mxu0 0.0
        %3389 = vmatprep.subr.mxu0 0.0
        %3390 = vmatpush1.msra.mxu0 0.0
        %3391 = vmatprep.subr.mxu0 0.0
        %3392 = vmatpush1.msra.mxu0 0.0
        %3393 = vmatprep.subr.mxu0 0.0
        %3394 = vmatpush1.msra.mxu0 0.0
        %3395 = vmatprep.subr.mxu0 0.0
        %3396 = vmatpush1.msra.mxu0 0.0
        %3397 = vmatprep.subr.mxu0 0.0
        %3398 = vmatpush1.msra.mxu0 0.0
        %3399 = vmatprep.subr.mxu0 0.0
        %3400 = vmatpush1.msra.mxu0 0.0
        %3401 = vmatprep.subr.mxu0 0.0
        %3402 = vmatpush1.msra.mxu0 0.0
        %3403 = vmatprep.subr.mxu0 0.0
        %3404 = vmatpush1.msra.mxu0 0.0
        %3405 = vmatprep.subr.mxu0 0.0
        %3406 = vmatpush1.msra.mxu0 0.0
        %3407 = vmatprep.subr.mxu0 0.0
        %3408 = vmatpush1.msra.mxu0 0.0
        %3409 = vmatprep.subr.mxu0 0.0
        %3410 = vmatpush1.msra.mxu0 0.0
        %3411 = vmatprep.mubr.f32.mxu0 0.0
        %3412 = vmatmul.mubr.f32.gmra.mrb[0].mxu0 %v493
        %v3413 = vpop.f32.mrb[0].mxu0
        %v3414 = vadd.f32 0.0, %v3413
        %v3415 = vpop.f32.mrb[0].mxu0
        %3416 = vmatprep.mubr.f32.mxu0 0.0
        %3417 = vmatmul.mubr.f32.gmra.mrb[0].mxu0 %v496
        %v3418 = vpop.f32.mrb[0].mxu0
        %v3419 = vadd.f32 0.0, %v3418
        %v3420 = vpop.f32.mrb[0].mxu0
        %3421 = vdwg.mxu0
        %s3422 = scalar_lea.vmem [#allocation3], 352
        %v3423 = vld [vmem:[%s3422] sm:$0xff]
        %v3424 = vld [vmem:[%s3422 + $0x8] sm:$0xff]
        %v3425 = vld [vmem:[%s3422 + $0x10] sm:$0xff]
        %v3426 = vld [vmem:[%s3422 + $0x18] sm:$0xff]
        %v3428 = vsel %vm2060, %v3414, 0
        %v3431 = vsel %vm2060, %v3419, 0
        %3433 = vmatprep.subr.mxu0 0.0
        %3434 = vmatpush1.msra.mxu0 %v3423
        %3435 = vmatprep.subr.mxu0 0.0
        %3436 = vmatpush1.msra.mxu0 %v3424
        %3437 = vmatprep.subr.mxu0 0.0
        %3438 = vmatpush1.msra.mxu0 %v3425
        %3439 = vmatprep.subr.mxu0 0.0
        %3440 = vmatpush1.msra.mxu0 %v3426
        %3441 = vmatprep.subr.mxu0 0.0
        %3442 = vmatpush1.msra.mxu0 0.0
        %3443 = vmatprep.subr.mxu0 0.0
        %3444 = vmatpush1.msra.mxu0 0.0
        %3445 = vmatprep.subr.mxu0 0.0
        %3446 = vmatpush1.msra.mxu0 0.0
        %3447 = vmatprep.subr.mxu0 0.0
        %3448 = vmatpush1.msra.mxu0 0.0
        %3449 = vmatprep.subr.mxu0 0.0
        %3450 = vmatpush1.msra.mxu0 0.0
        %3451 = vmatprep.subr.mxu0 0.0
        %3452 = vmatpush1.msra.mxu0 0.0
        %3453 = vmatprep.subr.mxu0 0.0
        %3454 = vmatpush1.msra.mxu0 0.0
        %3455 = vmatprep.subr.mxu0 0.0
        %3456 = vmatpush1.msra.mxu0 0.0
        %3457 = vmatprep.subr.mxu0 0.0
        %3458 = vmatpush1.msra.mxu0 0.0
        %3459 = vmatprep.subr.mxu0 0.0
        %3460 = vmatpush1.msra.mxu0 0.0
        %3461 = vmatprep.subr.mxu0 0.0
        %3462 = vmatpush1.msra.mxu0 0.0
        %3463 = vmatprep.subr.mxu0 0.0
        %3464 = vmatpush1.msra.mxu0 0.0
        %3465 = vmatprep.subr.mxu0 0.0
        %3466 = vmatpush1.msra.mxu0 0.0
        %3467 = vmatprep.subr.mxu0 0.0
        %3468 = vmatpush1.msra.mxu0 0.0
        %3469 = vmatprep.subr.mxu0 0.0
        %3470 = vmatpush1.msra.mxu0 0.0
        %3471 = vmatprep.subr.mxu0 0.0
        %3472 = vmatpush1.msra.mxu0 0.0
        %3473 = vmatprep.subr.mxu0 0.0
        %3474 = vmatpush1.msra.mxu0 0.0
        %3475 = vmatprep.subr.mxu0 0.0
        %3476 = vmatpush1.msra.mxu0 0.0
        %3477 = vmatprep.subr.mxu0 0.0
        %3478 = vmatpush1.msra.mxu0 0.0
        %3479 = vmatprep.subr.mxu0 0.0
        %3480 = vmatpush1.msra.mxu0 0.0
        %3481 = vmatprep.subr.mxu0 0.0
        %3482 = vmatpush1.msra.mxu0 0.0
        %3483 = vmatprep.subr.mxu0 0.0
        %3484 = vmatpush1.msra.mxu0 0.0
        %3485 = vmatprep.subr.mxu0 0.0
        %3486 = vmatpush1.msra.mxu0 0.0
        %3487 = vmatprep.subr.mxu0 0.0
        %3488 = vmatpush1.msra.mxu0 0.0
        %3489 = vmatprep.subr.mxu0 0.0
        %3490 = vmatpush1.msra.mxu0 0.0
        %3491 = vmatprep.subr.mxu0 0.0
        %3492 = vmatpush1.msra.mxu0 0.0
        %3493 = vmatprep.subr.mxu0 0.0
        %3494 = vmatpush1.msra.mxu0 0.0
        %3495 = vmatprep.subr.mxu0 0.0
        %3496 = vmatpush1.msra.mxu0 0.0
        %3497 = vmatprep.mubr.f32.mxu0 0.0
        %3498 = vmatmul.mubr.f32.gmra.mrb[0].mxu0 %v3428
        %v3499 = vpop.f32.mrb[0].mxu0
        %v3500 = vadd.f32 0.0, %v3499
        %v3501 = vpop.f32.mrb[0].mxu0
        %3502 = vmatprep.mubr.f32.mxu0 0.0
        %3503 = vmatmul.mubr.f32.gmra.mrb[0].mxu0 %v3431
        %v3504 = vpop.f32.mrb[0].mxu0
        %v3505 = vadd.f32 0.0, %v3504
        %v3506 = vpop.f32.mrb[0].mxu0
        %3507 = vdwg.mxu0
        %v3508 = vadd.f32 %v3345, %v3500
        %v3509 = vadd.f32 %v3346, %v3505
        %3510 = vmatprep.subr.mxu0 0.0
        %3511 = vmatpush1.msra.mxu0 %v3414
        %3512 = vmatprep.subr.mxu0 0.0
        %3513 = vmatpush1.msra.mxu0 %v3419
        %3514 = vmatprep.subr.mxu0 0.0
        %3515 = vmatpush1.msra.mxu0 0.0
        %3516 = vmatprep.subr.mxu0 0.0
        %3517 = vmatpush1.msra.mxu0 0.0
        %3518 = vmatprep.subr.mxu0 0.0
        %3519 = vmatpush1.msra.mxu0 0.0
        %3520 = vmatprep.subr.mxu0 0.0
        %3521 = vmatpush1.msra.mxu0 0.0
        %3522 = vmatprep.subr.mxu0 0.0
        %3523 = vmatpush1.msra.mxu0 0.0
        %3524 = vmatprep.subr.mxu0 0.0
        %3525 = vmatpush1.msra.mxu0 0.0
        %3526 = vmatprep.subr.mxu0 0.0
        %3527 = vmatpush1.msra.mxu0 0.0
        %3528 = vmatprep.subr.mxu0 0.0
        %3529 = vmatpush1.msra.mxu0 0.0
        %3530 = vmatprep.subr.mxu0 0.0
        %3531 = vmatpush1.msra.mxu0 0.0
        %3532 = vmatprep.subr.mxu0 0.0
        %3533 = vmatpush1.msra.mxu0 0.0
        %3534 = vmatprep.subr.mxu0 0.0
        %3535 = vmatpush1.msra.mxu0 0.0
        %3536 = vmatprep.subr.mxu0 0.0
        %3537 = vmatpush1.msra.mxu0 0.0
        %3538 = vmatprep.subr.mxu0 0.0
        %3539 = vmatpush1.msra.mxu0 0.0
        %3540 = vmatprep.subr.mxu0 0.0
        %3541 = vmatpush1.msra.mxu0 0.0
        %3542 = vmatprep.subr.mxu0 0.0
        %3543 = vmatpush1.msra.mxu0 0.0
        %3544 = vmatprep.subr.mxu0 0.0
        %3545 = vmatpush1.msra.mxu0 0.0
        %3546 = vmatprep.subr.mxu0 0.0
        %3547 = vmatpush1.msra.mxu0 0.0
        %3548 = vmatprep.subr.mxu0 0.0
        %3549 = vmatpush1.msra.mxu0 0.0
        %3550 = vmatprep.subr.mxu0 0.0
        %3551 = vmatpush1.msra.mxu0 0.0
        %3552 = vmatprep.subr.mxu0 0.0
        %3553 = vmatpush1.msra.mxu0 0.0
        %3554 = vmatprep.subr.mxu0 0.0
        %3555 = vmatpush1.msra.mxu0 0.0
        %3556 = vmatprep.subr.mxu0 0.0
        %3557 = vmatpush1.msra.mxu0 0.0
        %3558 = vmatprep.subr.mxu0 0.0
        %3559 = vmatpush1.msra.mxu0 0.0
        %3560 = vmatprep.subr.mxu0 0.0
        %3561 = vmatpush1.msra.mxu0 0.0
        %3562 = vmatprep.subr.mxu0 0.0
        %3563 = vmatpush1.msra.mxu0 0.0
        %3564 = vmatprep.subr.mxu0 0.0
        %3565 = vmatpush1.msra.mxu0 0.0
        %3566 = vmatprep.subr.mxu0 0.0
        %3567 = vmatpush1.msra.mxu0 0.0
        %3568 = vmatprep.subr.mxu0 0.0
        %3569 = vmatpush1.msra.mxu0 0.0
        %3570 = vmatprep.subr.mxu0 0.0
        %3571 = vmatpush1.msra.mxu0 0.0
        %3572 = vmatprep.subr.mxu0 0.0
        %3573 = vmatpush1.msra.mxu0 0.0
        %3574 = vmatprep.mubr.f32.mxu0 0.0
        %3575 = vmatmul.mubr.f32.gmra.mrb[0].mxu0 %v493
        %v3576 = vpop.f32.mrb[0].mxu0
        %v3577 = vadd.f32 0.0, %v3576
        %v3578 = vpop.f32.mrb[0].mxu0
        %3579 = vmatprep.mubr.f32.mxu0 0.0
        %3580 = vmatmul.mubr.f32.gmra.mrb[0].mxu0 %v496
        %v3581 = vpop.f32.mrb[0].mxu0
        %v3582 = vadd.f32 0.0, %v3581
        %v3583 = vpop.f32.mrb[0].mxu0
        %3584 = vdwg.mxu0
        %v3585 = vmul.f32 %v3577, 2.0
        %v3586 = vmul.f32 %v3582, 2.0
        %v3587 = vsub.f32 %v3585, %v3257
        %v3588 = vsub.f32 %v3586, %v3258
        %s3589 = scalar_lea.vmem [#allocation3], 384
        %v3590 = vld [vmem:[%s3589] sm:$0xff]
        %v3591 = vld [vmem:[%s3589 + $0x8] sm:$0xff]
        %v3592 = vld [vmem:[%s3589 + $0x10] sm:$0xff]
        %v3593 = vld [vmem:[%s3589 + $0x18] sm:$0xff]
        %v3595 = vsel %vm2060, %v3587, 0
        %v3598 = vsel %vm2060, %v3588, 0
        %3600 = vmatprep.subr.mxu0 0.0
        %3601 = vmatpush1.msra.mxu0 %v3590
        %3602 = vmatprep.subr.mxu0 0.0
        %3603 = vmatpush1.msra.mxu0 %v3591
        %3604 = vmatprep.subr.mxu0 0.0
        %3605 = vmatpush1.msra.mxu0 %v3592
        %3606 = vmatprep.subr.mxu0 0.0
        %3607 = vmatpush1.msra.mxu0 %v3593
        %3608 = vmatprep.subr.mxu0 0.0
        %3609 = vmatpush1.msra.mxu0 0.0
        %3610 = vmatprep.subr.mxu0 0.0
        %3611 = vmatpush1.msra.mxu0 0.0
        %3612 = vmatprep.subr.mxu0 0.0
        %3613 = vmatpush1.msra.mxu0 0.0
        %3614 = vmatprep.subr.mxu0 0.0
        %3615 = vmatpush1.msra.mxu0 0.0
        %3616 = vmatprep.subr.mxu0 0.0
        %3617 = vmatpush1.msra.mxu0 0.0
        %3618 = vmatprep.subr.mxu0 0.0
        %3619 = vmatpush1.msra.mxu0 0.0
        %3620 = vmatprep.subr.mxu0 0.0
        %3621 = vmatpush1.msra.mxu0 0.0
        %3622 = vmatprep.subr.mxu0 0.0
        %3623 = vmatpush1.msra.mxu0 0.0
        %3624 = vmatprep.subr.mxu0 0.0
        %3625 = vmatpush1.msra.mxu0 0.0
        %3626 = vmatprep.subr.mxu0 0.0
        %3627 = vmatpush1.msra.mxu0 0.0
        %3628 = vmatprep.subr.mxu0 0.0
        %3629 = vmatpush1.msra.mxu0 0.0
        %3630 = vmatprep.subr.mxu0 0.0
        %3631 = vmatpush1.msra.mxu0 0.0
        %3632 = vmatprep.subr.mxu0 0.0
        %3633 = vmatpush1.msra.mxu0 0.0
        %3634 = vmatprep.subr.mxu0 0.0
        %3635 = vmatpush1.msra.mxu0 0.0
        %3636 = vmatprep.subr.mxu0 0.0
        %3637 = vmatpush1.msra.mxu0 0.0
        %3638 = vmatprep.subr.mxu0 0.0
        %3639 = vmatpush1.msra.mxu0 0.0
        %3640 = vmatprep.subr.mxu0 0.0
        %3641 = vmatpush1.msra.mxu0 0.0
        %3642 = vmatprep.subr.mxu0 0.0
        %3643 = vmatpush1.msra.mxu0 0.0
        %3644 = vmatprep.subr.mxu0 0.0
        %3645 = vmatpush1.msra.mxu0 0.0
        %3646 = vmatprep.subr.mxu0 0.0
        %3647 = vmatpush1.msra.mxu0 0.0
        %3648 = vmatprep.subr.mxu0 0.0
        %3649 = vmatpush1.msra.mxu0 0.0
        %3650 = vmatprep.subr.mxu0 0.0
        %3651 = vmatpush1.msra.mxu0 0.0
        %3652 = vmatprep.subr.mxu0 0.0
        %3653 = vmatpush1.msra.mxu0 0.0
        %3654 = vmatprep.subr.mxu0 0.0
        %3655 = vmatpush1.msra.mxu0 0.0
        %3656 = vmatprep.subr.mxu0 0.0
        %3657 = vmatpush1.msra.mxu0 0.0
        %3658 = vmatprep.subr.mxu0 0.0
        %3659 = vmatpush1.msra.mxu0 0.0
        %3660 = vmatprep.subr.mxu0 0.0
        %3661 = vmatpush1.msra.mxu0 0.0
        %3662 = vmatprep.subr.mxu0 0.0
        %3663 = vmatpush1.msra.mxu0 0.0
        %3664 = vmatprep.mubr.f32.mxu0 0.0
        %3665 = vmatmul.mubr.f32.gmra.mrb[0].mxu0 %v3595
        %v3666 = vpop.f32.mrb[0].mxu0
        %v3667 = vadd.f32 0.0, %v3666
        %v3668 = vpop.f32.mrb[0].mxu0
        %3669 = vmatprep.mubr.f32.mxu0 0.0
        %3670 = vmatmul.mubr.f32.gmra.mrb[0].mxu0 %v3598
        %v3671 = vpop.f32.mrb[0].mxu0
        %v3672 = vadd.f32 0.0, %v3671
        %v3673 = vpop.f32.mrb[0].mxu0
        %3674 = vdwg.mxu0
        %v3675 = vadd.f32 %v3508, %v3667
        %v3676 = vadd.f32 %v3509, %v3672
        %3677 = vmatprep.subr.mxu0 0.0
        %3678 = vmatpush1.msra.mxu0 %v3414
        %3679 = vmatprep.subr.mxu0 0.0
        %3680 = vmatpush1.msra.mxu0 %v3419
        %3681 = vmatprep.subr.mxu0 0.0
        %3682 = vmatpush1.msra.mxu0 0.0
        %3683 = vmatprep.subr.mxu0 0.0
        %3684 = vmatpush1.msra.mxu0 0.0
        %3685 = vmatprep.subr.mxu0 0.0
        %3686 = vmatpush1.msra.mxu0 0.0
        %3687 = vmatprep.subr.mxu0 0.0
        %3688 = vmatpush1.msra.mxu0 0.0
        %3689 = vmatprep.subr.mxu0 0.0
        %3690 = vmatpush1.msra.mxu0 0.0
        %3691 = vmatprep.subr.mxu0 0.0
        %3692 = vmatpush1.msra.mxu0 0.0
        %3693 = vmatprep.subr.mxu0 0.0
        %3694 = vmatpush1.msra.mxu0 0.0
        %3695 = vmatprep.subr.mxu0 0.0
        %3696 = vmatpush1.msra.mxu0 0.0
        %3697 = vmatprep.subr.mxu0 0.0
        %3698 = vmatpush1.msra.mxu0 0.0
        %3699 = vmatprep.subr.mxu0 0.0
        %3700 = vmatpush1.msra.mxu0 0.0
        %3701 = vmatprep.subr.mxu0 0.0
        %3702 = vmatpush1.msra.mxu0 0.0
        %3703 = vmatprep.subr.mxu0 0.0
        %3704 = vmatpush1.msra.mxu0 0.0
        %3705 = vmatprep.subr.mxu0 0.0
        %3706 = vmatpush1.msra.mxu0 0.0
        %3707 = vmatprep.subr.mxu0 0.0
        %3708 = vmatpush1.msra.mxu0 0.0
        %3709 = vmatprep.subr.mxu0 0.0
        %3710 = vmatpush1.msra.mxu0 0.0
        %3711 = vmatprep.subr.mxu0 0.0
        %3712 = vmatpush1.msra.mxu0 0.0
        %3713 = vmatprep.subr.mxu0 0.0
        %3714 = vmatpush1.msra.mxu0 0.0
        %3715 = vmatprep.subr.mxu0 0.0
        %3716 = vmatpush1.msra.mxu0 0.0
        %3717 = vmatprep.subr.mxu0 0.0
        %3718 = vmatpush1.msra.mxu0 0.0
        %3719 = vmatprep.subr.mxu0 0.0
        %3720 = vmatpush1.msra.mxu0 0.0
        %3721 = vmatprep.subr.mxu0 0.0
        %3722 = vmatpush1.msra.mxu0 0.0
        %3723 = vmatprep.subr.mxu0 0.0
        %3724 = vmatpush1.msra.mxu0 0.0
        %3725 = vmatprep.subr.mxu0 0.0
        %3726 = vmatpush1.msra.mxu0 0.0
        %3727 = vmatprep.subr.mxu0 0.0
        %3728 = vmatpush1.msra.mxu0 0.0
        %3729 = vmatprep.subr.mxu0 0.0
        %3730 = vmatpush1.msra.mxu0 0.0
        %3731 = vmatprep.subr.mxu0 0.0
        %3732 = vmatpush1.msra.mxu0 0.0
        %3733 = vmatprep.subr.mxu0 0.0
        %3734 = vmatpush1.msra.mxu0 0.0
        %3735 = vmatprep.subr.mxu0 0.0
        %3736 = vmatpush1.msra.mxu0 0.0
        %3737 = vmatprep.subr.mxu0 0.0
        %3738 = vmatpush1.msra.mxu0 0.0
        %3739 = vmatprep.subr.mxu0 0.0
        %3740 = vmatpush1.msra.mxu0 0.0
        %3741 = vmatprep.mubr.f32.mxu0 0.0
        %3742 = vmatmul.mubr.f32.gmra.mrb[0].mxu0 %v1393
        %v3743 = vpop.f32.mrb[0].mxu0
        %v3744 = vadd.f32 0.0, %v3743
        %v3745 = vpop.f32.mrb[0].mxu0
        %3746 = vmatprep.mubr.f32.mxu0 0.0
        %3747 = vmatmul.mubr.f32.gmra.mrb[0].mxu0 %v1396
        %v3748 = vpop.f32.mrb[0].mxu0
        %v3749 = vadd.f32 0.0, %v3748
        %v3750 = vpop.f32.mrb[0].mxu0
        %3751 = vdwg.mxu0
        %s3752 = scalar_lea.vmem [#allocation3], 416
        %v3753 = vld [vmem:[%s3752] sm:$0xff]
        %v3754 = vld [vmem:[%s3752 + $0x8] sm:$0xff]
        %v3755 = vld [vmem:[%s3752 + $0x10] sm:$0xff]
        %v3756 = vld [vmem:[%s3752 + $0x18] sm:$0xff]
        %v3758 = vsel %vm2060, %v3744, 0
        %v3761 = vsel %vm2060, %v3749, 0
        %3763 = vmatprep.subr.mxu0 0.0
        %3764 = vmatpush1.msra.mxu0 %v3753
        %3765 = vmatprep.subr.mxu0 0.0
        %3766 = vmatpush1.msra.mxu0 %v3754
        %3767 = vmatprep.subr.mxu0 0.0
        %3768 = vmatpush1.msra.mxu0 %v3755
        %3769 = vmatprep.subr.mxu0 0.0
        %3770 = vmatpush1.msra.mxu0 %v3756
        %3771 = vmatprep.subr.mxu0 0.0
        %3772 = vmatpush1.msra.mxu0 0.0
        %3773 = vmatprep.subr.mxu0 0.0
        %3774 = vmatpush1.msra.mxu0 0.0
        %3775 = vmatprep.subr.mxu0 0.0
        %3776 = vmatpush1.msra.mxu0 0.0
        %3777 = vmatprep.subr.mxu0 0.0
        %3778 = vmatpush1.msra.mxu0 0.0
        %3779 = vmatprep.subr.mxu0 0.0
        %3780 = vmatpush1.msra.mxu0 0.0
        %3781 = vmatprep.subr.mxu0 0.0
        %3782 = vmatpush1.msra.mxu0 0.0
        %3783 = vmatprep.subr.mxu0 0.0
        %3784 = vmatpush1.msra.mxu0 0.0
        %3785 = vmatprep.subr.mxu0 0.0
        %3786 = vmatpush1.msra.mxu0 0.0
        %3787 = vmatprep.subr.mxu0 0.0
        %3788 = vmatpush1.msra.mxu0 0.0
        %3789 = vmatprep.subr.mxu0 0.0
        %3790 = vmatpush1.msra.mxu0 0.0
        %3791 = vmatprep.subr.mxu0 0.0
        %3792 = vmatpush1.msra.mxu0 0.0
        %3793 = vmatprep.subr.mxu0 0.0
        %3794 = vmatpush1.msra.mxu0 0.0
        %3795 = vmatprep.subr.mxu0 0.0
        %3796 = vmatpush1.msra.mxu0 0.0
        %3797 = vmatprep.subr.mxu0 0.0
        %3798 = vmatpush1.msra.mxu0 0.0
        %3799 = vmatprep.subr.mxu0 0.0
        %3800 = vmatpush1.msra.mxu0 0.0
        %3801 = vmatprep.subr.mxu0 0.0
        %3802 = vmatpush1.msra.mxu0 0.0
        %3803 = vmatprep.subr.mxu0 0.0
        %3804 = vmatpush1.msra.mxu0 0.0
        %3805 = vmatprep.subr.mxu0 0.0
        %3806 = vmatpush1.msra.mxu0 0.0
        %3807 = vmatprep.subr.mxu0 0.0
        %3808 = vmatpush1.msra.mxu0 0.0
        %3809 = vmatprep.subr.mxu0 0.0
        %3810 = vmatpush1.msra.mxu0 0.0
        %3811 = vmatprep.subr.mxu0 0.0
        %3812 = vmatpush1.msra.mxu0 0.0
        %3813 = vmatprep.subr.mxu0 0.0
        %3814 = vmatpush1.msra.mxu0 0.0
        %3815 = vmatprep.subr.mxu0 0.0
        %3816 = vmatpush1.msra.mxu0 0.0
        %3817 = vmatprep.subr.mxu0 0.0
        %3818 = vmatpush1.msra.mxu0 0.0
        %3819 = vmatprep.subr.mxu0 0.0
        %3820 = vmatpush1.msra.mxu0 0.0
        %3821 = vmatprep.subr.mxu0 0.0
        %3822 = vmatpush1.msra.mxu0 0.0
        %3823 = vmatprep.subr.mxu0 0.0
        %3824 = vmatpush1.msra.mxu0 0.0
        %3825 = vmatprep.subr.mxu0 0.0
        %3826 = vmatpush1.msra.mxu0 0.0
        %3827 = vmatprep.mubr.f32.mxu0 0.0
        %3828 = vmatmul.mubr.f32.gmra.mrb[0].mxu0 %v3758
        %v3829 = vpop.f32.mrb[0].mxu0
        %v3830 = vadd.f32 0.0, %v3829
        %v3831 = vpop.f32.mrb[0].mxu0
        %3832 = vmatprep.mubr.f32.mxu0 0.0
        %3833 = vmatmul.mubr.f32.gmra.mrb[0].mxu0 %v3761
        %v3834 = vpop.f32.mrb[0].mxu0
        %v3835 = vadd.f32 0.0, %v3834
        %v3836 = vpop.f32.mrb[0].mxu0
        %3837 = vdwg.mxu0
        %v3838 = vadd.f32 %v3675, %v3830
        %v3839 = vadd.f32 %v3676, %v3835
        %3840 = vmatprep.subr.mxu0 0.0
        %3841 = vmatpush1.msra.mxu0 %v3744
        %3842 = vmatprep.subr.mxu0 0.0
        %3843 = vmatpush1.msra.mxu0 %v3749
        %3844 = vmatprep.subr.mxu0 0.0
        %3845 = vmatpush1.msra.mxu0 0.0
        %3846 = vmatprep.subr.mxu0 0.0
        %3847 = vmatpush1.msra.mxu0 0.0
        %3848 = vmatprep.subr.mxu0 0.0
        %3849 = vmatpush1.msra.mxu0 0.0
        %3850 = vmatprep.subr.mxu0 0.0
        %3851 = vmatpush1.msra.mxu0 0.0
        %3852 = vmatprep.subr.mxu0 0.0
        %3853 = vmatpush1.msra.mxu0 0.0
        %3854 = vmatprep.subr.mxu0 0.0
        %3855 = vmatpush1.msra.mxu0 0.0
        %3856 = vmatprep.subr.mxu0 0.0
        %3857 = vmatpush1.msra.mxu0 0.0
        %3858 = vmatprep.subr.mxu0 0.0
        %3859 = vmatpush1.msra.mxu0 0.0
        %3860 = vmatprep.subr.mxu0 0.0
        %3861 = vmatpush1.msra.mxu0 0.0
        %3862 = vmatprep.subr.mxu0 0.0
        %3863 = vmatpush1.msra.mxu0 0.0
        %3864 = vmatprep.subr.mxu0 0.0
        %3865 = vmatpush1.msra.mxu0 0.0
        %3866 = vmatprep.subr.mxu0 0.0
        %3867 = vmatpush1.msra.mxu0 0.0
        %3868 = vmatprep.subr.mxu0 0.0
        %3869 = vmatpush1.msra.mxu0 0.0
        %3870 = vmatprep.subr.mxu0 0.0
        %3871 = vmatpush1.msra.mxu0 0.0
        %3872 = vmatprep.subr.mxu0 0.0
        %3873 = vmatpush1.msra.mxu0 0.0
        %3874 = vmatprep.subr.mxu0 0.0
        %3875 = vmatpush1.msra.mxu0 0.0
        %3876 = vmatprep.subr.mxu0 0.0
        %3877 = vmatpush1.msra.mxu0 0.0
        %3878 = vmatprep.subr.mxu0 0.0
        %3879 = vmatpush1.msra.mxu0 0.0
        %3880 = vmatprep.subr.mxu0 0.0
        %3881 = vmatpush1.msra.mxu0 0.0
        %3882 = vmatprep.subr.mxu0 0.0
        %3883 = vmatpush1.msra.mxu0 0.0
        %3884 = vmatprep.subr.mxu0 0.0
        %3885 = vmatpush1.msra.mxu0 0.0
        %3886 = vmatprep.subr.mxu0 0.0
        %3887 = vmatpush1.msra.mxu0 0.0
        %3888 = vmatprep.subr.mxu0 0.0
        %3889 = vmatpush1.msra.mxu0 0.0
        %3890 = vmatprep.subr.mxu0 0.0
        %3891 = vmatpush1.msra.mxu0 0.0
        %3892 = vmatprep.subr.mxu0 0.0
        %3893 = vmatpush1.msra.mxu0 0.0
        %3894 = vmatprep.subr.mxu0 0.0
        %3895 = vmatpush1.msra.mxu0 0.0
        %3896 = vmatprep.subr.mxu0 0.0
        %3897 = vmatpush1.msra.mxu0 0.0
        %3898 = vmatprep.subr.mxu0 0.0
        %3899 = vmatpush1.msra.mxu0 0.0
        %3900 = vmatprep.subr.mxu0 0.0
        %3901 = vmatpush1.msra.mxu0 0.0
        %3902 = vmatprep.subr.mxu0 0.0
        %3903 = vmatpush1.msra.mxu0 0.0
        %3904 = vmatprep.mubr.f32.mxu0 0.0
        %3905 = vmatmul.mubr.f32.gmra.mrb[0].mxu0 %v1393
        %v3906 = vpop.f32.mrb[0].mxu0
        %v3907 = vadd.f32 0.0, %v3906
        %v3908 = vpop.f32.mrb[0].mxu0
        %3909 = vmatprep.mubr.f32.mxu0 0.0
        %3910 = vmatmul.mubr.f32.gmra.mrb[0].mxu0 %v1396
        %v3911 = vpop.f32.mrb[0].mxu0
        %v3912 = vadd.f32 0.0, %v3911
        %v3913 = vpop.f32.mrb[0].mxu0
        %3914 = vdwg.mxu0
        %v3915 = vmul.f32 %v3907, 2.0
        %v3916 = vmul.f32 %v3912, 2.0
        %v3917 = vsub.f32 %v3915, %v3414
        %v3918 = vsub.f32 %v3916, %v3419
        %s3919 = scalar_lea.vmem [#allocation3], 448
        %v3920 = vld [vmem:[%s3919] sm:$0xff]
        %v3921 = vld [vmem:[%s3919 + $0x8] sm:$0xff]
        %v3922 = vld [vmem:[%s3919 + $0x10] sm:$0xff]
        %v3923 = vld [vmem:[%s3919 + $0x18] sm:$0xff]
        %v3925 = vsel %vm2060, %v3917, 0
        %v3928 = vsel %vm2060, %v3918, 0
        %3930 = vmatprep.subr.mxu0 0.0
        %3931 = vmatpush1.msra.mxu0 %v3920
        %3932 = vmatprep.subr.mxu0 0.0
        %3933 = vmatpush1.msra.mxu0 %v3921
        %3934 = vmatprep.subr.mxu0 0.0
        %3935 = vmatpush1.msra.mxu0 %v3922
        %3936 = vmatprep.subr.mxu0 0.0
        %3937 = vmatpush1.msra.mxu0 %v3923
        %3938 = vmatprep.subr.mxu0 0.0
        %3939 = vmatpush1.msra.mxu0 0.0
        %3940 = vmatprep.subr.mxu0 0.0
        %3941 = vmatpush1.msra.mxu0 0.0
        %3942 = vmatprep.subr.mxu0 0.0
        %3943 = vmatpush1.msra.mxu0 0.0
        %3944 = vmatprep.subr.mxu0 0.0
        %3945 = vmatpush1.msra.mxu0 0.0
        %3946 = vmatprep.subr.mxu0 0.0
        %3947 = vmatpush1.msra.mxu0 0.0
        %3948 = vmatprep.subr.mxu0 0.0
        %3949 = vmatpush1.msra.mxu0 0.0
        %3950 = vmatprep.subr.mxu0 0.0
        %3951 = vmatpush1.msra.mxu0 0.0
        %3952 = vmatprep.subr.mxu0 0.0
        %3953 = vmatpush1.msra.mxu0 0.0
        %3954 = vmatprep.subr.mxu0 0.0
        %3955 = vmatpush1.msra.mxu0 0.0
        %3956 = vmatprep.subr.mxu0 0.0
        %3957 = vmatpush1.msra.mxu0 0.0
        %3958 = vmatprep.subr.mxu0 0.0
        %3959 = vmatpush1.msra.mxu0 0.0
        %3960 = vmatprep.subr.mxu0 0.0
        %3961 = vmatpush1.msra.mxu0 0.0
        %3962 = vmatprep.subr.mxu0 0.0
        %3963 = vmatpush1.msra.mxu0 0.0
        %3964 = vmatprep.subr.mxu0 0.0
        %3965 = vmatpush1.msra.mxu0 0.0
        %3966 = vmatprep.subr.mxu0 0.0
        %3967 = vmatpush1.msra.mxu0 0.0
        %3968 = vmatprep.subr.mxu0 0.0
        %3969 = vmatpush1.msra.mxu0 0.0
        %3970 = vmatprep.subr.mxu0 0.0
        %3971 = vmatpush1.msra.mxu0 0.0
        %3972 = vmatprep.subr.mxu0 0.0
        %3973 = vmatpush1.msra.mxu0 0.0
        %3974 = vmatprep.subr.mxu0 0.0
        %3975 = vmatpush1.msra.mxu0 0.0
        %3976 = vmatprep.subr.mxu0 0.0
        %3977 = vmatpush1.msra.mxu0 0.0
        %3978 = vmatprep.subr.mxu0 0.0
        %3979 = vmatpush1.msra.mxu0 0.0
        %3980 = vmatprep.subr.mxu0 0.0
        %3981 = vmatpush1.msra.mxu0 0.0
        %3982 = vmatprep.subr.mxu0 0.0
        %3983 = vmatpush1.msra.mxu0 0.0
        %3984 = vmatprep.subr.mxu0 0.0
        %3985 = vmatpush1.msra.mxu0 0.0
        %3986 = vmatprep.subr.mxu0 0.0
        %3987 = vmatpush1.msra.mxu0 0.0
        %3988 = vmatprep.subr.mxu0 0.0
        %3989 = vmatpush1.msra.mxu0 0.0
        %3990 = vmatprep.subr.mxu0 0.0
        %3991 = vmatpush1.msra.mxu0 0.0
        %3992 = vmatprep.subr.mxu0 0.0
        %3993 = vmatpush1.msra.mxu0 0.0
        %3994 = vmatprep.mubr.f32.mxu0 0.0
        %3995 = vmatmul.mubr.f32.gmra.mrb[0].mxu0 %v3925
        %v3996 = vpop.f32.mrb[0].mxu0
        %v3997 = vadd.f32 0.0, %v3996
        %v3998 = vpop.f32.mrb[0].mxu0
        %3999 = vmatprep.mubr.f32.mxu0 0.0
        %4000 = vmatmul.mubr.f32.gmra.mrb[0].mxu0 %v3928
        %v4001 = vpop.f32.mrb[0].mxu0
        %v4002 = vadd.f32 0.0, %v4001
        %v4003 = vpop.f32.mrb[0].mxu0
        %4004 = vdwg.mxu0
        %v4005 = vadd.f32 %v3838, %v3997
        %v4006 = vadd.f32 %v3839, %v4002
        %s4007 = scalar_lea.vmem %s5, 2
        %v4008 = vld [vmem:[%s4007] sm:$0x1]
        %v4010 = vlaneseq
        %v4011 = vshrl.u32 %v4010, 7
        %v4012 = vsub.s32 0, %v4011
        %v4013 = vrot.slane %v4008, %v4012
        %v4015 = vadd.f32 %v4005, %v4013
        %v4016 = vadd.f32 %v4006, %v4013
        %v4017 = vtanh.pop %v4015
        %v4018 = vtanh.pop %v4016
        %v4019 = vmul.f32 %v3254, %v484
        %v4020 = vmul.f32 %v3256, %v485
        %v4021 = vsub.f32 1.0, %v3254
        %v4022 = vsub.f32 1.0, %v3256
        %v4023 = vmul.f32 %v4021, %v4017
        %v4024 = vmul.f32 %v4022, %v4018
        %v4025 = vadd.f32 %v4019, %v4023
        %v4026 = vadd.f32 %v4020, %v4024
        %4027 = vst.msk [vmem:[%s454] sm:$0xff] %vm2060, %v4025
        %4028 = vst.msk [vmem:[%s454 + $0x8] sm:$0xff] %vm2060, %v4026
        %s4029 = scalar_lea.vmem %s454, 16 [#allocation8]
        %v4030 = vld [vmem:[%s4029] sm:$0xff]
        %v4031 = vld [vmem:[%s4029 + $0x8] sm:$0xff]
        %v4032 = vld [vmem:[#allocation5] sm:$0xff]
        %v4033 = vld [vmem:[#allocation5 + $0x8] sm:$0xff]
        %v4034 = vld [vmem:[#allocation5 + $0x10] sm:$0xff]
        %v4035 = vld [vmem:[#allocation5 + $0x18] sm:$0xff]
        %s4036 = scalar_lea.vmem [#allocation5], 160
        %v4037 = vld [vmem:[%s4036] sm:$0xff]
        %v4038 = vld [vmem:[%s4036 + $0x8] sm:$0xff]
        %v4039 = vld [vmem:[%s4036 + $0x10] sm:$0xff]
        %v4040 = vld [vmem:[%s4036 + $0x18] sm:$0xff]
        %s4041 = scalar_lea.vmem [#allocation5], 320
        %v4042 = vld [vmem:[%s4041] sm:$0xff]
        %v4043 = vld [vmem:[%s4041 + $0x8] sm:$0xff]
        %v4044 = vld [vmem:[%s4041 + $0x10] sm:$0xff]
        %v4045 = vld [vmem:[%s4041 + $0x18] sm:$0xff]
        %4046 = vmatprep.subr.mxu0 0.0
        %4047 = vmatpush1.msra.mxu0 %v4025
        %4048 = vmatprep.subr.mxu0 0.0
        %4049 = vmatpush1.msra.mxu0 %v4026
        %4050 = vmatprep.subr.mxu0 0.0
        %4051 = vmatpush1.msra.mxu0 0.0
        %4052 = vmatprep.subr.mxu0 0.0
        %4053 = vmatpush1.msra.mxu0 0.0
        %4054 = vmatprep.subr.mxu0 0.0
        %4055 = vmatpush1.msra.mxu0 0.0
        %4056 = vmatprep.subr.mxu0 0.0
        %4057 = vmatpush1.msra.mxu0 0.0
        %4058 = vmatprep.subr.mxu0 0.0
        %4059 = vmatpush1.msra.mxu0 0.0
        %4060 = vmatprep.subr.mxu0 0.0
        %4061 = vmatpush1.msra.mxu0 0.0
        %4062 = vmatprep.subr.mxu0 0.0
        %4063 = vmatpush1.msra.mxu0 0.0
        %4064 = vmatprep.subr.mxu0 0.0
        %4065 = vmatpush1.msra.mxu0 0.0
        %4066 = vmatprep.subr.mxu0 0.0
        %4067 = vmatpush1.msra.mxu0 0.0
        %4068 = vmatprep.subr.mxu0 0.0
        %4069 = vmatpush1.msra.mxu0 0.0
        %4070 = vmatprep.subr.mxu0 0.0
        %4071 = vmatpush1.msra.mxu0 0.0
        %4072 = vmatprep.subr.mxu0 0.0
        %4073 = vmatpush1.msra.mxu0 0.0
        %4074 = vmatprep.subr.mxu0 0.0
        %4075 = vmatpush1.msra.mxu0 0.0
        %4076 = vmatprep.subr.mxu0 0.0
        %4077 = vmatpush1.msra.mxu0 0.0
        %4078 = vmatprep.subr.mxu0 0.0
        %4079 = vmatpush1.msra.mxu0 0.0
        %4080 = vmatprep.subr.mxu0 0.0
        %4081 = vmatpush1.msra.mxu0 0.0
        %4082 = vmatprep.subr.mxu0 0.0
        %4083 = vmatpush1.msra.mxu0 0.0
        %4084 = vmatprep.subr.mxu0 0.0
        %4085 = vmatpush1.msra.mxu0 0.0
        %4086 = vmatprep.subr.mxu0 0.0
        %4087 = vmatpush1.msra.mxu0 0.0
        %4088 = vmatprep.subr.mxu0 0.0
        %4089 = vmatpush1.msra.mxu0 0.0
        %4090 = vmatprep.subr.mxu0 0.0
        %4091 = vmatpush1.msra.mxu0 0.0
        %4092 = vmatprep.subr.mxu0 0.0
        %4093 = vmatpush1.msra.mxu0 0.0
        %4094 = vmatprep.subr.mxu0 0.0
        %4095 = vmatpush1.msra.mxu0 0.0
        %4096 = vmatprep.subr.mxu0 0.0
        %4097 = vmatpush1.msra.mxu0 0.0
        %4098 = vmatprep.subr.mxu0 0.0
        %4099 = vmatpush1.msra.mxu0 0.0
        %4100 = vmatprep.subr.mxu0 0.0
        %4101 = vmatpush1.msra.mxu0 0.0
        %4102 = vmatprep.subr.mxu0 0.0
        %4103 = vmatpush1.msra.mxu0 0.0
        %4104 = vmatprep.subr.mxu0 0.0
        %4105 = vmatpush1.msra.mxu0 0.0
        %4106 = vmatprep.subr.mxu0 0.0
        %4107 = vmatpush1.msra.mxu0 0.0
        %4108 = vmatprep.subr.mxu0 0.0
        %4109 = vmatpush1.msra.mxu0 0.0
        %4110 = vmatprep.mubr.f32.mxu0 0.0
        %4111 = vmatmul.mubr.f32.gmra.mrb[0].mxu0 %v493
        %v4112 = vpop.f32.mrb[0].mxu0
        %v4113 = vadd.f32 0.0, %v4112
        %v4114 = vpop.f32.mrb[0].mxu0
        %4115 = vmatprep.mubr.f32.mxu0 0.0
        %4116 = vmatmul.mubr.f32.gmra.mrb[0].mxu0 %v496
        %v4117 = vpop.f32.mrb[0].mxu0
        %v4118 = vadd.f32 0.0, %v4117
        %v4119 = vpop.f32.mrb[0].mxu0
        %4120 = vdwg.mxu0
        %s4121 = scalar_lea.vmem [#allocation5], 32
        %v4122 = vld [vmem:[%s4121] sm:$0xff]
        %v4123 = vld [vmem:[%s4121 + $0x8] sm:$0xff]
        %v4124 = vld [vmem:[%s4121 + $0x10] sm:$0xff]
        %v4125 = vld [vmem:[%s4121 + $0x18] sm:$0xff]
        %v4127 = vsel %vm2060, %v4113, 0
        %v4130 = vsel %vm2060, %v4118, 0
        %4132 = vmatprep.subr.mxu0 0.0
        %4133 = vmatpush1.msra.mxu0 %v4122
        %4134 = vmatprep.subr.mxu0 0.0
        %4135 = vmatpush1.msra.mxu0 %v4123
        %4136 = vmatprep.subr.mxu0 0.0
        %4137 = vmatpush1.msra.mxu0 %v4124
        %4138 = vmatprep.subr.mxu0 0.0
        %4139 = vmatpush1.msra.mxu0 %v4125
        %4140 = vmatprep.subr.mxu0 0.0
        %4141 = vmatpush1.msra.mxu0 0.0
        %4142 = vmatprep.subr.mxu0 0.0
        %4143 = vmatpush1.msra.mxu0 0.0
        %4144 = vmatprep.subr.mxu0 0.0
        %4145 = vmatpush1.msra.mxu0 0.0
        %4146 = vmatprep.subr.mxu0 0.0
        %4147 = vmatpush1.msra.mxu0 0.0
        %4148 = vmatprep.subr.mxu0 0.0
        %4149 = vmatpush1.msra.mxu0 0.0
        %4150 = vmatprep.subr.mxu0 0.0
        %4151 = vmatpush1.msra.mxu0 0.0
        %4152 = vmatprep.subr.mxu0 0.0
        %4153 = vmatpush1.msra.mxu0 0.0
        %4154 = vmatprep.subr.mxu0 0.0
        %4155 = vmatpush1.msra.mxu0 0.0
        %4156 = vmatprep.subr.mxu0 0.0
        %4157 = vmatpush1.msra.mxu0 0.0
        %4158 = vmatprep.subr.mxu0 0.0
        %4159 = vmatpush1.msra.mxu0 0.0
        %4160 = vmatprep.subr.mxu0 0.0
        %4161 = vmatpush1.msra.mxu0 0.0
        %4162 = vmatprep.subr.mxu0 0.0
        %4163 = vmatpush1.msra.mxu0 0.0
        %4164 = vmatprep.subr.mxu0 0.0
        %4165 = vmatpush1.msra.mxu0 0.0
        %4166 = vmatprep.subr.mxu0 0.0
        %4167 = vmatpush1.msra.mxu0 0.0
        %4168 = vmatprep.subr.mxu0 0.0
        %4169 = vmatpush1.msra.mxu0 0.0
        %4170 = vmatprep.subr.mxu0 0.0
        %4171 = vmatpush1.msra.mxu0 0.0
        %4172 = vmatprep.subr.mxu0 0.0
        %4173 = vmatpush1.msra.mxu0 0.0
        %4174 = vmatprep.subr.mxu0 0.0
        %4175 = vmatpush1.msra.mxu0 0.0
        %4176 = vmatprep.subr.mxu0 0.0
        %4177 = vmatpush1.msra.mxu0 0.0
        %4178 = vmatprep.subr.mxu0 0.0
        %4179 = vmatpush1.msra.mxu0 0.0
        %4180 = vmatprep.subr.mxu0 0.0
        %4181 = vmatpush1.msra.mxu0 0.0
        %4182 = vmatprep.subr.mxu0 0.0
        %4183 = vmatpush1.msra.mxu0 0.0
        %4184 = vmatprep.subr.mxu0 0.0
        %4185 = vmatpush1.msra.mxu0 0.0
        %4186 = vmatprep.subr.mxu0 0.0
        %4187 = vmatpush1.msra.mxu0 0.0
        %4188 = vmatprep.subr.mxu0 0.0
        %4189 = vmatpush1.msra.mxu0 0.0
        %4190 = vmatprep.subr.mxu0 0.0
        %4191 = vmatpush1.msra.mxu0 0.0
        %4192 = vmatprep.subr.mxu0 0.0
        %4193 = vmatpush1.msra.mxu0 0.0
        %4194 = vmatprep.subr.mxu0 0.0
        %4195 = vmatpush1.msra.mxu0 0.0
        %4196 = vmatprep.mubr.f32.mxu0 0.0
        %4197 = vmatmul.mubr.f32.gmra.mrb[0].mxu0 %v4127
        %v4198 = vpop.f32.mrb[0].mxu0
        %v4199 = vadd.f32 0.0, %v4198
        %v4200 = vpop.f32.mrb[0].mxu0
        %4201 = vmatprep.mubr.f32.mxu0 0.0
        %4202 = vmatmul.mubr.f32.gmra.mrb[0].mxu0 %v4130
        %v4203 = vpop.f32.mrb[0].mxu0
        %v4204 = vadd.f32 0.0, %v4203
        %v4205 = vpop.f32.mrb[0].mxu0
        %4206 = vdwg.mxu0
        %v4208 = vsel %vm2060, %v4025, 0
        %v4211 = vsel %vm2060, %v4026, 0
        %4213 = vmatprep.subr.mxu0 0.0
        %4214 = vmatpush1.msra.mxu0 %v4032
        %4215 = vmatprep.subr.mxu0 0.0
        %4216 = vmatpush1.msra.mxu0 %v4033
        %4217 = vmatprep.subr.mxu0 0.0
        %4218 = vmatpush1.msra.mxu0 %v4034
        %4219 = vmatprep.subr.mxu0 0.0
        %4220 = vmatpush1.msra.mxu0 %v4035
        %4221 = vmatprep.subr.mxu0 0.0
        %4222 = vmatpush1.msra.mxu0 0.0
        %4223 = vmatprep.subr.mxu0 0.0
        %4224 = vmatpush1.msra.mxu0 0.0
        %4225 = vmatprep.subr.mxu0 0.0
        %4226 = vmatpush1.msra.mxu0 0.0
        %4227 = vmatprep.subr.mxu0 0.0
        %4228 = vmatpush1.msra.mxu0 0.0
        %4229 = vmatprep.subr.mxu0 0.0
        %4230 = vmatpush1.msra.mxu0 0.0
        %4231 = vmatprep.subr.mxu0 0.0
        %4232 = vmatpush1.msra.mxu0 0.0
        %4233 = vmatprep.subr.mxu0 0.0
        %4234 = vmatpush1.msra.mxu0 0.0
        %4235 = vmatprep.subr.mxu0 0.0
        %4236 = vmatpush1.msra.mxu0 0.0
        %4237 = vmatprep.subr.mxu0 0.0
        %4238 = vmatpush1.msra.mxu0 0.0
        %4239 = vmatprep.subr.mxu0 0.0
        %4240 = vmatpush1.msra.mxu0 0.0
        %4241 = vmatprep.subr.mxu0 0.0
        %4242 = vmatpush1.msra.mxu0 0.0
        %4243 = vmatprep.subr.mxu0 0.0
        %4244 = vmatpush1.msra.mxu0 0.0
        %4245 = vmatprep.subr.mxu0 0.0
        %4246 = vmatpush1.msra.mxu0 0.0
        %4247 = vmatprep.subr.mxu0 0.0
        %4248 = vmatpush1.msra.mxu0 0.0
        %4249 = vmatprep.subr.mxu0 0.0
        %4250 = vmatpush1.msra.mxu0 0.0
        %4251 = vmatprep.subr.mxu0 0.0
        %4252 = vmatpush1.msra.mxu0 0.0
        %4253 = vmatprep.subr.mxu0 0.0
        %4254 = vmatpush1.msra.mxu0 0.0
        %4255 = vmatprep.subr.mxu0 0.0
        %4256 = vmatpush1.msra.mxu0 0.0
        %4257 = vmatprep.subr.mxu0 0.0
        %4258 = vmatpush1.msra.mxu0 0.0
        %4259 = vmatprep.subr.mxu0 0.0
        %4260 = vmatpush1.msra.mxu0 0.0
        %4261 = vmatprep.subr.mxu0 0.0
        %4262 = vmatpush1.msra.mxu0 0.0
        %4263 = vmatprep.subr.mxu0 0.0
        %4264 = vmatpush1.msra.mxu0 0.0
        %4265 = vmatprep.subr.mxu0 0.0
        %4266 = vmatpush1.msra.mxu0 0.0
        %4267 = vmatprep.subr.mxu0 0.0
        %4268 = vmatpush1.msra.mxu0 0.0
        %4269 = vmatprep.subr.mxu0 0.0
        %4270 = vmatpush1.msra.mxu0 0.0
        %4271 = vmatprep.subr.mxu0 0.0
        %4272 = vmatpush1.msra.mxu0 0.0
        %4273 = vmatprep.subr.mxu0 0.0
        %4274 = vmatpush1.msra.mxu0 0.0
        %4275 = vmatprep.subr.mxu0 0.0
        %4276 = vmatpush1.msra.mxu0 0.0
        %4277 = vmatprep.mubr.f32.mxu0 0.0
        %4278 = vmatmul.mubr.f32.gmra.mrb[0].mxu0 %v4208
        %v4279 = vpop.f32.mrb[0].mxu0
        %v4280 = vadd.f32 %v4199, %v4279
        %v4281 = vpop.f32.mrb[0].mxu0
        %4282 = vmatprep.mubr.f32.mxu0 0.0
        %4283 = vmatmul.mubr.f32.gmra.mrb[0].mxu0 %v4211
        %v4284 = vpop.f32.mrb[0].mxu0
        %v4285 = vadd.f32 %v4204, %v4284
        %v4286 = vpop.f32.mrb[0].mxu0
        %4287 = vdwg.mxu0
        %s4288 = scalar_lea.vmem [#allocation5], 192
        %v4289 = vld [vmem:[%s4288] sm:$0xff]
        %v4290 = vld [vmem:[%s4288 + $0x8] sm:$0xff]
        %v4291 = vld [vmem:[%s4288 + $0x10] sm:$0xff]
        %v4292 = vld [vmem:[%s4288 + $0x18] sm:$0xff]
        %4293 = vmatprep.subr.mxu0 0.0
        %4294 = vmatpush1.msra.mxu0 %v4289
        %4295 = vmatprep.subr.mxu0 0.0
        %4296 = vmatpush1.msra.mxu0 %v4290
        %4297 = vmatprep.subr.mxu0 0.0
        %4298 = vmatpush1.msra.mxu0 %v4291
        %4299 = vmatprep.subr.mxu0 0.0
        %4300 = vmatpush1.msra.mxu0 %v4292
        %4301 = vmatprep.subr.mxu0 0.0
        %4302 = vmatpush1.msra.mxu0 0.0
        %4303 = vmatprep.subr.mxu0 0.0
        %4304 = vmatpush1.msra.mxu0 0.0
        %4305 = vmatprep.subr.mxu0 0.0
        %4306 = vmatpush1.msra.mxu0 0.0
        %4307 = vmatprep.subr.mxu0 0.0
        %4308 = vmatpush1.msra.mxu0 0.0
        %4309 = vmatprep.subr.mxu0 0.0
        %4310 = vmatpush1.msra.mxu0 0.0
        %4311 = vmatprep.subr.mxu0 0.0
        %4312 = vmatpush1.msra.mxu0 0.0
        %4313 = vmatprep.subr.mxu0 0.0
        %4314 = vmatpush1.msra.mxu0 0.0
        %4315 = vmatprep.subr.mxu0 0.0
        %4316 = vmatpush1.msra.mxu0 0.0
        %4317 = vmatprep.subr.mxu0 0.0
        %4318 = vmatpush1.msra.mxu0 0.0
        %4319 = vmatprep.subr.mxu0 0.0
        %4320 = vmatpush1.msra.mxu0 0.0
        %4321 = vmatprep.subr.mxu0 0.0
        %4322 = vmatpush1.msra.mxu0 0.0
        %4323 = vmatprep.subr.mxu0 0.0
        %4324 = vmatpush1.msra.mxu0 0.0
        %4325 = vmatprep.subr.mxu0 0.0
        %4326 = vmatpush1.msra.mxu0 0.0
        %4327 = vmatprep.subr.mxu0 0.0
        %4328 = vmatpush1.msra.mxu0 0.0
        %4329 = vmatprep.subr.mxu0 0.0
        %4330 = vmatpush1.msra.mxu0 0.0
        %4331 = vmatprep.subr.mxu0 0.0
        %4332 = vmatpush1.msra.mxu0 0.0
        %4333 = vmatprep.subr.mxu0 0.0
        %4334 = vmatpush1.msra.mxu0 0.0
        %4335 = vmatprep.subr.mxu0 0.0
        %4336 = vmatpush1.msra.mxu0 0.0
        %4337 = vmatprep.subr.mxu0 0.0
        %4338 = vmatpush1.msra.mxu0 0.0
        %4339 = vmatprep.subr.mxu0 0.0
        %4340 = vmatpush1.msra.mxu0 0.0
        %4341 = vmatprep.subr.mxu0 0.0
        %4342 = vmatpush1.msra.mxu0 0.0
        %4343 = vmatprep.subr.mxu0 0.0
        %4344 = vmatpush1.msra.mxu0 0.0
        %4345 = vmatprep.subr.mxu0 0.0
        %4346 = vmatpush1.msra.mxu0 0.0
        %4347 = vmatprep.subr.mxu0 0.0
        %4348 = vmatpush1.msra.mxu0 0.0
        %4349 = vmatprep.subr.mxu0 0.0
        %4350 = vmatpush1.msra.mxu0 0.0
        %4351 = vmatprep.subr.mxu0 0.0
        %4352 = vmatpush1.msra.mxu0 0.0
        %4353 = vmatprep.subr.mxu0 0.0
        %4354 = vmatpush1.msra.mxu0 0.0
        %4355 = vmatprep.subr.mxu0 0.0
        %4356 = vmatpush1.msra.mxu0 0.0
        %4357 = vmatprep.mubr.f32.mxu0 0.0
        %4358 = vmatmul.mubr.f32.gmra.mrb[0].mxu0 %v4127
        %v4359 = vpop.f32.mrb[0].mxu0
        %v4360 = vadd.f32 0.0, %v4359
        %v4361 = vpop.f32.mrb[0].mxu0
        %4362 = vmatprep.mubr.f32.mxu0 0.0
        %4363 = vmatmul.mubr.f32.gmra.mrb[0].mxu0 %v4130
        %v4364 = vpop.f32.mrb[0].mxu0
        %v4365 = vadd.f32 0.0, %v4364
        %v4366 = vpop.f32.mrb[0].mxu0
        %4367 = vdwg.mxu0
        %4368 = vmatprep.subr.mxu0 0.0
        %4369 = vmatpush1.msra.mxu0 %v4037
        %4370 = vmatprep.subr.mxu0 0.0
        %4371 = vmatpush1.msra.mxu0 %v4038
        %4372 = vmatprep.subr.mxu0 0.0
        %4373 = vmatpush1.msra.mxu0 %v4039
        %4374 = vmatprep.subr.mxu0 0.0
        %4375 = vmatpush1.msra.mxu0 %v4040
        %4376 = vmatprep.subr.mxu0 0.0
        %4377 = vmatpush1.msra.mxu0 0.0
        %4378 = vmatprep.subr.mxu0 0.0
        %4379 = vmatpush1.msra.mxu0 0.0
        %4380 = vmatprep.subr.mxu0 0.0
        %4381 = vmatpush1.msra.mxu0 0.0
        %4382 = vmatprep.subr.mxu0 0.0
        %4383 = vmatpush1.msra.mxu0 0.0
        %4384 = vmatprep.subr.mxu0 0.0
        %4385 = vmatpush1.msra.mxu0 0.0
        %4386 = vmatprep.subr.mxu0 0.0
        %4387 = vmatpush1.msra.mxu0 0.0
        %4388 = vmatprep.subr.mxu0 0.0
        %4389 = vmatpush1.msra.mxu0 0.0
        %4390 = vmatprep.subr.mxu0 0.0
        %4391 = vmatpush1.msra.mxu0 0.0
        %4392 = vmatprep.subr.mxu0 0.0
        %4393 = vmatpush1.msra.mxu0 0.0
        %4394 = vmatprep.subr.mxu0 0.0
        %4395 = vmatpush1.msra.mxu0 0.0
        %4396 = vmatprep.subr.mxu0 0.0
        %4397 = vmatpush1.msra.mxu0 0.0
        %4398 = vmatprep.subr.mxu0 0.0
        %4399 = vmatpush1.msra.mxu0 0.0
        %4400 = vmatprep.subr.mxu0 0.0
        %4401 = vmatpush1.msra.mxu0 0.0
        %4402 = vmatprep.subr.mxu0 0.0
        %4403 = vmatpush1.msra.mxu0 0.0
        %4404 = vmatprep.subr.mxu0 0.0
        %4405 = vmatpush1.msra.mxu0 0.0
        %4406 = vmatprep.subr.mxu0 0.0
        %4407 = vmatpush1.msra.mxu0 0.0
        %4408 = vmatprep.subr.mxu0 0.0
        %4409 = vmatpush1.msra.mxu0 0.0
        %4410 = vmatprep.subr.mxu0 0.0
        %4411 = vmatpush1.msra.mxu0 0.0
        %4412 = vmatprep.subr.mxu0 0.0
        %4413 = vmatpush1.msra.mxu0 0.0
        %4414 = vmatprep.subr.mxu0 0.0
        %4415 = vmatpush1.msra.mxu0 0.0
        %4416 = vmatprep.subr.mxu0 0.0
        %4417 = vmatpush1.msra.mxu0 0.0
        %4418 = vmatprep.subr.mxu0 0.0
        %4419 = vmatpush1.msra.mxu0 0.0
        %4420 = vmatprep.subr.mxu0 0.0
        %4421 = vmatpush1.msra.mxu0 0.0
        %4422 = vmatprep.subr.mxu0 0.0
        %4423 = vmatpush1.msra.mxu0 0.0
        %4424 = vmatprep.subr.mxu0 0.0
        %4425 = vmatpush1.msra.mxu0 0.0
        %4426 = vmatprep.subr.mxu0 0.0
        %4427 = vmatpush1.msra.mxu0 0.0
        %4428 = vmatprep.subr.mxu0 0.0
        %4429 = vmatpush1.msra.mxu0 0.0
        %4430 = vmatprep.subr.mxu0 0.0
        %4431 = vmatpush1.msra.mxu0 0.0
        %4432 = vmatprep.mubr.f32.mxu0 0.0
        %4433 = vmatmul.mubr.f32.gmra.mrb[0].mxu0 %v4208
        %v4434 = vpop.f32.mrb[0].mxu0
        %v4435 = vadd.f32 %v4360, %v4434
        %v4436 = vpop.f32.mrb[0].mxu0
        %4437 = vmatprep.mubr.f32.mxu0 0.0
        %4438 = vmatmul.mubr.f32.gmra.mrb[0].mxu0 %v4211
        %v4439 = vpop.f32.mrb[0].mxu0
        %v4440 = vadd.f32 %v4365, %v4439
        %v4441 = vpop.f32.mrb[0].mxu0
        %4442 = vdwg.mxu0
        %s4443 = scalar_lea.vmem [#allocation5], 352
        %v4444 = vld [vmem:[%s4443] sm:$0xff]
        %v4445 = vld [vmem:[%s4443 + $0x8] sm:$0xff]
        %v4446 = vld [vmem:[%s4443 + $0x10] sm:$0xff]
        %v4447 = vld [vmem:[%s4443 + $0x18] sm:$0xff]
        %4448 = vmatprep.subr.mxu0 0.0
        %4449 = vmatpush1.msra.mxu0 %v4444
        %4450 = vmatprep.subr.mxu0 0.0
        %4451 = vmatpush1.msra.mxu0 %v4445
        %4452 = vmatprep.subr.mxu0 0.0
        %4453 = vmatpush1.msra.mxu0 %v4446
        %4454 = vmatprep.subr.mxu0 0.0
        %4455 = vmatpush1.msra.mxu0 %v4447
        %4456 = vmatprep.subr.mxu0 0.0
        %4457 = vmatpush1.msra.mxu0 0.0
        %4458 = vmatprep.subr.mxu0 0.0
        %4459 = vmatpush1.msra.mxu0 0.0
        %4460 = vmatprep.subr.mxu0 0.0
        %4461 = vmatpush1.msra.mxu0 0.0
        %4462 = vmatprep.subr.mxu0 0.0
        %4463 = vmatpush1.msra.mxu0 0.0
        %4464 = vmatprep.subr.mxu0 0.0
        %4465 = vmatpush1.msra.mxu0 0.0
        %4466 = vmatprep.subr.mxu0 0.0
        %4467 = vmatpush1.msra.mxu0 0.0
        %4468 = vmatprep.subr.mxu0 0.0
        %4469 = vmatpush1.msra.mxu0 0.0
        %4470 = vmatprep.subr.mxu0 0.0
        %4471 = vmatpush1.msra.mxu0 0.0
        %4472 = vmatprep.subr.mxu0 0.0
        %4473 = vmatpush1.msra.mxu0 0.0
        %4474 = vmatprep.subr.mxu0 0.0
        %4475 = vmatpush1.msra.mxu0 0.0
        %4476 = vmatprep.subr.mxu0 0.0
        %4477 = vmatpush1.msra.mxu0 0.0
        %4478 = vmatprep.subr.mxu0 0.0
        %4479 = vmatpush1.msra.mxu0 0.0
        %4480 = vmatprep.subr.mxu0 0.0
        %4481 = vmatpush1.msra.mxu0 0.0
        %4482 = vmatprep.subr.mxu0 0.0
        %4483 = vmatpush1.msra.mxu0 0.0
        %4484 = vmatprep.subr.mxu0 0.0
        %4485 = vmatpush1.msra.mxu0 0.0
        %4486 = vmatprep.subr.mxu0 0.0
        %4487 = vmatpush1.msra.mxu0 0.0
        %4488 = vmatprep.subr.mxu0 0.0
        %4489 = vmatpush1.msra.mxu0 0.0
        %4490 = vmatprep.subr.mxu0 0.0
        %4491 = vmatpush1.msra.mxu0 0.0
        %4492 = vmatprep.subr.mxu0 0.0
        %4493 = vmatpush1.msra.mxu0 0.0
        %4494 = vmatprep.subr.mxu0 0.0
        %4495 = vmatpush1.msra.mxu0 0.0
        %4496 = vmatprep.subr.mxu0 0.0
        %4497 = vmatpush1.msra.mxu0 0.0
        %4498 = vmatprep.subr.mxu0 0.0
        %4499 = vmatpush1.msra.mxu0 0.0
        %4500 = vmatprep.subr.mxu0 0.0
        %4501 = vmatpush1.msra.mxu0 0.0
        %4502 = vmatprep.subr.mxu0 0.0
        %4503 = vmatpush1.msra.mxu0 0.0
        %4504 = vmatprep.subr.mxu0 0.0
        %4505 = vmatpush1.msra.mxu0 0.0
        %4506 = vmatprep.subr.mxu0 0.0
        %4507 = vmatpush1.msra.mxu0 0.0
        %4508 = vmatprep.subr.mxu0 0.0
        %4509 = vmatpush1.msra.mxu0 0.0
        %4510 = vmatprep.subr.mxu0 0.0
        %4511 = vmatpush1.msra.mxu0 0.0
        %4512 = vmatprep.mubr.f32.mxu0 0.0
        %4513 = vmatmul.mubr.f32.gmra.mrb[0].mxu0 %v4127
        %v4514 = vpop.f32.mrb[0].mxu0
        %v4515 = vadd.f32 0.0, %v4514
        %v4516 = vpop.f32.mrb[0].mxu0
        %4517 = vmatprep.mubr.f32.mxu0 0.0
        %4518 = vmatmul.mubr.f32.gmra.mrb[0].mxu0 %v4130
        %v4519 = vpop.f32.mrb[0].mxu0
        %v4520 = vadd.f32 0.0, %v4519
        %v4521 = vpop.f32.mrb[0].mxu0
        %4522 = vdwg.mxu0
        %4523 = vmatprep.subr.mxu0 0.0
        %4524 = vmatpush1.msra.mxu0 %v4042
        %4525 = vmatprep.subr.mxu0 0.0
        %4526 = vmatpush1.msra.mxu0 %v4043
        %4527 = vmatprep.subr.mxu0 0.0
        %4528 = vmatpush1.msra.mxu0 %v4044
        %4529 = vmatprep.subr.mxu0 0.0
        %4530 = vmatpush1.msra.mxu0 %v4045
        %4531 = vmatprep.subr.mxu0 0.0
        %4532 = vmatpush1.msra.mxu0 0.0
        %4533 = vmatprep.subr.mxu0 0.0
        %4534 = vmatpush1.msra.mxu0 0.0
        %4535 = vmatprep.subr.mxu0 0.0
        %4536 = vmatpush1.msra.mxu0 0.0
        %4537 = vmatprep.subr.mxu0 0.0
        %4538 = vmatpush1.msra.mxu0 0.0
        %4539 = vmatprep.subr.mxu0 0.0
        %4540 = vmatpush1.msra.mxu0 0.0
        %4541 = vmatprep.subr.mxu0 0.0
        %4542 = vmatpush1.msra.mxu0 0.0
        %4543 = vmatprep.subr.mxu0 0.0
        %4544 = vmatpush1.msra.mxu0 0.0
        %4545 = vmatprep.subr.mxu0 0.0
        %4546 = vmatpush1.msra.mxu0 0.0
        %4547 = vmatprep.subr.mxu0 0.0
        %4548 = vmatpush1.msra.mxu0 0.0
        %4549 = vmatprep.subr.mxu0 0.0
        %4550 = vmatpush1.msra.mxu0 0.0
        %4551 = vmatprep.subr.mxu0 0.0
        %4552 = vmatpush1.msra.mxu0 0.0
        %4553 = vmatprep.subr.mxu0 0.0
        %4554 = vmatpush1.msra.mxu0 0.0
        %4555 = vmatprep.subr.mxu0 0.0
        %4556 = vmatpush1.msra.mxu0 0.0
        %4557 = vmatprep.subr.mxu0 0.0
        %4558 = vmatpush1.msra.mxu0 0.0
        %4559 = vmatprep.subr.mxu0 0.0
        %4560 = vmatpush1.msra.mxu0 0.0
        %4561 = vmatprep.subr.mxu0 0.0
        %4562 = vmatpush1.msra.mxu0 0.0
        %4563 = vmatprep.subr.mxu0 0.0
        %4564 = vmatpush1.msra.mxu0 0.0
        %4565 = vmatprep.subr.mxu0 0.0
        %4566 = vmatpush1.msra.mxu0 0.0
        %4567 = vmatprep.subr.mxu0 0.0
        %4568 = vmatpush1.msra.mxu0 0.0
        %4569 = vmatprep.subr.mxu0 0.0
        %4570 = vmatpush1.msra.mxu0 0.0
        %4571 = vmatprep.subr.mxu0 0.0
        %4572 = vmatpush1.msra.mxu0 0.0
        %4573 = vmatprep.subr.mxu0 0.0
        %4574 = vmatpush1.msra.mxu0 0.0
        %4575 = vmatprep.subr.mxu0 0.0
        %4576 = vmatpush1.msra.mxu0 0.0
        %4577 = vmatprep.subr.mxu0 0.0
        %4578 = vmatpush1.msra.mxu0 0.0
        %4579 = vmatprep.subr.mxu0 0.0
        %4580 = vmatpush1.msra.mxu0 0.0
        %4581 = vmatprep.subr.mxu0 0.0
        %4582 = vmatpush1.msra.mxu0 0.0
        %4583 = vmatprep.subr.mxu0 0.0
        %4584 = vmatpush1.msra.mxu0 0.0
        %4585 = vmatprep.subr.mxu0 0.0
        %4586 = vmatpush1.msra.mxu0 0.0
        %4587 = vmatprep.mubr.f32.mxu0 0.0
        %4588 = vmatmul.mubr.f32.gmra.mrb[0].mxu0 %v4208
        %v4589 = vpop.f32.mrb[0].mxu0
        %v4590 = vadd.f32 %v4515, %v4589
        %v4591 = vpop.f32.mrb[0].mxu0
        %4592 = vmatprep.mubr.f32.mxu0 0.0
        %4593 = vmatmul.mubr.f32.gmra.mrb[0].mxu0 %v4211
        %v4594 = vpop.f32.mrb[0].mxu0
        %v4595 = vadd.f32 %v4520, %v4594
        %v4596 = vpop.f32.mrb[0].mxu0
        %4597 = vdwg.mxu0
        %4598 = vmatprep.subr.mxu0 0.0
        %4599 = vmatpush1.msra.mxu0 %v4113
        %4600 = vmatprep.subr.mxu0 0.0
        %4601 = vmatpush1.msra.mxu0 %v4118
        %4602 = vmatprep.subr.mxu0 0.0
        %4603 = vmatpush1.msra.mxu0 0.0
        %4604 = vmatprep.subr.mxu0 0.0
        %4605 = vmatpush1.msra.mxu0 0.0
        %4606 = vmatprep.subr.mxu0 0.0
        %4607 = vmatpush1.msra.mxu0 0.0
        %4608 = vmatprep.subr.mxu0 0.0
        %4609 = vmatpush1.msra.mxu0 0.0
        %4610 = vmatprep.subr.mxu0 0.0
        %4611 = vmatpush1.msra.mxu0 0.0
        %4612 = vmatprep.subr.mxu0 0.0
        %4613 = vmatpush1.msra.mxu0 0.0
        %4614 = vmatprep.subr.mxu0 0.0
        %4615 = vmatpush1.msra.mxu0 0.0
        %4616 = vmatprep.subr.mxu0 0.0
        %4617 = vmatpush1.msra.mxu0 0.0
        %4618 = vmatprep.subr.mxu0 0.0
        %4619 = vmatpush1.msra.mxu0 0.0
        %4620 = vmatprep.subr.mxu0 0.0
        %4621 = vmatpush1.msra.mxu0 0.0
        %4622 = vmatprep.subr.mxu0 0.0
        %4623 = vmatpush1.msra.mxu0 0.0
        %4624 = vmatprep.subr.mxu0 0.0
        %4625 = vmatpush1.msra.mxu0 0.0
        %4626 = vmatprep.subr.mxu0 0.0
        %4627 = vmatpush1.msra.mxu0 0.0
        %4628 = vmatprep.subr.mxu0 0.0
        %4629 = vmatpush1.msra.mxu0 0.0
        %4630 = vmatprep.subr.mxu0 0.0
        %4631 = vmatpush1.msra.mxu0 0.0
        %4632 = vmatprep.subr.mxu0 0.0
        %4633 = vmatpush1.msra.mxu0 0.0
        %4634 = vmatprep.subr.mxu0 0.0
        %4635 = vmatpush1.msra.mxu0 0.0
        %4636 = vmatprep.subr.mxu0 0.0
        %4637 = vmatpush1.msra.mxu0 0.0
        %4638 = vmatprep.subr.mxu0 0.0
        %4639 = vmatpush1.msra.mxu0 0.0
        %4640 = vmatprep.subr.mxu0 0.0
        %4641 = vmatpush1.msra.mxu0 0.0
        %4642 = vmatprep.subr.mxu0 0.0
        %4643 = vmatpush1.msra.mxu0 0.0
        %4644 = vmatprep.subr.mxu0 0.0
        %4645 = vmatpush1.msra.mxu0 0.0
        %4646 = vmatprep.subr.mxu0 0.0
        %4647 = vmatpush1.msra.mxu0 0.0
        %4648 = vmatprep.subr.mxu0 0.0
        %4649 = vmatpush1.msra.mxu0 0.0
        %4650 = vmatprep.subr.mxu0 0.0
        %4651 = vmatpush1.msra.mxu0 0.0
        %4652 = vmatprep.subr.mxu0 0.0
        %4653 = vmatpush1.msra.mxu0 0.0
        %4654 = vmatprep.subr.mxu0 0.0
        %4655 = vmatpush1.msra.mxu0 0.0
        %4656 = vmatprep.subr.mxu0 0.0
        %4657 = vmatpush1.msra.mxu0 0.0
        %4658 = vmatprep.subr.mxu0 0.0
        %4659 = vmatpush1.msra.mxu0 0.0
        %4660 = vmatprep.subr.mxu0 0.0
        %4661 = vmatpush1.msra.mxu0 0.0
        %4662 = vmatprep.mubr.f32.mxu0 0.0
        %4663 = vmatmul.mubr.f32.gmra.mrb[0].mxu0 %v493
        %v4664 = vpop.f32.mrb[0].mxu0
        %v4665 = vadd.f32 0.0, %v4664
        %v4666 = vpop.f32.mrb[0].mxu0
        %4667 = vmatprep.mubr.f32.mxu0 0.0
        %4668 = vmatmul.mubr.f32.gmra.mrb[0].mxu0 %v496
        %v4669 = vpop.f32.mrb[0].mxu0
        %v4670 = vadd.f32 0.0, %v4669
        %v4671 = vpop.f32.mrb[0].mxu0
        %4672 = vdwg.mxu0
        %v4673 = vmul.f32 %v4665, 2.0
        %v4674 = vmul.f32 %v4670, 2.0
        %v4675 = vsub.f32 %v4673, %v4025
        %v4676 = vsub.f32 %v4674, %v4026
        %s4677 = scalar_lea.vmem [#allocation5], 64
        %v4678 = vld [vmem:[%s4677] sm:$0xff]
        %v4679 = vld [vmem:[%s4677 + $0x8] sm:$0xff]
        %v4680 = vld [vmem:[%s4677 + $0x10] sm:$0xff]
        %v4681 = vld [vmem:[%s4677 + $0x18] sm:$0xff]
        %v4683 = vsel %vm2060, %v4675, 0
        %v4686 = vsel %vm2060, %v4676, 0
        %4688 = vmatprep.subr.mxu0 0.0
        %4689 = vmatpush1.msra.mxu0 %v4678
        %4690 = vmatprep.subr.mxu0 0.0
        %4691 = vmatpush1.msra.mxu0 %v4679
        %4692 = vmatprep.subr.mxu0 0.0
        %4693 = vmatpush1.msra.mxu0 %v4680
        %4694 = vmatprep.subr.mxu0 0.0
        %4695 = vmatpush1.msra.mxu0 %v4681
        %4696 = vmatprep.subr.mxu0 0.0
        %4697 = vmatpush1.msra.mxu0 0.0
        %4698 = vmatprep.subr.mxu0 0.0
        %4699 = vmatpush1.msra.mxu0 0.0
        %4700 = vmatprep.subr.mxu0 0.0
        %4701 = vmatpush1.msra.mxu0 0.0
        %4702 = vmatprep.subr.mxu0 0.0
        %4703 = vmatpush1.msra.mxu0 0.0
        %4704 = vmatprep.subr.mxu0 0.0
        %4705 = vmatpush1.msra.mxu0 0.0
        %4706 = vmatprep.subr.mxu0 0.0
        %4707 = vmatpush1.msra.mxu0 0.0
        %4708 = vmatprep.subr.mxu0 0.0
        %4709 = vmatpush1.msra.mxu0 0.0
        %4710 = vmatprep.subr.mxu0 0.0
        %4711 = vmatpush1.msra.mxu0 0.0
        %4712 = vmatprep.subr.mxu0 0.0
        %4713 = vmatpush1.msra.mxu0 0.0
        %4714 = vmatprep.subr.mxu0 0.0
        %4715 = vmatpush1.msra.mxu0 0.0
        %4716 = vmatprep.subr.mxu0 0.0
        %4717 = vmatpush1.msra.mxu0 0.0
        %4718 = vmatprep.subr.mxu0 0.0
        %4719 = vmatpush1.msra.mxu0 0.0
        %4720 = vmatprep.subr.mxu0 0.0
        %4721 = vmatpush1.msra.mxu0 0.0
        %4722 = vmatprep.subr.mxu0 0.0
        %4723 = vmatpush1.msra.mxu0 0.0
        %4724 = vmatprep.subr.mxu0 0.0
        %4725 = vmatpush1.msra.mxu0 0.0
        %4726 = vmatprep.subr.mxu0 0.0
        %4727 = vmatpush1.msra.mxu0 0.0
        %4728 = vmatprep.subr.mxu0 0.0
        %4729 = vmatpush1.msra.mxu0 0.0
        %4730 = vmatprep.subr.mxu0 0.0
        %4731 = vmatpush1.msra.mxu0 0.0
        %4732 = vmatprep.subr.mxu0 0.0
        %4733 = vmatpush1.msra.mxu0 0.0
        %4734 = vmatprep.subr.mxu0 0.0
        %4735 = vmatpush1.msra.mxu0 0.0
        %4736 = vmatprep.subr.mxu0 0.0
        %4737 = vmatpush1.msra.mxu0 0.0
        %4738 = vmatprep.subr.mxu0 0.0
        %4739 = vmatpush1.msra.mxu0 0.0
        %4740 = vmatprep.subr.mxu0 0.0
        %4741 = vmatpush1.msra.mxu0 0.0
        %4742 = vmatprep.subr.mxu0 0.0
        %4743 = vmatpush1.msra.mxu0 0.0
        %4744 = vmatprep.subr.mxu0 0.0
        %4745 = vmatpush1.msra.mxu0 0.0
        %4746 = vmatprep.subr.mxu0 0.0
        %4747 = vmatpush1.msra.mxu0 0.0
        %4748 = vmatprep.subr.mxu0 0.0
        %4749 = vmatpush1.msra.mxu0 0.0
        %4750 = vmatprep.subr.mxu0 0.0
        %4751 = vmatpush1.msra.mxu0 0.0
        %4752 = vmatprep.mubr.f32.mxu0 0.0
        %4753 = vmatmul.mubr.f32.gmra.mrb[0].mxu0 %v4683
        %v4754 = vpop.f32.mrb[0].mxu0
        %v4755 = vadd.f32 0.0, %v4754
        %v4756 = vpop.f32.mrb[0].mxu0
        %4757 = vmatprep.mubr.f32.mxu0 0.0
        %4758 = vmatmul.mubr.f32.gmra.mrb[0].mxu0 %v4686
        %v4759 = vpop.f32.mrb[0].mxu0
        %v4760 = vadd.f32 0.0, %v4759
        %v4761 = vpop.f32.mrb[0].mxu0
        %4762 = vdwg.mxu0
        %v4763 = vadd.f32 %v4280, %v4755
        %v4764 = vadd.f32 %v4285, %v4760
        %s4765 = scalar_lea.vmem [#allocation5], 224
        %v4766 = vld [vmem:[%s4765] sm:$0xff]
        %v4767 = vld [vmem:[%s4765 + $0x8] sm:$0xff]
        %v4768 = vld [vmem:[%s4765 + $0x10] sm:$0xff]
        %v4769 = vld [vmem:[%s4765 + $0x18] sm:$0xff]
        %4770 = vmatprep.subr.mxu0 0.0
        %4771 = vmatpush1.msra.mxu0 %v4766
        %4772 = vmatprep.subr.mxu0 0.0
        %4773 = vmatpush1.msra.mxu0 %v4767
        %4774 = vmatprep.subr.mxu0 0.0
        %4775 = vmatpush1.msra.mxu0 %v4768
        %4776 = vmatprep.subr.mxu0 0.0
        %4777 = vmatpush1.msra.mxu0 %v4769
        %4778 = vmatprep.subr.mxu0 0.0
        %4779 = vmatpush1.msra.mxu0 0.0
        %4780 = vmatprep.subr.mxu0 0.0
        %4781 = vmatpush1.msra.mxu0 0.0
        %4782 = vmatprep.subr.mxu0 0.0
        %4783 = vmatpush1.msra.mxu0 0.0
        %4784 = vmatprep.subr.mxu0 0.0
        %4785 = vmatpush1.msra.mxu0 0.0
        %4786 = vmatprep.subr.mxu0 0.0
        %4787 = vmatpush1.msra.mxu0 0.0
        %4788 = vmatprep.subr.mxu0 0.0
        %4789 = vmatpush1.msra.mxu0 0.0
        %4790 = vmatprep.subr.mxu0 0.0
        %4791 = vmatpush1.msra.mxu0 0.0
        %4792 = vmatprep.subr.mxu0 0.0
        %4793 = vmatpush1.msra.mxu0 0.0
        %4794 = vmatprep.subr.mxu0 0.0
        %4795 = vmatpush1.msra.mxu0 0.0
        %4796 = vmatprep.subr.mxu0 0.0
        %4797 = vmatpush1.msra.mxu0 0.0
        %4798 = vmatprep.subr.mxu0 0.0
        %4799 = vmatpush1.msra.mxu0 0.0
        %4800 = vmatprep.subr.mxu0 0.0
        %4801 = vmatpush1.msra.mxu0 0.0
        %4802 = vmatprep.subr.mxu0 0.0
        %4803 = vmatpush1.msra.mxu0 0.0
        %4804 = vmatprep.subr.mxu0 0.0
        %4805 = vmatpush1.msra.mxu0 0.0
        %4806 = vmatprep.subr.mxu0 0.0
        %4807 = vmatpush1.msra.mxu0 0.0
        %4808 = vmatprep.subr.mxu0 0.0
        %4809 = vmatpush1.msra.mxu0 0.0
        %4810 = vmatprep.subr.mxu0 0.0
        %4811 = vmatpush1.msra.mxu0 0.0
        %4812 = vmatprep.subr.mxu0 0.0
        %4813 = vmatpush1.msra.mxu0 0.0
        %4814 = vmatprep.subr.mxu0 0.0
        %4815 = vmatpush1.msra.mxu0 0.0
        %4816 = vmatprep.subr.mxu0 0.0
        %4817 = vmatpush1.msra.mxu0 0.0
        %4818 = vmatprep.subr.mxu0 0.0
        %4819 = vmatpush1.msra.mxu0 0.0
        %4820 = vmatprep.subr.mxu0 0.0
        %4821 = vmatpush1.msra.mxu0 0.0
        %4822 = vmatprep.subr.mxu0 0.0
        %4823 = vmatpush1.msra.mxu0 0.0
        %4824 = vmatprep.subr.mxu0 0.0
        %4825 = vmatpush1.msra.mxu0 0.0
        %4826 = vmatprep.subr.mxu0 0.0
        %4827 = vmatpush1.msra.mxu0 0.0
        %4828 = vmatprep.subr.mxu0 0.0
        %4829 = vmatpush1.msra.mxu0 0.0
        %4830 = vmatprep.subr.mxu0 0.0
        %4831 = vmatpush1.msra.mxu0 0.0
        %4832 = vmatprep.subr.mxu0 0.0
        %4833 = vmatpush1.msra.mxu0 0.0
        %4834 = vmatprep.mubr.f32.mxu0 0.0
        %4835 = vmatmul.mubr.f32.gmra.mrb[0].mxu0 %v4683
        %v4836 = vpop.f32.mrb[0].mxu0
        %v4837 = vadd.f32 0.0, %v4836
        %v4838 = vpop.f32.mrb[0].mxu0
        %4839 = vmatprep.mubr.f32.mxu0 0.0
        %4840 = vmatmul.mubr.f32.gmra.mrb[0].mxu0 %v4686
        %v4841 = vpop.f32.mrb[0].mxu0
        %v4842 = vadd.f32 0.0, %v4841
        %v4843 = vpop.f32.mrb[0].mxu0
        %4844 = vdwg.mxu0
        %v4845 = vadd.f32 %v4435, %v4837
        %v4846 = vadd.f32 %v4440, %v4842
        %s4847 = scalar_lea.vmem [#allocation5], 384
        %v4848 = vld [vmem:[%s4847] sm:$0xff]
        %v4849 = vld [vmem:[%s4847 + $0x8] sm:$0xff]
        %v4850 = vld [vmem:[%s4847 + $0x10] sm:$0xff]
        %v4851 = vld [vmem:[%s4847 + $0x18] sm:$0xff]
        %4852 = vmatprep.subr.mxu0 0.0
        %4853 = vmatpush1.msra.mxu0 %v4848
        %4854 = vmatprep.subr.mxu0 0.0
        %4855 = vmatpush1.msra.mxu0 %v4849
        %4856 = vmatprep.subr.mxu0 0.0
        %4857 = vmatpush1.msra.mxu0 %v4850
        %4858 = vmatprep.subr.mxu0 0.0
        %4859 = vmatpush1.msra.mxu0 %v4851
        %4860 = vmatprep.subr.mxu0 0.0
        %4861 = vmatpush1.msra.mxu0 0.0
        %4862 = vmatprep.subr.mxu0 0.0
        %4863 = vmatpush1.msra.mxu0 0.0
        %4864 = vmatprep.subr.mxu0 0.0
        %4865 = vmatpush1.msra.mxu0 0.0
        %4866 = vmatprep.subr.mxu0 0.0
        %4867 = vmatpush1.msra.mxu0 0.0
        %4868 = vmatprep.subr.mxu0 0.0
        %4869 = vmatpush1.msra.mxu0 0.0
        %4870 = vmatprep.subr.mxu0 0.0
        %4871 = vmatpush1.msra.mxu0 0.0
        %4872 = vmatprep.subr.mxu0 0.0
        %4873 = vmatpush1.msra.mxu0 0.0
        %4874 = vmatprep.subr.mxu0 0.0
        %4875 = vmatpush1.msra.mxu0 0.0
        %4876 = vmatprep.subr.mxu0 0.0
        %4877 = vmatpush1.msra.mxu0 0.0
        %4878 = vmatprep.subr.mxu0 0.0
        %4879 = vmatpush1.msra.mxu0 0.0
        %4880 = vmatprep.subr.mxu0 0.0
        %4881 = vmatpush1.msra.mxu0 0.0
        %4882 = vmatprep.subr.mxu0 0.0
        %4883 = vmatpush1.msra.mxu0 0.0
        %4884 = vmatprep.subr.mxu0 0.0
        %4885 = vmatpush1.msra.mxu0 0.0
        %4886 = vmatprep.subr.mxu0 0.0
        %4887 = vmatpush1.msra.mxu0 0.0
        %4888 = vmatprep.subr.mxu0 0.0
        %4889 = vmatpush1.msra.mxu0 0.0
        %4890 = vmatprep.subr.mxu0 0.0
        %4891 = vmatpush1.msra.mxu0 0.0
        %4892 = vmatprep.subr.mxu0 0.0
        %4893 = vmatpush1.msra.mxu0 0.0
        %4894 = vmatprep.subr.mxu0 0.0
        %4895 = vmatpush1.msra.mxu0 0.0
        %4896 = vmatprep.subr.mxu0 0.0
        %4897 = vmatpush1.msra.mxu0 0.0
        %4898 = vmatprep.subr.mxu0 0.0
        %4899 = vmatpush1.msra.mxu0 0.0
        %4900 = vmatprep.subr.mxu0 0.0
        %4901 = vmatpush1.msra.mxu0 0.0
        %4902 = vmatprep.subr.mxu0 0.0
        %4903 = vmatpush1.msra.mxu0 0.0
        %4904 = vmatprep.subr.mxu0 0.0
        %4905 = vmatpush1.msra.mxu0 0.0
        %4906 = vmatprep.subr.mxu0 0.0
        %4907 = vmatpush1.msra.mxu0 0.0
        %4908 = vmatprep.subr.mxu0 0.0
        %4909 = vmatpush1.msra.mxu0 0.0
        %4910 = vmatprep.subr.mxu0 0.0
        %4911 = vmatpush1.msra.mxu0 0.0
        %4912 = vmatprep.subr.mxu0 0.0
        %4913 = vmatpush1.msra.mxu0 0.0
        %4914 = vmatprep.subr.mxu0 0.0
        %4915 = vmatpush1.msra.mxu0 0.0
        %4916 = vmatprep.mubr.f32.mxu0 0.0
        %4917 = vmatmul.mubr.f32.gmra.mrb[0].mxu0 %v4683
        %v4918 = vpop.f32.mrb[0].mxu0
        %v4919 = vadd.f32 0.0, %v4918
        %v4920 = vpop.f32.mrb[0].mxu0
        %4921 = vmatprep.mubr.f32.mxu0 0.0
        %4922 = vmatmul.mubr.f32.gmra.mrb[0].mxu0 %v4686
        %v4923 = vpop.f32.mrb[0].mxu0
        %v4924 = vadd.f32 0.0, %v4923
        %v4925 = vpop.f32.mrb[0].mxu0
        %4926 = vdwg.mxu0
        %v4927 = vadd.f32 %v4590, %v4919
        %v4928 = vadd.f32 %v4595, %v4924
        %4929 = vmatprep.subr.mxu0 0.0
        %4930 = vmatpush1.msra.mxu0 %v4113
        %4931 = vmatprep.subr.mxu0 0.0
        %4932 = vmatpush1.msra.mxu0 %v4118
        %4933 = vmatprep.subr.mxu0 0.0
        %4934 = vmatpush1.msra.mxu0 0.0
        %4935 = vmatprep.subr.mxu0 0.0
        %4936 = vmatpush1.msra.mxu0 0.0
        %4937 = vmatprep.subr.mxu0 0.0
        %4938 = vmatpush1.msra.mxu0 0.0
        %4939 = vmatprep.subr.mxu0 0.0
        %4940 = vmatpush1.msra.mxu0 0.0
        %4941 = vmatprep.subr.mxu0 0.0
        %4942 = vmatpush1.msra.mxu0 0.0
        %4943 = vmatprep.subr.mxu0 0.0
        %4944 = vmatpush1.msra.mxu0 0.0
        %4945 = vmatprep.subr.mxu0 0.0
        %4946 = vmatpush1.msra.mxu0 0.0
        %4947 = vmatprep.subr.mxu0 0.0
        %4948 = vmatpush1.msra.mxu0 0.0
        %4949 = vmatprep.subr.mxu0 0.0
        %4950 = vmatpush1.msra.mxu0 0.0
        %4951 = vmatprep.subr.mxu0 0.0
        %4952 = vmatpush1.msra.mxu0 0.0
        %4953 = vmatprep.subr.mxu0 0.0
        %4954 = vmatpush1.msra.mxu0 0.0
        %4955 = vmatprep.subr.mxu0 0.0
        %4956 = vmatpush1.msra.mxu0 0.0
        %4957 = vmatprep.subr.mxu0 0.0
        %4958 = vmatpush1.msra.mxu0 0.0
        %4959 = vmatprep.subr.mxu0 0.0
        %4960 = vmatpush1.msra.mxu0 0.0
        %4961 = vmatprep.subr.mxu0 0.0
        %4962 = vmatpush1.msra.mxu0 0.0
        %4963 = vmatprep.subr.mxu0 0.0
        %4964 = vmatpush1.msra.mxu0 0.0
        %4965 = vmatprep.subr.mxu0 0.0
        %4966 = vmatpush1.msra.mxu0 0.0
        %4967 = vmatprep.subr.mxu0 0.0
        %4968 = vmatpush1.msra.mxu0 0.0
        %4969 = vmatprep.subr.mxu0 0.0
        %4970 = vmatpush1.msra.mxu0 0.0
        %4971 = vmatprep.subr.mxu0 0.0
        %4972 = vmatpush1.msra.mxu0 0.0
        %4973 = vmatprep.subr.mxu0 0.0
        %4974 = vmatpush1.msra.mxu0 0.0
        %4975 = vmatprep.subr.mxu0 0.0
        %4976 = vmatpush1.msra.mxu0 0.0
        %4977 = vmatprep.subr.mxu0 0.0
        %4978 = vmatpush1.msra.mxu0 0.0
        %4979 = vmatprep.subr.mxu0 0.0
        %4980 = vmatpush1.msra.mxu0 0.0
        %4981 = vmatprep.subr.mxu0 0.0
        %4982 = vmatpush1.msra.mxu0 0.0
        %4983 = vmatprep.subr.mxu0 0.0
        %4984 = vmatpush1.msra.mxu0 0.0
        %4985 = vmatprep.subr.mxu0 0.0
        %4986 = vmatpush1.msra.mxu0 0.0
        %4987 = vmatprep.subr.mxu0 0.0
        %4988 = vmatpush1.msra.mxu0 0.0
        %4989 = vmatprep.subr.mxu0 0.0
        %4990 = vmatpush1.msra.mxu0 0.0
        %4991 = vmatprep.subr.mxu0 0.0
        %4992 = vmatpush1.msra.mxu0 0.0
        %4993 = vmatprep.mubr.f32.mxu0 0.0
        %4994 = vmatmul.mubr.f32.gmra.mrb[0].mxu0 %v1393
        %v4995 = vpop.f32.mrb[0].mxu0
        %v4996 = vadd.f32 0.0, %v4995
        %v4997 = vpop.f32.mrb[0].mxu0
        %4998 = vmatprep.mubr.f32.mxu0 0.0
        %4999 = vmatmul.mubr.f32.gmra.mrb[0].mxu0 %v1396
        %v5000 = vpop.f32.mrb[0].mxu0
        %v5001 = vadd.f32 0.0, %v5000
        %v5002 = vpop.f32.mrb[0].mxu0
        %5003 = vdwg.mxu0
        %s5004 = scalar_lea.vmem [#allocation5], 96
        %v5005 = vld [vmem:[%s5004] sm:$0xff]
        %v5006 = vld [vmem:[%s5004 + $0x8] sm:$0xff]
        %v5007 = vld [vmem:[%s5004 + $0x10] sm:$0xff]
        %v5008 = vld [vmem:[%s5004 + $0x18] sm:$0xff]
        %v5010 = vsel %vm2060, %v4996, 0
        %v5013 = vsel %vm2060, %v5001, 0
        %5015 = vmatprep.subr.mxu0 0.0
        %5016 = vmatpush1.msra.mxu0 %v5005
        %5017 = vmatprep.subr.mxu0 0.0
        %5018 = vmatpush1.msra.mxu0 %v5006
        %5019 = vmatprep.subr.mxu0 0.0
        %5020 = vmatpush1.msra.mxu0 %v5007
        %5021 = vmatprep.subr.mxu0 0.0
        %5022 = vmatpush1.msra.mxu0 %v5008
        %5023 = vmatprep.subr.mxu0 0.0
        %5024 = vmatpush1.msra.mxu0 0.0
        %5025 = vmatprep.subr.mxu0 0.0
        %5026 = vmatpush1.msra.mxu0 0.0
        %5027 = vmatprep.subr.mxu0 0.0
        %5028 = vmatpush1.msra.mxu0 0.0
        %5029 = vmatprep.subr.mxu0 0.0
        %5030 = vmatpush1.msra.mxu0 0.0
        %5031 = vmatprep.subr.mxu0 0.0
        %5032 = vmatpush1.msra.mxu0 0.0
        %5033 = vmatprep.subr.mxu0 0.0
        %5034 = vmatpush1.msra.mxu0 0.0
        %5035 = vmatprep.subr.mxu0 0.0
        %5036 = vmatpush1.msra.mxu0 0.0
        %5037 = vmatprep.subr.mxu0 0.0
        %5038 = vmatpush1.msra.mxu0 0.0
        %5039 = vmatprep.subr.mxu0 0.0
        %5040 = vmatpush1.msra.mxu0 0.0
        %5041 = vmatprep.subr.mxu0 0.0
        %5042 = vmatpush1.msra.mxu0 0.0
        %5043 = vmatprep.subr.mxu0 0.0
        %5044 = vmatpush1.msra.mxu0 0.0
        %5045 = vmatprep.subr.mxu0 0.0
        %5046 = vmatpush1.msra.mxu0 0.0
        %5047 = vmatprep.subr.mxu0 0.0
        %5048 = vmatpush1.msra.mxu0 0.0
        %5049 = vmatprep.subr.mxu0 0.0
        %5050 = vmatpush1.msra.mxu0 0.0
        %5051 = vmatprep.subr.mxu0 0.0
        %5052 = vmatpush1.msra.mxu0 0.0
        %5053 = vmatprep.subr.mxu0 0.0
        %5054 = vmatpush1.msra.mxu0 0.0
        %5055 = vmatprep.subr.mxu0 0.0
        %5056 = vmatpush1.msra.mxu0 0.0
        %5057 = vmatprep.subr.mxu0 0.0
        %5058 = vmatpush1.msra.mxu0 0.0
        %5059 = vmatprep.subr.mxu0 0.0
        %5060 = vmatpush1.msra.mxu0 0.0
        %5061 = vmatprep.subr.mxu0 0.0
        %5062 = vmatpush1.msra.mxu0 0.0
        %5063 = vmatprep.subr.mxu0 0.0
        %5064 = vmatpush1.msra.mxu0 0.0
        %5065 = vmatprep.subr.mxu0 0.0
        %5066 = vmatpush1.msra.mxu0 0.0
        %5067 = vmatprep.subr.mxu0 0.0
        %5068 = vmatpush1.msra.mxu0 0.0
        %5069 = vmatprep.subr.mxu0 0.0
        %5070 = vmatpush1.msra.mxu0 0.0
        %5071 = vmatprep.subr.mxu0 0.0
        %5072 = vmatpush1.msra.mxu0 0.0
        %5073 = vmatprep.subr.mxu0 0.0
        %5074 = vmatpush1.msra.mxu0 0.0
        %5075 = vmatprep.subr.mxu0 0.0
        %5076 = vmatpush1.msra.mxu0 0.0
        %5077 = vmatprep.subr.mxu0 0.0
        %5078 = vmatpush1.msra.mxu0 0.0
        %5079 = vmatprep.mubr.f32.mxu0 0.0
        %5080 = vmatmul.mubr.f32.gmra.mrb[0].mxu0 %v5010
        %v5081 = vpop.f32.mrb[0].mxu0
        %v5082 = vadd.f32 0.0, %v5081
        %v5083 = vpop.f32.mrb[0].mxu0
        %5084 = vmatprep.mubr.f32.mxu0 0.0
        %5085 = vmatmul.mubr.f32.gmra.mrb[0].mxu0 %v5013
        %v5086 = vpop.f32.mrb[0].mxu0
        %v5087 = vadd.f32 0.0, %v5086
        %v5088 = vpop.f32.mrb[0].mxu0
        %5089 = vdwg.mxu0
        %v5090 = vadd.f32 %v4763, %v5082
        %v5091 = vadd.f32 %v4764, %v5087
        %s5092 = scalar_lea.vmem [#allocation5], 256
        %v5093 = vld [vmem:[%s5092] sm:$0xff]
        %v5094 = vld [vmem:[%s5092 + $0x8] sm:$0xff]
        %v5095 = vld [vmem:[%s5092 + $0x10] sm:$0xff]
        %v5096 = vld [vmem:[%s5092 + $0x18] sm:$0xff]
        %5097 = vmatprep.subr.mxu0 0.0
        %5098 = vmatpush1.msra.mxu0 %v5093
        %5099 = vmatprep.subr.mxu0 0.0
        %5100 = vmatpush1.msra.mxu0 %v5094
        %5101 = vmatprep.subr.mxu0 0.0
        %5102 = vmatpush1.msra.mxu0 %v5095
        %5103 = vmatprep.subr.mxu0 0.0
        %5104 = vmatpush1.msra.mxu0 %v5096
        %5105 = vmatprep.subr.mxu0 0.0
        %5106 = vmatpush1.msra.mxu0 0.0
        %5107 = vmatprep.subr.mxu0 0.0
        %5108 = vmatpush1.msra.mxu0 0.0
        %5109 = vmatprep.subr.mxu0 0.0
        %5110 = vmatpush1.msra.mxu0 0.0
        %5111 = vmatprep.subr.mxu0 0.0
        %5112 = vmatpush1.msra.mxu0 0.0
        %5113 = vmatprep.subr.mxu0 0.0
        %5114 = vmatpush1.msra.mxu0 0.0
        %5115 = vmatprep.subr.mxu0 0.0
        %5116 = vmatpush1.msra.mxu0 0.0
        %5117 = vmatprep.subr.mxu0 0.0
        %5118 = vmatpush1.msra.mxu0 0.0
        %5119 = vmatprep.subr.mxu0 0.0
        %5120 = vmatpush1.msra.mxu0 0.0
        %5121 = vmatprep.subr.mxu0 0.0
        %5122 = vmatpush1.msra.mxu0 0.0
        %5123 = vmatprep.subr.mxu0 0.0
        %5124 = vmatpush1.msra.mxu0 0.0
        %5125 = vmatprep.subr.mxu0 0.0
        %5126 = vmatpush1.msra.mxu0 0.0
        %5127 = vmatprep.subr.mxu0 0.0
        %5128 = vmatpush1.msra.mxu0 0.0
        %5129 = vmatprep.subr.mxu0 0.0
        %5130 = vmatpush1.msra.mxu0 0.0
        %5131 = vmatprep.subr.mxu0 0.0
        %5132 = vmatpush1.msra.mxu0 0.0
        %5133 = vmatprep.subr.mxu0 0.0
        %5134 = vmatpush1.msra.mxu0 0.0
        %5135 = vmatprep.subr.mxu0 0.0
        %5136 = vmatpush1.msra.mxu0 0.0
        %5137 = vmatprep.subr.mxu0 0.0
        %5138 = vmatpush1.msra.mxu0 0.0
        %5139 = vmatprep.subr.mxu0 0.0
        %5140 = vmatpush1.msra.mxu0 0.0
        %5141 = vmatprep.subr.mxu0 0.0
        %5142 = vmatpush1.msra.mxu0 0.0
        %5143 = vmatprep.subr.mxu0 0.0
        %5144 = vmatpush1.msra.mxu0 0.0
        %5145 = vmatprep.subr.mxu0 0.0
        %5146 = vmatpush1.msra.mxu0 0.0
        %5147 = vmatprep.subr.mxu0 0.0
        %5148 = vmatpush1.msra.mxu0 0.0
        %5149 = vmatprep.subr.mxu0 0.0
        %5150 = vmatpush1.msra.mxu0 0.0
        %5151 = vmatprep.subr.mxu0 0.0
        %5152 = vmatpush1.msra.mxu0 0.0
        %5153 = vmatprep.subr.mxu0 0.0
        %5154 = vmatpush1.msra.mxu0 0.0
        %5155 = vmatprep.subr.mxu0 0.0
        %5156 = vmatpush1.msra.mxu0 0.0
        %5157 = vmatprep.subr.mxu0 0.0
        %5158 = vmatpush1.msra.mxu0 0.0
        %5159 = vmatprep.subr.mxu0 0.0
        %5160 = vmatpush1.msra.mxu0 0.0
        %5161 = vmatprep.mubr.f32.mxu0 0.0
        %5162 = vmatmul.mubr.f32.gmra.mrb[0].mxu0 %v5010
        %v5163 = vpop.f32.mrb[0].mxu0
        %v5164 = vadd.f32 0.0, %v5163
        %v5165 = vpop.f32.mrb[0].mxu0
        %5166 = vmatprep.mubr.f32.mxu0 0.0
        %5167 = vmatmul.mubr.f32.gmra.mrb[0].mxu0 %v5013
        %v5168 = vpop.f32.mrb[0].mxu0
        %v5169 = vadd.f32 0.0, %v5168
        %v5170 = vpop.f32.mrb[0].mxu0
        %5171 = vdwg.mxu0
        %v5172 = vadd.f32 %v4845, %v5164
        %v5173 = vadd.f32 %v4846, %v5169
        %s5174 = scalar_lea.vmem [#allocation5], 416
        %v5175 = vld [vmem:[%s5174] sm:$0xff]
        %v5176 = vld [vmem:[%s5174 + $0x8] sm:$0xff]
        %v5177 = vld [vmem:[%s5174 + $0x10] sm:$0xff]
        %v5178 = vld [vmem:[%s5174 + $0x18] sm:$0xff]
        %5179 = vmatprep.subr.mxu0 0.0
        %5180 = vmatpush1.msra.mxu0 %v5175
        %5181 = vmatprep.subr.mxu0 0.0
        %5182 = vmatpush1.msra.mxu0 %v5176
        %5183 = vmatprep.subr.mxu0 0.0
        %5184 = vmatpush1.msra.mxu0 %v5177
        %5185 = vmatprep.subr.mxu0 0.0
        %5186 = vmatpush1.msra.mxu0 %v5178
        %5187 = vmatprep.subr.mxu0 0.0
        %5188 = vmatpush1.msra.mxu0 0.0
        %5189 = vmatprep.subr.mxu0 0.0
        %5190 = vmatpush1.msra.mxu0 0.0
        %5191 = vmatprep.subr.mxu0 0.0
        %5192 = vmatpush1.msra.mxu0 0.0
        %5193 = vmatprep.subr.mxu0 0.0
        %5194 = vmatpush1.msra.mxu0 0.0
        %5195 = vmatprep.subr.mxu0 0.0
        %5196 = vmatpush1.msra.mxu0 0.0
        %5197 = vmatprep.subr.mxu0 0.0
        %5198 = vmatpush1.msra.mxu0 0.0
        %5199 = vmatprep.subr.mxu0 0.0
        %5200 = vmatpush1.msra.mxu0 0.0
        %5201 = vmatprep.subr.mxu0 0.0
        %5202 = vmatpush1.msra.mxu0 0.0
        %5203 = vmatprep.subr.mxu0 0.0
        %5204 = vmatpush1.msra.mxu0 0.0
        %5205 = vmatprep.subr.mxu0 0.0
        %5206 = vmatpush1.msra.mxu0 0.0
        %5207 = vmatprep.subr.mxu0 0.0
        %5208 = vmatpush1.msra.mxu0 0.0
        %5209 = vmatprep.subr.mxu0 0.0
        %5210 = vmatpush1.msra.mxu0 0.0
        %5211 = vmatprep.subr.mxu0 0.0
        %5212 = vmatpush1.msra.mxu0 0.0
        %5213 = vmatprep.subr.mxu0 0.0
        %5214 = vmatpush1.msra.mxu0 0.0
        %5215 = vmatprep.subr.mxu0 0.0
        %5216 = vmatpush1.msra.mxu0 0.0
        %5217 = vmatprep.subr.mxu0 0.0
        %5218 = vmatpush1.msra.mxu0 0.0
        %5219 = vmatprep.subr.mxu0 0.0
        %5220 = vmatpush1.msra.mxu0 0.0
        %5221 = vmatprep.subr.mxu0 0.0
        %5222 = vmatpush1.msra.mxu0 0.0
        %5223 = vmatprep.subr.mxu0 0.0
        %5224 = vmatpush1.msra.mxu0 0.0
        %5225 = vmatprep.subr.mxu0 0.0
        %5226 = vmatpush1.msra.mxu0 0.0
        %5227 = vmatprep.subr.mxu0 0.0
        %5228 = vmatpush1.msra.mxu0 0.0
        %5229 = vmatprep.subr.mxu0 0.0
        %5230 = vmatpush1.msra.mxu0 0.0
        %5231 = vmatprep.subr.mxu0 0.0
        %5232 = vmatpush1.msra.mxu0 0.0
        %5233 = vmatprep.subr.mxu0 0.0
        %5234 = vmatpush1.msra.mxu0 0.0
        %5235 = vmatprep.subr.mxu0 0.0
        %5236 = vmatpush1.msra.mxu0 0.0
        %5237 = vmatprep.subr.mxu0 0.0
        %5238 = vmatpush1.msra.mxu0 0.0
        %5239 = vmatprep.subr.mxu0 0.0
        %5240 = vmatpush1.msra.mxu0 0.0
        %5241 = vmatprep.subr.mxu0 0.0
        %5242 = vmatpush1.msra.mxu0 0.0
        %5243 = vmatprep.mubr.f32.mxu0 0.0
        %5244 = vmatmul.mubr.f32.gmra.mrb[0].mxu0 %v5010
        %v5245 = vpop.f32.mrb[0].mxu0
        %v5246 = vadd.f32 0.0, %v5245
        %v5247 = vpop.f32.mrb[0].mxu0
        %5248 = vmatprep.mubr.f32.mxu0 0.0
        %5249 = vmatmul.mubr.f32.gmra.mrb[0].mxu0 %v5013
        %v5250 = vpop.f32.mrb[0].mxu0
        %v5251 = vadd.f32 0.0, %v5250
        %v5252 = vpop.f32.mrb[0].mxu0
        %5253 = vdwg.mxu0
        %v5254 = vadd.f32 %v4927, %v5246
        %v5255 = vadd.f32 %v4928, %v5251
        %5256 = vmatprep.subr.mxu0 0.0
        %5257 = vmatpush1.msra.mxu0 %v4996
        %5258 = vmatprep.subr.mxu0 0.0
        %5259 = vmatpush1.msra.mxu0 %v5001
        %5260 = vmatprep.subr.mxu0 0.0
        %5261 = vmatpush1.msra.mxu0 0.0
        %5262 = vmatprep.subr.mxu0 0.0
        %5263 = vmatpush1.msra.mxu0 0.0
        %5264 = vmatprep.subr.mxu0 0.0
        %5265 = vmatpush1.msra.mxu0 0.0
        %5266 = vmatprep.subr.mxu0 0.0
        %5267 = vmatpush1.msra.mxu0 0.0
        %5268 = vmatprep.subr.mxu0 0.0
        %5269 = vmatpush1.msra.mxu0 0.0
        %5270 = vmatprep.subr.mxu0 0.0
        %5271 = vmatpush1.msra.mxu0 0.0
        %5272 = vmatprep.subr.mxu0 0.0
        %5273 = vmatpush1.msra.mxu0 0.0
        %5274 = vmatprep.subr.mxu0 0.0
        %5275 = vmatpush1.msra.mxu0 0.0
        %5276 = vmatprep.subr.mxu0 0.0
        %5277 = vmatpush1.msra.mxu0 0.0
        %5278 = vmatprep.subr.mxu0 0.0
        %5279 = vmatpush1.msra.mxu0 0.0
        %5280 = vmatprep.subr.mxu0 0.0
        %5281 = vmatpush1.msra.mxu0 0.0
        %5282 = vmatprep.subr.mxu0 0.0
        %5283 = vmatpush1.msra.mxu0 0.0
        %5284 = vmatprep.subr.mxu0 0.0
        %5285 = vmatpush1.msra.mxu0 0.0
        %5286 = vmatprep.subr.mxu0 0.0
        %5287 = vmatpush1.msra.mxu0 0.0
        %5288 = vmatprep.subr.mxu0 0.0
        %5289 = vmatpush1.msra.mxu0 0.0
        %5290 = vmatprep.subr.mxu0 0.0
        %5291 = vmatpush1.msra.mxu0 0.0
        %5292 = vmatprep.subr.mxu0 0.0
        %5293 = vmatpush1.msra.mxu0 0.0
        %5294 = vmatprep.subr.mxu0 0.0
        %5295 = vmatpush1.msra.mxu0 0.0
        %5296 = vmatprep.subr.mxu0 0.0
        %5297 = vmatpush1.msra.mxu0 0.0
        %5298 = vmatprep.subr.mxu0 0.0
        %5299 = vmatpush1.msra.mxu0 0.0
        %5300 = vmatprep.subr.mxu0 0.0
        %5301 = vmatpush1.msra.mxu0 0.0
        %5302 = vmatprep.subr.mxu0 0.0
        %5303 = vmatpush1.msra.mxu0 0.0
        %5304 = vmatprep.subr.mxu0 0.0
        %5305 = vmatpush1.msra.mxu0 0.0
        %5306 = vmatprep.subr.mxu0 0.0
        %5307 = vmatpush1.msra.mxu0 0.0
        %5308 = vmatprep.subr.mxu0 0.0
        %5309 = vmatpush1.msra.mxu0 0.0
        %5310 = vmatprep.subr.mxu0 0.0
        %5311 = vmatpush1.msra.mxu0 0.0
        %5312 = vmatprep.subr.mxu0 0.0
        %5313 = vmatpush1.msra.mxu0 0.0
        %5314 = vmatprep.subr.mxu0 0.0
        %5315 = vmatpush1.msra.mxu0 0.0
        %5316 = vmatprep.subr.mxu0 0.0
        %5317 = vmatpush1.msra.mxu0 0.0
        %5318 = vmatprep.subr.mxu0 0.0
        %5319 = vmatpush1.msra.mxu0 0.0
        %5320 = vmatprep.mubr.f32.mxu0 0.0
        %5321 = vmatmul.mubr.f32.gmra.mrb[0].mxu0 %v1393
        %v5322 = vpop.f32.mrb[0].mxu0
        %v5323 = vadd.f32 0.0, %v5322
        %v5324 = vpop.f32.mrb[0].mxu0
        %5325 = vmatprep.mubr.f32.mxu0 0.0
        %5326 = vmatmul.mubr.f32.gmra.mrb[0].mxu0 %v1396
        %v5327 = vpop.f32.mrb[0].mxu0
        %v5328 = vadd.f32 0.0, %v5327
        %v5329 = vpop.f32.mrb[0].mxu0
        %5330 = vdwg.mxu0
        %v5331 = vmul.f32 %v5323, 2.0
        %v5332 = vmul.f32 %v5328, 2.0
        %v5333 = vsub.f32 %v5331, %v4113
        %v5334 = vsub.f32 %v5332, %v4118
        %s5335 = scalar_lea.vmem [#allocation5], 128
        %v5336 = vld [vmem:[%s5335] sm:$0xff]
        %v5337 = vld [vmem:[%s5335 + $0x8] sm:$0xff]
        %v5338 = vld [vmem:[%s5335 + $0x10] sm:$0xff]
        %v5339 = vld [vmem:[%s5335 + $0x18] sm:$0xff]
        %v5341 = vsel %vm2060, %v5333, 0
        %v5344 = vsel %vm2060, %v5334, 0
        %5346 = vmatprep.subr.mxu0 0.0
        %5347 = vmatpush1.msra.mxu0 %v5336
        %5348 = vmatprep.subr.mxu0 0.0
        %5349 = vmatpush1.msra.mxu0 %v5337
        %5350 = vmatprep.subr.mxu0 0.0
        %5351 = vmatpush1.msra.mxu0 %v5338
        %5352 = vmatprep.subr.mxu0 0.0
        %5353 = vmatpush1.msra.mxu0 %v5339
        %5354 = vmatprep.subr.mxu0 0.0
        %5355 = vmatpush1.msra.mxu0 0.0
        %5356 = vmatprep.subr.mxu0 0.0
        %5357 = vmatpush1.msra.mxu0 0.0
        %5358 = vmatprep.subr.mxu0 0.0
        %5359 = vmatpush1.msra.mxu0 0.0
        %5360 = vmatprep.subr.mxu0 0.0
        %5361 = vmatpush1.msra.mxu0 0.0
        %5362 = vmatprep.subr.mxu0 0.0
        %5363 = vmatpush1.msra.mxu0 0.0
        %5364 = vmatprep.subr.mxu0 0.0
        %5365 = vmatpush1.msra.mxu0 0.0
        %5366 = vmatprep.subr.mxu0 0.0
        %5367 = vmatpush1.msra.mxu0 0.0
        %5368 = vmatprep.subr.mxu0 0.0
        %5369 = vmatpush1.msra.mxu0 0.0
        %5370 = vmatprep.subr.mxu0 0.0
        %5371 = vmatpush1.msra.mxu0 0.0
        %5372 = vmatprep.subr.mxu0 0.0
        %5373 = vmatpush1.msra.mxu0 0.0
        %5374 = vmatprep.subr.mxu0 0.0
        %5375 = vmatpush1.msra.mxu0 0.0
        %5376 = vmatprep.subr.mxu0 0.0
        %5377 = vmatpush1.msra.mxu0 0.0
        %5378 = vmatprep.subr.mxu0 0.0
        %5379 = vmatpush1.msra.mxu0 0.0
        %5380 = vmatprep.subr.mxu0 0.0
        %5381 = vmatpush1.msra.mxu0 0.0
        %5382 = vmatprep.subr.mxu0 0.0
        %5383 = vmatpush1.msra.mxu0 0.0
        %5384 = vmatprep.subr.mxu0 0.0
        %5385 = vmatpush1.msra.mxu0 0.0
        %5386 = vmatprep.subr.mxu0 0.0
        %5387 = vmatpush1.msra.mxu0 0.0
        %5388 = vmatprep.subr.mxu0 0.0
        %5389 = vmatpush1.msra.mxu0 0.0
        %5390 = vmatprep.subr.mxu0 0.0
        %5391 = vmatpush1.msra.mxu0 0.0
        %5392 = vmatprep.subr.mxu0 0.0
        %5393 = vmatpush1.msra.mxu0 0.0
        %5394 = vmatprep.subr.mxu0 0.0
        %5395 = vmatpush1.msra.mxu0 0.0
        %5396 = vmatprep.subr.mxu0 0.0
        %5397 = vmatpush1.msra.mxu0 0.0
        %5398 = vmatprep.subr.mxu0 0.0
        %5399 = vmatpush1.msra.mxu0 0.0
        %5400 = vmatprep.subr.mxu0 0.0
        %5401 = vmatpush1.msra.mxu0 0.0
        %5402 = vmatprep.subr.mxu0 0.0
        %5403 = vmatpush1.msra.mxu0 0.0
        %5404 = vmatprep.subr.mxu0 0.0
        %5405 = vmatpush1.msra.mxu0 0.0
        %5406 = vmatprep.subr.mxu0 0.0
        %5407 = vmatpush1.msra.mxu0 0.0
        %5408 = vmatprep.subr.mxu0 0.0
        %5409 = vmatpush1.msra.mxu0 0.0
        %5410 = vmatprep.mubr.f32.mxu0 0.0
        %5411 = vmatmul.mubr.f32.gmra.mrb[0].mxu0 %v5341
        %v5412 = vpop.f32.mrb[0].mxu0
        %v5413 = vadd.f32 0.0, %v5412
        %v5414 = vpop.f32.mrb[0].mxu0
        %5415 = vmatprep.mubr.f32.mxu0 0.0
        %5416 = vmatmul.mubr.f32.gmra.mrb[0].mxu0 %v5344
        %v5417 = vpop.f32.mrb[0].mxu0
        %v5418 = vadd.f32 0.0, %v5417
        %v5419 = vpop.f32.mrb[0].mxu0
        %5420 = vdwg.mxu0
        %v5421 = vadd.f32 %v5090, %v5413
        %v5422 = vadd.f32 %v5091, %v5418
        %s5423 = scalar_lea.vmem [#allocation5], 288
        %v5424 = vld [vmem:[%s5423] sm:$0xff]
        %v5425 = vld [vmem:[%s5423 + $0x8] sm:$0xff]
        %v5426 = vld [vmem:[%s5423 + $0x10] sm:$0xff]
        %v5427 = vld [vmem:[%s5423 + $0x18] sm:$0xff]
        %5428 = vmatprep.subr.mxu0 0.0
        %5429 = vmatpush1.msra.mxu0 %v5424
        %5430 = vmatprep.subr.mxu0 0.0
        %5431 = vmatpush1.msra.mxu0 %v5425
        %5432 = vmatprep.subr.mxu0 0.0
        %5433 = vmatpush1.msra.mxu0 %v5426
        %5434 = vmatprep.subr.mxu0 0.0
        %5435 = vmatpush1.msra.mxu0 %v5427
        %5436 = vmatprep.subr.mxu0 0.0
        %5437 = vmatpush1.msra.mxu0 0.0
        %5438 = vmatprep.subr.mxu0 0.0
        %5439 = vmatpush1.msra.mxu0 0.0
        %5440 = vmatprep.subr.mxu0 0.0
        %5441 = vmatpush1.msra.mxu0 0.0
        %5442 = vmatprep.subr.mxu0 0.0
        %5443 = vmatpush1.msra.mxu0 0.0
        %5444 = vmatprep.subr.mxu0 0.0
        %5445 = vmatpush1.msra.mxu0 0.0
        %5446 = vmatprep.subr.mxu0 0.0
        %5447 = vmatpush1.msra.mxu0 0.0
        %5448 = vmatprep.subr.mxu0 0.0
        %5449 = vmatpush1.msra.mxu0 0.0
        %5450 = vmatprep.subr.mxu0 0.0
        %5451 = vmatpush1.msra.mxu0 0.0
        %5452 = vmatprep.subr.mxu0 0.0
        %5453 = vmatpush1.msra.mxu0 0.0
        %5454 = vmatprep.subr.mxu0 0.0
        %5455 = vmatpush1.msra.mxu0 0.0
        %5456 = vmatprep.subr.mxu0 0.0
        %5457 = vmatpush1.msra.mxu0 0.0
        %5458 = vmatprep.subr.mxu0 0.0
        %5459 = vmatpush1.msra.mxu0 0.0
        %5460 = vmatprep.subr.mxu0 0.0
        %5461 = vmatpush1.msra.mxu0 0.0
        %5462 = vmatprep.subr.mxu0 0.0
        %5463 = vmatpush1.msra.mxu0 0.0
        %5464 = vmatprep.subr.mxu0 0.0
        %5465 = vmatpush1.msra.mxu0 0.0
        %5466 = vmatprep.subr.mxu0 0.0
        %5467 = vmatpush1.msra.mxu0 0.0
        %5468 = vmatprep.subr.mxu0 0.0
        %5469 = vmatpush1.msra.mxu0 0.0
        %5470 = vmatprep.subr.mxu0 0.0
        %5471 = vmatpush1.msra.mxu0 0.0
        %5472 = vmatprep.subr.mxu0 0.0
        %5473 = vmatpush1.msra.mxu0 0.0
        %5474 = vmatprep.subr.mxu0 0.0
        %5475 = vmatpush1.msra.mxu0 0.0
        %5476 = vmatprep.subr.mxu0 0.0
        %5477 = vmatpush1.msra.mxu0 0.0
        %5478 = vmatprep.subr.mxu0 0.0
        %5479 = vmatpush1.msra.mxu0 0.0
        %5480 = vmatprep.subr.mxu0 0.0
        %5481 = vmatpush1.msra.mxu0 0.0
        %5482 = vmatprep.subr.mxu0 0.0
        %5483 = vmatpush1.msra.mxu0 0.0
        %5484 = vmatprep.subr.mxu0 0.0
        %5485 = vmatpush1.msra.mxu0 0.0
        %5486 = vmatprep.subr.mxu0 0.0
        %5487 = vmatpush1.msra.mxu0 0.0
        %5488 = vmatprep.subr.mxu0 0.0
        %5489 = vmatpush1.msra.mxu0 0.0
        %5490 = vmatprep.subr.mxu0 0.0
        %5491 = vmatpush1.msra.mxu0 0.0
        %5492 = vmatprep.mubr.f32.mxu0 0.0
        %5493 = vmatmul.mubr.f32.gmra.mrb[0].mxu0 %v5341
        %v5494 = vpop.f32.mrb[0].mxu0
        %v5495 = vadd.f32 0.0, %v5494
        %v5496 = vpop.f32.mrb[0].mxu0
        %5497 = vmatprep.mubr.f32.mxu0 0.0
        %5498 = vmatmul.mubr.f32.gmra.mrb[0].mxu0 %v5344
        %v5499 = vpop.f32.mrb[0].mxu0
        %v5500 = vadd.f32 0.0, %v5499
        %v5501 = vpop.f32.mrb[0].mxu0
        %5502 = vdwg.mxu0
        %v5503 = vadd.f32 %v5172, %v5495
        %v5504 = vadd.f32 %v5173, %v5500
        %s5505 = scalar_lea.vmem [#allocation5], 448
        %v5506 = vld [vmem:[%s5505] sm:$0xff]
        %v5507 = vld [vmem:[%s5505 + $0x8] sm:$0xff]
        %v5508 = vld [vmem:[%s5505 + $0x10] sm:$0xff]
        %v5509 = vld [vmem:[%s5505 + $0x18] sm:$0xff]
        %5510 = vmatprep.subr.mxu0 0.0
        %5511 = vmatpush1.msra.mxu0 %v5506
        %5512 = vmatprep.subr.mxu0 0.0
        %5513 = vmatpush1.msra.mxu0 %v5507
        %5514 = vmatprep.subr.mxu0 0.0
        %5515 = vmatpush1.msra.mxu0 %v5508
        %5516 = vmatprep.subr.mxu0 0.0
        %5517 = vmatpush1.msra.mxu0 %v5509
        %5518 = vmatprep.subr.mxu0 0.0
        %5519 = vmatpush1.msra.mxu0 0.0
        %5520 = vmatprep.subr.mxu0 0.0
        %5521 = vmatpush1.msra.mxu0 0.0
        %5522 = vmatprep.subr.mxu0 0.0
        %5523 = vmatpush1.msra.mxu0 0.0
        %5524 = vmatprep.subr.mxu0 0.0
        %5525 = vmatpush1.msra.mxu0 0.0
        %5526 = vmatprep.subr.mxu0 0.0
        %5527 = vmatpush1.msra.mxu0 0.0
        %5528 = vmatprep.subr.mxu0 0.0
        %5529 = vmatpush1.msra.mxu0 0.0
        %5530 = vmatprep.subr.mxu0 0.0
        %5531 = vmatpush1.msra.mxu0 0.0
        %5532 = vmatprep.subr.mxu0 0.0
        %5533 = vmatpush1.msra.mxu0 0.0
        %5534 = vmatprep.subr.mxu0 0.0
        %5535 = vmatpush1.msra.mxu0 0.0
        %5536 = vmatprep.subr.mxu0 0.0
        %5537 = vmatpush1.msra.mxu0 0.0
        %5538 = vmatprep.subr.mxu0 0.0
        %5539 = vmatpush1.msra.mxu0 0.0
        %5540 = vmatprep.subr.mxu0 0.0
        %5541 = vmatpush1.msra.mxu0 0.0
        %5542 = vmatprep.subr.mxu0 0.0
        %5543 = vmatpush1.msra.mxu0 0.0
        %5544 = vmatprep.subr.mxu0 0.0
        %5545 = vmatpush1.msra.mxu0 0.0
        %5546 = vmatprep.subr.mxu0 0.0
        %5547 = vmatpush1.msra.mxu0 0.0
        %5548 = vmatprep.subr.mxu0 0.0
        %5549 = vmatpush1.msra.mxu0 0.0
        %5550 = vmatprep.subr.mxu0 0.0
        %5551 = vmatpush1.msra.mxu0 0.0
        %5552 = vmatprep.subr.mxu0 0.0
        %5553 = vmatpush1.msra.mxu0 0.0
        %5554 = vmatprep.subr.mxu0 0.0
        %5555 = vmatpush1.msra.mxu0 0.0
        %5556 = vmatprep.subr.mxu0 0.0
        %5557 = vmatpush1.msra.mxu0 0.0
        %5558 = vmatprep.subr.mxu0 0.0
        %5559 = vmatpush1.msra.mxu0 0.0
        %5560 = vmatprep.subr.mxu0 0.0
        %5561 = vmatpush1.msra.mxu0 0.0
        %5562 = vmatprep.subr.mxu0 0.0
        %5563 = vmatpush1.msra.mxu0 0.0
        %5564 = vmatprep.subr.mxu0 0.0
        %5565 = vmatpush1.msra.mxu0 0.0
        %5566 = vmatprep.subr.mxu0 0.0
        %5567 = vmatpush1.msra.mxu0 0.0
        %5568 = vmatprep.subr.mxu0 0.0
        %5569 = vmatpush1.msra.mxu0 0.0
        %5570 = vmatprep.subr.mxu0 0.0
        %5571 = vmatpush1.msra.mxu0 0.0
        %5572 = vmatprep.subr.mxu0 0.0
        %5573 = vmatpush1.msra.mxu0 0.0
        %5574 = vmatprep.mubr.f32.mxu0 0.0
        %5575 = vmatmul.mubr.f32.gmra.mrb[0].mxu0 %v5341
        %v5576 = vpop.f32.mrb[0].mxu0
        %v5577 = vadd.f32 0.0, %v5576
        %v5578 = vpop.f32.mrb[0].mxu0
        %5579 = vmatprep.mubr.f32.mxu0 0.0
        %5580 = vmatmul.mubr.f32.gmra.mrb[0].mxu0 %v5344
        %v5581 = vpop.f32.mrb[0].mxu0
        %v5582 = vadd.f32 0.0, %v5581
        %v5583 = vpop.f32.mrb[0].mxu0
        %5584 = vdwg.mxu0
        %v5585 = vadd.f32 %v5254, %v5577
        %v5586 = vadd.f32 %v5255, %v5582
        %v5587 = vld [vmem:[#allocation7] sm:$0xff]
        %v5588 = vld [vmem:[#allocation7 + $0x8] sm:$0xff]
        %v5589 = vld [vmem:[#allocation7 + $0x10] sm:$0xff]
        %v5590 = vld [vmem:[#allocation7 + $0x18] sm:$0xff]
        %v5592 = vsel %vm2060, %v4030, 0
        %v5595 = vsel %vm2060, %v4031, 0
        %5597 = vmatprep.subr.mxu0 0.0
        %5598 = vmatpush1.msra.mxu0 %v5587
        %5599 = vmatprep.subr.mxu0 0.0
        %5600 = vmatpush1.msra.mxu0 %v5588
        %5601 = vmatprep.subr.mxu0 0.0
        %5602 = vmatpush1.msra.mxu0 %v5589
        %5603 = vmatprep.subr.mxu0 0.0
        %5604 = vmatpush1.msra.mxu0 %v5590
        %5605 = vmatprep.subr.mxu0 0.0
        %5606 = vmatpush1.msra.mxu0 0.0
        %5607 = vmatprep.subr.mxu0 0.0
        %5608 = vmatpush1.msra.mxu0 0.0
        %5609 = vmatprep.subr.mxu0 0.0
        %5610 = vmatpush1.msra.mxu0 0.0
        %5611 = vmatprep.subr.mxu0 0.0
        %5612 = vmatpush1.msra.mxu0 0.0
        %5613 = vmatprep.subr.mxu0 0.0
        %5614 = vmatpush1.msra.mxu0 0.0
        %5615 = vmatprep.subr.mxu0 0.0
        %5616 = vmatpush1.msra.mxu0 0.0
        %5617 = vmatprep.subr.mxu0 0.0
        %5618 = vmatpush1.msra.mxu0 0.0
        %5619 = vmatprep.subr.mxu0 0.0
        %5620 = vmatpush1.msra.mxu0 0.0
        %5621 = vmatprep.subr.mxu0 0.0
        %5622 = vmatpush1.msra.mxu0 0.0
        %5623 = vmatprep.subr.mxu0 0.0
        %5624 = vmatpush1.msra.mxu0 0.0
        %5625 = vmatprep.subr.mxu0 0.0
        %5626 = vmatpush1.msra.mxu0 0.0
        %5627 = vmatprep.subr.mxu0 0.0
        %5628 = vmatpush1.msra.mxu0 0.0
        %5629 = vmatprep.subr.mxu0 0.0
        %5630 = vmatpush1.msra.mxu0 0.0
        %5631 = vmatprep.subr.mxu0 0.0
        %5632 = vmatpush1.msra.mxu0 0.0
        %5633 = vmatprep.subr.mxu0 0.0
        %5634 = vmatpush1.msra.mxu0 0.0
        %5635 = vmatprep.subr.mxu0 0.0
        %5636 = vmatpush1.msra.mxu0 0.0
        %5637 = vmatprep.subr.mxu0 0.0
        %5638 = vmatpush1.msra.mxu0 0.0
        %5639 = vmatprep.subr.mxu0 0.0
        %5640 = vmatpush1.msra.mxu0 0.0
        %5641 = vmatprep.subr.mxu0 0.0
        %5642 = vmatpush1.msra.mxu0 0.0
        %5643 = vmatprep.subr.mxu0 0.0
        %5644 = vmatpush1.msra.mxu0 0.0
        %5645 = vmatprep.subr.mxu0 0.0
        %5646 = vmatpush1.msra.mxu0 0.0
        %5647 = vmatprep.subr.mxu0 0.0
        %5648 = vmatpush1.msra.mxu0 0.0
        %5649 = vmatprep.subr.mxu0 0.0
        %5650 = vmatpush1.msra.mxu0 0.0
        %5651 = vmatprep.subr.mxu0 0.0
        %5652 = vmatpush1.msra.mxu0 0.0
        %5653 = vmatprep.subr.mxu0 0.0
        %5654 = vmatpush1.msra.mxu0 0.0
        %5655 = vmatprep.subr.mxu0 0.0
        %5656 = vmatpush1.msra.mxu0 0.0
        %5657 = vmatprep.subr.mxu0 0.0
        %5658 = vmatpush1.msra.mxu0 0.0
        %5659 = vmatprep.subr.mxu0 0.0
        %5660 = vmatpush1.msra.mxu0 0.0
        %5661 = vmatprep.mubr.f32.mxu0 0.0
        %5662 = vmatmul.mubr.f32.gmra.mrb[0].mxu0 %v5592
        %v5663 = vpop.f32.mrb[0].mxu0
        %v5664 = vadd.f32 0.0, %v5663
        %v5665 = vpop.f32.mrb[0].mxu0
        %5666 = vmatprep.mubr.f32.mxu0 0.0
        %5667 = vmatmul.mubr.f32.gmra.mrb[0].mxu0 %v5595
        %v5668 = vpop.f32.mrb[0].mxu0
        %v5669 = vadd.f32 0.0, %v5668
        %v5670 = vpop.f32.mrb[0].mxu0
        %5671 = vdwg.mxu0
        %v5672 = vadd.f32 %v5421, %v5664
        %v5673 = vadd.f32 %v5422, %v5669
        %s5674 = scalar_lea.vmem [#allocation7], 160
        %v5675 = vld [vmem:[%s5674] sm:$0xff]
        %v5676 = vld [vmem:[%s5674 + $0x8] sm:$0xff]
        %v5677 = vld [vmem:[%s5674 + $0x10] sm:$0xff]
        %v5678 = vld [vmem:[%s5674 + $0x18] sm:$0xff]
        %5679 = vmatprep.subr.mxu0 0.0
        %5680 = vmatpush1.msra.mxu0 %v5675
        %5681 = vmatprep.subr.mxu0 0.0
        %5682 = vmatpush1.msra.mxu0 %v5676
        %5683 = vmatprep.subr.mxu0 0.0
        %5684 = vmatpush1.msra.mxu0 %v5677
        %5685 = vmatprep.subr.mxu0 0.0
        %5686 = vmatpush1.msra.mxu0 %v5678
        %5687 = vmatprep.subr.mxu0 0.0
        %5688 = vmatpush1.msra.mxu0 0.0
        %5689 = vmatprep.subr.mxu0 0.0
        %5690 = vmatpush1.msra.mxu0 0.0
        %5691 = vmatprep.subr.mxu0 0.0
        %5692 = vmatpush1.msra.mxu0 0.0
        %5693 = vmatprep.subr.mxu0 0.0
        %5694 = vmatpush1.msra.mxu0 0.0
        %5695 = vmatprep.subr.mxu0 0.0
        %5696 = vmatpush1.msra.mxu0 0.0
        %5697 = vmatprep.subr.mxu0 0.0
        %5698 = vmatpush1.msra.mxu0 0.0
        %5699 = vmatprep.subr.mxu0 0.0
        %5700 = vmatpush1.msra.mxu0 0.0
        %5701 = vmatprep.subr.mxu0 0.0
        %5702 = vmatpush1.msra.mxu0 0.0
        %5703 = vmatprep.subr.mxu0 0.0
        %5704 = vmatpush1.msra.mxu0 0.0
        %5705 = vmatprep.subr.mxu0 0.0
        %5706 = vmatpush1.msra.mxu0 0.0
        %5707 = vmatprep.subr.mxu0 0.0
        %5708 = vmatpush1.msra.mxu0 0.0
        %5709 = vmatprep.subr.mxu0 0.0
        %5710 = vmatpush1.msra.mxu0 0.0
        %5711 = vmatprep.subr.mxu0 0.0
        %5712 = vmatpush1.msra.mxu0 0.0
        %5713 = vmatprep.subr.mxu0 0.0
        %5714 = vmatpush1.msra.mxu0 0.0
        %5715 = vmatprep.subr.mxu0 0.0
        %5716 = vmatpush1.msra.mxu0 0.0
        %5717 = vmatprep.subr.mxu0 0.0
        %5718 = vmatpush1.msra.mxu0 0.0
        %5719 = vmatprep.subr.mxu0 0.0
        %5720 = vmatpush1.msra.mxu0 0.0
        %5721 = vmatprep.subr.mxu0 0.0
        %5722 = vmatpush1.msra.mxu0 0.0
        %5723 = vmatprep.subr.mxu0 0.0
        %5724 = vmatpush1.msra.mxu0 0.0
        %5725 = vmatprep.subr.mxu0 0.0
        %5726 = vmatpush1.msra.mxu0 0.0
        %5727 = vmatprep.subr.mxu0 0.0
        %5728 = vmatpush1.msra.mxu0 0.0
        %5729 = vmatprep.subr.mxu0 0.0
        %5730 = vmatpush1.msra.mxu0 0.0
        %5731 = vmatprep.subr.mxu0 0.0
        %5732 = vmatpush1.msra.mxu0 0.0
        %5733 = vmatprep.subr.mxu0 0.0
        %5734 = vmatpush1.msra.mxu0 0.0
        %5735 = vmatprep.subr.mxu0 0.0
        %5736 = vmatpush1.msra.mxu0 0.0
        %5737 = vmatprep.subr.mxu0 0.0
        %5738 = vmatpush1.msra.mxu0 0.0
        %5739 = vmatprep.subr.mxu0 0.0
        %5740 = vmatpush1.msra.mxu0 0.0
        %5741 = vmatprep.subr.mxu0 0.0
        %5742 = vmatpush1.msra.mxu0 0.0
        %5743 = vmatprep.mubr.f32.mxu0 0.0
        %5744 = vmatmul.mubr.f32.gmra.mrb[0].mxu0 %v5592
        %v5745 = vpop.f32.mrb[0].mxu0
        %v5746 = vadd.f32 0.0, %v5745
        %v5747 = vpop.f32.mrb[0].mxu0
        %5748 = vmatprep.mubr.f32.mxu0 0.0
        %5749 = vmatmul.mubr.f32.gmra.mrb[0].mxu0 %v5595
        %v5750 = vpop.f32.mrb[0].mxu0
        %v5751 = vadd.f32 0.0, %v5750
        %v5752 = vpop.f32.mrb[0].mxu0
        %5753 = vdwg.mxu0
        %v5754 = vadd.f32 %v5503, %v5746
        %v5755 = vadd.f32 %v5504, %v5751
        %5756 = vmatprep.subr.mxu0 0.0
        %5757 = vmatpush1.msra.mxu0 %v4030
        %5758 = vmatprep.subr.mxu0 0.0
        %5759 = vmatpush1.msra.mxu0 %v4031
        %5760 = vmatprep.subr.mxu0 0.0
        %5761 = vmatpush1.msra.mxu0 0.0
        %5762 = vmatprep.subr.mxu0 0.0
        %5763 = vmatpush1.msra.mxu0 0.0
        %5764 = vmatprep.subr.mxu0 0.0
        %5765 = vmatpush1.msra.mxu0 0.0
        %5766 = vmatprep.subr.mxu0 0.0
        %5767 = vmatpush1.msra.mxu0 0.0
        %5768 = vmatprep.subr.mxu0 0.0
        %5769 = vmatpush1.msra.mxu0 0.0
        %5770 = vmatprep.subr.mxu0 0.0
        %5771 = vmatpush1.msra.mxu0 0.0
        %5772 = vmatprep.subr.mxu0 0.0
        %5773 = vmatpush1.msra.mxu0 0.0
        %5774 = vmatprep.subr.mxu0 0.0
        %5775 = vmatpush1.msra.mxu0 0.0
        %5776 = vmatprep.subr.mxu0 0.0
        %5777 = vmatpush1.msra.mxu0 0.0
        %5778 = vmatprep.subr.mxu0 0.0
        %5779 = vmatpush1.msra.mxu0 0.0
        %5780 = vmatprep.subr.mxu0 0.0
        %5781 = vmatpush1.msra.mxu0 0.0
        %5782 = vmatprep.subr.mxu0 0.0
        %5783 = vmatpush1.msra.mxu0 0.0
        %5784 = vmatprep.subr.mxu0 0.0
        %5785 = vmatpush1.msra.mxu0 0.0
        %5786 = vmatprep.subr.mxu0 0.0
        %5787 = vmatpush1.msra.mxu0 0.0
        %5788 = vmatprep.subr.mxu0 0.0
        %5789 = vmatpush1.msra.mxu0 0.0
        %5790 = vmatprep.subr.mxu0 0.0
        %5791 = vmatpush1.msra.mxu0 0.0
        %5792 = vmatprep.subr.mxu0 0.0
        %5793 = vmatpush1.msra.mxu0 0.0
        %5794 = vmatprep.subr.mxu0 0.0
        %5795 = vmatpush1.msra.mxu0 0.0
        %5796 = vmatprep.subr.mxu0 0.0
        %5797 = vmatpush1.msra.mxu0 0.0
        %5798 = vmatprep.subr.mxu0 0.0
        %5799 = vmatpush1.msra.mxu0 0.0
        %5800 = vmatprep.subr.mxu0 0.0
        %5801 = vmatpush1.msra.mxu0 0.0
        %5802 = vmatprep.subr.mxu0 0.0
        %5803 = vmatpush1.msra.mxu0 0.0
        %5804 = vmatprep.subr.mxu0 0.0
        %5805 = vmatpush1.msra.mxu0 0.0
        %5806 = vmatprep.subr.mxu0 0.0
        %5807 = vmatpush1.msra.mxu0 0.0
        %5808 = vmatprep.subr.mxu0 0.0
        %5809 = vmatpush1.msra.mxu0 0.0
        %5810 = vmatprep.subr.mxu0 0.0
        %5811 = vmatpush1.msra.mxu0 0.0
        %5812 = vmatprep.subr.mxu0 0.0
        %5813 = vmatpush1.msra.mxu0 0.0
        %5814 = vmatprep.subr.mxu0 0.0
        %5815 = vmatpush1.msra.mxu0 0.0
        %5816 = vmatprep.subr.mxu0 0.0
        %5817 = vmatpush1.msra.mxu0 0.0
        %5818 = vmatprep.subr.mxu0 0.0
        %5819 = vmatpush1.msra.mxu0 0.0
        %5820 = vmatprep.mubr.f32.mxu0 0.0
        %5821 = vmatmul.mubr.f32.gmra.mrb[0].mxu0 %v493
        %v5822 = vpop.f32.mrb[0].mxu0
        %v5823 = vadd.f32 0.0, %v5822
        %v5824 = vpop.f32.mrb[0].mxu0
        %5825 = vmatprep.mubr.f32.mxu0 0.0
        %5826 = vmatmul.mubr.f32.gmra.mrb[0].mxu0 %v496
        %v5827 = vpop.f32.mrb[0].mxu0
        %v5828 = vadd.f32 0.0, %v5827
        %v5829 = vpop.f32.mrb[0].mxu0
        %5830 = vdwg.mxu0
        %s5831 = scalar_lea.vmem [#allocation7], 32
        %v5832 = vld [vmem:[%s5831] sm:$0xff]
        %v5833 = vld [vmem:[%s5831 + $0x8] sm:$0xff]
        %v5834 = vld [vmem:[%s5831 + $0x10] sm:$0xff]
        %v5835 = vld [vmem:[%s5831 + $0x18] sm:$0xff]
        %v5837 = vsel %vm2060, %v5823, 0
        %v5840 = vsel %vm2060, %v5828, 0
        %5842 = vmatprep.subr.mxu0 0.0
        %5843 = vmatpush1.msra.mxu0 %v5832
        %5844 = vmatprep.subr.mxu0 0.0
        %5845 = vmatpush1.msra.mxu0 %v5833
        %5846 = vmatprep.subr.mxu0 0.0
        %5847 = vmatpush1.msra.mxu0 %v5834
        %5848 = vmatprep.subr.mxu0 0.0
        %5849 = vmatpush1.msra.mxu0 %v5835
        %5850 = vmatprep.subr.mxu0 0.0
        %5851 = vmatpush1.msra.mxu0 0.0
        %5852 = vmatprep.subr.mxu0 0.0
        %5853 = vmatpush1.msra.mxu0 0.0
        %5854 = vmatprep.subr.mxu0 0.0
        %5855 = vmatpush1.msra.mxu0 0.0
        %5856 = vmatprep.subr.mxu0 0.0
        %5857 = vmatpush1.msra.mxu0 0.0
        %5858 = vmatprep.subr.mxu0 0.0
        %5859 = vmatpush1.msra.mxu0 0.0
        %5860 = vmatprep.subr.mxu0 0.0
        %5861 = vmatpush1.msra.mxu0 0.0
        %5862 = vmatprep.subr.mxu0 0.0
        %5863 = vmatpush1.msra.mxu0 0.0
        %5864 = vmatprep.subr.mxu0 0.0
        %5865 = vmatpush1.msra.mxu0 0.0
        %5866 = vmatprep.subr.mxu0 0.0
        %5867 = vmatpush1.msra.mxu0 0.0
        %5868 = vmatprep.subr.mxu0 0.0
        %5869 = vmatpush1.msra.mxu0 0.0
        %5870 = vmatprep.subr.mxu0 0.0
        %5871 = vmatpush1.msra.mxu0 0.0
        %5872 = vmatprep.subr.mxu0 0.0
        %5873 = vmatpush1.msra.mxu0 0.0
        %5874 = vmatprep.subr.mxu0 0.0
        %5875 = vmatpush1.msra.mxu0 0.0
        %5876 = vmatprep.subr.mxu0 0.0
        %5877 = vmatpush1.msra.mxu0 0.0
        %5878 = vmatprep.subr.mxu0 0.0
        %5879 = vmatpush1.msra.mxu0 0.0
        %5880 = vmatprep.subr.mxu0 0.0
        %5881 = vmatpush1.msra.mxu0 0.0
        %5882 = vmatprep.subr.mxu0 0.0
        %5883 = vmatpush1.msra.mxu0 0.0
        %5884 = vmatprep.subr.mxu0 0.0
        %5885 = vmatpush1.msra.mxu0 0.0
        %5886 = vmatprep.subr.mxu0 0.0
        %5887 = vmatpush1.msra.mxu0 0.0
        %5888 = vmatprep.subr.mxu0 0.0
        %5889 = vmatpush1.msra.mxu0 0.0
        %5890 = vmatprep.subr.mxu0 0.0
        %5891 = vmatpush1.msra.mxu0 0.0
        %5892 = vmatprep.subr.mxu0 0.0
        %5893 = vmatpush1.msra.mxu0 0.0
        %5894 = vmatprep.subr.mxu0 0.0
        %5895 = vmatpush1.msra.mxu0 0.0
        %5896 = vmatprep.subr.mxu0 0.0
        %5897 = vmatpush1.msra.mxu0 0.0
        %5898 = vmatprep.subr.mxu0 0.0
        %5899 = vmatpush1.msra.mxu0 0.0
        %5900 = vmatprep.subr.mxu0 0.0
        %5901 = vmatpush1.msra.mxu0 0.0
        %5902 = vmatprep.subr.mxu0 0.0
        %5903 = vmatpush1.msra.mxu0 0.0
        %5904 = vmatprep.subr.mxu0 0.0
        %5905 = vmatpush1.msra.mxu0 0.0
        %5906 = vmatprep.mubr.f32.mxu0 0.0
        %5907 = vmatmul.mubr.f32.gmra.mrb[0].mxu0 %v5837
        %v5908 = vpop.f32.mrb[0].mxu0
        %v5909 = vadd.f32 0.0, %v5908
        %v5910 = vpop.f32.mrb[0].mxu0
        %5911 = vmatprep.mubr.f32.mxu0 0.0
        %5912 = vmatmul.mubr.f32.gmra.mrb[0].mxu0 %v5840
        %v5913 = vpop.f32.mrb[0].mxu0
        %v5914 = vadd.f32 0.0, %v5913
        %v5915 = vpop.f32.mrb[0].mxu0
        %5916 = vdwg.mxu0
        %v5917 = vadd.f32 %v5672, %v5909
        %v5918 = vadd.f32 %v5673, %v5914
        %s5919 = scalar_lea.vmem [#allocation7], 192
        %v5920 = vld [vmem:[%s5919] sm:$0xff]
        %v5921 = vld [vmem:[%s5919 + $0x8] sm:$0xff]
        %v5922 = vld [vmem:[%s5919 + $0x10] sm:$0xff]
        %v5923 = vld [vmem:[%s5919 + $0x18] sm:$0xff]
        %5924 = vmatprep.subr.mxu0 0.0
        %5925 = vmatpush1.msra.mxu0 %v5920
        %5926 = vmatprep.subr.mxu0 0.0
        %5927 = vmatpush1.msra.mxu0 %v5921
        %5928 = vmatprep.subr.mxu0 0.0
        %5929 = vmatpush1.msra.mxu0 %v5922
        %5930 = vmatprep.subr.mxu0 0.0
        %5931 = vmatpush1.msra.mxu0 %v5923
        %5932 = vmatprep.subr.mxu0 0.0
        %5933 = vmatpush1.msra.mxu0 0.0
        %5934 = vmatprep.subr.mxu0 0.0
        %5935 = vmatpush1.msra.mxu0 0.0
        %5936 = vmatprep.subr.mxu0 0.0
        %5937 = vmatpush1.msra.mxu0 0.0
        %5938 = vmatprep.subr.mxu0 0.0
        %5939 = vmatpush1.msra.mxu0 0.0
        %5940 = vmatprep.subr.mxu0 0.0
        %5941 = vmatpush1.msra.mxu0 0.0
        %5942 = vmatprep.subr.mxu0 0.0
        %5943 = vmatpush1.msra.mxu0 0.0
        %5944 = vmatprep.subr.mxu0 0.0
        %5945 = vmatpush1.msra.mxu0 0.0
        %5946 = vmatprep.subr.mxu0 0.0
        %5947 = vmatpush1.msra.mxu0 0.0
        %5948 = vmatprep.subr.mxu0 0.0
        %5949 = vmatpush1.msra.mxu0 0.0
        %5950 = vmatprep.subr.mxu0 0.0
        %5951 = vmatpush1.msra.mxu0 0.0
        %5952 = vmatprep.subr.mxu0 0.0
        %5953 = vmatpush1.msra.mxu0 0.0
        %5954 = vmatprep.subr.mxu0 0.0
        %5955 = vmatpush1.msra.mxu0 0.0
        %5956 = vmatprep.subr.mxu0 0.0
        %5957 = vmatpush1.msra.mxu0 0.0
        %5958 = vmatprep.subr.mxu0 0.0
        %5959 = vmatpush1.msra.mxu0 0.0
        %5960 = vmatprep.subr.mxu0 0.0
        %5961 = vmatpush1.msra.mxu0 0.0
        %5962 = vmatprep.subr.mxu0 0.0
        %5963 = vmatpush1.msra.mxu0 0.0
        %5964 = vmatprep.subr.mxu0 0.0
        %5965 = vmatpush1.msra.mxu0 0.0
        %5966 = vmatprep.subr.mxu0 0.0
        %5967 = vmatpush1.msra.mxu0 0.0
        %5968 = vmatprep.subr.mxu0 0.0
        %5969 = vmatpush1.msra.mxu0 0.0
        %5970 = vmatprep.subr.mxu0 0.0
        %5971 = vmatpush1.msra.mxu0 0.0
        %5972 = vmatprep.subr.mxu0 0.0
        %5973 = vmatpush1.msra.mxu0 0.0
        %5974 = vmatprep.subr.mxu0 0.0
        %5975 = vmatpush1.msra.mxu0 0.0
        %5976 = vmatprep.subr.mxu0 0.0
        %5977 = vmatpush1.msra.mxu0 0.0
        %5978 = vmatprep.subr.mxu0 0.0
        %5979 = vmatpush1.msra.mxu0 0.0
        %5980 = vmatprep.subr.mxu0 0.0
        %5981 = vmatpush1.msra.mxu0 0.0
        %5982 = vmatprep.subr.mxu0 0.0
        %5983 = vmatpush1.msra.mxu0 0.0
        %5984 = vmatprep.subr.mxu0 0.0
        %5985 = vmatpush1.msra.mxu0 0.0
        %5986 = vmatprep.subr.mxu0 0.0
        %5987 = vmatpush1.msra.mxu0 0.0
        %5988 = vmatprep.mubr.f32.mxu0 0.0
        %5989 = vmatmul.mubr.f32.gmra.mrb[0].mxu0 %v5837
        %v5990 = vpop.f32.mrb[0].mxu0
        %v5991 = vadd.f32 0.0, %v5990
        %v5992 = vpop.f32.mrb[0].mxu0
        %5993 = vmatprep.mubr.f32.mxu0 0.0
        %5994 = vmatmul.mubr.f32.gmra.mrb[0].mxu0 %v5840
        %v5995 = vpop.f32.mrb[0].mxu0
        %v5996 = vadd.f32 0.0, %v5995
        %v5997 = vpop.f32.mrb[0].mxu0
        %5998 = vdwg.mxu0
        %v5999 = vadd.f32 %v5754, %v5991
        %v6000 = vadd.f32 %v5755, %v5996
        %6001 = vmatprep.subr.mxu0 0.0
        %6002 = vmatpush1.msra.mxu0 %v5823
        %6003 = vmatprep.subr.mxu0 0.0
        %6004 = vmatpush1.msra.mxu0 %v5828
        %6005 = vmatprep.subr.mxu0 0.0
        %6006 = vmatpush1.msra.mxu0 0.0
        %6007 = vmatprep.subr.mxu0 0.0
        %6008 = vmatpush1.msra.mxu0 0.0
        %6009 = vmatprep.subr.mxu0 0.0
        %6010 = vmatpush1.msra.mxu0 0.0
        %6011 = vmatprep.subr.mxu0 0.0
        %6012 = vmatpush1.msra.mxu0 0.0
        %6013 = vmatprep.subr.mxu0 0.0
        %6014 = vmatpush1.msra.mxu0 0.0
        %6015 = vmatprep.subr.mxu0 0.0
        %6016 = vmatpush1.msra.mxu0 0.0
        %6017 = vmatprep.subr.mxu0 0.0
        %6018 = vmatpush1.msra.mxu0 0.0
        %6019 = vmatprep.subr.mxu0 0.0
        %6020 = vmatpush1.msra.mxu0 0.0
        %6021 = vmatprep.subr.mxu0 0.0
        %6022 = vmatpush1.msra.mxu0 0.0
        %6023 = vmatprep.subr.mxu0 0.0
        %6024 = vmatpush1.msra.mxu0 0.0
        %6025 = vmatprep.subr.mxu0 0.0
        %6026 = vmatpush1.msra.mxu0 0.0
        %6027 = vmatprep.subr.mxu0 0.0
        %6028 = vmatpush1.msra.mxu0 0.0
        %6029 = vmatprep.subr.mxu0 0.0
        %6030 = vmatpush1.msra.mxu0 0.0
        %6031 = vmatprep.subr.mxu0 0.0
        %6032 = vmatpush1.msra.mxu0 0.0
        %6033 = vmatprep.subr.mxu0 0.0
        %6034 = vmatpush1.msra.mxu0 0.0
        %6035 = vmatprep.subr.mxu0 0.0
        %6036 = vmatpush1.msra.mxu0 0.0
        %6037 = vmatprep.subr.mxu0 0.0
        %6038 = vmatpush1.msra.mxu0 0.0
        %6039 = vmatprep.subr.mxu0 0.0
        %6040 = vmatpush1.msra.mxu0 0.0
        %6041 = vmatprep.subr.mxu0 0.0
        %6042 = vmatpush1.msra.mxu0 0.0
        %6043 = vmatprep.subr.mxu0 0.0
        %6044 = vmatpush1.msra.mxu0 0.0
        %6045 = vmatprep.subr.mxu0 0.0
        %6046 = vmatpush1.msra.mxu0 0.0
        %6047 = vmatprep.subr.mxu0 0.0
        %6048 = vmatpush1.msra.mxu0 0.0
        %6049 = vmatprep.subr.mxu0 0.0
        %6050 = vmatpush1.msra.mxu0 0.0
        %6051 = vmatprep.subr.mxu0 0.0
        %6052 = vmatpush1.msra.mxu0 0.0
        %6053 = vmatprep.subr.mxu0 0.0
        %6054 = vmatpush1.msra.mxu0 0.0
        %6055 = vmatprep.subr.mxu0 0.0
        %6056 = vmatpush1.msra.mxu0 0.0
        %6057 = vmatprep.subr.mxu0 0.0
        %6058 = vmatpush1.msra.mxu0 0.0
        %6059 = vmatprep.subr.mxu0 0.0
        %6060 = vmatpush1.msra.mxu0 0.0
        %6061 = vmatprep.subr.mxu0 0.0
        %6062 = vmatpush1.msra.mxu0 0.0
        %6063 = vmatprep.subr.mxu0 0.0
        %6064 = vmatpush1.msra.mxu0 0.0
        %6065 = vmatprep.mubr.f32.mxu0 0.0
        %6066 = vmatmul.mubr.f32.gmra.mrb[0].mxu0 %v493
        %v6067 = vpop.f32.mrb[0].mxu0
        %v6068 = vadd.f32 0.0, %v6067
        %v6069 = vpop.f32.mrb[0].mxu0
        %6070 = vmatprep.mubr.f32.mxu0 0.0
        %6071 = vmatmul.mubr.f32.gmra.mrb[0].mxu0 %v496
        %v6072 = vpop.f32.mrb[0].mxu0
        %v6073 = vadd.f32 0.0, %v6072
        %v6074 = vpop.f32.mrb[0].mxu0
        %6075 = vdwg.mxu0
        %v6076 = vmul.f32 %v6068, 2.0
        %v6077 = vmul.f32 %v6073, 2.0
        %v6078 = vsub.f32 %v6076, %v4030
        %v6079 = vsub.f32 %v6077, %v4031
        %s6080 = scalar_lea.vmem [#allocation7], 64
        %v6081 = vld [vmem:[%s6080] sm:$0xff]
        %v6082 = vld [vmem:[%s6080 + $0x8] sm:$0xff]
        %v6083 = vld [vmem:[%s6080 + $0x10] sm:$0xff]
        %v6084 = vld [vmem:[%s6080 + $0x18] sm:$0xff]
        %v6086 = vsel %vm2060, %v6078, 0
        %v6089 = vsel %vm2060, %v6079, 0
        %6091 = vmatprep.subr.mxu0 0.0
        %6092 = vmatpush1.msra.mxu0 %v6081
        %6093 = vmatprep.subr.mxu0 0.0
        %6094 = vmatpush1.msra.mxu0 %v6082
        %6095 = vmatprep.subr.mxu0 0.0
        %6096 = vmatpush1.msra.mxu0 %v6083
        %6097 = vmatprep.subr.mxu0 0.0
        %6098 = vmatpush1.msra.mxu0 %v6084
        %6099 = vmatprep.subr.mxu0 0.0
        %6100 = vmatpush1.msra.mxu0 0.0
        %6101 = vmatprep.subr.mxu0 0.0
        %6102 = vmatpush1.msra.mxu0 0.0
        %6103 = vmatprep.subr.mxu0 0.0
        %6104 = vmatpush1.msra.mxu0 0.0
        %6105 = vmatprep.subr.mxu0 0.0
        %6106 = vmatpush1.msra.mxu0 0.0
        %6107 = vmatprep.subr.mxu0 0.0
        %6108 = vmatpush1.msra.mxu0 0.0
        %6109 = vmatprep.subr.mxu0 0.0
        %6110 = vmatpush1.msra.mxu0 0.0
        %6111 = vmatprep.subr.mxu0 0.0
        %6112 = vmatpush1.msra.mxu0 0.0
        %6113 = vmatprep.subr.mxu0 0.0
        %6114 = vmatpush1.msra.mxu0 0.0
        %6115 = vmatprep.subr.mxu0 0.0
        %6116 = vmatpush1.msra.mxu0 0.0
        %6117 = vmatprep.subr.mxu0 0.0
        %6118 = vmatpush1.msra.mxu0 0.0
        %6119 = vmatprep.subr.mxu0 0.0
        %6120 = vmatpush1.msra.mxu0 0.0
        %6121 = vmatprep.subr.mxu0 0.0
        %6122 = vmatpush1.msra.mxu0 0.0
        %6123 = vmatprep.subr.mxu0 0.0
        %6124 = vmatpush1.msra.mxu0 0.0
        %6125 = vmatprep.subr.mxu0 0.0
        %6126 = vmatpush1.msra.mxu0 0.0
        %6127 = vmatprep.subr.mxu0 0.0
        %6128 = vmatpush1.msra.mxu0 0.0
        %6129 = vmatprep.subr.mxu0 0.0
        %6130 = vmatpush1.msra.mxu0 0.0
        %6131 = vmatprep.subr.mxu0 0.0
        %6132 = vmatpush1.msra.mxu0 0.0
        %6133 = vmatprep.subr.mxu0 0.0
        %6134 = vmatpush1.msra.mxu0 0.0
        %6135 = vmatprep.subr.mxu0 0.0
        %6136 = vmatpush1.msra.mxu0 0.0
        %6137 = vmatprep.subr.mxu0 0.0
        %6138 = vmatpush1.msra.mxu0 0.0
        %6139 = vmatprep.subr.mxu0 0.0
        %6140 = vmatpush1.msra.mxu0 0.0
        %6141 = vmatprep.subr.mxu0 0.0
        %6142 = vmatpush1.msra.mxu0 0.0
        %6143 = vmatprep.subr.mxu0 0.0
        %6144 = vmatpush1.msra.mxu0 0.0
        %6145 = vmatprep.subr.mxu0 0.0
        %6146 = vmatpush1.msra.mxu0 0.0
        %6147 = vmatprep.subr.mxu0 0.0
        %6148 = vmatpush1.msra.mxu0 0.0
        %6149 = vmatprep.subr.mxu0 0.0
        %6150 = vmatpush1.msra.mxu0 0.0
        %6151 = vmatprep.subr.mxu0 0.0
        %6152 = vmatpush1.msra.mxu0 0.0
        %6153 = vmatprep.subr.mxu0 0.0
        %6154 = vmatpush1.msra.mxu0 0.0
        %6155 = vmatprep.mubr.f32.mxu0 0.0
        %6156 = vmatmul.mubr.f32.gmra.mrb[0].mxu0 %v6086
        %v6157 = vpop.f32.mrb[0].mxu0
        %v6158 = vadd.f32 0.0, %v6157
        %v6159 = vpop.f32.mrb[0].mxu0
        %6160 = vmatprep.mubr.f32.mxu0 0.0
        %6161 = vmatmul.mubr.f32.gmra.mrb[0].mxu0 %v6089
        %v6162 = vpop.f32.mrb[0].mxu0
        %v6163 = vadd.f32 0.0, %v6162
        %v6164 = vpop.f32.mrb[0].mxu0
        %6165 = vdwg.mxu0
        %v6166 = vadd.f32 %v5917, %v6158
        %v6167 = vadd.f32 %v5918, %v6163
        %s6168 = scalar_lea.vmem [#allocation7], 224
        %v6169 = vld [vmem:[%s6168] sm:$0xff]
        %v6170 = vld [vmem:[%s6168 + $0x8] sm:$0xff]
        %v6171 = vld [vmem:[%s6168 + $0x10] sm:$0xff]
        %v6172 = vld [vmem:[%s6168 + $0x18] sm:$0xff]
        %6173 = vmatprep.subr.mxu0 0.0
        %6174 = vmatpush1.msra.mxu0 %v6169
        %6175 = vmatprep.subr.mxu0 0.0
        %6176 = vmatpush1.msra.mxu0 %v6170
        %6177 = vmatprep.subr.mxu0 0.0
        %6178 = vmatpush1.msra.mxu0 %v6171
        %6179 = vmatprep.subr.mxu0 0.0
        %6180 = vmatpush1.msra.mxu0 %v6172
        %6181 = vmatprep.subr.mxu0 0.0
        %6182 = vmatpush1.msra.mxu0 0.0
        %6183 = vmatprep.subr.mxu0 0.0
        %6184 = vmatpush1.msra.mxu0 0.0
        %6185 = vmatprep.subr.mxu0 0.0
        %6186 = vmatpush1.msra.mxu0 0.0
        %6187 = vmatprep.subr.mxu0 0.0
        %6188 = vmatpush1.msra.mxu0 0.0
        %6189 = vmatprep.subr.mxu0 0.0
        %6190 = vmatpush1.msra.mxu0 0.0
        %6191 = vmatprep.subr.mxu0 0.0
        %6192 = vmatpush1.msra.mxu0 0.0
        %6193 = vmatprep.subr.mxu0 0.0
        %6194 = vmatpush1.msra.mxu0 0.0
        %6195 = vmatprep.subr.mxu0 0.0
        %6196 = vmatpush1.msra.mxu0 0.0
        %6197 = vmatprep.subr.mxu0 0.0
        %6198 = vmatpush1.msra.mxu0 0.0
        %6199 = vmatprep.subr.mxu0 0.0
        %6200 = vmatpush1.msra.mxu0 0.0
        %6201 = vmatprep.subr.mxu0 0.0
        %6202 = vmatpush1.msra.mxu0 0.0
        %6203 = vmatprep.subr.mxu0 0.0
        %6204 = vmatpush1.msra.mxu0 0.0
        %6205 = vmatprep.subr.mxu0 0.0
        %6206 = vmatpush1.msra.mxu0 0.0
        %6207 = vmatprep.subr.mxu0 0.0
        %6208 = vmatpush1.msra.mxu0 0.0
        %6209 = vmatprep.subr.mxu0 0.0
        %6210 = vmatpush1.msra.mxu0 0.0
        %6211 = vmatprep.subr.mxu0 0.0
        %6212 = vmatpush1.msra.mxu0 0.0
        %6213 = vmatprep.subr.mxu0 0.0
        %6214 = vmatpush1.msra.mxu0 0.0
        %6215 = vmatprep.subr.mxu0 0.0
        %6216 = vmatpush1.msra.mxu0 0.0
        %6217 = vmatprep.subr.mxu0 0.0
        %6218 = vmatpush1.msra.mxu0 0.0
        %6219 = vmatprep.subr.mxu0 0.0
        %6220 = vmatpush1.msra.mxu0 0.0
        %6221 = vmatprep.subr.mxu0 0.0
        %6222 = vmatpush1.msra.mxu0 0.0
        %6223 = vmatprep.subr.mxu0 0.0
        %6224 = vmatpush1.msra.mxu0 0.0
        %6225 = vmatprep.subr.mxu0 0.0
        %6226 = vmatpush1.msra.mxu0 0.0
        %6227 = vmatprep.subr.mxu0 0.0
        %6228 = vmatpush1.msra.mxu0 0.0
        %6229 = vmatprep.subr.mxu0 0.0
        %6230 = vmatpush1.msra.mxu0 0.0
        %6231 = vmatprep.subr.mxu0 0.0
        %6232 = vmatpush1.msra.mxu0 0.0
        %6233 = vmatprep.subr.mxu0 0.0
        %6234 = vmatpush1.msra.mxu0 0.0
        %6235 = vmatprep.subr.mxu0 0.0
        %6236 = vmatpush1.msra.mxu0 0.0
        %6237 = vmatprep.mubr.f32.mxu0 0.0
        %6238 = vmatmul.mubr.f32.gmra.mrb[0].mxu0 %v6086
        %v6239 = vpop.f32.mrb[0].mxu0
        %v6240 = vadd.f32 0.0, %v6239
        %v6241 = vpop.f32.mrb[0].mxu0
        %6242 = vmatprep.mubr.f32.mxu0 0.0
        %6243 = vmatmul.mubr.f32.gmra.mrb[0].mxu0 %v6089
        %v6244 = vpop.f32.mrb[0].mxu0
        %v6245 = vadd.f32 0.0, %v6244
        %v6246 = vpop.f32.mrb[0].mxu0
        %6247 = vdwg.mxu0
        %v6248 = vadd.f32 %v5999, %v6240
        %v6249 = vadd.f32 %v6000, %v6245
        %6250 = vmatprep.subr.mxu0 0.0
        %6251 = vmatpush1.msra.mxu0 %v5823
        %6252 = vmatprep.subr.mxu0 0.0
        %6253 = vmatpush1.msra.mxu0 %v5828
        %6254 = vmatprep.subr.mxu0 0.0
        %6255 = vmatpush1.msra.mxu0 0.0
        %6256 = vmatprep.subr.mxu0 0.0
        %6257 = vmatpush1.msra.mxu0 0.0
        %6258 = vmatprep.subr.mxu0 0.0
        %6259 = vmatpush1.msra.mxu0 0.0
        %6260 = vmatprep.subr.mxu0 0.0
        %6261 = vmatpush1.msra.mxu0 0.0
        %6262 = vmatprep.subr.mxu0 0.0
        %6263 = vmatpush1.msra.mxu0 0.0
        %6264 = vmatprep.subr.mxu0 0.0
        %6265 = vmatpush1.msra.mxu0 0.0
        %6266 = vmatprep.subr.mxu0 0.0
        %6267 = vmatpush1.msra.mxu0 0.0
        %6268 = vmatprep.subr.mxu0 0.0
        %6269 = vmatpush1.msra.mxu0 0.0
        %6270 = vmatprep.subr.mxu0 0.0
        %6271 = vmatpush1.msra.mxu0 0.0
        %6272 = vmatprep.subr.mxu0 0.0
        %6273 = vmatpush1.msra.mxu0 0.0
        %6274 = vmatprep.subr.mxu0 0.0
        %6275 = vmatpush1.msra.mxu0 0.0
        %6276 = vmatprep.subr.mxu0 0.0
        %6277 = vmatpush1.msra.mxu0 0.0
        %6278 = vmatprep.subr.mxu0 0.0
        %6279 = vmatpush1.msra.mxu0 0.0
        %6280 = vmatprep.subr.mxu0 0.0
        %6281 = vmatpush1.msra.mxu0 0.0
        %6282 = vmatprep.subr.mxu0 0.0
        %6283 = vmatpush1.msra.mxu0 0.0
        %6284 = vmatprep.subr.mxu0 0.0
        %6285 = vmatpush1.msra.mxu0 0.0
        %6286 = vmatprep.subr.mxu0 0.0
        %6287 = vmatpush1.msra.mxu0 0.0
        %6288 = vmatprep.subr.mxu0 0.0
        %6289 = vmatpush1.msra.mxu0 0.0
        %6290 = vmatprep.subr.mxu0 0.0
        %6291 = vmatpush1.msra.mxu0 0.0
        %6292 = vmatprep.subr.mxu0 0.0
        %6293 = vmatpush1.msra.mxu0 0.0
        %6294 = vmatprep.subr.mxu0 0.0
        %6295 = vmatpush1.msra.mxu0 0.0
        %6296 = vmatprep.subr.mxu0 0.0
        %6297 = vmatpush1.msra.mxu0 0.0
        %6298 = vmatprep.subr.mxu0 0.0
        %6299 = vmatpush1.msra.mxu0 0.0
        %6300 = vmatprep.subr.mxu0 0.0
        %6301 = vmatpush1.msra.mxu0 0.0
        %6302 = vmatprep.subr.mxu0 0.0
        %6303 = vmatpush1.msra.mxu0 0.0
        %6304 = vmatprep.subr.mxu0 0.0
        %6305 = vmatpush1.msra.mxu0 0.0
        %6306 = vmatprep.subr.mxu0 0.0
        %6307 = vmatpush1.msra.mxu0 0.0
        %6308 = vmatprep.subr.mxu0 0.0
        %6309 = vmatpush1.msra.mxu0 0.0
        %6310 = vmatprep.subr.mxu0 0.0
        %6311 = vmatpush1.msra.mxu0 0.0
        %6312 = vmatprep.subr.mxu0 0.0
        %6313 = vmatpush1.msra.mxu0 0.0
        %6314 = vmatprep.mubr.f32.mxu0 0.0
        %6315 = vmatmul.mubr.f32.gmra.mrb[0].mxu0 %v1393
        %v6316 = vpop.f32.mrb[0].mxu0
        %v6317 = vadd.f32 0.0, %v6316
        %v6318 = vpop.f32.mrb[0].mxu0
        %6319 = vmatprep.mubr.f32.mxu0 0.0
        %6320 = vmatmul.mubr.f32.gmra.mrb[0].mxu0 %v1396
        %v6321 = vpop.f32.mrb[0].mxu0
        %v6322 = vadd.f32 0.0, %v6321
        %v6323 = vpop.f32.mrb[0].mxu0
        %6324 = vdwg.mxu0
        %s6325 = scalar_lea.vmem [#allocation7], 96
        %v6326 = vld [vmem:[%s6325] sm:$0xff]
        %v6327 = vld [vmem:[%s6325 + $0x8] sm:$0xff]
        %v6328 = vld [vmem:[%s6325 + $0x10] sm:$0xff]
        %v6329 = vld [vmem:[%s6325 + $0x18] sm:$0xff]
        %v6331 = vsel %vm2060, %v6317, 0
        %v6334 = vsel %vm2060, %v6322, 0
        %6336 = vmatprep.subr.mxu0 0.0
        %6337 = vmatpush1.msra.mxu0 %v6326
        %6338 = vmatprep.subr.mxu0 0.0
        %6339 = vmatpush1.msra.mxu0 %v6327
        %6340 = vmatprep.subr.mxu0 0.0
        %6341 = vmatpush1.msra.mxu0 %v6328
        %6342 = vmatprep.subr.mxu0 0.0
        %6343 = vmatpush1.msra.mxu0 %v6329
        %6344 = vmatprep.subr.mxu0 0.0
        %6345 = vmatpush1.msra.mxu0 0.0
        %6346 = vmatprep.subr.mxu0 0.0
        %6347 = vmatpush1.msra.mxu0 0.0
        %6348 = vmatprep.subr.mxu0 0.0
        %6349 = vmatpush1.msra.mxu0 0.0
        %6350 = vmatprep.subr.mxu0 0.0
        %6351 = vmatpush1.msra.mxu0 0.0
        %6352 = vmatprep.subr.mxu0 0.0
        %6353 = vmatpush1.msra.mxu0 0.0
        %6354 = vmatprep.subr.mxu0 0.0
        %6355 = vmatpush1.msra.mxu0 0.0
        %6356 = vmatprep.subr.mxu0 0.0
        %6357 = vmatpush1.msra.mxu0 0.0
        %6358 = vmatprep.subr.mxu0 0.0
        %6359 = vmatpush1.msra.mxu0 0.0
        %6360 = vmatprep.subr.mxu0 0.0
        %6361 = vmatpush1.msra.mxu0 0.0
        %6362 = vmatprep.subr.mxu0 0.0
        %6363 = vmatpush1.msra.mxu0 0.0
        %6364 = vmatprep.subr.mxu0 0.0
        %6365 = vmatpush1.msra.mxu0 0.0
        %6366 = vmatprep.subr.mxu0 0.0
        %6367 = vmatpush1.msra.mxu0 0.0
        %6368 = vmatprep.subr.mxu0 0.0
        %6369 = vmatpush1.msra.mxu0 0.0
        %6370 = vmatprep.subr.mxu0 0.0
        %6371 = vmatpush1.msra.mxu0 0.0
        %6372 = vmatprep.subr.mxu0 0.0
        %6373 = vmatpush1.msra.mxu0 0.0
        %6374 = vmatprep.subr.mxu0 0.0
        %6375 = vmatpush1.msra.mxu0 0.0
        %6376 = vmatprep.subr.mxu0 0.0
        %6377 = vmatpush1.msra.mxu0 0.0
        %6378 = vmatprep.subr.mxu0 0.0
        %6379 = vmatpush1.msra.mxu0 0.0
        %6380 = vmatprep.subr.mxu0 0.0
        %6381 = vmatpush1.msra.mxu0 0.0
        %6382 = vmatprep.subr.mxu0 0.0
        %6383 = vmatpush1.msra.mxu0 0.0
        %6384 = vmatprep.subr.mxu0 0.0
        %6385 = vmatpush1.msra.mxu0 0.0
        %6386 = vmatprep.subr.mxu0 0.0
        %6387 = vmatpush1.msra.mxu0 0.0
        %6388 = vmatprep.subr.mxu0 0.0
        %6389 = vmatpush1.msra.mxu0 0.0
        %6390 = vmatprep.subr.mxu0 0.0
        %6391 = vmatpush1.msra.mxu0 0.0
        %6392 = vmatprep.subr.mxu0 0.0
        %6393 = vmatpush1.msra.mxu0 0.0
        %6394 = vmatprep.subr.mxu0 0.0
        %6395 = vmatpush1.msra.mxu0 0.0
        %6396 = vmatprep.subr.mxu0 0.0
        %6397 = vmatpush1.msra.mxu0 0.0
        %6398 = vmatprep.subr.mxu0 0.0
        %6399 = vmatpush1.msra.mxu0 0.0
        %6400 = vmatprep.mubr.f32.mxu0 0.0
        %6401 = vmatmul.mubr.f32.gmra.mrb[0].mxu0 %v6331
        %v6402 = vpop.f32.mrb[0].mxu0
        %v6403 = vadd.f32 0.0, %v6402
        %v6404 = vpop.f32.mrb[0].mxu0
        %6405 = vmatprep.mubr.f32.mxu0 0.0
        %6406 = vmatmul.mubr.f32.gmra.mrb[0].mxu0 %v6334
        %v6407 = vpop.f32.mrb[0].mxu0
        %v6408 = vadd.f32 0.0, %v6407
        %v6409 = vpop.f32.mrb[0].mxu0
        %6410 = vdwg.mxu0
        %v6411 = vadd.f32 %v6166, %v6403
        %v6412 = vadd.f32 %v6167, %v6408
        %s6413 = scalar_lea.vmem [#allocation7], 256
        %v6414 = vld [vmem:[%s6413] sm:$0xff]
        %v6415 = vld [vmem:[%s6413 + $0x8] sm:$0xff]
        %v6416 = vld [vmem:[%s6413 + $0x10] sm:$0xff]
        %v6417 = vld [vmem:[%s6413 + $0x18] sm:$0xff]
        %6418 = vmatprep.subr.mxu0 0.0
        %6419 = vmatpush1.msra.mxu0 %v6414
        %6420 = vmatprep.subr.mxu0 0.0
        %6421 = vmatpush1.msra.mxu0 %v6415
        %6422 = vmatprep.subr.mxu0 0.0
        %6423 = vmatpush1.msra.mxu0 %v6416
        %6424 = vmatprep.subr.mxu0 0.0
        %6425 = vmatpush1.msra.mxu0 %v6417
        %6426 = vmatprep.subr.mxu0 0.0
        %6427 = vmatpush1.msra.mxu0 0.0
        %6428 = vmatprep.subr.mxu0 0.0
        %6429 = vmatpush1.msra.mxu0 0.0
        %6430 = vmatprep.subr.mxu0 0.0
        %6431 = vmatpush1.msra.mxu0 0.0
        %6432 = vmatprep.subr.mxu0 0.0
        %6433 = vmatpush1.msra.mxu0 0.0
        %6434 = vmatprep.subr.mxu0 0.0
        %6435 = vmatpush1.msra.mxu0 0.0
        %6436 = vmatprep.subr.mxu0 0.0
        %6437 = vmatpush1.msra.mxu0 0.0
        %6438 = vmatprep.subr.mxu0 0.0
        %6439 = vmatpush1.msra.mxu0 0.0
        %6440 = vmatprep.subr.mxu0 0.0
        %6441 = vmatpush1.msra.mxu0 0.0
        %6442 = vmatprep.subr.mxu0 0.0
        %6443 = vmatpush1.msra.mxu0 0.0
        %6444 = vmatprep.subr.mxu0 0.0
        %6445 = vmatpush1.msra.mxu0 0.0
        %6446 = vmatprep.subr.mxu0 0.0
        %6447 = vmatpush1.msra.mxu0 0.0
        %6448 = vmatprep.subr.mxu0 0.0
        %6449 = vmatpush1.msra.mxu0 0.0
        %6450 = vmatprep.subr.mxu0 0.0
        %6451 = vmatpush1.msra.mxu0 0.0
        %6452 = vmatprep.subr.mxu0 0.0
        %6453 = vmatpush1.msra.mxu0 0.0
        %6454 = vmatprep.subr.mxu0 0.0
        %6455 = vmatpush1.msra.mxu0 0.0
        %6456 = vmatprep.subr.mxu0 0.0
        %6457 = vmatpush1.msra.mxu0 0.0
        %6458 = vmatprep.subr.mxu0 0.0
        %6459 = vmatpush1.msra.mxu0 0.0
        %6460 = vmatprep.subr.mxu0 0.0
        %6461 = vmatpush1.msra.mxu0 0.0
        %6462 = vmatprep.subr.mxu0 0.0
        %6463 = vmatpush1.msra.mxu0 0.0
        %6464 = vmatprep.subr.mxu0 0.0
        %6465 = vmatpush1.msra.mxu0 0.0
        %6466 = vmatprep.subr.mxu0 0.0
        %6467 = vmatpush1.msra.mxu0 0.0
        %6468 = vmatprep.subr.mxu0 0.0
        %6469 = vmatpush1.msra.mxu0 0.0
        %6470 = vmatprep.subr.mxu0 0.0
        %6471 = vmatpush1.msra.mxu0 0.0
        %6472 = vmatprep.subr.mxu0 0.0
        %6473 = vmatpush1.msra.mxu0 0.0
        %6474 = vmatprep.subr.mxu0 0.0
        %6475 = vmatpush1.msra.mxu0 0.0
        %6476 = vmatprep.subr.mxu0 0.0
        %6477 = vmatpush1.msra.mxu0 0.0
        %6478 = vmatprep.subr.mxu0 0.0
        %6479 = vmatpush1.msra.mxu0 0.0
        %6480 = vmatprep.subr.mxu0 0.0
        %6481 = vmatpush1.msra.mxu0 0.0
        %6482 = vmatprep.mubr.f32.mxu0 0.0
        %6483 = vmatmul.mubr.f32.gmra.mrb[0].mxu0 %v6331
        %v6484 = vpop.f32.mrb[0].mxu0
        %v6485 = vadd.f32 0.0, %v6484
        %v6486 = vpop.f32.mrb[0].mxu0
        %6487 = vmatprep.mubr.f32.mxu0 0.0
        %6488 = vmatmul.mubr.f32.gmra.mrb[0].mxu0 %v6334
        %v6489 = vpop.f32.mrb[0].mxu0
        %v6490 = vadd.f32 0.0, %v6489
        %v6491 = vpop.f32.mrb[0].mxu0
        %6492 = vdwg.mxu0
        %v6493 = vadd.f32 %v6248, %v6485
        %v6494 = vadd.f32 %v6249, %v6490
        %6495 = vmatprep.subr.mxu0 0.0
        %6496 = vmatpush1.msra.mxu0 %v6317
        %6497 = vmatprep.subr.mxu0 0.0
        %6498 = vmatpush1.msra.mxu0 %v6322
        %6499 = vmatprep.subr.mxu0 0.0
        %6500 = vmatpush1.msra.mxu0 0.0
        %6501 = vmatprep.subr.mxu0 0.0
        %6502 = vmatpush1.msra.mxu0 0.0
        %6503 = vmatprep.subr.mxu0 0.0
        %6504 = vmatpush1.msra.mxu0 0.0
        %6505 = vmatprep.subr.mxu0 0.0
        %6506 = vmatpush1.msra.mxu0 0.0
        %6507 = vmatprep.subr.mxu0 0.0
        %6508 = vmatpush1.msra.mxu0 0.0
        %6509 = vmatprep.subr.mxu0 0.0
        %6510 = vmatpush1.msra.mxu0 0.0
        %6511 = vmatprep.subr.mxu0 0.0
        %6512 = vmatpush1.msra.mxu0 0.0
        %6513 = vmatprep.subr.mxu0 0.0
        %6514 = vmatpush1.msra.mxu0 0.0
        %6515 = vmatprep.subr.mxu0 0.0
        %6516 = vmatpush1.msra.mxu0 0.0
        %6517 = vmatprep.subr.mxu0 0.0
        %6518 = vmatpush1.msra.mxu0 0.0
        %6519 = vmatprep.subr.mxu0 0.0
        %6520 = vmatpush1.msra.mxu0 0.0
        %6521 = vmatprep.subr.mxu0 0.0
        %6522 = vmatpush1.msra.mxu0 0.0
        %6523 = vmatprep.subr.mxu0 0.0
        %6524 = vmatpush1.msra.mxu0 0.0
        %6525 = vmatprep.subr.mxu0 0.0
        %6526 = vmatpush1.msra.mxu0 0.0
        %6527 = vmatprep.subr.mxu0 0.0
        %6528 = vmatpush1.msra.mxu0 0.0
        %6529 = vmatprep.subr.mxu0 0.0
        %6530 = vmatpush1.msra.mxu0 0.0
        %6531 = vmatprep.subr.mxu0 0.0
        %6532 = vmatpush1.msra.mxu0 0.0
        %6533 = vmatprep.subr.mxu0 0.0
        %6534 = vmatpush1.msra.mxu0 0.0
        %6535 = vmatprep.subr.mxu0 0.0
        %6536 = vmatpush1.msra.mxu0 0.0
        %6537 = vmatprep.subr.mxu0 0.0
        %6538 = vmatpush1.msra.mxu0 0.0
        %6539 = vmatprep.subr.mxu0 0.0
        %6540 = vmatpush1.msra.mxu0 0.0
        %6541 = vmatprep.subr.mxu0 0.0
        %6542 = vmatpush1.msra.mxu0 0.0
        %6543 = vmatprep.subr.mxu0 0.0
        %6544 = vmatpush1.msra.mxu0 0.0
        %6545 = vmatprep.subr.mxu0 0.0
        %6546 = vmatpush1.msra.mxu0 0.0
        %6547 = vmatprep.subr.mxu0 0.0
        %6548 = vmatpush1.msra.mxu0 0.0
        %6549 = vmatprep.subr.mxu0 0.0
        %6550 = vmatpush1.msra.mxu0 0.0
        %6551 = vmatprep.subr.mxu0 0.0
        %6552 = vmatpush1.msra.mxu0 0.0
        %6553 = vmatprep.subr.mxu0 0.0
        %6554 = vmatpush1.msra.mxu0 0.0
        %6555 = vmatprep.subr.mxu0 0.0
        %6556 = vmatpush1.msra.mxu0 0.0
        %6557 = vmatprep.subr.mxu0 0.0
        %6558 = vmatpush1.msra.mxu0 0.0
        %6559 = vmatprep.mubr.f32.mxu0 0.0
        %6560 = vmatmul.mubr.f32.gmra.mrb[0].mxu0 %v1393
        %v6561 = vpop.f32.mrb[0].mxu0
        %v6562 = vadd.f32 0.0, %v6561
        %v6563 = vpop.f32.mrb[0].mxu0
        %6564 = vmatprep.mubr.f32.mxu0 0.0
        %6565 = vmatmul.mubr.f32.gmra.mrb[0].mxu0 %v1396
        %v6566 = vpop.f32.mrb[0].mxu0
        %v6567 = vadd.f32 0.0, %v6566
        %v6568 = vpop.f32.mrb[0].mxu0
        %6569 = vdwg.mxu0
        %v6570 = vmul.f32 %v6562, 2.0
        %v6571 = vmul.f32 %v6567, 2.0
        %v6572 = vsub.f32 %v6570, %v5823
        %v6573 = vsub.f32 %v6571, %v5828
        %s6574 = scalar_lea.vmem [#allocation7], 128
        %v6575 = vld [vmem:[%s6574] sm:$0xff]
        %v6576 = vld [vmem:[%s6574 + $0x8] sm:$0xff]
        %v6577 = vld [vmem:[%s6574 + $0x10] sm:$0xff]
        %v6578 = vld [vmem:[%s6574 + $0x18] sm:$0xff]
        %v6580 = vsel %vm2060, %v6572, 0
        %v6583 = vsel %vm2060, %v6573, 0
        %6585 = vmatprep.subr.mxu0 0.0
        %6586 = vmatpush1.msra.mxu0 %v6575
        %6587 = vmatprep.subr.mxu0 0.0
        %6588 = vmatpush1.msra.mxu0 %v6576
        %6589 = vmatprep.subr.mxu0 0.0
        %6590 = vmatpush1.msra.mxu0 %v6577
        %6591 = vmatprep.subr.mxu0 0.0
        %6592 = vmatpush1.msra.mxu0 %v6578
        %6593 = vmatprep.subr.mxu0 0.0
        %6594 = vmatpush1.msra.mxu0 0.0
        %6595 = vmatprep.subr.mxu0 0.0
        %6596 = vmatpush1.msra.mxu0 0.0
        %6597 = vmatprep.subr.mxu0 0.0
        %6598 = vmatpush1.msra.mxu0 0.0
        %6599 = vmatprep.subr.mxu0 0.0
        %6600 = vmatpush1.msra.mxu0 0.0
        %6601 = vmatprep.subr.mxu0 0.0
        %6602 = vmatpush1.msra.mxu0 0.0
        %6603 = vmatprep.subr.mxu0 0.0
        %6604 = vmatpush1.msra.mxu0 0.0
        %6605 = vmatprep.subr.mxu0 0.0
        %6606 = vmatpush1.msra.mxu0 0.0
        %6607 = vmatprep.subr.mxu0 0.0
        %6608 = vmatpush1.msra.mxu0 0.0
        %6609 = vmatprep.subr.mxu0 0.0
        %6610 = vmatpush1.msra.mxu0 0.0
        %6611 = vmatprep.subr.mxu0 0.0
        %6612 = vmatpush1.msra.mxu0 0.0
        %6613 = vmatprep.subr.mxu0 0.0
        %6614 = vmatpush1.msra.mxu0 0.0
        %6615 = vmatprep.subr.mxu0 0.0
        %6616 = vmatpush1.msra.mxu0 0.0
        %6617 = vmatprep.subr.mxu0 0.0
        %6618 = vmatpush1.msra.mxu0 0.0
        %6619 = vmatprep.subr.mxu0 0.0
        %6620 = vmatpush1.msra.mxu0 0.0
        %6621 = vmatprep.subr.mxu0 0.0
        %6622 = vmatpush1.msra.mxu0 0.0
        %6623 = vmatprep.subr.mxu0 0.0
        %6624 = vmatpush1.msra.mxu0 0.0
        %6625 = vmatprep.subr.mxu0 0.0
        %6626 = vmatpush1.msra.mxu0 0.0
        %6627 = vmatprep.subr.mxu0 0.0
        %6628 = vmatpush1.msra.mxu0 0.0
        %6629 = vmatprep.subr.mxu0 0.0
        %6630 = vmatpush1.msra.mxu0 0.0
        %6631 = vmatprep.subr.mxu0 0.0
        %6632 = vmatpush1.msra.mxu0 0.0
        %6633 = vmatprep.subr.mxu0 0.0
        %6634 = vmatpush1.msra.mxu0 0.0
        %6635 = vmatprep.subr.mxu0 0.0
        %6636 = vmatpush1.msra.mxu0 0.0
        %6637 = vmatprep.subr.mxu0 0.0
        %6638 = vmatpush1.msra.mxu0 0.0
        %6639 = vmatprep.subr.mxu0 0.0
        %6640 = vmatpush1.msra.mxu0 0.0
        %6641 = vmatprep.subr.mxu0 0.0
        %6642 = vmatpush1.msra.mxu0 0.0
        %6643 = vmatprep.subr.mxu0 0.0
        %6644 = vmatpush1.msra.mxu0 0.0
        %6645 = vmatprep.subr.mxu0 0.0
        %6646 = vmatpush1.msra.mxu0 0.0
        %6647 = vmatprep.subr.mxu0 0.0
        %6648 = vmatpush1.msra.mxu0 0.0
        %6649 = vmatprep.mubr.f32.mxu0 0.0
        %6650 = vmatmul.mubr.f32.gmra.mrb[0].mxu0 %v6580
        %v6651 = vpop.f32.mrb[0].mxu0
        %v6652 = vadd.f32 0.0, %v6651
        %v6653 = vpop.f32.mrb[0].mxu0
        %6654 = vmatprep.mubr.f32.mxu0 0.0
        %6655 = vmatmul.mubr.f32.gmra.mrb[0].mxu0 %v6583
        %v6656 = vpop.f32.mrb[0].mxu0
        %v6657 = vadd.f32 0.0, %v6656
        %v6658 = vpop.f32.mrb[0].mxu0
        %6659 = vdwg.mxu0
        %v6660 = vadd.f32 %v6411, %v6652
        %v6661 = vadd.f32 %v6412, %v6657
        %s6662 = scalar_lea.vmem [#allocation7], 288
        %v6663 = vld [vmem:[%s6662] sm:$0xff]
        %v6664 = vld [vmem:[%s6662 + $0x8] sm:$0xff]
        %v6665 = vld [vmem:[%s6662 + $0x10] sm:$0xff]
        %v6666 = vld [vmem:[%s6662 + $0x18] sm:$0xff]
        %6667 = vmatprep.subr.mxu0 0.0
        %6668 = vmatpush1.msra.mxu0 %v6663
        %6669 = vmatprep.subr.mxu0 0.0
        %6670 = vmatpush1.msra.mxu0 %v6664
        %6671 = vmatprep.subr.mxu0 0.0
        %6672 = vmatpush1.msra.mxu0 %v6665
        %6673 = vmatprep.subr.mxu0 0.0
        %6674 = vmatpush1.msra.mxu0 %v6666
        %6675 = vmatprep.subr.mxu0 0.0
        %6676 = vmatpush1.msra.mxu0 0.0
        %6677 = vmatprep.subr.mxu0 0.0
        %6678 = vmatpush1.msra.mxu0 0.0
        %6679 = vmatprep.subr.mxu0 0.0
        %6680 = vmatpush1.msra.mxu0 0.0
        %6681 = vmatprep.subr.mxu0 0.0
        %6682 = vmatpush1.msra.mxu0 0.0
        %6683 = vmatprep.subr.mxu0 0.0
        %6684 = vmatpush1.msra.mxu0 0.0
        %6685 = vmatprep.subr.mxu0 0.0
        %6686 = vmatpush1.msra.mxu0 0.0
        %6687 = vmatprep.subr.mxu0 0.0
        %6688 = vmatpush1.msra.mxu0 0.0
        %6689 = vmatprep.subr.mxu0 0.0
        %6690 = vmatpush1.msra.mxu0 0.0
        %6691 = vmatprep.subr.mxu0 0.0
        %6692 = vmatpush1.msra.mxu0 0.0
        %6693 = vmatprep.subr.mxu0 0.0
        %6694 = vmatpush1.msra.mxu0 0.0
        %6695 = vmatprep.subr.mxu0 0.0
        %6696 = vmatpush1.msra.mxu0 0.0
        %6697 = vmatprep.subr.mxu0 0.0
        %6698 = vmatpush1.msra.mxu0 0.0
        %6699 = vmatprep.subr.mxu0 0.0
        %6700 = vmatpush1.msra.mxu0 0.0
        %6701 = vmatprep.subr.mxu0 0.0
        %6702 = vmatpush1.msra.mxu0 0.0
        %6703 = vmatprep.subr.mxu0 0.0
        %6704 = vmatpush1.msra.mxu0 0.0
        %6705 = vmatprep.subr.mxu0 0.0
        %6706 = vmatpush1.msra.mxu0 0.0
        %6707 = vmatprep.subr.mxu0 0.0
        %6708 = vmatpush1.msra.mxu0 0.0
        %6709 = vmatprep.subr.mxu0 0.0
        %6710 = vmatpush1.msra.mxu0 0.0
        %6711 = vmatprep.subr.mxu0 0.0
        %6712 = vmatpush1.msra.mxu0 0.0
        %6713 = vmatprep.subr.mxu0 0.0
        %6714 = vmatpush1.msra.mxu0 0.0
        %6715 = vmatprep.subr.mxu0 0.0
        %6716 = vmatpush1.msra.mxu0 0.0
        %6717 = vmatprep.subr.mxu0 0.0
        %6718 = vmatpush1.msra.mxu0 0.0
        %6719 = vmatprep.subr.mxu0 0.0
        %6720 = vmatpush1.msra.mxu0 0.0
        %6721 = vmatprep.subr.mxu0 0.0
        %6722 = vmatpush1.msra.mxu0 0.0
        %6723 = vmatprep.subr.mxu0 0.0
        %6724 = vmatpush1.msra.mxu0 0.0
        %6725 = vmatprep.subr.mxu0 0.0
        %6726 = vmatpush1.msra.mxu0 0.0
        %6727 = vmatprep.subr.mxu0 0.0
        %6728 = vmatpush1.msra.mxu0 0.0
        %6729 = vmatprep.subr.mxu0 0.0
        %6730 = vmatpush1.msra.mxu0 0.0
        %6731 = vmatprep.mubr.f32.mxu0 0.0
        %6732 = vmatmul.mubr.f32.gmra.mrb[0].mxu0 %v6580
        %v6733 = vpop.f32.mrb[0].mxu0
        %v6734 = vadd.f32 0.0, %v6733
        %v6735 = vpop.f32.mrb[0].mxu0
        %6736 = vmatprep.mubr.f32.mxu0 0.0
        %6737 = vmatmul.mubr.f32.gmra.mrb[0].mxu0 %v6583
        %v6738 = vpop.f32.mrb[0].mxu0
        %v6739 = vadd.f32 0.0, %v6738
        %v6740 = vpop.f32.mrb[0].mxu0
        %6741 = vdwg.mxu0
        %v6742 = vadd.f32 %v6493, %v6734
        %v6743 = vadd.f32 %v6494, %v6739
        %v6744 = vld [vmem:[%s8] sm:$0x1]
        %v6746 = vlaneseq
        %v6747 = vshrl.u32 %v6746, 7
        %v6748 = vsub.s32 0, %v6747
        %v6749 = vrot.slane %v6744, %v6748
        %v6751 = vadd.f32 %v6660, %v6749
        %v6752 = vadd.f32 %v6661, %v6749
        %v6753 = vxor.u32 %v6751, 2147483648
        %v6754 = vxor.u32 %v6752, 2147483648
        %v6755 = vmul.f32 %v6753, 1.442695
        %v6756 = vpow.pop %v6755
        %v6757 = vmul.f32 %v6754, 1.442695
        %v6758 = vpow.pop %v6757
        %v6759 = vadd.f32 %v6756, 1.0
        %v6760 = vadd.f32 %v6758, 1.0
        %v6761 = vrcp.pop %v6759
        %v6762 = vmul.f32 1.0, %v6761
        %v6763 = vrcp.pop %v6760
        %v6764 = vmul.f32 1.0, %v6763
        %s6765 = scalar_lea.vmem %s8, 1
        %v6766 = vld [vmem:[%s6765] sm:$0x1]
        %v6768 = vlaneseq
        %v6769 = vshrl.u32 %v6768, 7
        %v6770 = vsub.s32 0, %v6769
        %v6771 = vrot.slane %v6766, %v6770
        %v6773 = vadd.f32 %v6742, %v6771
        %v6774 = vadd.f32 %v6743, %v6771
        %v6775 = vxor.u32 %v6773, 2147483648
        %v6776 = vxor.u32 %v6774, 2147483648
        %v6777 = vmul.f32 %v6775, 1.442695
        %v6778 = vpow.pop %v6777
        %v6779 = vmul.f32 %v6776, 1.442695
        %v6780 = vpow.pop %v6779
        %v6781 = vadd.f32 %v6778, 1.0
        %v6782 = vadd.f32 %v6780, 1.0
        %v6783 = vrcp.pop %v6781
        %v6784 = vmul.f32 1.0, %v6783
        %v6785 = vrcp.pop %v6782
        %v6786 = vmul.f32 1.0, %v6785
        %v6787 = vmul.f32 %v6762, %v4030
        %v6788 = vmul.f32 %v6764, %v4031
        %s6789 = scalar_lea.vmem [#allocation7], 320
        %v6790 = vld [vmem:[%s6789] sm:$0xff]
        %v6791 = vld [vmem:[%s6789 + $0x8] sm:$0xff]
        %v6792 = vld [vmem:[%s6789 + $0x10] sm:$0xff]
        %v6793 = vld [vmem:[%s6789 + $0x18] sm:$0xff]
        %v6795 = vsel %vm2060, %v6787, 0
        %v6798 = vsel %vm2060, %v6788, 0
        %6800 = vmatprep.subr.mxu0 0.0
        %6801 = vmatpush1.msra.mxu0 %v6790
        %6802 = vmatprep.subr.mxu0 0.0
        %6803 = vmatpush1.msra.mxu0 %v6791
        %6804 = vmatprep.subr.mxu0 0.0
        %6805 = vmatpush1.msra.mxu0 %v6792
        %6806 = vmatprep.subr.mxu0 0.0
        %6807 = vmatpush1.msra.mxu0 %v6793
        %6808 = vmatprep.subr.mxu0 0.0
        %6809 = vmatpush1.msra.mxu0 0.0
        %6810 = vmatprep.subr.mxu0 0.0
        %6811 = vmatpush1.msra.mxu0 0.0
        %6812 = vmatprep.subr.mxu0 0.0
        %6813 = vmatpush1.msra.mxu0 0.0
        %6814 = vmatprep.subr.mxu0 0.0
        %6815 = vmatpush1.msra.mxu0 0.0
        %6816 = vmatprep.subr.mxu0 0.0
        %6817 = vmatpush1.msra.mxu0 0.0
        %6818 = vmatprep.subr.mxu0 0.0
        %6819 = vmatpush1.msra.mxu0 0.0
        %6820 = vmatprep.subr.mxu0 0.0
        %6821 = vmatpush1.msra.mxu0 0.0
        %6822 = vmatprep.subr.mxu0 0.0
        %6823 = vmatpush1.msra.mxu0 0.0
        %6824 = vmatprep.subr.mxu0 0.0
        %6825 = vmatpush1.msra.mxu0 0.0
        %6826 = vmatprep.subr.mxu0 0.0
        %6827 = vmatpush1.msra.mxu0 0.0
        %6828 = vmatprep.subr.mxu0 0.0
        %6829 = vmatpush1.msra.mxu0 0.0
        %6830 = vmatprep.subr.mxu0 0.0
        %6831 = vmatpush1.msra.mxu0 0.0
        %6832 = vmatprep.subr.mxu0 0.0
        %6833 = vmatpush1.msra.mxu0 0.0
        %6834 = vmatprep.subr.mxu0 0.0
        %6835 = vmatpush1.msra.mxu0 0.0
        %6836 = vmatprep.subr.mxu0 0.0
        %6837 = vmatpush1.msra.mxu0 0.0
        %6838 = vmatprep.subr.mxu0 0.0
        %6839 = vmatpush1.msra.mxu0 0.0
        %6840 = vmatprep.subr.mxu0 0.0
        %6841 = vmatpush1.msra.mxu0 0.0
        %6842 = vmatprep.subr.mxu0 0.0
        %6843 = vmatpush1.msra.mxu0 0.0
        %6844 = vmatprep.subr.mxu0 0.0
        %6845 = vmatpush1.msra.mxu0 0.0
        %6846 = vmatprep.subr.mxu0 0.0
        %6847 = vmatpush1.msra.mxu0 0.0
        %6848 = vmatprep.subr.mxu0 0.0
        %6849 = vmatpush1.msra.mxu0 0.0
        %6850 = vmatprep.subr.mxu0 0.0
        %6851 = vmatpush1.msra.mxu0 0.0
        %6852 = vmatprep.subr.mxu0 0.0
        %6853 = vmatpush1.msra.mxu0 0.0
        %6854 = vmatprep.subr.mxu0 0.0
        %6855 = vmatpush1.msra.mxu0 0.0
        %6856 = vmatprep.subr.mxu0 0.0
        %6857 = vmatpush1.msra.mxu0 0.0
        %6858 = vmatprep.subr.mxu0 0.0
        %6859 = vmatpush1.msra.mxu0 0.0
        %6860 = vmatprep.subr.mxu0 0.0
        %6861 = vmatpush1.msra.mxu0 0.0
        %6862 = vmatprep.subr.mxu0 0.0
        %6863 = vmatpush1.msra.mxu0 0.0
        %6864 = vmatprep.mubr.f32.mxu0 0.0
        %6865 = vmatmul.mubr.f32.gmra.mrb[0].mxu0 %v6795
        %v6866 = vpop.f32.mrb[0].mxu0
        %v6867 = vadd.f32 0.0, %v6866
        %v6868 = vpop.f32.mrb[0].mxu0
        %6869 = vmatprep.mubr.f32.mxu0 0.0
        %6870 = vmatmul.mubr.f32.gmra.mrb[0].mxu0 %v6798
        %v6871 = vpop.f32.mrb[0].mxu0
        %v6872 = vadd.f32 0.0, %v6871
        %v6873 = vpop.f32.mrb[0].mxu0
        %6874 = vdwg.mxu0
        %v6875 = vadd.f32 %v5585, %v6867
        %v6876 = vadd.f32 %v5586, %v6872
        %6877 = vmatprep.subr.mxu0 0.0
        %6878 = vmatpush1.msra.mxu0 %v6787
        %6879 = vmatprep.subr.mxu0 0.0
        %6880 = vmatpush1.msra.mxu0 %v6788
        %6881 = vmatprep.subr.mxu0 0.0
        %6882 = vmatpush1.msra.mxu0 0.0
        %6883 = vmatprep.subr.mxu0 0.0
        %6884 = vmatpush1.msra.mxu0 0.0
        %6885 = vmatprep.subr.mxu0 0.0
        %6886 = vmatpush1.msra.mxu0 0.0
        %6887 = vmatprep.subr.mxu0 0.0
        %6888 = vmatpush1.msra.mxu0 0.0
        %6889 = vmatprep.subr.mxu0 0.0
        %6890 = vmatpush1.msra.mxu0 0.0
        %6891 = vmatprep.subr.mxu0 0.0
        %6892 = vmatpush1.msra.mxu0 0.0
        %6893 = vmatprep.subr.mxu0 0.0
        %6894 = vmatpush1.msra.mxu0 0.0
        %6895 = vmatprep.subr.mxu0 0.0
        %6896 = vmatpush1.msra.mxu0 0.0
        %6897 = vmatprep.subr.mxu0 0.0
        %6898 = vmatpush1.msra.mxu0 0.0
        %6899 = vmatprep.subr.mxu0 0.0
        %6900 = vmatpush1.msra.mxu0 0.0
        %6901 = vmatprep.subr.mxu0 0.0
        %6902 = vmatpush1.msra.mxu0 0.0
        %6903 = vmatprep.subr.mxu0 0.0
        %6904 = vmatpush1.msra.mxu0 0.0
        %6905 = vmatprep.subr.mxu0 0.0
        %6906 = vmatpush1.msra.mxu0 0.0
        %6907 = vmatprep.subr.mxu0 0.0
        %6908 = vmatpush1.msra.mxu0 0.0
        %6909 = vmatprep.subr.mxu0 0.0
        %6910 = vmatpush1.msra.mxu0 0.0
        %6911 = vmatprep.subr.mxu0 0.0
        %6912 = vmatpush1.msra.mxu0 0.0
        %6913 = vmatprep.subr.mxu0 0.0
        %6914 = vmatpush1.msra.mxu0 0.0
        %6915 = vmatprep.subr.mxu0 0.0
        %6916 = vmatpush1.msra.mxu0 0.0
        %6917 = vmatprep.subr.mxu0 0.0
        %6918 = vmatpush1.msra.mxu0 0.0
        %6919 = vmatprep.subr.mxu0 0.0
        %6920 = vmatpush1.msra.mxu0 0.0
        %6921 = vmatprep.subr.mxu0 0.0
        %6922 = vmatpush1.msra.mxu0 0.0
        %6923 = vmatprep.subr.mxu0 0.0
        %6924 = vmatpush1.msra.mxu0 0.0
        %6925 = vmatprep.subr.mxu0 0.0
        %6926 = vmatpush1.msra.mxu0 0.0
        %6927 = vmatprep.subr.mxu0 0.0
        %6928 = vmatpush1.msra.mxu0 0.0
        %6929 = vmatprep.subr.mxu0 0.0
        %6930 = vmatpush1.msra.mxu0 0.0
        %6931 = vmatprep.subr.mxu0 0.0
        %6932 = vmatpush1.msra.mxu0 0.0
        %6933 = vmatprep.subr.mxu0 0.0
        %6934 = vmatpush1.msra.mxu0 0.0
        %6935 = vmatprep.subr.mxu0 0.0
        %6936 = vmatpush1.msra.mxu0 0.0
        %6937 = vmatprep.subr.mxu0 0.0
        %6938 = vmatpush1.msra.mxu0 0.0
        %6939 = vmatprep.subr.mxu0 0.0
        %6940 = vmatpush1.msra.mxu0 0.0
        %6941 = vmatprep.mubr.f32.mxu0 0.0
        %6942 = vmatmul.mubr.f32.gmra.mrb[0].mxu0 %v493
        %v6943 = vpop.f32.mrb[0].mxu0
        %v6944 = vadd.f32 0.0, %v6943
        %v6945 = vpop.f32.mrb[0].mxu0
        %6946 = vmatprep.mubr.f32.mxu0 0.0
        %6947 = vmatmul.mubr.f32.gmra.mrb[0].mxu0 %v496
        %v6948 = vpop.f32.mrb[0].mxu0
        %v6949 = vadd.f32 0.0, %v6948
        %v6950 = vpop.f32.mrb[0].mxu0
        %6951 = vdwg.mxu0
        %s6952 = scalar_lea.vmem [#allocation7], 352
        %v6953 = vld [vmem:[%s6952] sm:$0xff]
        %v6954 = vld [vmem:[%s6952 + $0x8] sm:$0xff]
        %v6955 = vld [vmem:[%s6952 + $0x10] sm:$0xff]
        %v6956 = vld [vmem:[%s6952 + $0x18] sm:$0xff]
        %v6958 = vsel %vm2060, %v6944, 0
        %v6961 = vsel %vm2060, %v6949, 0
        %6963 = vmatprep.subr.mxu0 0.0
        %6964 = vmatpush1.msra.mxu0 %v6953
        %6965 = vmatprep.subr.mxu0 0.0
        %6966 = vmatpush1.msra.mxu0 %v6954
        %6967 = vmatprep.subr.mxu0 0.0
        %6968 = vmatpush1.msra.mxu0 %v6955
        %6969 = vmatprep.subr.mxu0 0.0
        %6970 = vmatpush1.msra.mxu0 %v6956
        %6971 = vmatprep.subr.mxu0 0.0
        %6972 = vmatpush1.msra.mxu0 0.0
        %6973 = vmatprep.subr.mxu0 0.0
        %6974 = vmatpush1.msra.mxu0 0.0
        %6975 = vmatprep.subr.mxu0 0.0
        %6976 = vmatpush1.msra.mxu0 0.0
        %6977 = vmatprep.subr.mxu0 0.0
        %6978 = vmatpush1.msra.mxu0 0.0
        %6979 = vmatprep.subr.mxu0 0.0
        %6980 = vmatpush1.msra.mxu0 0.0
        %6981 = vmatprep.subr.mxu0 0.0
        %6982 = vmatpush1.msra.mxu0 0.0
        %6983 = vmatprep.subr.mxu0 0.0
        %6984 = vmatpush1.msra.mxu0 0.0
        %6985 = vmatprep.subr.mxu0 0.0
        %6986 = vmatpush1.msra.mxu0 0.0
        %6987 = vmatprep.subr.mxu0 0.0
        %6988 = vmatpush1.msra.mxu0 0.0
        %6989 = vmatprep.subr.mxu0 0.0
        %6990 = vmatpush1.msra.mxu0 0.0
        %6991 = vmatprep.subr.mxu0 0.0
        %6992 = vmatpush1.msra.mxu0 0.0
        %6993 = vmatprep.subr.mxu0 0.0
        %6994 = vmatpush1.msra.mxu0 0.0
        %6995 = vmatprep.subr.mxu0 0.0
        %6996 = vmatpush1.msra.mxu0 0.0
        %6997 = vmatprep.subr.mxu0 0.0
        %6998 = vmatpush1.msra.mxu0 0.0
        %6999 = vmatprep.subr.mxu0 0.0
        %7000 = vmatpush1.msra.mxu0 0.0
        %7001 = vmatprep.subr.mxu0 0.0
        %7002 = vmatpush1.msra.mxu0 0.0
        %7003 = vmatprep.subr.mxu0 0.0
        %7004 = vmatpush1.msra.mxu0 0.0
        %7005 = vmatprep.subr.mxu0 0.0
        %7006 = vmatpush1.msra.mxu0 0.0
        %7007 = vmatprep.subr.mxu0 0.0
        %7008 = vmatpush1.msra.mxu0 0.0
        %7009 = vmatprep.subr.mxu0 0.0
        %7010 = vmatpush1.msra.mxu0 0.0
        %7011 = vmatprep.subr.mxu0 0.0
        %7012 = vmatpush1.msra.mxu0 0.0
        %7013 = vmatprep.subr.mxu0 0.0
        %7014 = vmatpush1.msra.mxu0 0.0
        %7015 = vmatprep.subr.mxu0 0.0
        %7016 = vmatpush1.msra.mxu0 0.0
        %7017 = vmatprep.subr.mxu0 0.0
        %7018 = vmatpush1.msra.mxu0 0.0
        %7019 = vmatprep.subr.mxu0 0.0
        %7020 = vmatpush1.msra.mxu0 0.0
        %7021 = vmatprep.subr.mxu0 0.0
        %7022 = vmatpush1.msra.mxu0 0.0
        %7023 = vmatprep.subr.mxu0 0.0
        %7024 = vmatpush1.msra.mxu0 0.0
        %7025 = vmatprep.subr.mxu0 0.0
        %7026 = vmatpush1.msra.mxu0 0.0
        %7027 = vmatprep.mubr.f32.mxu0 0.0
        %7028 = vmatmul.mubr.f32.gmra.mrb[0].mxu0 %v6958
        %v7029 = vpop.f32.mrb[0].mxu0
        %v7030 = vadd.f32 0.0, %v7029
        %v7031 = vpop.f32.mrb[0].mxu0
        %7032 = vmatprep.mubr.f32.mxu0 0.0
        %7033 = vmatmul.mubr.f32.gmra.mrb[0].mxu0 %v6961
        %v7034 = vpop.f32.mrb[0].mxu0
        %v7035 = vadd.f32 0.0, %v7034
        %v7036 = vpop.f32.mrb[0].mxu0
        %7037 = vdwg.mxu0
        %v7038 = vadd.f32 %v6875, %v7030
        %v7039 = vadd.f32 %v6876, %v7035
        %7040 = vmatprep.subr.mxu0 0.0
        %7041 = vmatpush1.msra.mxu0 %v6944
        %7042 = vmatprep.subr.mxu0 0.0
        %7043 = vmatpush1.msra.mxu0 %v6949
        %7044 = vmatprep.subr.mxu0 0.0
        %7045 = vmatpush1.msra.mxu0 0.0
        %7046 = vmatprep.subr.mxu0 0.0
        %7047 = vmatpush1.msra.mxu0 0.0
        %7048 = vmatprep.subr.mxu0 0.0
        %7049 = vmatpush1.msra.mxu0 0.0
        %7050 = vmatprep.subr.mxu0 0.0
        %7051 = vmatpush1.msra.mxu0 0.0
        %7052 = vmatprep.subr.mxu0 0.0
        %7053 = vmatpush1.msra.mxu0 0.0
        %7054 = vmatprep.subr.mxu0 0.0
        %7055 = vmatpush1.msra.mxu0 0.0
        %7056 = vmatprep.subr.mxu0 0.0
        %7057 = vmatpush1.msra.mxu0 0.0
        %7058 = vmatprep.subr.mxu0 0.0
        %7059 = vmatpush1.msra.mxu0 0.0
        %7060 = vmatprep.subr.mxu0 0.0
        %7061 = vmatpush1.msra.mxu0 0.0
        %7062 = vmatprep.subr.mxu0 0.0
        %7063 = vmatpush1.msra.mxu0 0.0
        %7064 = vmatprep.subr.mxu0 0.0
        %7065 = vmatpush1.msra.mxu0 0.0
        %7066 = vmatprep.subr.mxu0 0.0
        %7067 = vmatpush1.msra.mxu0 0.0
        %7068 = vmatprep.subr.mxu0 0.0
        %7069 = vmatpush1.msra.mxu0 0.0
        %7070 = vmatprep.subr.mxu0 0.0
        %7071 = vmatpush1.msra.mxu0 0.0
        %7072 = vmatprep.subr.mxu0 0.0
        %7073 = vmatpush1.msra.mxu0 0.0
        %7074 = vmatprep.subr.mxu0 0.0
        %7075 = vmatpush1.msra.mxu0 0.0
        %7076 = vmatprep.subr.mxu0 0.0
        %7077 = vmatpush1.msra.mxu0 0.0
        %7078 = vmatprep.subr.mxu0 0.0
        %7079 = vmatpush1.msra.mxu0 0.0
        %7080 = vmatprep.subr.mxu0 0.0
        %7081 = vmatpush1.msra.mxu0 0.0
        %7082 = vmatprep.subr.mxu0 0.0
        %7083 = vmatpush1.msra.mxu0 0.0
        %7084 = vmatprep.subr.mxu0 0.0
        %7085 = vmatpush1.msra.mxu0 0.0
        %7086 = vmatprep.subr.mxu0 0.0
        %7087 = vmatpush1.msra.mxu0 0.0
        %7088 = vmatprep.subr.mxu0 0.0
        %7089 = vmatpush1.msra.mxu0 0.0
        %7090 = vmatprep.subr.mxu0 0.0
        %7091 = vmatpush1.msra.mxu0 0.0
        %7092 = vmatprep.subr.mxu0 0.0
        %7093 = vmatpush1.msra.mxu0 0.0
        %7094 = vmatprep.subr.mxu0 0.0
        %7095 = vmatpush1.msra.mxu0 0.0
        %7096 = vmatprep.subr.mxu0 0.0
        %7097 = vmatpush1.msra.mxu0 0.0
        %7098 = vmatprep.subr.mxu0 0.0
        %7099 = vmatpush1.msra.mxu0 0.0
        %7100 = vmatprep.subr.mxu0 0.0
        %7101 = vmatpush1.msra.mxu0 0.0
        %7102 = vmatprep.subr.mxu0 0.0
        %7103 = vmatpush1.msra.mxu0 0.0
        %7104 = vmatprep.mubr.f32.mxu0 0.0
        %7105 = vmatmul.mubr.f32.gmra.mrb[0].mxu0 %v493
        %v7106 = vpop.f32.mrb[0].mxu0
        %v7107 = vadd.f32 0.0, %v7106
        %v7108 = vpop.f32.mrb[0].mxu0
        %7109 = vmatprep.mubr.f32.mxu0 0.0
        %7110 = vmatmul.mubr.f32.gmra.mrb[0].mxu0 %v496
        %v7111 = vpop.f32.mrb[0].mxu0
        %v7112 = vadd.f32 0.0, %v7111
        %v7113 = vpop.f32.mrb[0].mxu0
        %7114 = vdwg.mxu0
        %v7115 = vmul.f32 %v7107, 2.0
        %v7116 = vmul.f32 %v7112, 2.0
        %v7117 = vsub.f32 %v7115, %v6787
        %v7118 = vsub.f32 %v7116, %v6788
        %s7119 = scalar_lea.vmem [#allocation7], 384
        %v7120 = vld [vmem:[%s7119] sm:$0xff]
        %v7121 = vld [vmem:[%s7119 + $0x8] sm:$0xff]
        %v7122 = vld [vmem:[%s7119 + $0x10] sm:$0xff]
        %v7123 = vld [vmem:[%s7119 + $0x18] sm:$0xff]
        %v7125 = vsel %vm2060, %v7117, 0
        %v7128 = vsel %vm2060, %v7118, 0
        %7130 = vmatprep.subr.mxu0 0.0
        %7131 = vmatpush1.msra.mxu0 %v7120
        %7132 = vmatprep.subr.mxu0 0.0
        %7133 = vmatpush1.msra.mxu0 %v7121
        %7134 = vmatprep.subr.mxu0 0.0
        %7135 = vmatpush1.msra.mxu0 %v7122
        %7136 = vmatprep.subr.mxu0 0.0
        %7137 = vmatpush1.msra.mxu0 %v7123
        %7138 = vmatprep.subr.mxu0 0.0
        %7139 = vmatpush1.msra.mxu0 0.0
        %7140 = vmatprep.subr.mxu0 0.0
        %7141 = vmatpush1.msra.mxu0 0.0
        %7142 = vmatprep.subr.mxu0 0.0
        %7143 = vmatpush1.msra.mxu0 0.0
        %7144 = vmatprep.subr.mxu0 0.0
        %7145 = vmatpush1.msra.mxu0 0.0
        %7146 = vmatprep.subr.mxu0 0.0
        %7147 = vmatpush1.msra.mxu0 0.0
        %7148 = vmatprep.subr.mxu0 0.0
        %7149 = vmatpush1.msra.mxu0 0.0
        %7150 = vmatprep.subr.mxu0 0.0
        %7151 = vmatpush1.msra.mxu0 0.0
        %7152 = vmatprep.subr.mxu0 0.0
        %7153 = vmatpush1.msra.mxu0 0.0
        %7154 = vmatprep.subr.mxu0 0.0
        %7155 = vmatpush1.msra.mxu0 0.0
        %7156 = vmatprep.subr.mxu0 0.0
        %7157 = vmatpush1.msra.mxu0 0.0
        %7158 = vmatprep.subr.mxu0 0.0
        %7159 = vmatpush1.msra.mxu0 0.0
        %7160 = vmatprep.subr.mxu0 0.0
        %7161 = vmatpush1.msra.mxu0 0.0
        %7162 = vmatprep.subr.mxu0 0.0
        %7163 = vmatpush1.msra.mxu0 0.0
        %7164 = vmatprep.subr.mxu0 0.0
        %7165 = vmatpush1.msra.mxu0 0.0
        %7166 = vmatprep.subr.mxu0 0.0
        %7167 = vmatpush1.msra.mxu0 0.0
        %7168 = vmatprep.subr.mxu0 0.0
        %7169 = vmatpush1.msra.mxu0 0.0
        %7170 = vmatprep.subr.mxu0 0.0
        %7171 = vmatpush1.msra.mxu0 0.0
        %7172 = vmatprep.subr.mxu0 0.0
        %7173 = vmatpush1.msra.mxu0 0.0
        %7174 = vmatprep.subr.mxu0 0.0
        %7175 = vmatpush1.msra.mxu0 0.0
        %7176 = vmatprep.subr.mxu0 0.0
        %7177 = vmatpush1.msra.mxu0 0.0
        %7178 = vmatprep.subr.mxu0 0.0
        %7179 = vmatpush1.msra.mxu0 0.0
        %7180 = vmatprep.subr.mxu0 0.0
        %7181 = vmatpush1.msra.mxu0 0.0
        %7182 = vmatprep.subr.mxu0 0.0
        %7183 = vmatpush1.msra.mxu0 0.0
        %7184 = vmatprep.subr.mxu0 0.0
        %7185 = vmatpush1.msra.mxu0 0.0
        %7186 = vmatprep.subr.mxu0 0.0
        %7187 = vmatpush1.msra.mxu0 0.0
        %7188 = vmatprep.subr.mxu0 0.0
        %7189 = vmatpush1.msra.mxu0 0.0
        %7190 = vmatprep.subr.mxu0 0.0
        %7191 = vmatpush1.msra.mxu0 0.0
        %7192 = vmatprep.subr.mxu0 0.0
        %7193 = vmatpush1.msra.mxu0 0.0
        %7194 = vmatprep.mubr.f32.mxu0 0.0
        %7195 = vmatmul.mubr.f32.gmra.mrb[0].mxu0 %v7125
        %v7196 = vpop.f32.mrb[0].mxu0
        %v7197 = vadd.f32 0.0, %v7196
        %v7198 = vpop.f32.mrb[0].mxu0
        %7199 = vmatprep.mubr.f32.mxu0 0.0
        %7200 = vmatmul.mubr.f32.gmra.mrb[0].mxu0 %v7128
        %v7201 = vpop.f32.mrb[0].mxu0
        %v7202 = vadd.f32 0.0, %v7201
        %v7203 = vpop.f32.mrb[0].mxu0
        %7204 = vdwg.mxu0
        %v7205 = vadd.f32 %v7038, %v7197
        %v7206 = vadd.f32 %v7039, %v7202
        %7207 = vmatprep.subr.mxu0 0.0
        %7208 = vmatpush1.msra.mxu0 %v6944
        %7209 = vmatprep.subr.mxu0 0.0
        %7210 = vmatpush1.msra.mxu0 %v6949
        %7211 = vmatprep.subr.mxu0 0.0
        %7212 = vmatpush1.msra.mxu0 0.0
        %7213 = vmatprep.subr.mxu0 0.0
        %7214 = vmatpush1.msra.mxu0 0.0
        %7215 = vmatprep.subr.mxu0 0.0
        %7216 = vmatpush1.msra.mxu0 0.0
        %7217 = vmatprep.subr.mxu0 0.0
        %7218 = vmatpush1.msra.mxu0 0.0
        %7219 = vmatprep.subr.mxu0 0.0
        %7220 = vmatpush1.msra.mxu0 0.0
        %7221 = vmatprep.subr.mxu0 0.0
        %7222 = vmatpush1.msra.mxu0 0.0
        %7223 = vmatprep.subr.mxu0 0.0
        %7224 = vmatpush1.msra.mxu0 0.0
        %7225 = vmatprep.subr.mxu0 0.0
        %7226 = vmatpush1.msra.mxu0 0.0
        %7227 = vmatprep.subr.mxu0 0.0
        %7228 = vmatpush1.msra.mxu0 0.0
        %7229 = vmatprep.subr.mxu0 0.0
        %7230 = vmatpush1.msra.mxu0 0.0
        %7231 = vmatprep.subr.mxu0 0.0
        %7232 = vmatpush1.msra.mxu0 0.0
        %7233 = vmatprep.subr.mxu0 0.0
        %7234 = vmatpush1.msra.mxu0 0.0
        %7235 = vmatprep.subr.mxu0 0.0
        %7236 = vmatpush1.msra.mxu0 0.0
        %7237 = vmatprep.subr.mxu0 0.0
        %7238 = vmatpush1.msra.mxu0 0.0
        %7239 = vmatprep.subr.mxu0 0.0
        %7240 = vmatpush1.msra.mxu0 0.0
        %7241 = vmatprep.subr.mxu0 0.0
        %7242 = vmatpush1.msra.mxu0 0.0
        %7243 = vmatprep.subr.mxu0 0.0
        %7244 = vmatpush1.msra.mxu0 0.0
        %7245 = vmatprep.subr.mxu0 0.0
        %7246 = vmatpush1.msra.mxu0 0.0
        %7247 = vmatprep.subr.mxu0 0.0
        %7248 = vmatpush1.msra.mxu0 0.0
        %7249 = vmatprep.subr.mxu0 0.0
        %7250 = vmatpush1.msra.mxu0 0.0
        %7251 = vmatprep.subr.mxu0 0.0
        %7252 = vmatpush1.msra.mxu0 0.0
        %7253 = vmatprep.subr.mxu0 0.0
        %7254 = vmatpush1.msra.mxu0 0.0
        %7255 = vmatprep.subr.mxu0 0.0
        %7256 = vmatpush1.msra.mxu0 0.0
        %7257 = vmatprep.subr.mxu0 0.0
        %7258 = vmatpush1.msra.mxu0 0.0
        %7259 = vmatprep.subr.mxu0 0.0
        %7260 = vmatpush1.msra.mxu0 0.0
        %7261 = vmatprep.subr.mxu0 0.0
        %7262 = vmatpush1.msra.mxu0 0.0
        %7263 = vmatprep.subr.mxu0 0.0
        %7264 = vmatpush1.msra.mxu0 0.0
        %7265 = vmatprep.subr.mxu0 0.0
        %7266 = vmatpush1.msra.mxu0 0.0
        %7267 = vmatprep.subr.mxu0 0.0
        %7268 = vmatpush1.msra.mxu0 0.0
        %7269 = vmatprep.subr.mxu0 0.0
        %7270 = vmatpush1.msra.mxu0 0.0
        %7271 = vmatprep.mubr.f32.mxu0 0.0
        %7272 = vmatmul.mubr.f32.gmra.mrb[0].mxu0 %v1393
        %v7273 = vpop.f32.mrb[0].mxu0
        %v7274 = vadd.f32 0.0, %v7273
        %v7275 = vpop.f32.mrb[0].mxu0
        %7276 = vmatprep.mubr.f32.mxu0 0.0
        %7277 = vmatmul.mubr.f32.gmra.mrb[0].mxu0 %v1396
        %v7278 = vpop.f32.mrb[0].mxu0
        %v7279 = vadd.f32 0.0, %v7278
        %v7280 = vpop.f32.mrb[0].mxu0
        %7281 = vdwg.mxu0
        %s7282 = scalar_lea.vmem [#allocation7], 416
        %v7283 = vld [vmem:[%s7282] sm:$0xff]
        %v7284 = vld [vmem:[%s7282 + $0x8] sm:$0xff]
        %v7285 = vld [vmem:[%s7282 + $0x10] sm:$0xff]
        %v7286 = vld [vmem:[%s7282 + $0x18] sm:$0xff]
        %v7288 = vsel %vm2060, %v7274, 0
        %v7291 = vsel %vm2060, %v7279, 0
        %7293 = vmatprep.subr.mxu0 0.0
        %7294 = vmatpush1.msra.mxu0 %v7283
        %7295 = vmatprep.subr.mxu0 0.0
        %7296 = vmatpush1.msra.mxu0 %v7284
        %7297 = vmatprep.subr.mxu0 0.0
        %7298 = vmatpush1.msra.mxu0 %v7285
        %7299 = vmatprep.subr.mxu0 0.0
        %7300 = vmatpush1.msra.mxu0 %v7286
        %7301 = vmatprep.subr.mxu0 0.0
        %7302 = vmatpush1.msra.mxu0 0.0
        %7303 = vmatprep.subr.mxu0 0.0
        %7304 = vmatpush1.msra.mxu0 0.0
        %7305 = vmatprep.subr.mxu0 0.0
        %7306 = vmatpush1.msra.mxu0 0.0
        %7307 = vmatprep.subr.mxu0 0.0
        %7308 = vmatpush1.msra.mxu0 0.0
        %7309 = vmatprep.subr.mxu0 0.0
        %7310 = vmatpush1.msra.mxu0 0.0
        %7311 = vmatprep.subr.mxu0 0.0
        %7312 = vmatpush1.msra.mxu0 0.0
        %7313 = vmatprep.subr.mxu0 0.0
        %7314 = vmatpush1.msra.mxu0 0.0
        %7315 = vmatprep.subr.mxu0 0.0
        %7316 = vmatpush1.msra.mxu0 0.0
        %7317 = vmatprep.subr.mxu0 0.0
        %7318 = vmatpush1.msra.mxu0 0.0
        %7319 = vmatprep.subr.mxu0 0.0
        %7320 = vmatpush1.msra.mxu0 0.0
        %7321 = vmatprep.subr.mxu0 0.0
        %7322 = vmatpush1.msra.mxu0 0.0
        %7323 = vmatprep.subr.mxu0 0.0
        %7324 = vmatpush1.msra.mxu0 0.0
        %7325 = vmatprep.subr.mxu0 0.0
        %7326 = vmatpush1.msra.mxu0 0.0
        %7327 = vmatprep.subr.mxu0 0.0
        %7328 = vmatpush1.msra.mxu0 0.0
        %7329 = vmatprep.subr.mxu0 0.0
        %7330 = vmatpush1.msra.mxu0 0.0
        %7331 = vmatprep.subr.mxu0 0.0
        %7332 = vmatpush1.msra.mxu0 0.0
        %7333 = vmatprep.subr.mxu0 0.0
        %7334 = vmatpush1.msra.mxu0 0.0
        %7335 = vmatprep.subr.mxu0 0.0
        %7336 = vmatpush1.msra.mxu0 0.0
        %7337 = vmatprep.subr.mxu0 0.0
        %7338 = vmatpush1.msra.mxu0 0.0
        %7339 = vmatprep.subr.mxu0 0.0
        %7340 = vmatpush1.msra.mxu0 0.0
        %7341 = vmatprep.subr.mxu0 0.0
        %7342 = vmatpush1.msra.mxu0 0.0
        %7343 = vmatprep.subr.mxu0 0.0
        %7344 = vmatpush1.msra.mxu0 0.0
        %7345 = vmatprep.subr.mxu0 0.0
        %7346 = vmatpush1.msra.mxu0 0.0
        %7347 = vmatprep.subr.mxu0 0.0
        %7348 = vmatpush1.msra.mxu0 0.0
        %7349 = vmatprep.subr.mxu0 0.0
        %7350 = vmatpush1.msra.mxu0 0.0
        %7351 = vmatprep.subr.mxu0 0.0
        %7352 = vmatpush1.msra.mxu0 0.0
        %7353 = vmatprep.subr.mxu0 0.0
        %7354 = vmatpush1.msra.mxu0 0.0
        %7355 = vmatprep.subr.mxu0 0.0
        %7356 = vmatpush1.msra.mxu0 0.0
        %7357 = vmatprep.mubr.f32.mxu0 0.0
        %7358 = vmatmul.mubr.f32.gmra.mrb[0].mxu0 %v7288
        %v7359 = vpop.f32.mrb[0].mxu0
        %v7360 = vadd.f32 0.0, %v7359
        %v7361 = vpop.f32.mrb[0].mxu0
        %7362 = vmatprep.mubr.f32.mxu0 0.0
        %7363 = vmatmul.mubr.f32.gmra.mrb[0].mxu0 %v7291
        %v7364 = vpop.f32.mrb[0].mxu0
        %v7365 = vadd.f32 0.0, %v7364
        %v7366 = vpop.f32.mrb[0].mxu0
        %7367 = vdwg.mxu0
        %v7368 = vadd.f32 %v7205, %v7360
        %v7369 = vadd.f32 %v7206, %v7365
        %7370 = vmatprep.subr.mxu0 0.0
        %7371 = vmatpush1.msra.mxu0 %v7274
        %7372 = vmatprep.subr.mxu0 0.0
        %7373 = vmatpush1.msra.mxu0 %v7279
        %7374 = vmatprep.subr.mxu0 0.0
        %7375 = vmatpush1.msra.mxu0 0.0
        %7376 = vmatprep.subr.mxu0 0.0
        %7377 = vmatpush1.msra.mxu0 0.0
        %7378 = vmatprep.subr.mxu0 0.0
        %7379 = vmatpush1.msra.mxu0 0.0
        %7380 = vmatprep.subr.mxu0 0.0
        %7381 = vmatpush1.msra.mxu0 0.0
        %7382 = vmatprep.subr.mxu0 0.0
        %7383 = vmatpush1.msra.mxu0 0.0
        %7384 = vmatprep.subr.mxu0 0.0
        %7385 = vmatpush1.msra.mxu0 0.0
        %7386 = vmatprep.subr.mxu0 0.0
        %7387 = vmatpush1.msra.mxu0 0.0
        %7388 = vmatprep.subr.mxu0 0.0
        %7389 = vmatpush1.msra.mxu0 0.0
        %7390 = vmatprep.subr.mxu0 0.0
        %7391 = vmatpush1.msra.mxu0 0.0
        %7392 = vmatprep.subr.mxu0 0.0
        %7393 = vmatpush1.msra.mxu0 0.0
        %7394 = vmatprep.subr.mxu0 0.0
        %7395 = vmatpush1.msra.mxu0 0.0
        %7396 = vmatprep.subr.mxu0 0.0
        %7397 = vmatpush1.msra.mxu0 0.0
        %7398 = vmatprep.subr.mxu0 0.0
        %7399 = vmatpush1.msra.mxu0 0.0
        %7400 = vmatprep.subr.mxu0 0.0
        %7401 = vmatpush1.msra.mxu0 0.0
        %7402 = vmatprep.subr.mxu0 0.0
        %7403 = vmatpush1.msra.mxu0 0.0
        %7404 = vmatprep.subr.mxu0 0.0
        %7405 = vmatpush1.msra.mxu0 0.0
        %7406 = vmatprep.subr.mxu0 0.0
        %7407 = vmatpush1.msra.mxu0 0.0
        %7408 = vmatprep.subr.mxu0 0.0
        %7409 = vmatpush1.msra.mxu0 0.0
        %7410 = vmatprep.subr.mxu0 0.0
        %7411 = vmatpush1.msra.mxu0 0.0
        %7412 = vmatprep.subr.mxu0 0.0
        %7413 = vmatpush1.msra.mxu0 0.0
        %7414 = vmatprep.subr.mxu0 0.0
        %7415 = vmatpush1.msra.mxu0 0.0
        %7416 = vmatprep.subr.mxu0 0.0
        %7417 = vmatpush1.msra.mxu0 0.0
        %7418 = vmatprep.subr.mxu0 0.0
        %7419 = vmatpush1.msra.mxu0 0.0
        %7420 = vmatprep.subr.mxu0 0.0
        %7421 = vmatpush1.msra.mxu0 0.0
        %7422 = vmatprep.subr.mxu0 0.0
        %7423 = vmatpush1.msra.mxu0 0.0
        %7424 = vmatprep.subr.mxu0 0.0
        %7425 = vmatpush1.msra.mxu0 0.0
        %7426 = vmatprep.subr.mxu0 0.0
        %7427 = vmatpush1.msra.mxu0 0.0
        %7428 = vmatprep.subr.mxu0 0.0
        %7429 = vmatpush1.msra.mxu0 0.0
        %7430 = vmatprep.subr.mxu0 0.0
        %7431 = vmatpush1.msra.mxu0 0.0
        %7432 = vmatprep.subr.mxu0 0.0
        %7433 = vmatpush1.msra.mxu0 0.0
        %7434 = vmatprep.mubr.f32.mxu0 0.0
        %7435 = vmatmul.mubr.f32.gmra.mrb[0].mxu0 %v1393
        %v7436 = vpop.f32.mrb[0].mxu0
        %v7437 = vadd.f32 0.0, %v7436
        %v7438 = vpop.f32.mrb[0].mxu0
        %7439 = vmatprep.mubr.f32.mxu0 0.0
        %7440 = vmatmul.mubr.f32.gmra.mrb[0].mxu0 %v1396
        %v7441 = vpop.f32.mrb[0].mxu0
        %v7442 = vadd.f32 0.0, %v7441
        %v7443 = vpop.f32.mrb[0].mxu0
        %7444 = vdwg.mxu0
        %v7445 = vmul.f32 %v7437, 2.0
        %v7446 = vmul.f32 %v7442, 2.0
        %v7447 = vsub.f32 %v7445, %v6944
        %v7448 = vsub.f32 %v7446, %v6949
        %s7449 = scalar_lea.vmem [#allocation7], 448
        %v7450 = vld [vmem:[%s7449] sm:$0xff]
        %v7451 = vld [vmem:[%s7449 + $0x8] sm:$0xff]
        %v7452 = vld [vmem:[%s7449 + $0x10] sm:$0xff]
        %v7453 = vld [vmem:[%s7449 + $0x18] sm:$0xff]
        %v7455 = vsel %vm2060, %v7447, 0
        %v7458 = vsel %vm2060, %v7448, 0
        %7460 = vmatprep.subr.mxu0 0.0
        %7461 = vmatpush1.msra.mxu0 %v7450
        %7462 = vmatprep.subr.mxu0 0.0
        %7463 = vmatpush1.msra.mxu0 %v7451
        %7464 = vmatprep.subr.mxu0 0.0
        %7465 = vmatpush1.msra.mxu0 %v7452
        %7466 = vmatprep.subr.mxu0 0.0
        %7467 = vmatpush1.msra.mxu0 %v7453
        %7468 = vmatprep.subr.mxu0 0.0
        %7469 = vmatpush1.msra.mxu0 0.0
        %7470 = vmatprep.subr.mxu0 0.0
        %7471 = vmatpush1.msra.mxu0 0.0
        %7472 = vmatprep.subr.mxu0 0.0
        %7473 = vmatpush1.msra.mxu0 0.0
        %7474 = vmatprep.subr.mxu0 0.0
        %7475 = vmatpush1.msra.mxu0 0.0
        %7476 = vmatprep.subr.mxu0 0.0
        %7477 = vmatpush1.msra.mxu0 0.0
        %7478 = vmatprep.subr.mxu0 0.0
        %7479 = vmatpush1.msra.mxu0 0.0
        %7480 = vmatprep.subr.mxu0 0.0
        %7481 = vmatpush1.msra.mxu0 0.0
        %7482 = vmatprep.subr.mxu0 0.0
        %7483 = vmatpush1.msra.mxu0 0.0
        %7484 = vmatprep.subr.mxu0 0.0
        %7485 = vmatpush1.msra.mxu0 0.0
        %7486 = vmatprep.subr.mxu0 0.0
        %7487 = vmatpush1.msra.mxu0 0.0
        %7488 = vmatprep.subr.mxu0 0.0
        %7489 = vmatpush1.msra.mxu0 0.0
        %7490 = vmatprep.subr.mxu0 0.0
        %7491 = vmatpush1.msra.mxu0 0.0
        %7492 = vmatprep.subr.mxu0 0.0
        %7493 = vmatpush1.msra.mxu0 0.0
        %7494 = vmatprep.subr.mxu0 0.0
        %7495 = vmatpush1.msra.mxu0 0.0
        %7496 = vmatprep.subr.mxu0 0.0
        %7497 = vmatpush1.msra.mxu0 0.0
        %7498 = vmatprep.subr.mxu0 0.0
        %7499 = vmatpush1.msra.mxu0 0.0
        %7500 = vmatprep.subr.mxu0 0.0
        %7501 = vmatpush1.msra.mxu0 0.0
        %7502 = vmatprep.subr.mxu0 0.0
        %7503 = vmatpush1.msra.mxu0 0.0
        %7504 = vmatprep.subr.mxu0 0.0
        %7505 = vmatpush1.msra.mxu0 0.0
        %7506 = vmatprep.subr.mxu0 0.0
        %7507 = vmatpush1.msra.mxu0 0.0
        %7508 = vmatprep.subr.mxu0 0.0
        %7509 = vmatpush1.msra.mxu0 0.0
        %7510 = vmatprep.subr.mxu0 0.0
        %7511 = vmatpush1.msra.mxu0 0.0
        %7512 = vmatprep.subr.mxu0 0.0
        %7513 = vmatpush1.msra.mxu0 0.0
        %7514 = vmatprep.subr.mxu0 0.0
        %7515 = vmatpush1.msra.mxu0 0.0
        %7516 = vmatprep.subr.mxu0 0.0
        %7517 = vmatpush1.msra.mxu0 0.0
        %7518 = vmatprep.subr.mxu0 0.0
        %7519 = vmatpush1.msra.mxu0 0.0
        %7520 = vmatprep.subr.mxu0 0.0
        %7521 = vmatpush1.msra.mxu0 0.0
        %7522 = vmatprep.subr.mxu0 0.0
        %7523 = vmatpush1.msra.mxu0 0.0
        %7524 = vmatprep.mubr.f32.mxu0 0.0
        %7525 = vmatmul.mubr.f32.gmra.mrb[0].mxu0 %v7455
        %v7526 = vpop.f32.mrb[0].mxu0
        %v7527 = vadd.f32 0.0, %v7526
        %v7528 = vpop.f32.mrb[0].mxu0
        %7529 = vmatprep.mubr.f32.mxu0 0.0
        %7530 = vmatmul.mubr.f32.gmra.mrb[0].mxu0 %v7458
        %v7531 = vpop.f32.mrb[0].mxu0
        %v7532 = vadd.f32 0.0, %v7531
        %v7533 = vpop.f32.mrb[0].mxu0
        %7534 = vdwg.mxu0
        %v7535 = vadd.f32 %v7368, %v7527
        %v7536 = vadd.f32 %v7369, %v7532
        %s7537 = scalar_lea.vmem %s8, 2
        %v7538 = vld [vmem:[%s7537] sm:$0x1]
        %v7540 = vlaneseq
        %v7541 = vshrl.u32 %v7540, 7
        %v7542 = vsub.s32 0, %v7541
        %v7543 = vrot.slane %v7538, %v7542
        %v7545 = vadd.f32 %v7535, %v7543
        %v7546 = vadd.f32 %v7536, %v7543
        %v7547 = vtanh.pop %v7545
        %v7548 = vtanh.pop %v7546
        %v7549 = vmul.f32 %v6784, %v4030
        %v7550 = vmul.f32 %v6786, %v4031
        %v7551 = vsub.f32 1.0, %v6784
        %v7552 = vsub.f32 1.0, %v6786
        %v7553 = vmul.f32 %v7551, %v7547
        %v7554 = vmul.f32 %v7552, %v7548
        %v7555 = vadd.f32 %v7549, %v7553
        %v7556 = vadd.f32 %v7550, %v7554
        %7557 = vst.msk [vmem:[%s4029] sm:$0xff] %vm2060, %v7555
        %7558 = vst.msk [vmem:[%s4029 + $0x8] sm:$0xff] %vm2060, %v7556
        %s7559 = sand.u32 %s243, 1
        %s7560 = sand.u32 %s243, 1
        %s7561 = smul.addr %s7560, 32
        %s7562 = scalar_lea.vmem [#allocation8], %s7561
        // Predicated region
        $region111: #{encoder_forward_seq.1} parent=89 // pred_check
          %p7563 = pneg %p253
        $region112: #{encoder_forward_seq.1} parent=89 // pred_check_branch
          %7565 = sbr.rel (%p7563) target = $region114
        $region113: #{encoder_forward_seq.1} parent=89 // pred_region
          %s7566 = smul.addr %s26, 2
          %s7567 = smul.addr %s7566, 8
          %s7568 = scalar_lea.vmem %s9, %s7567
          // Predicated region
          $region115: #{encoder_forward_seq.1} parent=113 // pred_check
            _
          $region116: #{encoder_forward_seq.1} parent=113 // pred_check_branch
            %7570 = sbr.rel (0) target = $region118
          $region117: #{encoder_forward_seq.1} parent=113 // pred_region
            // Predicated region
            $region119: #{encoder_forward_seq.1} parent=117 // pred_check
              _
            $region120: #{encoder_forward_seq.1} parent=117 // pred_check_branch
              %7572 = sbr.rel (0) target = $region122
            $region121: #{encoder_forward_seq.1} parent=117 // pred_region
              // Predicated region
              $region134: #{encoder_forward_seq.1} parent=121 // pred_check
                _
              $region135: #{encoder_forward_seq.1} parent=121 // pred_check_branch
                %7593 = sbr.rel (0) target = $region137
              $region136: #{encoder_forward_seq.1} parent=121 // pred_region
                loop: start=0, step=1, limit=1
                $region138: #{encoder_forward_seq.1} parent=136 // loop_pre_header
                  _
                $region139: #{encoder_forward_seq.1} parent=136 // loop_header
                  %s7595 = sphi 0, %s7599
                  %p7596 = scmp.ge.s32.totalorder %s7595, 1
                  %s7600 = sphi %s7562, %s7562
                  %s7601 = sphi %s7568, %s7568
                $region140: #{encoder_forward_seq.1} parent=136 // loop_header_branch
                  %7598 = sbr.rel (%p7596) target = $region144
                $region141: #{encoder_forward_seq.1} parent=136 // loop_body
                  %v7602 = vld [vmem:[%s7600] sm:$0xff]
                  %7603 = vst [vmem:[%s7601] sm:$0xff] %v7602
                  %v7604 = vld [vmem:[%s7600 + $0x8] sm:$0xff]
                  %7605 = vst [vmem:[%s7601 + $0x8] sm:$0xff] %v7604
                  %v7606 = vld [vmem:[%s7600 + $0x10] sm:$0xff]
                  %7607 = vst [vmem:[%s7601 + $0x20] sm:$0xff] %v7606
                  %v7608 = vld [vmem:[%s7600 + $0x18] sm:$0xff]
                  %7609 = vst [vmem:[%s7601 + $0x28] sm:$0xff] %v7608
                $region142: #{encoder_forward_seq.1} parent=136 // loop_footer
                  %s7599 = sadd.s32 1, %s7595
                $region143: #{encoder_forward_seq.1} parent=136 // loop_footer_branch
                  %7594 = sbr.rel target = $region139
                $region144: #{encoder_forward_seq.1} parent=136 // loop_exit
                  _
              $region137: #{encoder_forward_seq.1} parent=121 // pred_fallthru
                _
              // Predicated region
              $region145: #{encoder_forward_seq.1} parent=121 // pred_check
                _
              $region146: #{encoder_forward_seq.1} parent=121 // pred_check_branch
                %7611 = sbr.rel target = $region148
              $region147: #{encoder_forward_seq.1} parent=121 // pred_region
                _
              $region148: #{encoder_forward_seq.1} parent=121 // pred_fallthru
                _
            $region122: #{encoder_forward_seq.1} parent=117 // pred_fallthru
              _
            // Predicated region
            $region123: #{encoder_forward_seq.1} parent=117 // pred_check
              _
            $region124: #{encoder_forward_seq.1} parent=117 // pred_check_branch
              %7574 = sbr.rel target = $region126
            $region125: #{encoder_forward_seq.1} parent=117 // pred_region
              loop: start=0, step=1, limit=1
              $region127: #{encoder_forward_seq.1} parent=125 // loop_pre_header
                _
              $region128: #{encoder_forward_seq.1} parent=125 // loop_header
                %s7577 = sphi 0, %s7581
                %p7578 = scmp.ge.s32.totalorder %s7577, 1
                %s7582 = sphi %s7562, %s7562
                %s7583 = sphi %s7568, %s7568
              $region129: #{encoder_forward_seq.1} parent=125 // loop_header_branch
                %7580 = sbr.rel (%p7578) target = $region133
              $region130: #{encoder_forward_seq.1} parent=125 // loop_body
                %v7584 = vld [vmem:[%s7582] sm:$0xff]
                %7585 = vst [vmem:[%s7583] sm:$0xff] %v7584
                %v7586 = vld [vmem:[%s7582 + $0x8] sm:$0xff]
                %7587 = vst [vmem:[%s7583 + $0x8] sm:$0xff] %v7586
                %v7588 = vld [vmem:[%s7582 + $0x10] sm:$0xff]
                %7589 = vst [vmem:[%s7583 + $0x20] sm:$0xff] %v7588
                %v7590 = vld [vmem:[%s7582 + $0x18] sm:$0xff]
                %7591 = vst [vmem:[%s7583 + $0x28] sm:$0xff] %v7590
              $region131: #{encoder_forward_seq.1} parent=125 // loop_footer
                %s7581 = sadd.s32 1, %s7577
              $region132: #{encoder_forward_seq.1} parent=125 // loop_footer_branch
                %7576 = sbr.rel target = $region128
              $region133: #{encoder_forward_seq.1} parent=125 // loop_exit
                _
            $region126: #{encoder_forward_seq.1} parent=117 // pred_fallthru
              _
          $region118: #{encoder_forward_seq.1} parent=113 // pred_fallthru
            _
          %7612 = vnop
        $region114: #{encoder_forward_seq.1} parent=89 // pred_fallthru
          _
      $region90: #{encoder_forward_seq.1} parent=5 // pred_fallthru
        _
      %p7613 = scmp.le.s32.totalorder 2, %s17
      // Predicated region
      $region149: #{encoder_forward_seq.1} parent=5 // pred_check
        %p7614 = pneg %p7613
      $region150: #{encoder_forward_seq.1} parent=5 // pred_check_branch
        %7616 = sbr.rel (%p7614) target = $region152
      $region151: #{encoder_forward_seq.1} parent=5 // pred_region
        %s7617 = ssub.s32 %s17, 2
        // Predicated region
        $region153: #{encoder_forward_seq.1} parent=151 // pred_check
          %p7618 = pneg %p259
        $region154: #{encoder_forward_seq.1} parent=151 // pred_check_branch
          %7620 = sbr.rel (%p7618) target = $region156
        $region155: #{encoder_forward_seq.1} parent=151 // pred_region
          %s7621 = sand.u32 %s244, 1
          %s7622 = sand.u32 %s244, 1
          %s7623 = smul.addr %s7622, 32
          %s7624 = scalar_lea.vmem [#allocation8], %s7623
        $region156: #{encoder_forward_seq.1} parent=151 // pred_fallthru
          _
      $region152: #{encoder_forward_seq.1} parent=5 // pred_fallthru
        _
    $region6: #{encoder_forward_seq.1} parent=1 // loop_footer
      %s21 = sadd.s32 1, %s17
    $region7: #{encoder_forward_seq.1} parent=1 // loop_footer_branch
      %16 = sbr.rel target = $region3
    $region8: #{encoder_forward_seq.1} parent=1 // loop_exit
      _
    %7625 = vsyncpa [#allocation4], 1
    %s7626 = scalar_lea.sflag [#allocation4], 1
    %7627 = vsyncpa %s7626, 1
    %7628 = vsyncpa [#allocation6], 1

</llo_original>
